<compile_context>
chip_gen: v7x
topology: tpu7x:2x2x1
jax: 0.10.0
libtpu: 0.0.40
codegen_flags: <defaults>
</compile_context>

<pallas_src>
import math

import jax
import jax.numpy as jnp
from jax.experimental import pallas as pl
from jax.experimental.pallas import tpu as pltpu

VMEM = pltpu.MemorySpace.VMEM
NEG_SLOPE = 0.01  # nn.LeakyReLU() default


def _lrelu(v):
    return jnp.where(v > 0, v, NEG_SLOPE * v)


def _resident(arr):
    # whole-array block with a constant index_map -> stays resident across grid
    zeros = (0,) * arr.ndim
    return pl.BlockSpec(arr.shape, lambda b, _z=zeros: _z)


# ----------------------------------------------------------------------------
# Kernel factories (geometry baked in as static Python ints)
# ----------------------------------------------------------------------------

def _make_zrb_kernel(L, C, Ci, Wp, lpad):
    """One fused ZhuGoResidualConvBlock, one sample per grid step."""

    def kernel(x_ref, mask_ref, enc_s_ref, enc_t_ref, enc_w_ref,
               rb_s_ref, rb_t_ref, rb_w_ref,
               dec_s_ref, dec_t_ref, dec_w_ref,
               o_ref, ybuf_ref):
        x = x_ref[0]                       # (L, C) f32
        mask = mask_ref[...]               # (L, 1): 1 = board cell, 0 = halo
        ybuf_ref[...] = jnp.zeros_like(ybuf_ref)

        def act(v, s, sh):
            # folded inference BatchNorm + LeakyReLU; zero the halo so the
            # following convolution sees exact zero padding.
            return _lrelu(v * s + sh) * mask

        def conv1x1(v, w):
            return jnp.dot(v.astype(jnp.bfloat16), w,
                           preferred_element_type=jnp.float32)

        def conv3x3(v, widx):
            # v: (L, Ci) halo-masked activation.  Stage into the zero-padded
            # VMEM scratch and accumulate the 9 taps as shifted slice loads.
            ybuf_ref[lpad:lpad + L, :] = v
            acc = jnp.zeros((L, Ci), jnp.float32)
            for t in range(9):
                dy, dx = divmod(t, 3)
                off = (dy - 1) * Wp + (dx - 1)
                sl = ybuf_ref[lpad + off:lpad + off + L, :]
                acc = acc + jnp.dot(sl.astype(jnp.bfloat16),
                                    rb_w_ref[widx * 9 + t],
                                    preferred_element_type=jnp.float32)
            return acc

        # encoder: BN + LReLU + 1x1 conv (C -> Ci)
        h = conv1x1(act(x, enc_s_ref[...], enc_t_ref[...]), enc_w_ref[...])
        # two inner ResidualConvBlocks on Ci channels
        for blk in range(2):
            y1 = act(h, rb_s_ref[2 * blk], rb_t_ref[2 * blk])
            c1 = conv3x3(y1, 2 * blk)
            y2 = act(c1, rb_s_ref[2 * blk + 1], rb_t_ref[2 * blk + 1])
            h = h + conv3x3(y2, 2 * blk + 1)
        # decoder: BN + LReLU + 1x1 conv (Ci -> C) + outer residual add
        out = x + conv1x1(act(h, dec_s_ref[...], dec_t_ref[...]),
                          dec_w_ref[...])
        o_ref[0] = out.astype(o_ref.dtype)

    return kernel


def _make_gbb_kernel(hw):
    """One fused GlobalBiasBLock, one sample per grid step."""
    inv = 1.0 / hw

    def kernel(x_ref, mask_ref, s_ref, t_ref, wm_ref, wx_ref, b_ref, o_ref):
        x = x_ref[0]                       # (L, C)
        mask = mask_ref[...]               # (L, 1)
        y = _lrelu(x * s_ref[...] + t_ref[...])
        means = jnp.sum(y * mask, axis=0, keepdims=True) * inv          # (1, C)
        maxes = jnp.max(jnp.where(mask > 0, y, -3.0e38),
                        axis=0, keepdims=True)                          # (1, C)
        bias = jnp.dot(means.astype(jnp.bfloat16), wm_ref[...],
                       preferred_element_type=jnp.float32)
        bias = bias + jnp.dot(maxes.astype(jnp.bfloat16), wx_ref[...],
                              preferred_element_type=jnp.float32)
        bias = bias + b_ref[...]
        o_ref[0] = (x + bias).astype(o_ref.dtype)

    return kernel


def _make_head_kernel(hw):
    """Fused trailing BN/LReLU + flatten1 + flatten2 + dense head."""
    inv = 1.0 / hw

    def kernel(x_ref, mask_ref, fs_ref, ft_ref,
               p_ref, pm_ref, s9_ref, t9_ref,
               fw1_ref, f1s_ref, f1t_ref,
               fw2_ref, f2s_ref, f2t_ref,
               fw3_ref, f3s_ref, f3t_ref,
               w1a_ref, w1bt_ref, sel_ref, b1_ref, w2_ref, b2_ref, o_ref):
        # trailing BN + LReLU of self.residual, flatten1 (global avg pool)
        y = _lrelu(x_ref[...] * fs_ref[...] + ft_ref[...])              # (B, L, C)
        pool = jnp.sum(y * mask_ref[...], axis=1) * inv                 # (B, C)

        # flatten2: stride-2 3x3 conv as ONE lane-dense (N, 9C) @ (9C, C) dot.
        # The BN/LReLU of self.residual is applied to the raw patches here and
        # the patch mask re-creates the conv's zero padding exactly.
        p = _lrelu(p_ref[...] * s9_ref[...] + t9_ref[...]) * pm_ref[...]
        f = jnp.dot(p.astype(jnp.bfloat16), fw1_ref[...],
                    preferred_element_type=jnp.float32)                 # (N, C)
        f = _lrelu(f * f1s_ref[...] + f1t_ref[...])
        f = jnp.dot(f.astype(jnp.bfloat16), fw2_ref[...],
                    preferred_element_type=jnp.float32)                 # (N, Ci)
        f = _lrelu(f * f2s_ref[...] + f2t_ref[...])
        f = jnp.dot(f.astype(jnp.bfloat16), fw3_ref[...],
                    preferred_element_type=jnp.float32)                 # (N, 1)
        f = _lrelu(f * f3s_ref[...] + f3t_ref[...])

        # dense: cat([flatten1, flatten2]) @ W1 + b1 computed as two halves.
        # The flatten2 half is a per-sample segmented sum via the selector
        # matrix, avoiding any in-kernel reshape of the lane-sparse (N, 1) slab.
        spat = jnp.dot(sel_ref[...], f * w1bt_ref[...],
                       preferred_element_type=jnp.float32)              # (B, mid)
        h = jnp.dot(pool.astype(jnp.bfloat16), w1a_ref[...],
                    preferred_element_type=jnp.float32)
        h = _lrelu(h + spat + b1_ref[...])
        # TODO(synk): Dropout(0.5) is identity here (inference mode only).
        out = jnp.dot(h.astype(jnp.bfloat16), w2_ref[...],
                      preferred_element_type=jnp.float32) + b2_ref[...]
        o_ref[...] = out.astype(o_ref.dtype)

    return kernel


# ----------------------------------------------------------------------------
# pallas_call wrappers
# ----------------------------------------------------------------------------

def _run_zrb(x, mask, p, B, L, C, Ci, Wp):
    lpad = ((Wp + 1 + 7) // 8) * 8          # aligned pad >= max tap offset
    args = (x, mask, p["enc_s"], p["enc_t"], p["enc_w"],
            p["rb_s"], p["rb_t"], p["rb_w"],
            p["dec_s"], p["dec_t"], p["dec_w"])
    in_specs = [pl.BlockSpec((1, L, C), lambda b: (b, 0, 0))]
    in_specs += [_resident(a) for a in args[1:]]
    return pl.pallas_call(
        _make_zrb_kernel(L, C, Ci, Wp, lpad),
        out_shape=jax.ShapeDtypeStruct((B, L, C), jnp.float32),
        grid=(B,),
        in_specs=in_specs,
        out_specs=pl.BlockSpec((1, L, C), lambda b: (b, 0, 0)),
        scratch_shapes=[pltpu.VMEM((L + 2 * lpad, Ci), jnp.float32)],
        compiler_params=pltpu.CompilerParams(
            dimension_semantics=("parallel",)),
    )(*args)


def _run_gbb(x, mask, p, B, L, C, hw):
    args = (x, mask, p["s"], p["t"], p["wm"], p["wx"], p["b"])
    in_specs = [pl.BlockSpec((1, L, C), lambda b: (b, 0, 0))]
    in_specs += [_resident(a) for a in args[1:]]
    return pl.pallas_call(
        _make_gbb_kernel(hw),
        out_shape=jax.ShapeDtypeStruct((B, L, C), jnp.float32),
        grid=(B,),
        in_specs=in_specs,
        out_specs=pl.BlockSpec((1, L, C), lambda b: (b, 0, 0)),
        compiler_params=pltpu.CompilerParams(
            dimension_semantics=("parallel",)),
    )(*args)


def _run_head(x3, mask3, fs3, ft3, patches, pmask, s9, t9,
              w1b_tiled, sel, prm, B, hw):
    args = (x3, mask3, fs3, ft3, patches, pmask, s9, t9,
            prm["f2_w1"], prm["f2_bn1"][0], prm["f2_bn1"][1],
            prm["f2_w2"], prm["f2_bn2"][0], prm["f2_bn2"][1],
            prm["f2_w3"], prm["f2_bn3"][0], prm["f2_bn3"][1],
            prm["d_w1a"], w1b_tiled, sel,
            prm["d_b1"], prm["d_w2"], prm["d_b2"])
    return pl.pallas_call(
        _make_head_kernel(hw),
        out_shape=jax.ShapeDtypeStruct((B, 1), jnp.float32),
        in_specs=[pl.BlockSpec(memory_space=VMEM) for _ in args],
        out_specs=pl.BlockSpec(memory_space=VMEM),
    )(*args)


# ----------------------------------------------------------------------------
# Forward pass
# ----------------------------------------------------------------------------

def zhugo_value_head(x_nchw, params, board_size, C):
    B = x_nchw.shape[0]
    H, W = board_size
    Ci = C // 2
    Hp, Wp = H + 2, W + 2
    L = Hp * Wp
    H2, W2 = (H + 1) // 2, (W + 1) // 2

    # NCHW -> NHWC with a one-cell zero halo, flattened to (B, L, C).
    x = jnp.transpose(x_nchw, (0, 2, 3, 1))
    x = jnp.pad(x, ((0, 0), (1, 1), (1, 1), (0, 0))).reshape(B, L, C)

    # static halo mask: 1 on board cells, 0 on the padding ring
    m2 = jnp.zeros((Hp, Wp), jnp.float32).at[1:H + 1, 1:W + 1].set(1.0)
    mask = m2.reshape(L, 1)

    for blk in params["blocks"]:
        if blk["type"] == "zrb":
            x = _run_zrb(x, mask, blk, B, L, C, Ci, Wp)
        else:
            x = _run_gbb(x, mask, blk, B, L, C, H * W)

    # flatten2 input: stride-2 3x3 patches of the raw residual stream, gathered
    # once into a lane-dense (B*H2*W2, 9C) slab; the trailing BN/LReLU and the
    # conv's zero padding are applied inside the head kernel.
    def gather_s2(a4):
        pieces = []
        for dy in range(3):
            for dx in range(3):
                pieces.append(a4[:, dy:dy + 2 * H2 - 1:2,
                                 dx:dx + 2 * W2 - 1:2, :])
        cat = jnp.concatenate(pieces, axis=-1)
        return cat.reshape(a4.shape[0] * H2 * W2, 9 * a4.shape[-1])

    patches = gather_s2(x.reshape(B, Hp, Wp, C))                         # (N, 9C)
    pmask = gather_s2(jnp.broadcast_to(m2[None, :, :, None],
                                       (1, Hp, Wp, C)))                  # (H2W2, 9C)
    pmask = jnp.tile(pmask, (B, 1))                                      # (N, 9C)
    s9 = jnp.tile(params["final_s"], (1, 9))
    t9 = jnp.tile(params["final_t"], (1, 9))
    w1b_tiled = jnp.tile(params["d_w1b"], (B, 1))                        # (N, mid)
    sel = jnp.repeat(jnp.eye(B, dtype=jnp.float32), H2 * W2, axis=1)     # (B, N)

    return _run_head(x, mask.reshape(1, L, 1),
                     params["final_s"].reshape(1, 1, C),
                     params["final_t"].reshape(1, 1, C),
                     patches, pmask, s9, t9, w1b_tiled, sel,
                     params, B, H * W)


# ----------------------------------------------------------------------------
# Deterministic parameter init (shapes / init scales match __init__)
# ----------------------------------------------------------------------------

def init_params(key, board_size, C, depth, mid):
    H, W = board_size
    Ci = C // 2
    keys = iter(jax.random.split(key, 1024))

    def nk():
        return next(keys)

    def bn(c):
        eps = 1e-5
        gamma = jnp.ones((1, c), jnp.float32)
        beta = jnp.zeros((1, c), jnp.float32)
        mean = jnp.zeros((1, c), jnp.float32)
        var = jnp.ones((1, c), jnp.float32)
        scale = gamma / jnp.sqrt(var + eps)
        shift = beta - mean * scale
        return scale, shift

    def kaiming(shape, fan_in, a=0.01, dtype=jnp.bfloat16):
        gain = math.sqrt(2.0 / (1.0 + a * a))
        w = (gain / math.sqrt(fan_in)) * jax.random.normal(nk(), shape, jnp.float32)
        return w.astype(dtype)

    def xavier(shape, fan_in, fan_out, dtype=jnp.bfloat16):
        std = math.sqrt(2.0 / (fan_in + fan_out))
        return (std * jax.random.normal(nk(), shape, jnp.float32)).astype(dtype)

    blocks = []
    for idx in range(depth):
        rb_s, rb_t, rb_w = [], [], []
        for _ in range(4):                        # 2 inner blocks x 2 conv3x3
            s, t = bn(Ci)
            rb_s.append(s)
            rb_t.append(t)
            rb_w.append(kaiming((9, Ci, Ci), Ci * 9))
        enc_s, enc_t = bn(C)
        dec_s, dec_t = bn(Ci)
        blocks.append(dict(
            type="zrb",
            enc_s=enc_s, enc_t=enc_t, enc_w=kaiming((C, Ci), C),
            rb_s=jnp.stack(rb_s), rb_t=jnp.stack(rb_t),       # (4, 1, Ci)
            rb_w=jnp.concatenate(rb_w, axis=0),               # (36, Ci, Ci)
            dec_s=dec_s, dec_t=dec_t, dec_w=kaiming((Ci, C), Ci)))
        if idx % 3 == 0:
            s, t = bn(C)
            blocks.append(dict(
                type="gbb", s=s, t=t,
                wm=xavier((C, C), 2 * C, C),      # Linear(2C -> C), mean half
                wx=xavier((C, C), 2 * C, C),      # Linear(2C -> C), max half
                b=jnp.zeros((1, C), jnp.float32)))

    H2, W2 = (H + 1) // 2, (W + 1) // 2
    dense_in = C + H2 * W2
    fs, ft = bn(C)
    b1s, b1t = bn(C)
    b2s, b2t = bn(Ci)
    b3s, b3t = bn(1)
    return dict(
        blocks=blocks,
        final_s=fs, final_t=ft,
        f2_w1=kaiming((9 * C, C), C * 9),
        f2_bn1=(b1s, b1t),
        f2_w2=kaiming((C, Ci), C),
        f2_bn2=(b2s, b2t),
        f2_w3=kaiming((Ci, 1), Ci),
        f2_bn3=(b3s, b3t),
        d_w1a=kaiming((C, mid), dense_in),
        d_w1b=kaiming((H2 * W2, mid), dense_in, dtype=jnp.float32),
        d_b1=jnp.zeros((1, mid), jnp.float32),
        d_w2=xavier((mid, 1), mid, 1),
        d_b2=jnp.zeros((1, 1), jnp.float32),
    )


# ----------------------------------------------------------------------------

if __name__ == "__main__":
    B, C, H, W = 2, 16, 8, 8          # batch, bottleneck_channels, board_size
    depth, mid = 2, 32                # value_residual_depth, value_middle_width

    key = jax.random.PRNGKey(0)
    kx, kp = jax.random.split(key)
    x = jax.random.normal(kx, (B, C, H, W), jnp.float32)   # PyTorch-style NCHW
    params = init_params(kp, (H, W), C, depth, mid)

    fwd = jax.jit(lambda inp: zhugo_value_head(inp, params, (H, W), C))
    out = jax.block_until_ready(fwd(x))
    assert out.shape == (B, 1), out.shape
    assert bool(jnp.all(jnp.isfinite(out)))
    print("KERNEL_OK")
</pallas_src>

<mosaic_0001>
module attributes {stable_mosaic.version = 11 : i64} {
  func.func @kernel(%arg0: i32, %arg1: memref<1x100x16xf32, #tpu.memory_space<vmem>>, %arg2: memref<100x1xf32, #tpu.memory_space<vmem>>, %arg3: memref<1x16xf32, #tpu.memory_space<vmem>>, %arg4: memref<1x16xf32, #tpu.memory_space<vmem>>, %arg5: memref<16x16xbf16, #tpu.memory_space<vmem>>, %arg6: memref<16x16xbf16, #tpu.memory_space<vmem>>, %arg7: memref<1x16xf32, #tpu.memory_space<vmem>>, %arg8: memref<1x100x16xf32, #tpu.memory_space<vmem>>) attributes {dimension_semantics = [#tpu.dimension_semantics<parallel>], iteration_bounds = array<i64: 2>, scalar_prefetch = 0 : i64, scratch_operands = 0 : i64, tpu.core_type = #tpu.core_type<tc>, window_params = [{transform_indices = @transform_0, window_bounds = array<i64: 1, 100, 16>}, {pipeline_mode = #tpu.pipeline_mode<synchronous>, transform_indices = @transform_1, window_bounds = array<i64: 100, 1>}, {pipeline_mode = #tpu.pipeline_mode<synchronous>, transform_indices = @transform_2, window_bounds = array<i64: 1, 16>}, {pipeline_mode = #tpu.pipeline_mode<synchronous>, transform_indices = @transform_3, window_bounds = array<i64: 1, 16>}, {pipeline_mode = #tpu.pipeline_mode<synchronous>, transform_indices = @transform_4, window_bounds = array<i64: 16, 16>}, {pipeline_mode = #tpu.pipeline_mode<synchronous>, transform_indices = @transform_5, window_bounds = array<i64: 16, 16>}, {pipeline_mode = #tpu.pipeline_mode<synchronous>, transform_indices = @transform_6, window_bounds = array<i64: 1, 16>}, {transform_indices = @transform_7, window_bounds = array<i64: 1, 100, 16>}]} {
    %c0 = arith.constant 0 : index
    %c0_0 = arith.constant 0 : index
    %c0_1 = arith.constant 0 : index
    %0 = vector.load %arg1[%c0, %c0_0, %c0_1] : memref<1x100x16xf32, #tpu.memory_space<vmem>>, vector<1x100x16xf32>
    %1 = vector.shape_cast %0 : vector<1x100x16xf32> to vector<100x16xf32>
    %c0_2 = arith.constant 0 : index
    %c0_3 = arith.constant 0 : index
    %2 = vector.load %arg2[%c0_2, %c0_3] : memref<100x1xf32, #tpu.memory_space<vmem>>, vector<100x1xf32>
    %c0_4 = arith.constant 0 : index
    %c0_5 = arith.constant 0 : index
    %3 = vector.load %arg3[%c0_4, %c0_5] : memref<1x16xf32, #tpu.memory_space<vmem>>, vector<1x16xf32>
    %4 = vector.broadcast %3 : vector<1x16xf32> to vector<100x16xf32>
    %5 = arith.mulf %1, %4 : vector<100x16xf32>
    %c0_6 = arith.constant 0 : index
    %c0_7 = arith.constant 0 : index
    %6 = vector.load %arg4[%c0_6, %c0_7] : memref<1x16xf32, #tpu.memory_space<vmem>>, vector<1x16xf32>
    %7 = vector.broadcast %6 : vector<1x16xf32> to vector<100x16xf32>
    %8 = arith.addf %5, %7 : vector<100x16xf32>
    %cst = arith.constant 0.000000e+00 : f32
    %9 = vector.broadcast %cst : f32 to vector<100x16xf32>
    %10 = arith.cmpf ogt, %8, %9 : vector<100x16xf32>
    %cst_8 = arith.constant 0.00999999977 : f32
    %11 = vector.broadcast %cst_8 : f32 to vector<100x16xf32>
    %12 = arith.mulf %11, %8 : vector<100x16xf32>
    %13 = arith.select %10, %8, %12 : vector<100x16xi1>, vector<100x16xf32>
    %14 = vector.broadcast %2 : vector<100x1xf32> to vector<100x16xf32>
    %15 = arith.mulf %13, %14 : vector<100x16xf32>
    %cst_9 = arith.constant dense<0.000000e+00> : vector<16xf32>
    %16 = vector.multi_reduction <add>, %15, %cst_9 [0] : vector<100x16xf32> to vector<16xf32>
    %17 = vector.shape_cast %16 : vector<16xf32> to vector<1x16xf32>
    %cst_10 = arith.constant 1.562500e-02 : f32
    %18 = vector.broadcast %cst_10 : f32 to vector<1x16xf32>
    %19 = arith.mulf %17, %18 : vector<1x16xf32>
    %cst_11 = arith.constant 0.000000e+00 : f32
    %20 = vector.broadcast %cst_11 : f32 to vector<100x1xf32>
    %21 = arith.cmpf ogt, %2, %20 : vector<100x1xf32>
    %cst_12 = arith.constant -3.000000e+38 : f32
    %22 = vector.shape_cast %21 : vector<100x1xi1> to vector<100x1xi1>
    %23 = vector.broadcast %22 : vector<100x1xi1> to vector<100x16xi1>
    %24 = vector.broadcast %cst_12 : f32 to vector<100x16xf32>
    %25 = arith.select %23, %13, %24 : vector<100x16xi1>, vector<100x16xf32>
    %cst_13 = arith.constant dense<0xFF800000> : vector<16xf32>
    %26 = vector.multi_reduction <maximumf>, %25, %cst_13 [0] : vector<100x16xf32> to vector<16xf32>
    %27 = vector.shape_cast %26 : vector<16xf32> to vector<1x16xf32>
    %28 = arith.truncf %19 : vector<1x16xf32> to vector<1x16xbf16>
    %c0_14 = arith.constant 0 : index
    %c0_15 = arith.constant 0 : index
    %29 = vector.load %arg5[%c0_14, %c0_15] : memref<16x16xbf16, #tpu.memory_space<vmem>>, vector<16x16xbf16>
    %cst_16 = arith.constant dense<0.000000e+00> : vector<1x16xf32>
    %30 = tpu.matmul %28, %29, %cst_16 {dimension_numbers = #tpu.dot_dimension_numbers<[1], [0], [0], [1], [0, 0, 1, 1], [], []>} : vector<1x16xbf16>, vector<16x16xbf16>, vector<1x16xf32> -> vector<1x16xf32>
    %31 = arith.truncf %27 : vector<1x16xf32> to vector<1x16xbf16>
    %c0_17 = arith.constant 0 : index
    %c0_18 = arith.constant 0 : index
    %32 = vector.load %arg6[%c0_17, %c0_18] : memref<16x16xbf16, #tpu.memory_space<vmem>>, vector<16x16xbf16>
    %cst_19 = arith.constant dense<0.000000e+00> : vector<1x16xf32>
    %33 = tpu.matmul %31, %32, %cst_19 {dimension_numbers = #tpu.dot_dimension_numbers<[1], [0], [0], [1], [0, 0, 1, 1], [], []>} : vector<1x16xbf16>, vector<16x16xbf16>, vector<1x16xf32> -> vector<1x16xf32>
    %34 = arith.addf %30, %33 : vector<1x16xf32>
    %c0_20 = arith.constant 0 : index
    %c0_21 = arith.constant 0 : index
    %35 = vector.load %arg7[%c0_20, %c0_21] : memref<1x16xf32, #tpu.memory_space<vmem>>, vector<1x16xf32>
    %36 = arith.addf %34, %35 : vector<1x16xf32>
    %37 = vector.broadcast %36 : vector<1x16xf32> to vector<100x16xf32>
    %38 = arith.addf %1, %37 : vector<100x16xf32>
    %c0_22 = arith.constant 0 : index
    %c0_23 = arith.constant 0 : index
    %c0_24 = arith.constant 0 : index
    %39 = vector.load %arg8[%c0_22, %c0_23, %c0_24] : memref<1x100x16xf32, #tpu.memory_space<vmem>>, vector<1x100x16xf32>
    %40 = vector.shape_cast %39 : vector<1x100x16xf32> to vector<100x16xf32>
    %41 = vector.shape_cast %38 : vector<100x16xf32> to vector<1x100x16xf32>
    tpu.vector_store %arg8[%c0_22, %c0_23, %c0_24], %41 {strides = array<i32>} : memref<1x100x16xf32, #tpu.memory_space<vmem>>, vector<1x100x16xf32>,
    return
  }
  func.func @transform_0(%arg0: i32) -> (i32, i32, i32) {
    %c0_i32 = arith.constant 0 : i32
    %c0_i32_0 = arith.constant 0 : i32
    %c0_i32_1 = arith.constant 0 : i32
    return %arg0, %c0_i32, %c0_i32_0 : i32, i32, i32
  }
  func.func @transform_1(%arg0: i32) -> (i32, i32) {
    %c0_i32 = arith.constant 0 : i32
    %c0_i32_0 = arith.constant 0 : i32
    %c0_i32_1 = arith.constant 0 : i32
    return %c0_i32, %c0_i32_0 : i32, i32
  }
  func.func @transform_2(%arg0: i32) -> (i32, i32) {
    %c0_i32 = arith.constant 0 : i32
    %c0_i32_0 = arith.constant 0 : i32
    %c0_i32_1 = arith.constant 0 : i32
    return %c0_i32, %c0_i32_0 : i32, i32
  }
  func.func @transform_3(%arg0: i32) -> (i32, i32) {
    %c0_i32 = arith.constant 0 : i32
    %c0_i32_0 = arith.constant 0 : i32
    %c0_i32_1 = arith.constant 0 : i32
    return %c0_i32, %c0_i32_0 : i32, i32
  }
  func.func @transform_4(%arg0: i32) -> (i32, i32) {
    %c0_i32 = arith.constant 0 : i32
    %c0_i32_0 = arith.constant 0 : i32
    %c0_i32_1 = arith.constant 0 : i32
    return %c0_i32, %c0_i32_0 : i32, i32
  }
  func.func @transform_5(%arg0: i32) -> (i32, i32) {
    %c0_i32 = arith.constant 0 : i32
    %c0_i32_0 = arith.constant 0 : i32
    %c0_i32_1 = arith.constant 0 : i32
    return %c0_i32, %c0_i32_0 : i32, i32
  }
  func.func @transform_6(%arg0: i32) -> (i32, i32) {
    %c0_i32 = arith.constant 0 : i32
    %c0_i32_0 = arith.constant 0 : i32
    %c0_i32_1 = arith.constant 0 : i32
    return %c0_i32, %c0_i32_0 : i32, i32
  }
  func.func @transform_7(%arg0: i32) -> (i32, i32, i32) {
    %c0_i32 = arith.constant 0 : i32
    %c0_i32_0 = arith.constant 0 : i32
    %c0_i32_1 = arith.constant 0 : i32
    return %arg0, %c0_i32, %c0_i32_0 : i32, i32, i32
  }
}

module attributes {stable_mosaic.version = 11 : i64} {
  func.func @kernel(%arg0: i32, %arg1: memref<1x100x16xf32, #tpu.memory_space<vmem>>, %arg2: memref<100x1xf32, #tpu.memory_space<vmem>>, %arg3: memref<1x16xf32, #tpu.memory_space<vmem>>, %arg4: memref<1x16xf32, #tpu.memory_space<vmem>>, %arg5: memref<16x8xbf16, #tpu.memory_space<vmem>>, %arg6: memref<4x1x8xf32, #tpu.memory_space<vmem>>, %arg7: memref<4x1x8xf32, #tpu.memory_space<vmem>>, %arg8: memref<36x8x8xbf16, #tpu.memory_space<vmem>>, %arg9: memref<1x8xf32, #tpu.memory_space<vmem>>, %arg10: memref<1x8xf32, #tpu.memory_space<vmem>>, %arg11: memref<8x16xbf16, #tpu.memory_space<vmem>>, %arg12: memref<1x100x16xf32, #tpu.memory_space<vmem>>, %arg13: memref<132x8xf32, #tpu.memory_space<vmem>>) attributes {dimension_semantics = [#tpu.dimension_semantics<parallel>], iteration_bounds = array<i64: 2>, scalar_prefetch = 0 : i64, scratch_operands = 1 : i64, tpu.core_type = #tpu.core_type<tc>, window_params = [{transform_indices = @transform_0, window_bounds = array<i64: 1, 100, 16>}, {pipeline_mode = #tpu.pipeline_mode<synchronous>, transform_indices = @transform_1, window_bounds = array<i64: 100, 1>}, {pipeline_mode = #tpu.pipeline_mode<synchronous>, transform_indices = @transform_2, window_bounds = array<i64: 1, 16>}, {pipeline_mode = #tpu.pipeline_mode<synchronous>, transform_indices = @transform_3, window_bounds = array<i64: 1, 16>}, {pipeline_mode = #tpu.pipeline_mode<synchronous>, transform_indices = @transform_4, window_bounds = array<i64: 16, 8>}, {pipeline_mode = #tpu.pipeline_mode<synchronous>, transform_indices = @transform_5, window_bounds = array<i64: 4, 1, 8>}, {pipeline_mode = #tpu.pipeline_mode<synchronous>, transform_indices = @transform_6, window_bounds = array<i64: 4, 1, 8>}, {pipeline_mode = #tpu.pipeline_mode<synchronous>, transform_indices = @transform_7, window_bounds = array<i64: 36, 8, 8>}, {pipeline_mode = #tpu.pipeline_mode<synchronous>, transform_indices = @transform_8, window_bounds = array<i64: 1, 8>}, {pipeline_mode = #tpu.pipeline_mode<synchronous>, transform_indices = @transform_9, window_bounds = array<i64: 1, 8>}, {pipeline_mode = #tpu.pipeline_mode<synchronous>, transform_indices = @transform_10, window_bounds = array<i64: 8, 16>}, {transform_indices = @transform_11, window_bounds = array<i64: 1, 100, 16>}]} {
    %c0 = arith.constant 0 : index
    %c0_0 = arith.constant 0 : index
    %c0_1 = arith.constant 0 : index
    %0 = vector.load %arg1[%c0, %c0_0, %c0_1] : memref<1x100x16xf32, #tpu.memory_space<vmem>>, vector<1x100x16xf32>
    %1 = vector.shape_cast %0 : vector<1x100x16xf32> to vector<100x16xf32>
    %c0_2 = arith.constant 0 : index
    %c0_3 = arith.constant 0 : index
    %2 = vector.load %arg2[%c0_2, %c0_3] : memref<100x1xf32, #tpu.memory_space<vmem>>, vector<100x1xf32>
    %cst = arith.constant 0.000000e+00 : f32
    %3 = vector.broadcast %cst : f32 to vector<132x8xf32>
    %c0_4 = arith.constant 0 : index
    %c0_5 = arith.constant 0 : index
    %4 = vector.load %arg13[%c0_4, %c0_5] : memref<132x8xf32, #tpu.memory_space<vmem>>, vector<132x8xf32>
    tpu.vector_store %arg13[%c0_4, %c0_5], %3 {strides = array<i32>} : memref<132x8xf32, #tpu.memory_space<vmem>>, vector<132x8xf32>,
    %c0_6 = arith.constant 0 : index
    %c0_7 = arith.constant 0 : index
    %5 = vector.load %arg3[%c0_6, %c0_7] : memref<1x16xf32, #tpu.memory_space<vmem>>, vector<1x16xf32>
    %c0_8 = arith.constant 0 : index
    %c0_9 = arith.constant 0 : index
    %6 = vector.load %arg4[%c0_8, %c0_9] : memref<1x16xf32, #tpu.memory_space<vmem>>, vector<1x16xf32>
    %7 = vector.broadcast %5 : vector<1x16xf32> to vector<100x16xf32>
    %8 = arith.mulf %1, %7 : vector<100x16xf32>
    %9 = vector.broadcast %6 : vector<1x16xf32> to vector<100x16xf32>
    %10 = arith.addf %8, %9 : vector<100x16xf32>
    %cst_10 = arith.constant 0.000000e+00 : f32
    %11 = vector.broadcast %cst_10 : f32 to vector<100x16xf32>
    %12 = arith.cmpf ogt, %10, %11 : vector<100x16xf32>
    %cst_11 = arith.constant 0.00999999977 : f32
    %13 = vector.broadcast %cst_11 : f32 to vector<100x16xf32>
    %14 = arith.mulf %13, %10 : vector<100x16xf32>
    %15 = arith.select %12, %10, %14 : vector<100x16xi1>, vector<100x16xf32>
    %16 = vector.broadcast %2 : vector<100x1xf32> to vector<100x16xf32>
    %17 = arith.mulf %15, %16 : vector<100x16xf32>
    %c0_12 = arith.constant 0 : index
    %c0_13 = arith.constant 0 : index
    %18 = vector.load %arg5[%c0_12, %c0_13] : memref<16x8xbf16, #tpu.memory_space<vmem>>, vector<16x8xbf16>
    %19 = arith.truncf %17 : vector<100x16xf32> to vector<100x16xbf16>
    %cst_14 = arith.constant dense<0.000000e+00> : vector<100x8xf32>
    %20 = tpu.matmul %19, %18, %cst_14 {dimension_numbers = #tpu.dot_dimension_numbers<[1], [0], [0], [1], [0, 0, 1, 1], [], []>} : vector<100x16xbf16>, vector<16x8xbf16>, vector<100x8xf32> -> vector<100x8xf32>
    %c0_15 = arith.constant 0 : index
    %c0_16 = arith.constant 0 : index
    %c0_17 = arith.constant 0 : index
    %21 = vector.load %arg6[%c0_15, %c0_16, %c0_17] : memref<4x1x8xf32, #tpu.memory_space<vmem>>, vector<1x1x8xf32>
    %22 = vector.shape_cast %21 : vector<1x1x8xf32> to vector<1x8xf32>
    %c0_18 = arith.constant 0 : index
    %c0_19 = arith.constant 0 : index
    %c0_20 = arith.constant 0 : index
    %23 = vector.load %arg7[%c0_18, %c0_19, %c0_20] : memref<4x1x8xf32, #tpu.memory_space<vmem>>, vector<1x1x8xf32>
    %24 = vector.shape_cast %23 : vector<1x1x8xf32> to vector<1x8xf32>
    %25 = vector.broadcast %22 : vector<1x8xf32> to vector<100x8xf32>
    %26 = arith.mulf %20, %25 : vector<100x8xf32>
    %27 = vector.broadcast %24 : vector<1x8xf32> to vector<100x8xf32>
    %28 = arith.addf %26, %27 : vector<100x8xf32>
    %cst_21 = arith.constant 0.000000e+00 : f32
    %29 = vector.broadcast %cst_21 : f32 to vector<100x8xf32>
    %30 = arith.cmpf ogt, %28, %29 : vector<100x8xf32>
    %cst_22 = arith.constant 0.00999999977 : f32
    %31 = vector.broadcast %cst_22 : f32 to vector<100x8xf32>
    %32 = arith.mulf %31, %28 : vector<100x8xf32>
    %33 = arith.select %30, %28, %32 : vector<100x8xi1>, vector<100x8xf32>
    %34 = vector.broadcast %2 : vector<100x1xf32> to vector<100x8xf32>
    %35 = arith.mulf %33, %34 : vector<100x8xf32>
    %c16 = arith.constant 16 : index
    %c0_23 = arith.constant 0 : index
    %36 = vector.load %arg13[%c16, %c0_23] : memref<132x8xf32, #tpu.memory_space<vmem>>, vector<100x8xf32>
    tpu.vector_store %arg13[%c16, %c0_23], %35 {strides = array<i32>} : memref<132x8xf32, #tpu.memory_space<vmem>>, vector<100x8xf32>,
    %cst_24 = arith.constant 0.000000e+00 : f32
    %37 = vector.broadcast %cst_24 : f32 to vector<100x8xf32>
    %c5 = arith.constant 5 : index
    %c0_25 = arith.constant 0 : index
    %38 = vector.load %arg13[%c5, %c0_25] : memref<132x8xf32, #tpu.memory_space<vmem>>, vector<100x8xf32>
    %39 = arith.truncf %38 : vector<100x8xf32> to vector<100x8xbf16>
    %c0_26 = arith.constant 0 : index
    %c0_27 = arith.constant 0 : index
    %c0_28 = arith.constant 0 : index
    %40 = vector.load %arg8[%c0_26, %c0_27, %c0_28] : memref<36x8x8xbf16, #tpu.memory_space<vmem>>, vector<1x8x8xbf16>
    %41 = vector.shape_cast %40 : vector<1x8x8xbf16> to vector<8x8xbf16>
    %cst_29 = arith.constant dense<0.000000e+00> : vector<100x8xf32>
    %42 = tpu.matmul %39, %41, %cst_29 {dimension_numbers = #tpu.dot_dimension_numbers<[1], [0], [0], [1], [0, 0, 1, 1], [], []>} : vector<100x8xbf16>, vector<8x8xbf16>, vector<100x8xf32> -> vector<100x8xf32>
    %43 = arith.addf %37, %42 : vector<100x8xf32>
    %c6 = arith.constant 6 : index
    %c0_30 = arith.constant 0 : index
    %44 = vector.load %arg13[%c6, %c0_30] : memref<132x8xf32, #tpu.memory_space<vmem>>, vector<100x8xf32>
    %45 = arith.truncf %44 : vector<100x8xf32> to vector<100x8xbf16>
    %c1 = arith.constant 1 : index
    %c0_31 = arith.constant 0 : index
    %c0_32 = arith.constant 0 : index
    %46 = vector.load %arg8[%c1, %c0_31, %c0_32] : memref<36x8x8xbf16, #tpu.memory_space<vmem>>, vector<1x8x8xbf16>
    %47 = vector.shape_cast %46 : vector<1x8x8xbf16> to vector<8x8xbf16>
    %cst_33 = arith.constant dense<0.000000e+00> : vector<100x8xf32>
    %48 = tpu.matmul %45, %47, %cst_33 {dimension_numbers = #tpu.dot_dimension_numbers<[1], [0], [0], [1], [0, 0, 1, 1], [], []>} : vector<100x8xbf16>, vector<8x8xbf16>, vector<100x8xf32> -> vector<100x8xf32>
    %49 = arith.addf %43, %48 : vector<100x8xf32>
    %c7 = arith.constant 7 : index
    %c0_34 = arith.constant 0 : index
    %50 = vector.load %arg13[%c7, %c0_34] : memref<132x8xf32, #tpu.memory_space<vmem>>, vector<100x8xf32>
    %51 = arith.truncf %50 : vector<100x8xf32> to vector<100x8xbf16>
    %c2 = arith.constant 2 : index
    %c0_35 = arith.constant 0 : index
    %c0_36 = arith.constant 0 : index
    %52 = vector.load %arg8[%c2, %c0_35, %c0_36] : memref<36x8x8xbf16, #tpu.memory_space<vmem>>, vector<1x8x8xbf16>
    %53 = vector.shape_cast %52 : vector<1x8x8xbf16> to vector<8x8xbf16>
    %cst_37 = arith.constant dense<0.000000e+00> : vector<100x8xf32>
    %54 = tpu.matmul %51, %53, %cst_37 {dimension_numbers = #tpu.dot_dimension_numbers<[1], [0], [0], [1], [0, 0, 1, 1], [], []>} : vector<100x8xbf16>, vector<8x8xbf16>, vector<100x8xf32> -> vector<100x8xf32>
    %55 = arith.addf %49, %54 : vector<100x8xf32>
    %c15 = arith.constant 15 : index
    %c0_38 = arith.constant 0 : index
    %56 = vector.load %arg13[%c15, %c0_38] : memref<132x8xf32, #tpu.memory_space<vmem>>, vector<100x8xf32>
    %57 = arith.truncf %56 : vector<100x8xf32> to vector<100x8xbf16>
    %c3 = arith.constant 3 : index
    %c0_39 = arith.constant 0 : index
    %c0_40 = arith.constant 0 : index
    %58 = vector.load %arg8[%c3, %c0_39, %c0_40] : memref<36x8x8xbf16, #tpu.memory_space<vmem>>, vector<1x8x8xbf16>
    %59 = vector.shape_cast %58 : vector<1x8x8xbf16> to vector<8x8xbf16>
    %cst_41 = arith.constant dense<0.000000e+00> : vector<100x8xf32>
    %60 = tpu.matmul %57, %59, %cst_41 {dimension_numbers = #tpu.dot_dimension_numbers<[1], [0], [0], [1], [0, 0, 1, 1], [], []>} : vector<100x8xbf16>, vector<8x8xbf16>, vector<100x8xf32> -> vector<100x8xf32>
    %61 = arith.addf %55, %60 : vector<100x8xf32>
    %c16_42 = arith.constant 16 : index
    %c0_43 = arith.constant 0 : index
    %62 = vector.load %arg13[%c16_42, %c0_43] : memref<132x8xf32, #tpu.memory_space<vmem>>, vector<100x8xf32>
    %63 = arith.truncf %62 : vector<100x8xf32> to vector<100x8xbf16>
    %c4 = arith.constant 4 : index
    %c0_44 = arith.constant 0 : index
    %c0_45 = arith.constant 0 : index
    %64 = vector.load %arg8[%c4, %c0_44, %c0_45] : memref<36x8x8xbf16, #tpu.memory_space<vmem>>, vector<1x8x8xbf16>
    %65 = vector.shape_cast %64 : vector<1x8x8xbf16> to vector<8x8xbf16>
    %cst_46 = arith.constant dense<0.000000e+00> : vector<100x8xf32>
    %66 = tpu.matmul %63, %65, %cst_46 {dimension_numbers = #tpu.dot_dimension_numbers<[1], [0], [0], [1], [0, 0, 1, 1], [], []>} : vector<100x8xbf16>, vector<8x8xbf16>, vector<100x8xf32> -> vector<100x8xf32>
    %67 = arith.addf %61, %66 : vector<100x8xf32>
    %c17 = arith.constant 17 : index
    %c0_47 = arith.constant 0 : index
    %68 = vector.load %arg13[%c17, %c0_47] : memref<132x8xf32, #tpu.memory_space<vmem>>, vector<100x8xf32>
    %69 = arith.truncf %68 : vector<100x8xf32> to vector<100x8xbf16>
    %c5_48 = arith.constant 5 : index
    %c0_49 = arith.constant 0 : index
    %c0_50 = arith.constant 0 : index
    %70 = vector.load %arg8[%c5_48, %c0_49, %c0_50] : memref<36x8x8xbf16, #tpu.memory_space<vmem>>, vector<1x8x8xbf16>
    %71 = vector.shape_cast %70 : vector<1x8x8xbf16> to vector<8x8xbf16>
    %cst_51 = arith.constant dense<0.000000e+00> : vector<100x8xf32>
    %72 = tpu.matmul %69, %71, %cst_51 {dimension_numbers = #tpu.dot_dimension_numbers<[1], [0], [0], [1], [0, 0, 1, 1], [], []>} : vector<100x8xbf16>, vector<8x8xbf16>, vector<100x8xf32> -> vector<100x8xf32>
    %73 = arith.addf %67, %72 : vector<100x8xf32>
    %c25 = arith.constant 25 : index
    %c0_52 = arith.constant 0 : index
    %74 = vector.load %arg13[%c25, %c0_52] : memref<132x8xf32, #tpu.memory_space<vmem>>, vector<100x8xf32>
    %75 = arith.truncf %74 : vector<100x8xf32> to vector<100x8xbf16>
    %c6_53 = arith.constant 6 : index
    %c0_54 = arith.constant 0 : index
    %c0_55 = arith.constant 0 : index
    %76 = vector.load %arg8[%c6_53, %c0_54, %c0_55] : memref<36x8x8xbf16, #tpu.memory_space<vmem>>, vector<1x8x8xbf16>
    %77 = vector.shape_cast %76 : vector<1x8x8xbf16> to vector<8x8xbf16>
    %cst_56 = arith.constant dense<0.000000e+00> : vector<100x8xf32>
    %78 = tpu.matmul %75, %77, %cst_56 {dimension_numbers = #tpu.dot_dimension_numbers<[1], [0], [0], [1], [0, 0, 1, 1], [], []>} : vector<100x8xbf16>, vector<8x8xbf16>, vector<100x8xf32> -> vector<100x8xf32>
    %79 = arith.addf %73, %78 : vector<100x8xf32>
    %c26 = arith.constant 26 : index
    %c0_57 = arith.constant 0 : index
    %80 = vector.load %arg13[%c26, %c0_57] : memref<132x8xf32, #tpu.memory_space<vmem>>, vector<100x8xf32>
    %81 = arith.truncf %80 : vector<100x8xf32> to vector<100x8xbf16>
    %c7_58 = arith.constant 7 : index
    %c0_59 = arith.constant 0 : index
    %c0_60 = arith.constant 0 : index
    %82 = vector.load %arg8[%c7_58, %c0_59, %c0_60] : memref<36x8x8xbf16, #tpu.memory_space<vmem>>, vector<1x8x8xbf16>
    %83 = vector.shape_cast %82 : vector<1x8x8xbf16> to vector<8x8xbf16>
    %cst_61 = arith.constant dense<0.000000e+00> : vector<100x8xf32>
    %84 = tpu.matmul %81, %83, %cst_61 {dimension_numbers = #tpu.dot_dimension_numbers<[1], [0], [0], [1], [0, 0, 1, 1], [], []>} : vector<100x8xbf16>, vector<8x8xbf16>, vector<100x8xf32> -> vector<100x8xf32>
    %85 = arith.addf %79, %84 : vector<100x8xf32>
    %c27 = arith.constant 27 : index
    %c0_62 = arith.constant 0 : index
    %86 = vector.load %arg13[%c27, %c0_62] : memref<132x8xf32, #tpu.memory_space<vmem>>, vector<100x8xf32>
    %87 = arith.truncf %86 : vector<100x8xf32> to vector<100x8xbf16>
    %c8 = arith.constant 8 : index
    %c0_63 = arith.constant 0 : index
    %c0_64 = arith.constant 0 : index
    %88 = vector.load %arg8[%c8, %c0_63, %c0_64] : memref<36x8x8xbf16, #tpu.memory_space<vmem>>, vector<1x8x8xbf16>
    %89 = vector.shape_cast %88 : vector<1x8x8xbf16> to vector<8x8xbf16>
    %cst_65 = arith.constant dense<0.000000e+00> : vector<100x8xf32>
    %90 = tpu.matmul %87, %89, %cst_65 {dimension_numbers = #tpu.dot_dimension_numbers<[1], [0], [0], [1], [0, 0, 1, 1], [], []>} : vector<100x8xbf16>, vector<8x8xbf16>, vector<100x8xf32> -> vector<100x8xf32>
    %91 = arith.addf %85, %90 : vector<100x8xf32>
    %c1_66 = arith.constant 1 : index
    %c0_67 = arith.constant 0 : index
    %c0_68 = arith.constant 0 : index
    %92 = vector.load %arg6[%c1_66, %c0_67, %c0_68] : memref<4x1x8xf32, #tpu.memory_space<vmem>>, vector<1x1x8xf32>
    %93 = vector.shape_cast %92 : vector<1x1x8xf32> to vector<1x8xf32>
    %c1_69 = arith.constant 1 : index
    %c0_70 = arith.constant 0 : index
    %c0_71 = arith.constant 0 : index
    %94 = vector.load %arg7[%c1_69, %c0_70, %c0_71] : memref<4x1x8xf32, #tpu.memory_space<vmem>>, vector<1x1x8xf32>
    %95 = vector.shape_cast %94 : vector<1x1x8xf32> to vector<1x8xf32>
    %96 = vector.broadcast %93 : vector<1x8xf32> to vector<100x8xf32>
    %97 = arith.mulf %91, %96 : vector<100x8xf32>
    %98 = vector.broadcast %95 : vector<1x8xf32> to vector<100x8xf32>
    %99 = arith.addf %97, %98 : vector<100x8xf32>
    %cst_72 = arith.constant 0.000000e+00 : f32
    %100 = vector.broadcast %cst_72 : f32 to vector<100x8xf32>
    %101 = arith.cmpf ogt, %99, %100 : vector<100x8xf32>
    %cst_73 = arith.constant 0.00999999977 : f32
    %102 = vector.broadcast %cst_73 : f32 to vector<100x8xf32>
    %103 = arith.mulf %102, %99 : vector<100x8xf32>
    %104 = arith.select %101, %99, %103 : vector<100x8xi1>, vector<100x8xf32>
    %105 = vector.broadcast %2 : vector<100x1xf32> to vector<100x8xf32>
    %106 = arith.mulf %104, %105 : vector<100x8xf32>
    %c16_74 = arith.constant 16 : index
    %c0_75 = arith.constant 0 : index
    %107 = vector.load %arg13[%c16_74, %c0_75] : memref<132x8xf32, #tpu.memory_space<vmem>>, vector<100x8xf32>
    tpu.vector_store %arg13[%c16_74, %c0_75], %106 {strides = array<i32>} : memref<132x8xf32, #tpu.memory_space<vmem>>, vector<100x8xf32>,
    %cst_76 = arith.constant 0.000000e+00 : f32
    %108 = vector.broadcast %cst_76 : f32 to vector<100x8xf32>
    %c5_77 = arith.constant 5 : index
    %c0_78 = arith.constant 0 : index
    %109 = vector.load %arg13[%c5_77, %c0_78] : memref<132x8xf32, #tpu.memory_space<vmem>>, vector<100x8xf32>
    %110 = arith.truncf %109 : vector<100x8xf32> to vector<100x8xbf16>
    %c9 = arith.constant 9 : index
    %c0_79 = arith.constant 0 : index
    %c0_80 = arith.constant 0 : index
    %111 = vector.load %arg8[%c9, %c0_79, %c0_80] : memref<36x8x8xbf16, #tpu.memory_space<vmem>>, vector<1x8x8xbf16>
    %112 = vector.shape_cast %111 : vector<1x8x8xbf16> to vector<8x8xbf16>
    %cst_81 = arith.constant dense<0.000000e+00> : vector<100x8xf32>
    %113 = tpu.matmul %110, %112, %cst_81 {dimension_numbers = #tpu.dot_dimension_numbers<[1], [0], [0], [1], [0, 0, 1, 1], [], []>} : vector<100x8xbf16>, vector<8x8xbf16>, vector<100x8xf32> -> vector<100x8xf32>
    %114 = arith.addf %108, %113 : vector<100x8xf32>
    %c6_82 = arith.constant 6 : index
    %c0_83 = arith.constant 0 : index
    %115 = vector.load %arg13[%c6_82, %c0_83] : memref<132x8xf32, #tpu.memory_space<vmem>>, vector<100x8xf32>
    %116 = arith.truncf %115 : vector<100x8xf32> to vector<100x8xbf16>
    %c10 = arith.constant 10 : index
    %c0_84 = arith.constant 0 : index
    %c0_85 = arith.constant 0 : index
    %117 = vector.load %arg8[%c10, %c0_84, %c0_85] : memref<36x8x8xbf16, #tpu.memory_space<vmem>>, vector<1x8x8xbf16>
    %118 = vector.shape_cast %117 : vector<1x8x8xbf16> to vector<8x8xbf16>
    %cst_86 = arith.constant dense<0.000000e+00> : vector<100x8xf32>
    %119 = tpu.matmul %116, %118, %cst_86 {dimension_numbers = #tpu.dot_dimension_numbers<[1], [0], [0], [1], [0, 0, 1, 1], [], []>} : vector<100x8xbf16>, vector<8x8xbf16>, vector<100x8xf32> -> vector<100x8xf32>
    %120 = arith.addf %114, %119 : vector<100x8xf32>
    %c7_87 = arith.constant 7 : index
    %c0_88 = arith.constant 0 : index
    %121 = vector.load %arg13[%c7_87, %c0_88] : memref<132x8xf32, #tpu.memory_space<vmem>>, vector<100x8xf32>
    %122 = arith.truncf %121 : vector<100x8xf32> to vector<100x8xbf16>
    %c11 = arith.constant 11 : index
    %c0_89 = arith.constant 0 : index
    %c0_90 = arith.constant 0 : index
    %123 = vector.load %arg8[%c11, %c0_89, %c0_90] : memref<36x8x8xbf16, #tpu.memory_space<vmem>>, vector<1x8x8xbf16>
    %124 = vector.shape_cast %123 : vector<1x8x8xbf16> to vector<8x8xbf16>
    %cst_91 = arith.constant dense<0.000000e+00> : vector<100x8xf32>
    %125 = tpu.matmul %122, %124, %cst_91 {dimension_numbers = #tpu.dot_dimension_numbers<[1], [0], [0], [1], [0, 0, 1, 1], [], []>} : vector<100x8xbf16>, vector<8x8xbf16>, vector<100x8xf32> -> vector<100x8xf32>
    %126 = arith.addf %120, %125 : vector<100x8xf32>
    %c15_92 = arith.constant 15 : index
    %c0_93 = arith.constant 0 : index
    %127 = vector.load %arg13[%c15_92, %c0_93] : memref<132x8xf32, #tpu.memory_space<vmem>>, vector<100x8xf32>
    %128 = arith.truncf %127 : vector<100x8xf32> to vector<100x8xbf16>
    %c12 = arith.constant 12 : index
    %c0_94 = arith.constant 0 : index
    %c0_95 = arith.constant 0 : index
    %129 = vector.load %arg8[%c12, %c0_94, %c0_95] : memref<36x8x8xbf16, #tpu.memory_space<vmem>>, vector<1x8x8xbf16>
    %130 = vector.shape_cast %129 : vector<1x8x8xbf16> to vector<8x8xbf16>
    %cst_96 = arith.constant dense<0.000000e+00> : vector<100x8xf32>
    %131 = tpu.matmul %128, %130, %cst_96 {dimension_numbers = #tpu.dot_dimension_numbers<[1], [0], [0], [1], [0, 0, 1, 1], [], []>} : vector<100x8xbf16>, vector<8x8xbf16>, vector<100x8xf32> -> vector<100x8xf32>
    %132 = arith.addf %126, %131 : vector<100x8xf32>
    %c16_97 = arith.constant 16 : index
    %c0_98 = arith.constant 0 : index
    %133 = vector.load %arg13[%c16_97, %c0_98] : memref<132x8xf32, #tpu.memory_space<vmem>>, vector<100x8xf32>
    %134 = arith.truncf %133 : vector<100x8xf32> to vector<100x8xbf16>
    %c13 = arith.constant 13 : index
    %c0_99 = arith.constant 0 : index
    %c0_100 = arith.constant 0 : index
    %135 = vector.load %arg8[%c13, %c0_99, %c0_100] : memref<36x8x8xbf16, #tpu.memory_space<vmem>>, vector<1x8x8xbf16>
    %136 = vector.shape_cast %135 : vector<1x8x8xbf16> to vector<8x8xbf16>
    %cst_101 = arith.constant dense<0.000000e+00> : vector<100x8xf32>
    %137 = tpu.matmul %134, %136, %cst_101 {dimension_numbers = #tpu.dot_dimension_numbers<[1], [0], [0], [1], [0, 0, 1, 1], [], []>} : vector<100x8xbf16>, vector<8x8xbf16>, vector<100x8xf32> -> vector<100x8xf32>
    %138 = arith.addf %132, %137 : vector<100x8xf32>
    %c17_102 = arith.constant 17 : index
    %c0_103 = arith.constant 0 : index
    %139 = vector.load %arg13[%c17_102, %c0_103] : memref<132x8xf32, #tpu.memory_space<vmem>>, vector<100x8xf32>
    %140 = arith.truncf %139 : vector<100x8xf32> to vector<100x8xbf16>
    %c14 = arith.constant 14 : index
    %c0_104 = arith.constant 0 : index
    %c0_105 = arith.constant 0 : index
    %141 = vector.load %arg8[%c14, %c0_104, %c0_105] : memref<36x8x8xbf16, #tpu.memory_space<vmem>>, vector<1x8x8xbf16>
    %142 = vector.shape_cast %141 : vector<1x8x8xbf16> to vector<8x8xbf16>
    %cst_106 = arith.constant dense<0.000000e+00> : vector<100x8xf32>
    %143 = tpu.matmul %140, %142, %cst_106 {dimension_numbers = #tpu.dot_dimension_numbers<[1], [0], [0], [1], [0, 0, 1, 1], [], []>} : vector<100x8xbf16>, vector<8x8xbf16>, vector<100x8xf32> -> vector<100x8xf32>
    %144 = arith.addf %138, %143 : vector<100x8xf32>
    %c25_107 = arith.constant 25 : index
    %c0_108 = arith.constant 0 : index
    %145 = vector.load %arg13[%c25_107, %c0_108] : memref<132x8xf32, #tpu.memory_space<vmem>>, vector<100x8xf32>
    %146 = arith.truncf %145 : vector<100x8xf32> to vector<100x8xbf16>
    %c15_109 = arith.constant 15 : index
    %c0_110 = arith.constant 0 : index
    %c0_111 = arith.constant 0 : index
    %147 = vector.load %arg8[%c15_109, %c0_110, %c0_111] : memref<36x8x8xbf16, #tpu.memory_space<vmem>>, vector<1x8x8xbf16>
    %148 = vector.shape_cast %147 : vector<1x8x8xbf16> to vector<8x8xbf16>
    %cst_112 = arith.constant dense<0.000000e+00> : vector<100x8xf32>
    %149 = tpu.matmul %146, %148, %cst_112 {dimension_numbers = #tpu.dot_dimension_numbers<[1], [0], [0], [1], [0, 0, 1, 1], [], []>} : vector<100x8xbf16>, vector<8x8xbf16>, vector<100x8xf32> -> vector<100x8xf32>
    %150 = arith.addf %144, %149 : vector<100x8xf32>
    %c26_113 = arith.constant 26 : index
    %c0_114 = arith.constant 0 : index
    %151 = vector.load %arg13[%c26_113, %c0_114] : memref<132x8xf32, #tpu.memory_space<vmem>>, vector<100x8xf32>
    %152 = arith.truncf %151 : vector<100x8xf32> to vector<100x8xbf16>
    %c16_115 = arith.constant 16 : index
    %c0_116 = arith.constant 0 : index
    %c0_117 = arith.constant 0 : index
    %153 = vector.load %arg8[%c16_115, %c0_116, %c0_117] : memref<36x8x8xbf16, #tpu.memory_space<vmem>>, vector<1x8x8xbf16>
    %154 = vector.shape_cast %153 : vector<1x8x8xbf16> to vector<8x8xbf16>
    %cst_118 = arith.constant dense<0.000000e+00> : vector<100x8xf32>
    %155 = tpu.matmul %152, %154, %cst_118 {dimension_numbers = #tpu.dot_dimension_numbers<[1], [0], [0], [1], [0, 0, 1, 1], [], []>} : vector<100x8xbf16>, vector<8x8xbf16>, vector<100x8xf32> -> vector<100x8xf32>
    %156 = arith.addf %150, %155 : vector<100x8xf32>
    %c27_119 = arith.constant 27 : index
    %c0_120 = arith.constant 0 : index
    %157 = vector.load %arg13[%c27_119, %c0_120] : memref<132x8xf32, #tpu.memory_space<vmem>>, vector<100x8xf32>
    %158 = arith.truncf %157 : vector<100x8xf32> to vector<100x8xbf16>
    %c17_121 = arith.constant 17 : index
    %c0_122 = arith.constant 0 : index
    %c0_123 = arith.constant 0 : index
    %159 = vector.load %arg8[%c17_121, %c0_122, %c0_123] : memref<36x8x8xbf16, #tpu.memory_space<vmem>>, vector<1x8x8xbf16>
    %160 = vector.shape_cast %159 : vector<1x8x8xbf16> to vector<8x8xbf16>
    %cst_124 = arith.constant dense<0.000000e+00> : vector<100x8xf32>
    %161 = tpu.matmul %158, %160, %cst_124 {dimension_numbers = #tpu.dot_dimension_numbers<[1], [0], [0], [1], [0, 0, 1, 1], [], []>} : vector<100x8xbf16>, vector<8x8xbf16>, vector<100x8xf32> -> vector<100x8xf32>
    %162 = arith.addf %156, %161 : vector<100x8xf32>
    %163 = arith.addf %20, %162 : vector<100x8xf32>
    %c2_125 = arith.constant 2 : index
    %c0_126 = arith.constant 0 : index
    %c0_127 = arith.constant 0 : index
    %164 = vector.load %arg6[%c2_125, %c0_126, %c0_127] : memref<4x1x8xf32, #tpu.memory_space<vmem>>, vector<1x1x8xf32>
    %165 = vector.shape_cast %164 : vector<1x1x8xf32> to vector<1x8xf32>
    %c2_128 = arith.constant 2 : index
    %c0_129 = arith.constant 0 : index
    %c0_130 = arith.constant 0 : index
    %166 = vector.load %arg7[%c2_128, %c0_129, %c0_130] : memref<4x1x8xf32, #tpu.memory_space<vmem>>, vector<1x1x8xf32>
    %167 = vector.shape_cast %166 : vector<1x1x8xf32> to vector<1x8xf32>
    %168 = vector.broadcast %165 : vector<1x8xf32> to vector<100x8xf32>
    %169 = arith.mulf %163, %168 : vector<100x8xf32>
    %170 = vector.broadcast %167 : vector<1x8xf32> to vector<100x8xf32>
    %171 = arith.addf %169, %170 : vector<100x8xf32>
    %cst_131 = arith.constant 0.000000e+00 : f32
    %172 = vector.broadcast %cst_131 : f32 to vector<100x8xf32>
    %173 = arith.cmpf ogt, %171, %172 : vector<100x8xf32>
    %cst_132 = arith.constant 0.00999999977 : f32
    %174 = vector.broadcast %cst_132 : f32 to vector<100x8xf32>
    %175 = arith.mulf %174, %171 : vector<100x8xf32>
    %176 = arith.select %173, %171, %175 : vector<100x8xi1>, vector<100x8xf32>
    %177 = vector.broadcast %2 : vector<100x1xf32> to vector<100x8xf32>
    %178 = arith.mulf %176, %177 : vector<100x8xf32>
    %c16_133 = arith.constant 16 : index
    %c0_134 = arith.constant 0 : index
    %179 = vector.load %arg13[%c16_133, %c0_134] : memref<132x8xf32, #tpu.memory_space<vmem>>, vector<100x8xf32>
    tpu.vector_store %arg13[%c16_133, %c0_134], %178 {strides = array<i32>} : memref<132x8xf32, #tpu.memory_space<vmem>>, vector<100x8xf32>,
    %cst_135 = arith.constant 0.000000e+00 : f32
    %180 = vector.broadcast %cst_135 : f32 to vector<100x8xf32>
    %c5_136 = arith.constant 5 : index
    %c0_137 = arith.constant 0 : index
    %181 = vector.load %arg13[%c5_136, %c0_137] : memref<132x8xf32, #tpu.memory_space<vmem>>, vector<100x8xf32>
    %182 = arith.truncf %181 : vector<100x8xf32> to vector<100x8xbf16>
    %c18 = arith.constant 18 : index
    %c0_138 = arith.constant 0 : index
    %c0_139 = arith.constant 0 : index
    %183 = vector.load %arg8[%c18, %c0_138, %c0_139] : memref<36x8x8xbf16, #tpu.memory_space<vmem>>, vector<1x8x8xbf16>
    %184 = vector.shape_cast %183 : vector<1x8x8xbf16> to vector<8x8xbf16>
    %cst_140 = arith.constant dense<0.000000e+00> : vector<100x8xf32>
    %185 = tpu.matmul %182, %184, %cst_140 {dimension_numbers = #tpu.dot_dimension_numbers<[1], [0], [0], [1], [0, 0, 1, 1], [], []>} : vector<100x8xbf16>, vector<8x8xbf16>, vector<100x8xf32> -> vector<100x8xf32>
    %186 = arith.addf %180, %185 : vector<100x8xf32>
    %c6_141 = arith.constant 6 : index
    %c0_142 = arith.constant 0 : index
    %187 = vector.load %arg13[%c6_141, %c0_142] : memref<132x8xf32, #tpu.memory_space<vmem>>, vector<100x8xf32>
    %188 = arith.truncf %187 : vector<100x8xf32> to vector<100x8xbf16>
    %c19 = arith.constant 19 : index
    %c0_143 = arith.constant 0 : index
    %c0_144 = arith.constant 0 : index
    %189 = vector.load %arg8[%c19, %c0_143, %c0_144] : memref<36x8x8xbf16, #tpu.memory_space<vmem>>, vector<1x8x8xbf16>
    %190 = vector.shape_cast %189 : vector<1x8x8xbf16> to vector<8x8xbf16>
    %cst_145 = arith.constant dense<0.000000e+00> : vector<100x8xf32>
    %191 = tpu.matmul %188, %190, %cst_145 {dimension_numbers = #tpu.dot_dimension_numbers<[1], [0], [0], [1], [0, 0, 1, 1], [], []>} : vector<100x8xbf16>, vector<8x8xbf16>, vector<100x8xf32> -> vector<100x8xf32>
    %192 = arith.addf %186, %191 : vector<100x8xf32>
    %c7_146 = arith.constant 7 : index
    %c0_147 = arith.constant 0 : index
    %193 = vector.load %arg13[%c7_146, %c0_147] : memref<132x8xf32, #tpu.memory_space<vmem>>, vector<100x8xf32>
    %194 = arith.truncf %193 : vector<100x8xf32> to vector<100x8xbf16>
    %c20 = arith.constant 20 : index
    %c0_148 = arith.constant 0 : index
    %c0_149 = arith.constant 0 : index
    %195 = vector.load %arg8[%c20, %c0_148, %c0_149] : memref<36x8x8xbf16, #tpu.memory_space<vmem>>, vector<1x8x8xbf16>
    %196 = vector.shape_cast %195 : vector<1x8x8xbf16> to vector<8x8xbf16>
    %cst_150 = arith.constant dense<0.000000e+00> : vector<100x8xf32>
    %197 = tpu.matmul %194, %196, %cst_150 {dimension_numbers = #tpu.dot_dimension_numbers<[1], [0], [0], [1], [0, 0, 1, 1], [], []>} : vector<100x8xbf16>, vector<8x8xbf16>, vector<100x8xf32> -> vector<100x8xf32>
    %198 = arith.addf %192, %197 : vector<100x8xf32>
    %c15_151 = arith.constant 15 : index
    %c0_152 = arith.constant 0 : index
    %199 = vector.load %arg13[%c15_151, %c0_152] : memref<132x8xf32, #tpu.memory_space<vmem>>, vector<100x8xf32>
    %200 = arith.truncf %199 : vector<100x8xf32> to vector<100x8xbf16>
    %c21 = arith.constant 21 : index
    %c0_153 = arith.constant 0 : index
    %c0_154 = arith.constant 0 : index
    %201 = vector.load %arg8[%c21, %c0_153, %c0_154] : memref<36x8x8xbf16, #tpu.memory_space<vmem>>, vector<1x8x8xbf16>
    %202 = vector.shape_cast %201 : vector<1x8x8xbf16> to vector<8x8xbf16>
    %cst_155 = arith.constant dense<0.000000e+00> : vector<100x8xf32>
    %203 = tpu.matmul %200, %202, %cst_155 {dimension_numbers = #tpu.dot_dimension_numbers<[1], [0], [0], [1], [0, 0, 1, 1], [], []>} : vector<100x8xbf16>, vector<8x8xbf16>, vector<100x8xf32> -> vector<100x8xf32>
    %204 = arith.addf %198, %203 : vector<100x8xf32>
    %c16_156 = arith.constant 16 : index
    %c0_157 = arith.constant 0 : index
    %205 = vector.load %arg13[%c16_156, %c0_157] : memref<132x8xf32, #tpu.memory_space<vmem>>, vector<100x8xf32>
    %206 = arith.truncf %205 : vector<100x8xf32> to vector<100x8xbf16>
    %c22 = arith.constant 22 : index
    %c0_158 = arith.constant 0 : index
    %c0_159 = arith.constant 0 : index
    %207 = vector.load %arg8[%c22, %c0_158, %c0_159] : memref<36x8x8xbf16, #tpu.memory_space<vmem>>, vector<1x8x8xbf16>
    %208 = vector.shape_cast %207 : vector<1x8x8xbf16> to vector<8x8xbf16>
    %cst_160 = arith.constant dense<0.000000e+00> : vector<100x8xf32>
    %209 = tpu.matmul %206, %208, %cst_160 {dimension_numbers = #tpu.dot_dimension_numbers<[1], [0], [0], [1], [0, 0, 1, 1], [], []>} : vector<100x8xbf16>, vector<8x8xbf16>, vector<100x8xf32> -> vector<100x8xf32>
    %210 = arith.addf %204, %209 : vector<100x8xf32>
    %c17_161 = arith.constant 17 : index
    %c0_162 = arith.constant 0 : index
    %211 = vector.load %arg13[%c17_161, %c0_162] : memref<132x8xf32, #tpu.memory_space<vmem>>, vector<100x8xf32>
    %212 = arith.truncf %211 : vector<100x8xf32> to vector<100x8xbf16>
    %c23 = arith.constant 23 : index
    %c0_163 = arith.constant 0 : index
    %c0_164 = arith.constant 0 : index
    %213 = vector.load %arg8[%c23, %c0_163, %c0_164] : memref<36x8x8xbf16, #tpu.memory_space<vmem>>, vector<1x8x8xbf16>
    %214 = vector.shape_cast %213 : vector<1x8x8xbf16> to vector<8x8xbf16>
    %cst_165 = arith.constant dense<0.000000e+00> : vector<100x8xf32>
    %215 = tpu.matmul %212, %214, %cst_165 {dimension_numbers = #tpu.dot_dimension_numbers<[1], [0], [0], [1], [0, 0, 1, 1], [], []>} : vector<100x8xbf16>, vector<8x8xbf16>, vector<100x8xf32> -> vector<100x8xf32>
    %216 = arith.addf %210, %215 : vector<100x8xf32>
    %c25_166 = arith.constant 25 : index
    %c0_167 = arith.constant 0 : index
    %217 = vector.load %arg13[%c25_166, %c0_167] : memref<132x8xf32, #tpu.memory_space<vmem>>, vector<100x8xf32>
    %218 = arith.truncf %217 : vector<100x8xf32> to vector<100x8xbf16>
    %c24 = arith.constant 24 : index
    %c0_168 = arith.constant 0 : index
    %c0_169 = arith.constant 0 : index
    %219 = vector.load %arg8[%c24, %c0_168, %c0_169] : memref<36x8x8xbf16, #tpu.memory_space<vmem>>, vector<1x8x8xbf16>
    %220 = vector.shape_cast %219 : vector<1x8x8xbf16> to vector<8x8xbf16>
    %cst_170 = arith.constant dense<0.000000e+00> : vector<100x8xf32>
    %221 = tpu.matmul %218, %220, %cst_170 {dimension_numbers = #tpu.dot_dimension_numbers<[1], [0], [0], [1], [0, 0, 1, 1], [], []>} : vector<100x8xbf16>, vector<8x8xbf16>, vector<100x8xf32> -> vector<100x8xf32>
    %222 = arith.addf %216, %221 : vector<100x8xf32>
    %c26_171 = arith.constant 26 : index
    %c0_172 = arith.constant 0 : index
    %223 = vector.load %arg13[%c26_171, %c0_172] : memref<132x8xf32, #tpu.memory_space<vmem>>, vector<100x8xf32>
    %224 = arith.truncf %223 : vector<100x8xf32> to vector<100x8xbf16>
    %c25_173 = arith.constant 25 : index
    %c0_174 = arith.constant 0 : index
    %c0_175 = arith.constant 0 : index
    %225 = vector.load %arg8[%c25_173, %c0_174, %c0_175] : memref<36x8x8xbf16, #tpu.memory_space<vmem>>, vector<1x8x8xbf16>
    %226 = vector.shape_cast %225 : vector<1x8x8xbf16> to vector<8x8xbf16>
    %cst_176 = arith.constant dense<0.000000e+00> : vector<100x8xf32>
    %227 = tpu.matmul %224, %226, %cst_176 {dimension_numbers = #tpu.dot_dimension_numbers<[1], [0], [0], [1], [0, 0, 1, 1], [], []>} : vector<100x8xbf16>, vector<8x8xbf16>, vector<100x8xf32> -> vector<100x8xf32>
    %228 = arith.addf %222, %227 : vector<100x8xf32>
    %c27_177 = arith.constant 27 : index
    %c0_178 = arith.constant 0 : index
    %229 = vector.load %arg13[%c27_177, %c0_178] : memref<132x8xf32, #tpu.memory_space<vmem>>, vector<100x8xf32>
    %230 = arith.truncf %229 : vector<100x8xf32> to vector<100x8xbf16>
    %c26_179 = arith.constant 26 : index
    %c0_180 = arith.constant 0 : index
    %c0_181 = arith.constant 0 : index
    %231 = vector.load %arg8[%c26_179, %c0_180, %c0_181] : memref<36x8x8xbf16, #tpu.memory_space<vmem>>, vector<1x8x8xbf16>
    %232 = vector.shape_cast %231 : vector<1x8x8xbf16> to vector<8x8xbf16>
    %cst_182 = arith.constant dense<0.000000e+00> : vector<100x8xf32>
    %233 = tpu.matmul %230, %232, %cst_182 {dimension_numbers = #tpu.dot_dimension_numbers<[1], [0], [0], [1], [0, 0, 1, 1], [], []>} : vector<100x8xbf16>, vector<8x8xbf16>, vector<100x8xf32> -> vector<100x8xf32>
    %234 = arith.addf %228, %233 : vector<100x8xf32>
    %c3_183 = arith.constant 3 : index
    %c0_184 = arith.constant 0 : index
    %c0_185 = arith.constant 0 : index
    %235 = vector.load %arg6[%c3_183, %c0_184, %c0_185] : memref<4x1x8xf32, #tpu.memory_space<vmem>>, vector<1x1x8xf32>
    %236 = vector.shape_cast %235 : vector<1x1x8xf32> to vector<1x8xf32>
    %c3_186 = arith.constant 3 : index
    %c0_187 = arith.constant 0 : index
    %c0_188 = arith.constant 0 : index
    %237 = vector.load %arg7[%c3_186, %c0_187, %c0_188] : memref<4x1x8xf32, #tpu.memory_space<vmem>>, vector<1x1x8xf32>
    %238 = vector.shape_cast %237 : vector<1x1x8xf32> to vector<1x8xf32>
    %239 = vector.broadcast %236 : vector<1x8xf32> to vector<100x8xf32>
    %240 = arith.mulf %234, %239 : vector<100x8xf32>
    %241 = vector.broadcast %238 : vector<1x8xf32> to vector<100x8xf32>
    %242 = arith.addf %240, %241 : vector<100x8xf32>
    %cst_189 = arith.constant 0.000000e+00 : f32
    %243 = vector.broadcast %cst_189 : f32 to vector<100x8xf32>
    %244 = arith.cmpf ogt, %242, %243 : vector<100x8xf32>
    %cst_190 = arith.constant 0.00999999977 : f32
    %245 = vector.broadcast %cst_190 : f32 to vector<100x8xf32>
    %246 = arith.mulf %245, %242 : vector<100x8xf32>
    %247 = arith.select %244, %242, %246 : vector<100x8xi1>, vector<100x8xf32>
    %248 = vector.broadcast %2 : vector<100x1xf32> to vector<100x8xf32>
    %249 = arith.mulf %247, %248 : vector<100x8xf32>
    %c16_191 = arith.constant 16 : index
    %c0_192 = arith.constant 0 : index
    %250 = vector.load %arg13[%c16_191, %c0_192] : memref<132x8xf32, #tpu.memory_space<vmem>>, vector<100x8xf32>
    tpu.vector_store %arg13[%c16_191, %c0_192], %249 {strides = array<i32>} : memref<132x8xf32, #tpu.memory_space<vmem>>, vector<100x8xf32>,
    %cst_193 = arith.constant 0.000000e+00 : f32
    %251 = vector.broadcast %cst_193 : f32 to vector<100x8xf32>
    %c5_194 = arith.constant 5 : index
    %c0_195 = arith.constant 0 : index
    %252 = vector.load %arg13[%c5_194, %c0_195] : memref<132x8xf32, #tpu.memory_space<vmem>>, vector<100x8xf32>
    %253 = arith.truncf %252 : vector<100x8xf32> to vector<100x8xbf16>
    %c27_196 = arith.constant 27 : index
    %c0_197 = arith.constant 0 : index
    %c0_198 = arith.constant 0 : index
    %254 = vector.load %arg8[%c27_196, %c0_197, %c0_198] : memref<36x8x8xbf16, #tpu.memory_space<vmem>>, vector<1x8x8xbf16>
    %255 = vector.shape_cast %254 : vector<1x8x8xbf16> to vector<8x8xbf16>
    %cst_199 = arith.constant dense<0.000000e+00> : vector<100x8xf32>
    %256 = tpu.matmul %253, %255, %cst_199 {dimension_numbers = #tpu.dot_dimension_numbers<[1], [0], [0], [1], [0, 0, 1, 1], [], []>} : vector<100x8xbf16>, vector<8x8xbf16>, vector<100x8xf32> -> vector<100x8xf32>
    %257 = arith.addf %251, %256 : vector<100x8xf32>
    %c6_200 = arith.constant 6 : index
    %c0_201 = arith.constant 0 : index
    %258 = vector.load %arg13[%c6_200, %c0_201] : memref<132x8xf32, #tpu.memory_space<vmem>>, vector<100x8xf32>
    %259 = arith.truncf %258 : vector<100x8xf32> to vector<100x8xbf16>
    %c28 = arith.constant 28 : index
    %c0_202 = arith.constant 0 : index
    %c0_203 = arith.constant 0 : index
    %260 = vector.load %arg8[%c28, %c0_202, %c0_203] : memref<36x8x8xbf16, #tpu.memory_space<vmem>>, vector<1x8x8xbf16>
    %261 = vector.shape_cast %260 : vector<1x8x8xbf16> to vector<8x8xbf16>
    %cst_204 = arith.constant dense<0.000000e+00> : vector<100x8xf32>
    %262 = tpu.matmul %259, %261, %cst_204 {dimension_numbers = #tpu.dot_dimension_numbers<[1], [0], [0], [1], [0, 0, 1, 1], [], []>} : vector<100x8xbf16>, vector<8x8xbf16>, vector<100x8xf32> -> vector<100x8xf32>
    %263 = arith.addf %257, %262 : vector<100x8xf32>
    %c7_205 = arith.constant 7 : index
    %c0_206 = arith.constant 0 : index
    %264 = vector.load %arg13[%c7_205, %c0_206] : memref<132x8xf32, #tpu.memory_space<vmem>>, vector<100x8xf32>
    %265 = arith.truncf %264 : vector<100x8xf32> to vector<100x8xbf16>
    %c29 = arith.constant 29 : index
    %c0_207 = arith.constant 0 : index
    %c0_208 = arith.constant 0 : index
    %266 = vector.load %arg8[%c29, %c0_207, %c0_208] : memref<36x8x8xbf16, #tpu.memory_space<vmem>>, vector<1x8x8xbf16>
    %267 = vector.shape_cast %266 : vector<1x8x8xbf16> to vector<8x8xbf16>
    %cst_209 = arith.constant dense<0.000000e+00> : vector<100x8xf32>
    %268 = tpu.matmul %265, %267, %cst_209 {dimension_numbers = #tpu.dot_dimension_numbers<[1], [0], [0], [1], [0, 0, 1, 1], [], []>} : vector<100x8xbf16>, vector<8x8xbf16>, vector<100x8xf32> -> vector<100x8xf32>
    %269 = arith.addf %263, %268 : vector<100x8xf32>
    %c15_210 = arith.constant 15 : index
    %c0_211 = arith.constant 0 : index
    %270 = vector.load %arg13[%c15_210, %c0_211] : memref<132x8xf32, #tpu.memory_space<vmem>>, vector<100x8xf32>
    %271 = arith.truncf %270 : vector<100x8xf32> to vector<100x8xbf16>
    %c30 = arith.constant 30 : index
    %c0_212 = arith.constant 0 : index
    %c0_213 = arith.constant 0 : index
    %272 = vector.load %arg8[%c30, %c0_212, %c0_213] : memref<36x8x8xbf16, #tpu.memory_space<vmem>>, vector<1x8x8xbf16>
    %273 = vector.shape_cast %272 : vector<1x8x8xbf16> to vector<8x8xbf16>
    %cst_214 = arith.constant dense<0.000000e+00> : vector<100x8xf32>
    %274 = tpu.matmul %271, %273, %cst_214 {dimension_numbers = #tpu.dot_dimension_numbers<[1], [0], [0], [1], [0, 0, 1, 1], [], []>} : vector<100x8xbf16>, vector<8x8xbf16>, vector<100x8xf32> -> vector<100x8xf32>
    %275 = arith.addf %269, %274 : vector<100x8xf32>
    %c16_215 = arith.constant 16 : index
    %c0_216 = arith.constant 0 : index
    %276 = vector.load %arg13[%c16_215, %c0_216] : memref<132x8xf32, #tpu.memory_space<vmem>>, vector<100x8xf32>
    %277 = arith.truncf %276 : vector<100x8xf32> to vector<100x8xbf16>
    %c31 = arith.constant 31 : index
    %c0_217 = arith.constant 0 : index
    %c0_218 = arith.constant 0 : index
    %278 = vector.load %arg8[%c31, %c0_217, %c0_218] : memref<36x8x8xbf16, #tpu.memory_space<vmem>>, vector<1x8x8xbf16>
    %279 = vector.shape_cast %278 : vector<1x8x8xbf16> to vector<8x8xbf16>
    %cst_219 = arith.constant dense<0.000000e+00> : vector<100x8xf32>
    %280 = tpu.matmul %277, %279, %cst_219 {dimension_numbers = #tpu.dot_dimension_numbers<[1], [0], [0], [1], [0, 0, 1, 1], [], []>} : vector<100x8xbf16>, vector<8x8xbf16>, vector<100x8xf32> -> vector<100x8xf32>
    %281 = arith.addf %275, %280 : vector<100x8xf32>
    %c17_220 = arith.constant 17 : index
    %c0_221 = arith.constant 0 : index
    %282 = vector.load %arg13[%c17_220, %c0_221] : memref<132x8xf32, #tpu.memory_space<vmem>>, vector<100x8xf32>
    %283 = arith.truncf %282 : vector<100x8xf32> to vector<100x8xbf16>
    %c32 = arith.constant 32 : index
    %c0_222 = arith.constant 0 : index
    %c0_223 = arith.constant 0 : index
    %284 = vector.load %arg8[%c32, %c0_222, %c0_223] : memref<36x8x8xbf16, #tpu.memory_space<vmem>>, vector<1x8x8xbf16>
    %285 = vector.shape_cast %284 : vector<1x8x8xbf16> to vector<8x8xbf16>
    %cst_224 = arith.constant dense<0.000000e+00> : vector<100x8xf32>
    %286 = tpu.matmul %283, %285, %cst_224 {dimension_numbers = #tpu.dot_dimension_numbers<[1], [0], [0], [1], [0, 0, 1, 1], [], []>} : vector<100x8xbf16>, vector<8x8xbf16>, vector<100x8xf32> -> vector<100x8xf32>
    %287 = arith.addf %281, %286 : vector<100x8xf32>
    %c25_225 = arith.constant 25 : index
    %c0_226 = arith.constant 0 : index
    %288 = vector.load %arg13[%c25_225, %c0_226] : memref<132x8xf32, #tpu.memory_space<vmem>>, vector<100x8xf32>
    %289 = arith.truncf %288 : vector<100x8xf32> to vector<100x8xbf16>
    %c33 = arith.constant 33 : index
    %c0_227 = arith.constant 0 : index
    %c0_228 = arith.constant 0 : index
    %290 = vector.load %arg8[%c33, %c0_227, %c0_228] : memref<36x8x8xbf16, #tpu.memory_space<vmem>>, vector<1x8x8xbf16>
    %291 = vector.shape_cast %290 : vector<1x8x8xbf16> to vector<8x8xbf16>
    %cst_229 = arith.constant dense<0.000000e+00> : vector<100x8xf32>
    %292 = tpu.matmul %289, %291, %cst_229 {dimension_numbers = #tpu.dot_dimension_numbers<[1], [0], [0], [1], [0, 0, 1, 1], [], []>} : vector<100x8xbf16>, vector<8x8xbf16>, vector<100x8xf32> -> vector<100x8xf32>
    %293 = arith.addf %287, %292 : vector<100x8xf32>
    %c26_230 = arith.constant 26 : index
    %c0_231 = arith.constant 0 : index
    %294 = vector.load %arg13[%c26_230, %c0_231] : memref<132x8xf32, #tpu.memory_space<vmem>>, vector<100x8xf32>
    %295 = arith.truncf %294 : vector<100x8xf32> to vector<100x8xbf16>
    %c34 = arith.constant 34 : index
    %c0_232 = arith.constant 0 : index
    %c0_233 = arith.constant 0 : index
    %296 = vector.load %arg8[%c34, %c0_232, %c0_233] : memref<36x8x8xbf16, #tpu.memory_space<vmem>>, vector<1x8x8xbf16>
    %297 = vector.shape_cast %296 : vector<1x8x8xbf16> to vector<8x8xbf16>
    %cst_234 = arith.constant dense<0.000000e+00> : vector<100x8xf32>
    %298 = tpu.matmul %295, %297, %cst_234 {dimension_numbers = #tpu.dot_dimension_numbers<[1], [0], [0], [1], [0, 0, 1, 1], [], []>} : vector<100x8xbf16>, vector<8x8xbf16>, vector<100x8xf32> -> vector<100x8xf32>
    %299 = arith.addf %293, %298 : vector<100x8xf32>
    %c27_235 = arith.constant 27 : index
    %c0_236 = arith.constant 0 : index
    %300 = vector.load %arg13[%c27_235, %c0_236] : memref<132x8xf32, #tpu.memory_space<vmem>>, vector<100x8xf32>
    %301 = arith.truncf %300 : vector<100x8xf32> to vector<100x8xbf16>
    %c35 = arith.constant 35 : index
    %c0_237 = arith.constant 0 : index
    %c0_238 = arith.constant 0 : index
    %302 = vector.load %arg8[%c35, %c0_237, %c0_238] : memref<36x8x8xbf16, #tpu.memory_space<vmem>>, vector<1x8x8xbf16>
    %303 = vector.shape_cast %302 : vector<1x8x8xbf16> to vector<8x8xbf16>
    %cst_239 = arith.constant dense<0.000000e+00> : vector<100x8xf32>
    %304 = tpu.matmul %301, %303, %cst_239 {dimension_numbers = #tpu.dot_dimension_numbers<[1], [0], [0], [1], [0, 0, 1, 1], [], []>} : vector<100x8xbf16>, vector<8x8xbf16>, vector<100x8xf32> -> vector<100x8xf32>
    %305 = arith.addf %299, %304 : vector<100x8xf32>
    %306 = arith.addf %163, %305 : vector<100x8xf32>
    %c0_240 = arith.constant 0 : index
    %c0_241 = arith.constant 0 : index
    %307 = vector.load %arg9[%c0_240, %c0_241] : memref<1x8xf32, #tpu.memory_space<vmem>>, vector<1x8xf32>
    %c0_242 = arith.constant 0 : index
    %c0_243 = arith.constant 0 : index
    %308 = vector.load %arg10[%c0_242, %c0_243] : memref<1x8xf32, #tpu.memory_space<vmem>>, vector<1x8xf32>
    %309 = vector.broadcast %307 : vector<1x8xf32> to vector<100x8xf32>
    %310 = arith.mulf %306, %309 : vector<100x8xf32>
    %311 = vector.broadcast %308 : vector<1x8xf32> to vector<100x8xf32>
    %312 = arith.addf %310, %311 : vector<100x8xf32>
    %cst_244 = arith.constant 0.000000e+00 : f32
    %313 = vector.broadcast %cst_244 : f32 to vector<100x8xf32>
    %314 = arith.cmpf ogt, %312, %313 : vector<100x8xf32>
    %cst_245 = arith.constant 0.00999999977 : f32
    %315 = vector.broadcast %cst_245 : f32 to vector<100x8xf32>
    %316 = arith.mulf %315, %312 : vector<100x8xf32>
    %317 = arith.select %314, %312, %316 : vector<100x8xi1>, vector<100x8xf32>
    %318 = vector.broadcast %2 : vector<100x1xf32> to vector<100x8xf32>
    %319 = arith.mulf %317, %318 : vector<100x8xf32>
    %c0_246 = arith.constant 0 : index
    %c0_247 = arith.constant 0 : index
    %320 = vector.load %arg11[%c0_246, %c0_247] : memref<8x16xbf16, #tpu.memory_space<vmem>>, vector<8x16xbf16>
    %321 = arith.truncf %319 : vector<100x8xf32> to vector<100x8xbf16>
    %cst_248 = arith.constant dense<0.000000e+00> : vector<100x16xf32>
    %322 = tpu.matmul %321, %320, %cst_248 {dimension_numbers = #tpu.dot_dimension_numbers<[1], [0], [0], [1], [0, 0, 1, 1], [], []>} : vector<100x8xbf16>, vector<8x16xbf16>, vector<100x16xf32> -> vector<100x16xf32>
    %323 = arith.addf %1, %322 : vector<100x16xf32>
    %c0_249 = arith.constant 0 : index
    %c0_250 = arith.constant 0 : index
    %c0_251 = arith.constant 0 : index
    %324 = vector.load %arg12[%c0_249, %c0_250, %c0_251] : memref<1x100x16xf32, #tpu.memory_space<vmem>>, vector<1x100x16xf32>
    %325 = vector.shape_cast %324 : vector<1x100x16xf32> to vector<100x16xf32>
    %326 = vector.shape_cast %323 : vector<100x16xf32> to vector<1x100x16xf32>
    tpu.vector_store %arg12[%c0_249, %c0_250, %c0_251], %326 {strides = array<i32>} : memref<1x100x16xf32, #tpu.memory_space<vmem>>, vector<1x100x16xf32>,
    return
  }
  func.func @transform_0(%arg0: i32) -> (i32, i32, i32) {
    %c0_i32 = arith.constant 0 : i32
    %c0_i32_0 = arith.constant 0 : i32
    %c0_i32_1 = arith.constant 0 : i32
    return %arg0, %c0_i32, %c0_i32_0 : i32, i32, i32
  }
  func.func @transform_1(%arg0: i32) -> (i32, i32) {
    %c0_i32 = arith.constant 0 : i32
    %c0_i32_0 = arith.constant 0 : i32
    %c0_i32_1 = arith.constant 0 : i32
    return %c0_i32, %c0_i32_0 : i32, i32
  }
  func.func @transform_2(%arg0: i32) -> (i32, i32) {
    %c0_i32 = arith.constant 0 : i32
    %c0_i32_0 = arith.constant 0 : i32
    %c0_i32_1 = arith.constant 0 : i32
    return %c0_i32, %c0_i32_0 : i32, i32
  }
  func.func @transform_3(%arg0: i32) -> (i32, i32) {
    %c0_i32 = arith.constant 0 : i32
    %c0_i32_0 = arith.constant 0 : i32
    %c0_i32_1 = arith.constant 0 : i32
    return %c0_i32, %c0_i32_0 : i32, i32
  }
  func.func @transform_4(%arg0: i32) -> (i32, i32) {
    %c0_i32 = arith.constant 0 : i32
    %c0_i32_0 = arith.constant 0 : i32
    %c0_i32_1 = arith.constant 0 : i32
    return %c0_i32, %c0_i32_0 : i32, i32
  }
  func.func @transform_5(%arg0: i32) -> (i32, i32, i32) {
    %c0_i32 = arith.constant 0 : i32
    %c0_i32_0 = arith.constant 0 : i32
    %c0_i32_1 = arith.constant 0 : i32
    %c0_i32_2 = arith.constant 0 : i32
    return %c0_i32, %c0_i32_0, %c0_i32_1 : i32, i32, i32
  }
  func.func @transform_6(%arg0: i32) -> (i32, i32, i32) {
    %c0_i32 = arith.constant 0 : i32
    %c0_i32_0 = arith.constant 0 : i32
    %c0_i32_1 = arith.constant 0 : i32
    %c0_i32_2 = arith.constant 0 : i32
    return %c0_i32, %c0_i32_0, %c0_i32_1 : i32, i32, i32
  }
  func.func @transform_7(%arg0: i32) -> (i32, i32, i32) {
    %c0_i32 = arith.constant 0 : i32
    %c0_i32_0 = arith.constant 0 : i32
    %c0_i32_1 = arith.constant 0 : i32
    %c0_i32_2 = arith.constant 0 : i32
    return %c0_i32, %c0_i32_0, %c0_i32_1 : i32, i32, i32
  }
  func.func @transform_8(%arg0: i32) -> (i32, i32) {
    %c0_i32 = arith.constant 0 : i32
    %c0_i32_0 = arith.constant 0 : i32
    %c0_i32_1 = arith.constant 0 : i32
    return %c0_i32, %c0_i32_0 : i32, i32
  }
  func.func @transform_9(%arg0: i32) -> (i32, i32) {
    %c0_i32 = arith.constant 0 : i32
    %c0_i32_0 = arith.constant 0 : i32
    %c0_i32_1 = arith.constant 0 : i32
    return %c0_i32, %c0_i32_0 : i32, i32
  }
  func.func @transform_10(%arg0: i32) -> (i32, i32) {
    %c0_i32 = arith.constant 0 : i32
    %c0_i32_0 = arith.constant 0 : i32
    %c0_i32_1 = arith.constant 0 : i32
    return %c0_i32, %c0_i32_0 : i32, i32
  }
  func.func @transform_11(%arg0: i32) -> (i32, i32, i32) {
    %c0_i32 = arith.constant 0 : i32
    %c0_i32_0 = arith.constant 0 : i32
    %c0_i32_1 = arith.constant 0 : i32
    return %arg0, %c0_i32, %c0_i32_0 : i32, i32, i32
  }
}

module attributes {stable_mosaic.version = 11 : i64} {
  func.func @kernel(%arg0: memref<2x100x16xf32, #tpu.memory_space<vmem>>, %arg1: memref<1x100x1xf32, #tpu.memory_space<vmem>>, %arg2: memref<1x1x16xf32, #tpu.memory_space<vmem>>, %arg3: memref<1x1x16xf32, #tpu.memory_space<vmem>>, %arg4: memref<32x144xf32, #tpu.memory_space<vmem>>, %arg5: memref<32x144xf32, #tpu.memory_space<vmem>>, %arg6: memref<1x144xf32, #tpu.memory_space<vmem>>, %arg7: memref<1x144xf32, #tpu.memory_space<vmem>>, %arg8: memref<144x16xbf16, #tpu.memory_space<vmem>>, %arg9: memref<1x16xf32, #tpu.memory_space<vmem>>, %arg10: memref<1x16xf32, #tpu.memory_space<vmem>>, %arg11: memref<16x8xbf16, #tpu.memory_space<vmem>>, %arg12: memref<1x8xf32, #tpu.memory_space<vmem>>, %arg13: memref<1x8xf32, #tpu.memory_space<vmem>>, %arg14: memref<8x1xbf16, #tpu.memory_space<vmem>>, %arg15: memref<1x1xf32, #tpu.memory_space<vmem>>, %arg16: memref<1x1xf32, #tpu.memory_space<vmem>>, %arg17: memref<16x32xbf16, #tpu.memory_space<vmem>>, %arg18: memref<32x32xf32, #tpu.memory_space<vmem>>, %arg19: memref<2x32xf32, #tpu.memory_space<vmem>>, %arg20: memref<1x32xf32, #tpu.memory_space<vmem>>, %arg21: memref<32x1xbf16, #tpu.memory_space<vmem>>, %arg22: memref<1x1xf32, #tpu.memory_space<vmem>>, %arg23: memref<2x1xf32, #tpu.memory_space<vmem>>) attributes {dimension_semantics = [], scalar_prefetch = 0 : i64, scratch_operands = 0 : i64, tpu.core_type = #tpu.core_type<tc>} {
    %c0 = arith.constant 0 : index
    %c0_0 = arith.constant 0 : index
    %c0_1 = arith.constant 0 : index
    %0 = vector.load %arg0[%c0, %c0_0, %c0_1] : memref<2x100x16xf32, #tpu.memory_space<vmem>>, vector<2x100x16xf32>
    %c0_2 = arith.constant 0 : index
    %c0_3 = arith.constant 0 : index
    %c0_4 = arith.constant 0 : index
    %1 = vector.load %arg2[%c0_2, %c0_3, %c0_4] : memref<1x1x16xf32, #tpu.memory_space<vmem>>, vector<1x1x16xf32>
    %2 = vector.broadcast %1 : vector<1x1x16xf32> to vector<2x100x16xf32>
    %3 = arith.mulf %0, %2 : vector<2x100x16xf32>
    %c0_5 = arith.constant 0 : index
    %c0_6 = arith.constant 0 : index
    %c0_7 = arith.constant 0 : index
    %4 = vector.load %arg3[%c0_5, %c0_6, %c0_7] : memref<1x1x16xf32, #tpu.memory_space<vmem>>, vector<1x1x16xf32>
    %5 = vector.broadcast %4 : vector<1x1x16xf32> to vector<2x100x16xf32>
    %6 = arith.addf %3, %5 : vector<2x100x16xf32>
    %cst = arith.constant 0.000000e+00 : f32
    %7 = vector.broadcast %cst : f32 to vector<2x100x16xf32>
    %8 = arith.cmpf ogt, %6, %7 : vector<2x100x16xf32>
    %cst_8 = arith.constant 0.00999999977 : f32
    %9 = vector.broadcast %cst_8 : f32 to vector<2x100x16xf32>
    %10 = arith.mulf %9, %6 : vector<2x100x16xf32>
    %11 = arith.select %8, %6, %10 : vector<2x100x16xi1>, vector<2x100x16xf32>
    %c0_9 = arith.constant 0 : index
    %c0_10 = arith.constant 0 : index
    %c0_11 = arith.constant 0 : index
    %12 = vector.load %arg1[%c0_9, %c0_10, %c0_11] : memref<1x100x1xf32, #tpu.memory_space<vmem>>, vector<1x100x1xf32>
    %13 = vector.broadcast %12 : vector<1x100x1xf32> to vector<2x100x16xf32>
    %14 = arith.mulf %11, %13 : vector<2x100x16xf32>
    %cst_12 = arith.constant dense<0.000000e+00> : vector<2x16xf32>
    %15 = vector.multi_reduction <add>, %14, %cst_12 [1] : vector<2x100x16xf32> to vector<2x16xf32>
    %cst_13 = arith.constant 1.562500e-02 : f32
    %16 = vector.broadcast %cst_13 : f32 to vector<2x16xf32>
    %17 = arith.mulf %15, %16 : vector<2x16xf32>
    %c0_14 = arith.constant 0 : index
    %c0_15 = arith.constant 0 : index
    %18 = vector.load %arg4[%c0_14, %c0_15] : memref<32x144xf32, #tpu.memory_space<vmem>>, vector<32x144xf32>
    %c0_16 = arith.constant 0 : index
    %c0_17 = arith.constant 0 : index
    %19 = vector.load %arg6[%c0_16, %c0_17] : memref<1x144xf32, #tpu.memory_space<vmem>>, vector<1x144xf32>
    %20 = vector.broadcast %19 : vector<1x144xf32> to vector<32x144xf32>
    %21 = arith.mulf %18, %20 : vector<32x144xf32>
    %c0_18 = arith.constant 0 : index
    %c0_19 = arith.constant 0 : index
    %22 = vector.load %arg7[%c0_18, %c0_19] : memref<1x144xf32, #tpu.memory_space<vmem>>, vector<1x144xf32>
    %23 = vector.broadcast %22 : vector<1x144xf32> to vector<32x144xf32>
    %24 = arith.addf %21, %23 : vector<32x144xf32>
    %cst_20 = arith.constant 0.000000e+00 : f32
    %25 = vector.broadcast %cst_20 : f32 to vector<32x144xf32>
    %26 = arith.cmpf ogt, %24, %25 : vector<32x144xf32>
    %cst_21 = arith.constant 0.00999999977 : f32
    %27 = vector.broadcast %cst_21 : f32 to vector<32x144xf32>
    %28 = arith.mulf %27, %24 : vector<32x144xf32>
    %29 = arith.select %26, %24, %28 : vector<32x144xi1>, vector<32x144xf32>
    %c0_22 = arith.constant 0 : index
    %c0_23 = arith.constant 0 : index
    %30 = vector.load %arg5[%c0_22, %c0_23] : memref<32x144xf32, #tpu.memory_space<vmem>>, vector<32x144xf32>
    %31 = arith.mulf %29, %30 : vector<32x144xf32>
    %32 = arith.truncf %31 : vector<32x144xf32> to vector<32x144xbf16>
    %c0_24 = arith.constant 0 : index
    %c0_25 = arith.constant 0 : index
    %33 = vector.load %arg8[%c0_24, %c0_25] : memref<144x16xbf16, #tpu.memory_space<vmem>>, vector<144x16xbf16>
    %cst_26 = arith.constant dense<0.000000e+00> : vector<32x16xf32>
    %34 = tpu.matmul %32, %33, %cst_26 {dimension_numbers = #tpu.dot_dimension_numbers<[1], [0], [0], [1], [0, 0, 1, 1], [], []>} : vector<32x144xbf16>, vector<144x16xbf16>, vector<32x16xf32> -> vector<32x16xf32>
    %c0_27 = arith.constant 0 : index
    %c0_28 = arith.constant 0 : index
    %35 = vector.load %arg9[%c0_27, %c0_28] : memref<1x16xf32, #tpu.memory_space<vmem>>, vector<1x16xf32>
    %36 = vector.broadcast %35 : vector<1x16xf32> to vector<32x16xf32>
    %37 = arith.mulf %34, %36 : vector<32x16xf32>
    %c0_29 = arith.constant 0 : index
    %c0_30 = arith.constant 0 : index
    %38 = vector.load %arg10[%c0_29, %c0_30] : memref<1x16xf32, #tpu.memory_space<vmem>>, vector<1x16xf32>
    %39 = vector.broadcast %38 : vector<1x16xf32> to vector<32x16xf32>
    %40 = arith.addf %37, %39 : vector<32x16xf32>
    %cst_31 = arith.constant 0.000000e+00 : f32
    %41 = vector.broadcast %cst_31 : f32 to vector<32x16xf32>
    %42 = arith.cmpf ogt, %40, %41 : vector<32x16xf32>
    %cst_32 = arith.constant 0.00999999977 : f32
    %43 = vector.broadcast %cst_32 : f32 to vector<32x16xf32>
    %44 = arith.mulf %43, %40 : vector<32x16xf32>
    %45 = arith.select %42, %40, %44 : vector<32x16xi1>, vector<32x16xf32>
    %46 = arith.truncf %45 : vector<32x16xf32> to vector<32x16xbf16>
    %c0_33 = arith.constant 0 : index
    %c0_34 = arith.constant 0 : index
    %47 = vector.load %arg11[%c0_33, %c0_34] : memref<16x8xbf16, #tpu.memory_space<vmem>>, vector<16x8xbf16>
    %cst_35 = arith.constant dense<0.000000e+00> : vector<32x8xf32>
    %48 = tpu.matmul %46, %47, %cst_35 {dimension_numbers = #tpu.dot_dimension_numbers<[1], [0], [0], [1], [0, 0, 1, 1], [], []>} : vector<32x16xbf16>, vector<16x8xbf16>, vector<32x8xf32> -> vector<32x8xf32>
    %c0_36 = arith.constant 0 : index
    %c0_37 = arith.constant 0 : index
    %49 = vector.load %arg12[%c0_36, %c0_37] : memref<1x8xf32, #tpu.memory_space<vmem>>, vector<1x8xf32>
    %50 = vector.broadcast %49 : vector<1x8xf32> to vector<32x8xf32>
    %51 = arith.mulf %48, %50 : vector<32x8xf32>
    %c0_38 = arith.constant 0 : index
    %c0_39 = arith.constant 0 : index
    %52 = vector.load %arg13[%c0_38, %c0_39] : memref<1x8xf32, #tpu.memory_space<vmem>>, vector<1x8xf32>
    %53 = vector.broadcast %52 : vector<1x8xf32> to vector<32x8xf32>
    %54 = arith.addf %51, %53 : vector<32x8xf32>
    %cst_40 = arith.constant 0.000000e+00 : f32
    %55 = vector.broadcast %cst_40 : f32 to vector<32x8xf32>
    %56 = arith.cmpf ogt, %54, %55 : vector<32x8xf32>
    %cst_41 = arith.constant 0.00999999977 : f32
    %57 = vector.broadcast %cst_41 : f32 to vector<32x8xf32>
    %58 = arith.mulf %57, %54 : vector<32x8xf32>
    %59 = arith.select %56, %54, %58 : vector<32x8xi1>, vector<32x8xf32>
    %60 = arith.truncf %59 : vector<32x8xf32> to vector<32x8xbf16>
    %c0_42 = arith.constant 0 : index
    %c0_43 = arith.constant 0 : index
    %61 = vector.load %arg14[%c0_42, %c0_43] : memref<8x1xbf16, #tpu.memory_space<vmem>>, vector<8x1xbf16>
    %cst_44 = arith.constant dense<0.000000e+00> : vector<32x1xf32>
    %62 = tpu.matmul %60, %61, %cst_44 {dimension_numbers = #tpu.dot_dimension_numbers<[1], [0], [0], [1], [0, 0, 1, 1], [], []>} : vector<32x8xbf16>, vector<8x1xbf16>, vector<32x1xf32> -> vector<32x1xf32>
    %c0_45 = arith.constant 0 : index
    %c0_46 = arith.constant 0 : index
    %63 = vector.load %arg15[%c0_45, %c0_46] : memref<1x1xf32, #tpu.memory_space<vmem>>, vector<1x1xf32>
    %64 = vector.broadcast %63 : vector<1x1xf32> to vector<32x1xf32>
    %65 = arith.mulf %62, %64 : vector<32x1xf32>
    %c0_47 = arith.constant 0 : index
    %c0_48 = arith.constant 0 : index
    %66 = vector.load %arg16[%c0_47, %c0_48] : memref<1x1xf32, #tpu.memory_space<vmem>>, vector<1x1xf32>
    %67 = vector.broadcast %66 : vector<1x1xf32> to vector<32x1xf32>
    %68 = arith.addf %65, %67 : vector<32x1xf32>
    %cst_49 = arith.constant 0.000000e+00 : f32
    %69 = vector.broadcast %cst_49 : f32 to vector<32x1xf32>
    %70 = arith.cmpf ogt, %68, %69 : vector<32x1xf32>
    %cst_50 = arith.constant 0.00999999977 : f32
    %71 = vector.broadcast %cst_50 : f32 to vector<32x1xf32>
    %72 = arith.mulf %71, %68 : vector<32x1xf32>
    %73 = arith.select %70, %68, %72 : vector<32x1xi1>, vector<32x1xf32>
    %c0_51 = arith.constant 0 : index
    %c0_52 = arith.constant 0 : index
    %74 = vector.load %arg19[%c0_51, %c0_52] : memref<2x32xf32, #tpu.memory_space<vmem>>, vector<2x32xf32>
    %c0_53 = arith.constant 0 : index
    %c0_54 = arith.constant 0 : index
    %75 = vector.load %arg18[%c0_53, %c0_54] : memref<32x32xf32, #tpu.memory_space<vmem>>, vector<32x32xf32>
    %76 = vector.broadcast %73 : vector<32x1xf32> to vector<32x32xf32>
    %77 = arith.mulf %76, %75 : vector<32x32xf32>
    %cst_55 = arith.constant dense<0.000000e+00> : vector<2x32xf32>
    %78 = tpu.matmul %74, %77, %cst_55 {dimension_numbers = #tpu.dot_dimension_numbers<[1], [0], [0], [1], [0, 0, 1, 1], [], []>} : vector<2x32xf32>, vector<32x32xf32>, vector<2x32xf32> -> vector<2x32xf32>
    %79 = arith.truncf %17 : vector<2x16xf32> to vector<2x16xbf16>
    %c0_56 = arith.constant 0 : index
    %c0_57 = arith.constant 0 : index
    %80 = vector.load %arg17[%c0_56, %c0_57] : memref<16x32xbf16, #tpu.memory_space<vmem>>, vector<16x32xbf16>
    %cst_58 = arith.constant dense<0.000000e+00> : vector<2x32xf32>
    %81 = tpu.matmul %79, %80, %cst_58 {dimension_numbers = #tpu.dot_dimension_numbers<[1], [0], [0], [1], [0, 0, 1, 1], [], []>} : vector<2x16xbf16>, vector<16x32xbf16>, vector<2x32xf32> -> vector<2x32xf32>
    %82 = arith.addf %81, %78 : vector<2x32xf32>
    %c0_59 = arith.constant 0 : index
    %c0_60 = arith.constant 0 : index
    %83 = vector.load %arg20[%c0_59, %c0_60] : memref<1x32xf32, #tpu.memory_space<vmem>>, vector<1x32xf32>
    %84 = vector.broadcast %83 : vector<1x32xf32> to vector<2x32xf32>
    %85 = arith.addf %82, %84 : vector<2x32xf32>
    %cst_61 = arith.constant 0.000000e+00 : f32
    %86 = vector.broadcast %cst_61 : f32 to vector<2x32xf32>
    %87 = arith.cmpf ogt, %85, %86 : vector<2x32xf32>
    %cst_62 = arith.constant 0.00999999977 : f32
    %88 = vector.broadcast %cst_62 : f32 to vector<2x32xf32>
    %89 = arith.mulf %88, %85 : vector<2x32xf32>
    %90 = arith.select %87, %85, %89 : vector<2x32xi1>, vector<2x32xf32>
    %91 = arith.truncf %90 : vector<2x32xf32> to vector<2x32xbf16>
    %c0_63 = arith.constant 0 : index
    %c0_64 = arith.constant 0 : index
    %92 = vector.load %arg21[%c0_63, %c0_64] : memref<32x1xbf16, #tpu.memory_space<vmem>>, vector<32x1xbf16>
    %cst_65 = arith.constant dense<0.000000e+00> : vector<2x1xf32>
    %93 = tpu.matmul %91, %92, %cst_65 {dimension_numbers = #tpu.dot_dimension_numbers<[1], [0], [0], [1], [0, 0, 1, 1], [], []>} : vector<2x32xbf16>, vector<32x1xbf16>, vector<2x1xf32> -> vector<2x1xf32>
    %c0_66 = arith.constant 0 : index
    %c0_67 = arith.constant 0 : index
    %94 = vector.load %arg22[%c0_66, %c0_67] : memref<1x1xf32, #tpu.memory_space<vmem>>, vector<1x1xf32>
    %95 = vector.broadcast %94 : vector<1x1xf32> to vector<2x1xf32>
    %96 = arith.addf %93, %95 : vector<2x1xf32>
    %c0_68 = arith.constant 0 : index
    %c0_69 = arith.constant 0 : index
    %97 = vector.load %arg23[%c0_68, %c0_69] : memref<2x1xf32, #tpu.memory_space<vmem>>, vector<2x1xf32>
    tpu.vector_store %arg23[%c0_68, %c0_69], %96 {strides = array<i32>} : memref<2x1xf32, #tpu.memory_space<vmem>>, vector<2x1xf32>,
    return
  }
}

</mosaic_0001>

<llo_original>
// kernel: _lambda_.5
$region0: #{_lambda_.5}
  #allocation0 [shape = 'u32[]', space=smem, size = 0x4, offset = 0x4, fixed_abs, tag = 'smem constant byte address 0x4 - core index']
  #allocation1 [shape = 'u32[144,128]{1,0:T(1,128)}', space=vmem, size = 0x12000, scoped, tag = 'internal scratch']
  %s0 = inlined_call_operand.vmem [shape: f32[2,100,16], index: 0, kind: input, shape index: {}]
  %s1 = inlined_call_operand.vmem [shape: f32[100,1], index: 1, kind: input, shape index: {}]
  %s2 = inlined_call_operand.vmem [shape: f32[1,16], index: 2, kind: input, shape index: {}]
  %s3 = inlined_call_operand.vmem [shape: f32[1,16], index: 3, kind: input, shape index: {}, may-alias: {3,6}]
  %s4 = inlined_call_operand.vmem [shape: bf16[16,16], index: 4, kind: input, shape index: {}]
  %s5 = inlined_call_operand.vmem [shape: bf16[16,16], index: 5, kind: input, shape index: {}]
  %s6 = inlined_call_operand.vmem [shape: f32[1,16], index: 6, kind: input, shape index: {}, may-alias: {3,6}]
  %s7 = inlined_call_operand.vmem [shape: f32[2,100,16], index: 7, kind: output, shape index: {}]
  %s8 = sld [smem:[#allocation0]]
  $region61: #{_lambda_.5} parent=0
    _
  %s10 = ssub.s32 1, %s8
  %s11 = scalar_select 0, %s10, %s8
  loop: start=0, step=1, limit=4
  $region2: #{_lambda_.5} parent=0 // loop_pre_header
    _
  $region3: #{_lambda_.5} parent=0 // loop_header
    %s13 = sphi 0, %s17
    %p14 = scmp.ge.s32.totalorder %s13, 4
    %s23 = sphi 0, %s25
    %s26 = sphi 0, %s23
    %s27 = sphi 0, %s26
    %s43 = sphi 0, %s27
    %s47 = sphi 0, %s47
    %s49 = sphi 0, %s47
    %s50 = sphi 0, %s49
    %s64 = sphi 0, %s50
    %s68 = sphi 0, %s68
    %s70 = sphi 0, %s68
    %s71 = sphi 0, %s70
    %s85 = sphi 0, %s71
    %s89 = sphi 0, %s89
    %s91 = sphi 0, %s89
    %s92 = sphi 0, %s91
    %s106 = sphi 0, %s92
    %s110 = sphi 0, %s110
    %s112 = sphi 0, %s110
    %s113 = sphi 0, %s112
    %s127 = sphi 0, %s113
    %s131 = sphi 0, %s131
    %s133 = sphi 0, %s131
    %s134 = sphi 0, %s133
    %s148 = sphi 0, %s134
    %s152 = sphi 0, %s152
    %s154 = sphi 0, %s152
    %s155 = sphi 0, %s154
    %s169 = sphi 0, %s155
    %s175 = sphi 0, %s177
    %s178 = sphi 0, %s175
    %s179 = sphi 0, %s178
    %s195 = sphi 0, %s179
  $region4: #{_lambda_.5} parent=0 // loop_header_branch
    %16 = sbr.rel (%p14) target = $region8
  $region5: #{_lambda_.5} parent=0 // loop_body
    %s18 = ssub.s32 %s13, 1
    %s19 = ssub.s32 %s13, 2
    %s20 = sadd.s32 %s13, 1
    %s21 = ssub.s32 %s13, %s20
    %p22 = scmp.eq.s32.totalorder %s21, 0
    %s24 = sadd.s32 %s23, 1
    %s25 = scalar_select %p22, %s23, %s24
    %p28 = pneg %p22
    %p29 = scmp.eq.s32.totalorder %s13, 1
    %p30 = por %p28, %p29
    %p31 = scmp.ne.s32.totalorder %s23, %s26
    %p32 = scmp.eq.s32.totalorder %s13, 0
    %p33 = por %p31, %p32
    %p34 = scmp.ne.s32.totalorder %s23, %s26
    %p35 = scmp.eq.s32.totalorder %s18, 1
    %p36 = por %p34, %p35
    %p37 = scmp.ne.s32.totalorder %s26, %s27
    %p38 = scmp.eq.s32.totalorder %s18, 0
    %p39 = por %p37, %p38
    %p40 = scmp.ne.s32.totalorder %s26, %s27
    %p41 = scmp.eq.s32.totalorder %s19, 1
    %p42 = por %p40, %p41
    %p44 = scmp.ne.s32.totalorder %s27, %s43
    %p45 = scmp.eq.s32.totalorder %s19, 0
    %p46 = por %p44, %p45
    %s48 = sadd.s32 %s47, 1
    %p51 = scmp.eq.s32.totalorder %s13, 1
    %p52 = scmp.ne.s32.totalorder %s47, %s49
    %p53 = scmp.eq.s32.totalorder %s13, 0
    %p54 = por %p52, %p53
    %p55 = scmp.ne.s32.totalorder %s47, %s49
    %p56 = scmp.eq.s32.totalorder %s18, 1
    %p57 = por %p55, %p56
    %p58 = scmp.ne.s32.totalorder %s49, %s50
    %p59 = scmp.eq.s32.totalorder %s18, 0
    %p60 = por %p58, %p59
    %p61 = scmp.ne.s32.totalorder %s49, %s50
    %p62 = scmp.eq.s32.totalorder %s19, 1
    %p63 = por %p61, %p62
    %p65 = scmp.ne.s32.totalorder %s50, %s64
    %p66 = scmp.eq.s32.totalorder %s19, 0
    %p67 = por %p65, %p66
    %s69 = sadd.s32 %s68, 1
    %p72 = scmp.eq.s32.totalorder %s13, 1
    %p73 = scmp.ne.s32.totalorder %s68, %s70
    %p74 = scmp.eq.s32.totalorder %s13, 0
    %p75 = por %p73, %p74
    %p76 = scmp.ne.s32.totalorder %s68, %s70
    %p77 = scmp.eq.s32.totalorder %s18, 1
    %p78 = por %p76, %p77
    %p79 = scmp.ne.s32.totalorder %s70, %s71
    %p80 = scmp.eq.s32.totalorder %s18, 0
    %p81 = por %p79, %p80
    %p82 = scmp.ne.s32.totalorder %s70, %s71
    %p83 = scmp.eq.s32.totalorder %s19, 1
    %p84 = por %p82, %p83
    %p86 = scmp.ne.s32.totalorder %s71, %s85
    %p87 = scmp.eq.s32.totalorder %s19, 0
    %p88 = por %p86, %p87
    %s90 = sadd.s32 %s89, 1
    %p93 = scmp.eq.s32.totalorder %s13, 1
    %p94 = scmp.ne.s32.totalorder %s89, %s91
    %p95 = scmp.eq.s32.totalorder %s13, 0
    %p96 = por %p94, %p95
    %p97 = scmp.ne.s32.totalorder %s89, %s91
    %p98 = scmp.eq.s32.totalorder %s18, 1
    %p99 = por %p97, %p98
    %p100 = scmp.ne.s32.totalorder %s91, %s92
    %p101 = scmp.eq.s32.totalorder %s18, 0
    %p102 = por %p100, %p101
    %p103 = scmp.ne.s32.totalorder %s91, %s92
    %p104 = scmp.eq.s32.totalorder %s19, 1
    %p105 = por %p103, %p104
    %p107 = scmp.ne.s32.totalorder %s92, %s106
    %p108 = scmp.eq.s32.totalorder %s19, 0
    %p109 = por %p107, %p108
    %s111 = sadd.s32 %s110, 1
    %p114 = scmp.eq.s32.totalorder %s13, 1
    %p115 = scmp.ne.s32.totalorder %s110, %s112
    %p116 = scmp.eq.s32.totalorder %s13, 0
    %p117 = por %p115, %p116
    %p118 = scmp.ne.s32.totalorder %s110, %s112
    %p119 = scmp.eq.s32.totalorder %s18, 1
    %p120 = por %p118, %p119
    %p121 = scmp.ne.s32.totalorder %s112, %s113
    %p122 = scmp.eq.s32.totalorder %s18, 0
    %p123 = por %p121, %p122
    %p124 = scmp.ne.s32.totalorder %s112, %s113
    %p125 = scmp.eq.s32.totalorder %s19, 1
    %p126 = por %p124, %p125
    %p128 = scmp.ne.s32.totalorder %s113, %s127
    %p129 = scmp.eq.s32.totalorder %s19, 0
    %p130 = por %p128, %p129
    %s132 = sadd.s32 %s131, 1
    %p135 = scmp.eq.s32.totalorder %s13, 1
    %p136 = scmp.ne.s32.totalorder %s131, %s133
    %p137 = scmp.eq.s32.totalorder %s13, 0
    %p138 = por %p136, %p137
    %p139 = scmp.ne.s32.totalorder %s131, %s133
    %p140 = scmp.eq.s32.totalorder %s18, 1
    %p141 = por %p139, %p140
    %p142 = scmp.ne.s32.totalorder %s133, %s134
    %p143 = scmp.eq.s32.totalorder %s18, 0
    %p144 = por %p142, %p143
    %p145 = scmp.ne.s32.totalorder %s133, %s134
    %p146 = scmp.eq.s32.totalorder %s19, 1
    %p147 = por %p145, %p146
    %p149 = scmp.ne.s32.totalorder %s134, %s148
    %p150 = scmp.eq.s32.totalorder %s19, 0
    %p151 = por %p149, %p150
    %s153 = sadd.s32 %s152, 1
    %p156 = scmp.eq.s32.totalorder %s13, 1
    %p157 = scmp.ne.s32.totalorder %s152, %s154
    %p158 = scmp.eq.s32.totalorder %s13, 0
    %p159 = por %p157, %p158
    %p160 = scmp.ne.s32.totalorder %s152, %s154
    %p161 = scmp.eq.s32.totalorder %s18, 1
    %p162 = por %p160, %p161
    %p163 = scmp.ne.s32.totalorder %s154, %s155
    %p164 = scmp.eq.s32.totalorder %s18, 0
    %p165 = por %p163, %p164
    %p166 = scmp.ne.s32.totalorder %s154, %s155
    %p167 = scmp.eq.s32.totalorder %s19, 1
    %p168 = por %p166, %p167
    %p170 = scmp.ne.s32.totalorder %s155, %s169
    %p171 = scmp.eq.s32.totalorder %s19, 0
    %p172 = por %p170, %p171
    %s173 = ssub.s32 %s13, %s20
    %p174 = scmp.eq.s32.totalorder %s173, 0
    %s176 = sadd.s32 %s175, 1
    %s177 = scalar_select %p174, %s175, %s176
    %p180 = pneg %p174
    %p181 = scmp.eq.s32.totalorder %s13, 1
    %p182 = por %p180, %p181
    %p183 = scmp.ne.s32.totalorder %s175, %s178
    %p184 = scmp.eq.s32.totalorder %s13, 0
    %p185 = por %p183, %p184
    %p186 = scmp.ne.s32.totalorder %s175, %s178
    %p187 = scmp.eq.s32.totalorder %s18, 1
    %p188 = por %p186, %p187
    %p189 = scmp.ne.s32.totalorder %s178, %s179
    %p190 = scmp.eq.s32.totalorder %s18, 0
    %p191 = por %p189, %p190
    %p192 = scmp.ne.s32.totalorder %s178, %s179
    %p193 = scmp.eq.s32.totalorder %s19, 1
    %p194 = por %p192, %p193
    %p196 = scmp.ne.s32.totalorder %s179, %s195
    %p197 = scmp.eq.s32.totalorder %s19, 0
    %p198 = por %p196, %p197
    %p199 = scmp.le.s32.totalorder 1, %s13
    %p200 = scmp.lt.s32.totalorder %s13, 3
    %p201 = pnand %p199, %p200
    %p202 = pneg %p201
    // Predicated region
    $region9: #{_lambda_.5} parent=5 // pred_check
      _
    $region10: #{_lambda_.5} parent=5 // pred_check_branch
      %204 = sbr.rel (%p201) target = $region12
    $region11: #{_lambda_.5} parent=5 // pred_region
      %s205 = ssub.s32 %s13, 1
      // Predicated region
      $region13: #{_lambda_.5} parent=11 // pred_check
        %p206 = pneg %p60
      $region14: #{_lambda_.5} parent=11 // pred_check_branch
        %208 = sbr.rel (%p206) target = $region16
      $region15: #{_lambda_.5} parent=11 // pred_region
        _
      $region16: #{_lambda_.5} parent=11 // pred_fallthru
        _
      // Predicated region
      $region17: #{_lambda_.5} parent=11 // pred_check
        %p209 = pneg %p81
      $region18: #{_lambda_.5} parent=11 // pred_check_branch
        %211 = sbr.rel (%p209) target = $region20
      $region19: #{_lambda_.5} parent=11 // pred_region
        _
      $region20: #{_lambda_.5} parent=11 // pred_fallthru
        _
      // Predicated region
      $region21: #{_lambda_.5} parent=11 // pred_check
        %p212 = pneg %p102
      $region22: #{_lambda_.5} parent=11 // pred_check_branch
        %214 = sbr.rel (%p212) target = $region24
      $region23: #{_lambda_.5} parent=11 // pred_region
        _
      $region24: #{_lambda_.5} parent=11 // pred_fallthru
        _
      // Predicated region
      $region25: #{_lambda_.5} parent=11 // pred_check
        %p215 = pneg %p123
      $region26: #{_lambda_.5} parent=11 // pred_check_branch
        %217 = sbr.rel (%p215) target = $region28
      $region27: #{_lambda_.5} parent=11 // pred_region
        _
      $region28: #{_lambda_.5} parent=11 // pred_fallthru
        _
      // Predicated region
      $region29: #{_lambda_.5} parent=11 // pred_check
        %p218 = pneg %p144
      $region30: #{_lambda_.5} parent=11 // pred_check_branch
        %220 = sbr.rel (%p218) target = $region32
      $region31: #{_lambda_.5} parent=11 // pred_region
        _
      $region32: #{_lambda_.5} parent=11 // pred_fallthru
        _
      // Predicated region
      $region33: #{_lambda_.5} parent=11 // pred_check
        %p221 = pneg %p165
      $region34: #{_lambda_.5} parent=11 // pred_check_branch
        %223 = sbr.rel (%p221) target = $region36
      $region35: #{_lambda_.5} parent=11 // pred_region
        _
      $region36: #{_lambda_.5} parent=11 // pred_fallthru
        _
    $region12: #{_lambda_.5} parent=5 // pred_fallthru
      _
    %p224 = scmp.lt.s32.totalorder %s13, 2
    // Predicated region
    $region37: #{_lambda_.5} parent=5 // pred_check
      %p225 = pneg %p224
    $region38: #{_lambda_.5} parent=5 // pred_check_branch
      %227 = sbr.rel (%p225) target = $region40
    $region39: #{_lambda_.5} parent=5 // pred_region
      // Predicated region
      $region41: #{_lambda_.5} parent=39 // pred_check
        %p228 = pneg %p33
      $region42: #{_lambda_.5} parent=39 // pred_check_branch
        %230 = sbr.rel (%p228) target = $region44
      $region43: #{_lambda_.5} parent=39 // pred_region
        %p231 = scmp.lt.s32.totalorder %s13, 1
        %s232 = scalar_select %p231, %s13, 1
        %s233 = smul.addr %s232, 13
        %s234 = smul.addr %s233, 8
        %s235 = scalar_lea.vmem %s0, %s234
      $region44: #{_lambda_.5} parent=39 // pred_fallthru
        _
    $region40: #{_lambda_.5} parent=5 // pred_fallthru
      _
    %p236 = scmp.le.s32.totalorder 1, %s13
    %p237 = scmp.lt.s32.totalorder %s13, 3
    %p238 = pnand %p236, %p237
    %p239 = pneg %p238
    // Predicated region
    $region45: #{_lambda_.5} parent=5 // pred_check
      _
    $region46: #{_lambda_.5} parent=5 // pred_check_branch
      %241 = sbr.rel (%p238) target = $region48
    $region47: #{_lambda_.5} parent=5 // pred_region
      %s242 = ssub.s32 %s13, 1
      %p243 = scmp.lt.s32.totalorder %s18, 1
      %s244 = scalar_select %p243, %s18, 1
      %s245 = smul.addr %s244, 13
      %s246 = smul.addr %s245, 8
      %s247 = scalar_lea.vmem %s0, %s246
      %p248 = pneg %p39
      %p249 = pneg %p36
      %p250 = pneg %p60
      %p251 = pneg %p57
      %p252 = pneg %p81
      %p253 = pneg %p78
      %p254 = pneg %p102
      %p255 = pneg %p99
      %p256 = pneg %p123
      %p257 = pneg %p120
      %p258 = pneg %p144
      %p259 = pneg %p141
      %p260 = pneg %p165
      %p261 = pneg %p162
      %p262 = pneg %p191
      %p263 = pneg %p188
      %p264 = scmp.lt.s32.totalorder %s18, 1
      %s265 = scalar_select %p264, %s18, 1
      %s266 = smul.addr %s265, 13
      %s267 = smul.addr %s266, 8
      %s268 = scalar_lea.vmem %s7, %s267
      %p269 = scmp.lt.s32.totalorder %s18, 1
      %s270 = scalar_select %p269, %s18, 1
      %s271 = smul.addr %s270, 13
      %s272 = smul.addr %s271, 8
      %s273 = scalar_lea.vmem %s0, %s272
      %p274 = scmp.lt.s32.totalorder %s18, 1
      %s275 = scalar_select %p274, %s18, 1
      %s276 = smul.addr %s275, 13
      %s277 = smul.addr %s276, 8
      %s278 = scalar_lea.vmem %s7, %s277
      %v280 = vld [vmem:[%s273] sm:$0xff]
      %v281 = vld [vmem:[%s273 + $0x8] sm:$0xff]
      %v282 = vld [vmem:[%s273 + $0x10] sm:$0xff]
      %v283 = vld [vmem:[%s273 + $0x18] sm:$0xff]
      %v284 = vld [vmem:[%s273 + $0x20] sm:$0xff]
      %v285 = vld [vmem:[%s273 + $0x28] sm:$0xff]
      %v286 = vld [vmem:[%s273 + $0x30] sm:$0xff]
      %v287 = vld [vmem:[%s273 + $0x38] sm:$0xff]
      %v288 = vld [vmem:[%s273 + $0x40] sm:$0xff]
      %v289 = vld [vmem:[%s273 + $0x48] sm:$0xff]
      %v290 = vld [vmem:[%s273 + $0x50] sm:$0xff]
      %v291 = vld [vmem:[%s273 + $0x58] sm:$0xff]
      %v292 = vld [vmem:[%s273 + $0x60] sm:$0xf]
      %v293 = vld [vmem:[%s1] sm:$0xff]
      %v294 = vld [vmem:[%s1 + $0x8] sm:$0xff]
      %v295 = vld [vmem:[%s1 + $0x10] sm:$0xff]
      %v296 = vld [vmem:[%s1 + $0x18] sm:$0xff]
      %v297 = vld [vmem:[%s1 + $0x20] sm:$0xff]
      %v298 = vld [vmem:[%s1 + $0x28] sm:$0xff]
      %v299 = vld [vmem:[%s1 + $0x30] sm:$0xff]
      %v300 = vld [vmem:[%s1 + $0x38] sm:$0xff]
      %v301 = vld [vmem:[%s1 + $0x40] sm:$0xff]
      %v302 = vld [vmem:[%s1 + $0x48] sm:$0xff]
      %v303 = vld [vmem:[%s1 + $0x50] sm:$0xff]
      %v304 = vld [vmem:[%s1 + $0x58] sm:$0xff]
      %v305 = vld [vmem:[%s1 + $0x60] sm:$0xf]
      %v306 = vld [vmem:[%s2] sm:$0x1]
      %v308 = vlaneseq
      %v309 = vshrl.u32 %v308, 7
      %v310 = vsub.s32 0, %v309
      %v311 = vrot.slane %v306, %v310
      %v313 = vmul.f32 %v280, %v311
      %v314 = vmul.f32 %v281, %v311
      %v315 = vmul.f32 %v282, %v311
      %v316 = vmul.f32 %v283, %v311
      %v317 = vmul.f32 %v284, %v311
      %v318 = vmul.f32 %v285, %v311
      %v319 = vmul.f32 %v286, %v311
      %v320 = vmul.f32 %v287, %v311
      %v321 = vmul.f32 %v288, %v311
      %v322 = vmul.f32 %v289, %v311
      %v323 = vmul.f32 %v290, %v311
      %v324 = vmul.f32 %v291, %v311
      %v325 = vmul.f32 %v292, %v311
      %v326 = vld [vmem:[%s3] sm:$0x1]
      %v328 = vlaneseq
      %v329 = vshrl.u32 %v328, 7
      %v330 = vsub.s32 0, %v329
      %v331 = vrot.slane %v326, %v330
      %v333 = vadd.f32 %v313, %v331
      %v334 = vadd.f32 %v314, %v331
      %v335 = vadd.f32 %v315, %v331
      %v336 = vadd.f32 %v316, %v331
      %v337 = vadd.f32 %v317, %v331
      %v338 = vadd.f32 %v318, %v331
      %v339 = vadd.f32 %v319, %v331
      %v340 = vadd.f32 %v320, %v331
      %v341 = vadd.f32 %v321, %v331
      %v342 = vadd.f32 %v322, %v331
      %v343 = vadd.f32 %v323, %v331
      %v344 = vadd.f32 %v324, %v331
      %v345 = vadd.f32 %v325, %v331
      %vm346 = vcmp.gt.f32.partialorder %v333, 0.0
      %vm347 = vcmp.gt.f32.partialorder %v334, 0.0
      %vm348 = vcmp.gt.f32.partialorder %v335, 0.0
      %vm349 = vcmp.gt.f32.partialorder %v336, 0.0
      %vm350 = vcmp.gt.f32.partialorder %v337, 0.0
      %vm351 = vcmp.gt.f32.partialorder %v338, 0.0
      %vm352 = vcmp.gt.f32.partialorder %v339, 0.0
      %vm353 = vcmp.gt.f32.partialorder %v340, 0.0
      %vm354 = vcmp.gt.f32.partialorder %v341, 0.0
      %vm355 = vcmp.gt.f32.partialorder %v342, 0.0
      %vm356 = vcmp.gt.f32.partialorder %v343, 0.0
      %vm357 = vcmp.gt.f32.partialorder %v344, 0.0
      %vm358 = vcmp.gt.f32.partialorder %v345, 0.0
      %v359 = vmul.f32 %v333, 0.01
      %v360 = vmul.f32 %v334, 0.01
      %v361 = vmul.f32 %v335, 0.01
      %v362 = vmul.f32 %v336, 0.01
      %v363 = vmul.f32 %v337, 0.01
      %v364 = vmul.f32 %v338, 0.01
      %v365 = vmul.f32 %v339, 0.01
      %v366 = vmul.f32 %v340, 0.01
      %v367 = vmul.f32 %v341, 0.01
      %v368 = vmul.f32 %v342, 0.01
      %v369 = vmul.f32 %v343, 0.01
      %v370 = vmul.f32 %v344, 0.01
      %v371 = vmul.f32 %v345, 0.01
      %v372 = vsel %vm346, %v333, %v359
      %v373 = vsel %vm347, %v334, %v360
      %v374 = vsel %vm348, %v335, %v361
      %v375 = vsel %vm349, %v336, %v362
      %v376 = vsel %vm350, %v337, %v363
      %v377 = vsel %vm351, %v338, %v364
      %v378 = vsel %vm352, %v339, %v365
      %v379 = vsel %vm353, %v340, %v366
      %v380 = vsel %vm354, %v341, %v367
      %v381 = vsel %vm355, %v342, %v368
      %v382 = vsel %vm356, %v343, %v369
      %v383 = vsel %vm357, %v344, %v370
      %v384 = vsel %vm358, %v345, %v371
      %386 = vset.pattern.permute.xlu0 0
      %387 = vperm.xlu0 %386, %v293
      %v388 = vpop.permute.xlu0 %387
      %391 = vset.pattern.permute.xlu0 0
      %392 = vperm.xlu0 %391, %v294
      %v393 = vpop.permute.xlu0 %392
      %396 = vset.pattern.permute.xlu0 0
      %397 = vperm.xlu0 %396, %v295
      %v398 = vpop.permute.xlu0 %397
      %401 = vset.pattern.permute.xlu0 0
      %402 = vperm.xlu0 %401, %v296
      %v403 = vpop.permute.xlu0 %402
      %406 = vset.pattern.permute.xlu0 0
      %407 = vperm.xlu0 %406, %v297
      %v408 = vpop.permute.xlu0 %407
      %411 = vset.pattern.permute.xlu0 0
      %412 = vperm.xlu0 %411, %v298
      %v413 = vpop.permute.xlu0 %412
      %416 = vset.pattern.permute.xlu0 0
      %417 = vperm.xlu0 %416, %v299
      %v418 = vpop.permute.xlu0 %417
      %421 = vset.pattern.permute.xlu0 0
      %422 = vperm.xlu0 %421, %v300
      %v423 = vpop.permute.xlu0 %422
      %426 = vset.pattern.permute.xlu0 0
      %427 = vperm.xlu0 %426, %v301
      %v428 = vpop.permute.xlu0 %427
      %431 = vset.pattern.permute.xlu0 0
      %432 = vperm.xlu0 %431, %v302
      %v433 = vpop.permute.xlu0 %432
      %436 = vset.pattern.permute.xlu0 0
      %437 = vperm.xlu0 %436, %v303
      %v438 = vpop.permute.xlu0 %437
      %441 = vset.pattern.permute.xlu0 0
      %442 = vperm.xlu0 %441, %v304
      %v443 = vpop.permute.xlu0 %442
      %446 = vset.pattern.permute.xlu0 0
      %447 = vperm.xlu0 %446, %v305
      %v448 = vpop.permute.xlu0 %447
      %v450 = vmul.f32 %v372, %v388
      %v451 = vmul.f32 %v373, %v393
      %v452 = vmul.f32 %v374, %v398
      %v453 = vmul.f32 %v375, %v403
      %v454 = vmul.f32 %v376, %v408
      %v455 = vmul.f32 %v377, %v413
      %v456 = vmul.f32 %v378, %v418
      %v457 = vmul.f32 %v379, %v423
      %v458 = vmul.f32 %v380, %v428
      %v459 = vmul.f32 %v381, %v433
      %v460 = vmul.f32 %v382, %v438
      %v461 = vmul.f32 %v383, %v443
      %v462 = vmul.f32 %v384, %v448
      %vm463 = vcmask 130048
      %v464 = vsel %vm463, %v450, 0.0
      %v465 = vsel %vm463, %v451, 0.0
      %v466 = vadd.f32 %v464, %v465
      %v467 = vsel %vm463, %v452, 0.0
      %v468 = vadd.f32 %v466, %v467
      %v469 = vsel %vm463, %v453, 0.0
      %v470 = vadd.f32 %v468, %v469
      %v471 = vsel %vm463, %v454, 0.0
      %v472 = vadd.f32 %v470, %v471
      %v473 = vsel %vm463, %v455, 0.0
      %v474 = vadd.f32 %v472, %v473
      %v475 = vsel %vm463, %v456, 0.0
      %v476 = vadd.f32 %v474, %v475
      %v477 = vsel %vm463, %v457, 0.0
      %v478 = vadd.f32 %v476, %v477
      %v479 = vsel %vm463, %v458, 0.0
      %v480 = vadd.f32 %v478, %v479
      %v481 = vsel %vm463, %v459, 0.0
      %v482 = vadd.f32 %v480, %v481
      %v483 = vsel %vm463, %v460, 0.0
      %v484 = vadd.f32 %v482, %v483
      %v485 = vsel %vm463, %v461, 0.0
      %v486 = vadd.f32 %v484, %v485
      %vm487 = vcmask 125952
      %v488 = vsel %vm487, %v462, 0.0
      %v489 = vadd.f32 %v486, %v488
      %v490 = vrot.slane %v489, 4
      %v491 = vadd.f32 %v489, %v490
      %v492 = vrot.slane %v491, 2
      %v493 = vadd.f32 %v491, %v492
      %v494 = vrot.slane %v493, 1
      %v495 = vadd.f32 %v493, %v494
      %v496 = vmul.f32 %v495, 0.015625
      %vm497 = vcmp.gt.f32.partialorder %v293, 0.0
      %vm498 = vcmp.gt.f32.partialorder %v294, 0.0
      %vm499 = vcmp.gt.f32.partialorder %v295, 0.0
      %vm500 = vcmp.gt.f32.partialorder %v296, 0.0
      %vm501 = vcmp.gt.f32.partialorder %v297, 0.0
      %vm502 = vcmp.gt.f32.partialorder %v298, 0.0
      %vm503 = vcmp.gt.f32.partialorder %v299, 0.0
      %vm504 = vcmp.gt.f32.partialorder %v300, 0.0
      %vm505 = vcmp.gt.f32.partialorder %v301, 0.0
      %vm506 = vcmp.gt.f32.partialorder %v302, 0.0
      %vm507 = vcmp.gt.f32.partialorder %v303, 0.0
      %vm508 = vcmp.gt.f32.partialorder %v304, 0.0
      %vm509 = vcmp.gt.f32.partialorder %v305, 0.0
      %v510 = vsel %vm497, 1, 0
      %v511 = vsel %vm498, 1, 0
      %v512 = vsel %vm499, 1, 0
      %v513 = vsel %vm500, 1, 0
      %v514 = vsel %vm501, 1, 0
      %v515 = vsel %vm502, 1, 0
      %v516 = vsel %vm503, 1, 0
      %v517 = vsel %vm504, 1, 0
      %v518 = vsel %vm505, 1, 0
      %v519 = vsel %vm506, 1, 0
      %v520 = vsel %vm507, 1, 0
      %v521 = vsel %vm508, 1, 0
      %v522 = vsel %vm509, 1, 0
      %523 = vset.pattern.permute.xlu0 0
      %524 = vperm.xlu0 %523, %v510
      %v525 = vpop.permute.xlu0 %524
      %526 = vset.pattern.permute.xlu0 0
      %527 = vperm.xlu0 %526, %v511
      %v528 = vpop.permute.xlu0 %527
      %529 = vset.pattern.permute.xlu0 0
      %530 = vperm.xlu0 %529, %v512
      %v531 = vpop.permute.xlu0 %530
      %532 = vset.pattern.permute.xlu0 0
      %533 = vperm.xlu0 %532, %v513
      %v534 = vpop.permute.xlu0 %533
      %535 = vset.pattern.permute.xlu0 0
      %536 = vperm.xlu0 %535, %v514
      %v537 = vpop.permute.xlu0 %536
      %538 = vset.pattern.permute.xlu0 0
      %539 = vperm.xlu0 %538, %v515
      %v540 = vpop.permute.xlu0 %539
      %541 = vset.pattern.permute.xlu0 0
      %542 = vperm.xlu0 %541, %v516
      %v543 = vpop.permute.xlu0 %542
      %544 = vset.pattern.permute.xlu0 0
      %545 = vperm.xlu0 %544, %v517
      %v546 = vpop.permute.xlu0 %545
      %547 = vset.pattern.permute.xlu0 0
      %548 = vperm.xlu0 %547, %v518
      %v549 = vpop.permute.xlu0 %548
      %550 = vset.pattern.permute.xlu0 0
      %551 = vperm.xlu0 %550, %v519
      %v552 = vpop.permute.xlu0 %551
      %553 = vset.pattern.permute.xlu0 0
      %554 = vperm.xlu0 %553, %v520
      %v555 = vpop.permute.xlu0 %554
      %556 = vset.pattern.permute.xlu0 0
      %557 = vperm.xlu0 %556, %v521
      %v558 = vpop.permute.xlu0 %557
      %559 = vset.pattern.permute.xlu0 0
      %560 = vperm.xlu0 %559, %v522
      %v561 = vpop.permute.xlu0 %560
      %vm562 = vcmp.eq.s32.totalorder %v525, 1
      %vm563 = vcmp.eq.s32.totalorder %v528, 1
      %vm564 = vcmp.eq.s32.totalorder %v531, 1
      %vm565 = vcmp.eq.s32.totalorder %v534, 1
      %vm566 = vcmp.eq.s32.totalorder %v537, 1
      %vm567 = vcmp.eq.s32.totalorder %v540, 1
      %vm568 = vcmp.eq.s32.totalorder %v543, 1
      %vm569 = vcmp.eq.s32.totalorder %v546, 1
      %vm570 = vcmp.eq.s32.totalorder %v549, 1
      %vm571 = vcmp.eq.s32.totalorder %v552, 1
      %vm572 = vcmp.eq.s32.totalorder %v555, 1
      %vm573 = vcmp.eq.s32.totalorder %v558, 1
      %vm574 = vcmp.eq.s32.totalorder %v561, 1
      %v575 = vsel %vm562, %v372, -3e+38
      %v576 = vsel %vm563, %v373, -3e+38
      %v577 = vsel %vm564, %v374, -3e+38
      %v578 = vsel %vm565, %v375, -3e+38
      %v579 = vsel %vm566, %v376, -3e+38
      %v580 = vsel %vm567, %v377, -3e+38
      %v581 = vsel %vm568, %v378, -3e+38
      %v582 = vsel %vm569, %v379, -3e+38
      %v583 = vsel %vm570, %v380, -3e+38
      %v584 = vsel %vm571, %v381, -3e+38
      %v585 = vsel %vm572, %v382, -3e+38
      %v586 = vsel %vm573, %v383, -3e+38
      %v587 = vsel %vm574, %v384, -3e+38
      %v588 = vsel %vm463, %v575, -inf
      %v589 = vsel %vm463, %v576, -inf
      %v590 = vsel %vm463, %v577, -inf
      %v591 = vsel %vm463, %v578, -inf
      %v592 = vsel %vm463, %v579, -inf
      %v593 = vmax.f32 %v588, %v592
      %v594 = vsel %vm463, %v580, -inf
      %v595 = vmax.f32 %v589, %v594
      %v596 = vsel %vm463, %v581, -inf
      %v597 = vmax.f32 %v590, %v596
      %v598 = vsel %vm463, %v582, -inf
      %v599 = vmax.f32 %v591, %v598
      %v600 = vsel %vm463, %v583, -inf
      %v601 = vmax.f32 %v593, %v600
      %v602 = vsel %vm463, %v584, -inf
      %v603 = vmax.f32 %v595, %v602
      %v604 = vsel %vm463, %v585, -inf
      %v605 = vmax.f32 %v597, %v604
      %v606 = vsel %vm463, %v586, -inf
      %v607 = vmax.f32 %v599, %v606
      %v608 = vsel %vm487, %v587, -inf
      %v609 = vmax.f32 %v601, %v608
      %v610 = vmax.f32 %v609, %v603
      %v611 = vmax.f32 %v605, %v607
      %v612 = vmax.f32 %v610, %v611
      %v613 = vrot.slane %v612, 4
      %v614 = vmax.f32 %v612, %v613
      %v615 = vrot.slane %v614, 2
      %v616 = vmax.f32 %v614, %v615
      %v617 = vrot.slane %v616, 1
      %v618 = vmax.f32 %v616, %v617
      %v619 = vpack.c.bf16 %v496, %v496
      %v620 = vld [vmem:[%s4] sm:$0xf]
      %v621 = vld [vmem:[%s4 + $0x4] sm:$0xf]
      %v622 = vpack.c.bf16 %v618, %v618
      %v623 = vld [vmem:[%s5] sm:$0xf]
      %v624 = vld [vmem:[%s5 + $0x4] sm:$0xf]
      %v627 = vunpack.c.l.b16 %v623
      %v628 = vunpack.c.l.b16 %v624
      %v629 = vpack.c.b16 %v628, %v627
      %v632 = vsel %vm463, %v622, 0
      %634 = vmatprep.subr.bf16.mxu0 0
      %635 = vmatpush1.bf16.msra.mxu0 %v629
      %636 = vmatprep.subr.bf16.mxu0 0
      %637 = vmatpush1.bf16.msra.mxu0 0
      %638 = vmatprep.subr.bf16.mxu0 0
      %639 = vmatpush1.bf16.msra.mxu0 0
      %640 = vmatprep.subr.bf16.mxu0 0
      %641 = vmatpush1.bf16.msra.mxu0 0
      %642 = vmatprep.subr.bf16.mxu0 0
      %643 = vmatpush1.bf16.msra.mxu0 0
      %644 = vmatprep.subr.bf16.mxu0 0
      %645 = vmatpush1.bf16.msra.mxu0 0
      %646 = vmatprep.subr.bf16.mxu0 0
      %647 = vmatpush1.bf16.msra.mxu0 0
      %648 = vmatprep.subr.bf16.mxu0 0
      %649 = vmatpush1.bf16.msra.mxu0 0
      %650 = vmatprep.subr.bf16.mxu0 0
      %651 = vmatpush1.bf16.msra.mxu0 0
      %652 = vmatprep.subr.bf16.mxu0 0
      %653 = vmatpush1.bf16.msra.mxu0 0
      %654 = vmatprep.subr.bf16.mxu0 0
      %655 = vmatpush1.bf16.msra.mxu0 0
      %656 = vmatprep.subr.bf16.mxu0 0
      %657 = vmatpush1.bf16.msra.mxu0 0
      %658 = vmatprep.subr.bf16.mxu0 0
      %659 = vmatpush1.bf16.msra.mxu0 0
      %660 = vmatprep.subr.bf16.mxu0 0
      %661 = vmatpush1.bf16.msra.mxu0 0
      %662 = vmatprep.subr.bf16.mxu0 0
      %663 = vmatpush1.bf16.msra.mxu0 0
      %664 = vmatprep.subr.bf16.mxu0 0
      %665 = vmatpush1.bf16.msra.mxu0 0
      %666 = vmatprep.mubr.bf16.mxu0 0
      %667 = vmatmul.mubr.bf16.gmra.mrb[0].mxu0 %v632
      %v668 = vpop.f32.mrb[0].mxu0
      %v669 = vadd.f32 0.0, %v668
      %v670 = vpop.f32.mrb[0].mxu0
      %v671 = vpop.f32.mrb[0].mxu0
      %v672 = vpop.f32.mrb[0].mxu0
      %673 = vdwg.mxu0
      %v676 = vunpack.c.l.b16 %v620
      %v677 = vunpack.c.l.b16 %v621
      %v678 = vpack.c.b16 %v677, %v676
      %v681 = vsel %vm463, %v619, 0
      %683 = vmatprep.subr.bf16.mxu0 0
      %684 = vmatpush1.bf16.msra.mxu0 %v678
      %685 = vmatprep.subr.bf16.mxu0 0
      %686 = vmatpush1.bf16.msra.mxu0 0
      %687 = vmatprep.subr.bf16.mxu0 0
      %688 = vmatpush1.bf16.msra.mxu0 0
      %689 = vmatprep.subr.bf16.mxu0 0
      %690 = vmatpush1.bf16.msra.mxu0 0
      %691 = vmatprep.subr.bf16.mxu0 0
      %692 = vmatpush1.bf16.msra.mxu0 0
      %693 = vmatprep.subr.bf16.mxu0 0
      %694 = vmatpush1.bf16.msra.mxu0 0
      %695 = vmatprep.subr.bf16.mxu0 0
      %696 = vmatpush1.bf16.msra.mxu0 0
      %697 = vmatprep.subr.bf16.mxu0 0
      %698 = vmatpush1.bf16.msra.mxu0 0
      %699 = vmatprep.subr.bf16.mxu0 0
      %700 = vmatpush1.bf16.msra.mxu0 0
      %701 = vmatprep.subr.bf16.mxu0 0
      %702 = vmatpush1.bf16.msra.mxu0 0
      %703 = vmatprep.subr.bf16.mxu0 0
      %704 = vmatpush1.bf16.msra.mxu0 0
      %705 = vmatprep.subr.bf16.mxu0 0
      %706 = vmatpush1.bf16.msra.mxu0 0
      %707 = vmatprep.subr.bf16.mxu0 0
      %708 = vmatpush1.bf16.msra.mxu0 0
      %709 = vmatprep.subr.bf16.mxu0 0
      %710 = vmatpush1.bf16.msra.mxu0 0
      %711 = vmatprep.subr.bf16.mxu0 0
      %712 = vmatpush1.bf16.msra.mxu0 0
      %713 = vmatprep.subr.bf16.mxu0 0
      %714 = vmatpush1.bf16.msra.mxu0 0
      %715 = vmatprep.mubr.bf16.mxu0 0
      %716 = vmatmul.mubr.bf16.gmra.mrb[0].mxu0 %v681
      %v717 = vpop.f32.mrb[0].mxu0
      %v718 = vadd.f32 %v669, %v717
      %v719 = vpop.f32.mrb[0].mxu0
      %v720 = vpop.f32.mrb[0].mxu0
      %v721 = vpop.f32.mrb[0].mxu0
      %722 = vdwg.mxu0
      %v723 = vld [vmem:[%s6] sm:$0x1]
      %v724 = vadd.f32 %v718, %v723
      %v725 = vlaneseq
      %v726 = vshrl.u32 %v725, 7
      %v727 = vsub.s32 0, %v726
      %v728 = vrot.slane %v724, %v727
      %v729 = vadd.f32 %v280, %v728
      %v730 = vadd.f32 %v281, %v728
      %v731 = vadd.f32 %v282, %v728
      %v732 = vadd.f32 %v283, %v728
      %v733 = vadd.f32 %v284, %v728
      %v734 = vadd.f32 %v285, %v728
      %v735 = vadd.f32 %v286, %v728
      %v736 = vadd.f32 %v287, %v728
      %v737 = vadd.f32 %v288, %v728
      %v738 = vadd.f32 %v289, %v728
      %v739 = vadd.f32 %v290, %v728
      %v740 = vadd.f32 %v291, %v728
      %v741 = vadd.f32 %v292, %v728
      %742 = vst.msk [vmem:[%s278] sm:$0xff] %vm463, %v729
      %743 = vst.msk [vmem:[%s278 + $0x8] sm:$0xff] %vm463, %v730
      %744 = vst.msk [vmem:[%s278 + $0x10] sm:$0xff] %vm463, %v731
      %745 = vst.msk [vmem:[%s278 + $0x18] sm:$0xff] %vm463, %v732
      %746 = vst.msk [vmem:[%s278 + $0x20] sm:$0xff] %vm463, %v733
      %747 = vst.msk [vmem:[%s278 + $0x28] sm:$0xff] %vm463, %v734
      %748 = vst.msk [vmem:[%s278 + $0x30] sm:$0xff] %vm463, %v735
      %749 = vst.msk [vmem:[%s278 + $0x38] sm:$0xff] %vm463, %v736
      %750 = vst.msk [vmem:[%s278 + $0x40] sm:$0xff] %vm463, %v737
      %751 = vst.msk [vmem:[%s278 + $0x48] sm:$0xff] %vm463, %v738
      %752 = vst.msk [vmem:[%s278 + $0x50] sm:$0xff] %vm463, %v739
      %753 = vst.msk [vmem:[%s278 + $0x58] sm:$0xff] %vm463, %v740
      %754 = vst.msk [vmem:[%s278 + $0x60] sm:$0xf] %vm487, %v741
      %p755 = scmp.lt.s32.totalorder %s18, 1
      %s756 = scalar_select %p755, %s18, 1
      %s757 = smul.addr %s756, 13
      %s758 = smul.addr %s757, 8
      %s759 = scalar_lea.vmem %s7, %s758
      // Predicated region
      $region49: #{_lambda_.5} parent=47 // pred_check
        %p760 = pneg %p188
      $region50: #{_lambda_.5} parent=47 // pred_check_branch
        %762 = sbr.rel (%p760) target = $region52
      $region51: #{_lambda_.5} parent=47 // pred_region
        _
      $region52: #{_lambda_.5} parent=47 // pred_fallthru
        _
    $region48: #{_lambda_.5} parent=5 // pred_fallthru
      _
    %p763 = scmp.le.s32.totalorder 2, %s13
    // Predicated region
    $region53: #{_lambda_.5} parent=5 // pred_check
      %p764 = pneg %p763
    $region54: #{_lambda_.5} parent=5 // pred_check_branch
      %766 = sbr.rel (%p764) target = $region56
    $region55: #{_lambda_.5} parent=5 // pred_region
      %s767 = ssub.s32 %s13, 2
      // Predicated region
      $region57: #{_lambda_.5} parent=55 // pred_check
        %p768 = pneg %p194
      $region58: #{_lambda_.5} parent=55 // pred_check_branch
        %770 = sbr.rel (%p768) target = $region60
      $region59: #{_lambda_.5} parent=55 // pred_region
        %p771 = scmp.lt.s32.totalorder %s19, 1
        %s772 = scalar_select %p771, %s19, 1
        %s773 = smul.addr %s772, 13
        %s774 = smul.addr %s773, 8
        %s775 = scalar_lea.vmem %s7, %s774
      $region60: #{_lambda_.5} parent=55 // pred_fallthru
        _
    $region56: #{_lambda_.5} parent=5 // pred_fallthru
      _
  $region6: #{_lambda_.5} parent=0 // loop_footer
    %s17 = sadd.s32 1, %s13
  $region7: #{_lambda_.5} parent=0 // loop_footer_branch
    %12 = sbr.rel target = $region3
  $region8: #{_lambda_.5} parent=0 // loop_exit
    _

// kernel: tile.10
$region0: #{tile.10}
  #allocation0 [shape = 's32[1]{0}', space=sflag, size = 0x4, scoped, tag = 'scoped memory for tile.10']
  %s0 = inlined_call_operand.<no memory space> [shape: f32[], index: 0, kind: input, shape index: {}]
  %s1 = inlined_call_operand.vmem [shape: f32[1,144], index: 1, kind: output, shape index: {}]
  %v2 = vstv %s0
  %3 = vst [vmem:[%s1] sm:$0x1] %v2
  %s4 = scalar_lea.vmem %s1, 1
  %5 = vst [vmem:[%s4] sm:$0x1] %v2

// kernel: _lambda_.7
$region0: #{_lambda_.7}
  #allocation0 [shape = 'u32[]', space=smem, size = 0x4, offset = 0x4, fixed_abs, tag = 'smem constant byte address 0x4 - core index']
  #allocation1 [shape = 'u32[144,128]{1,0:T(1,128)}', space=vmem, size = 0x12000, scoped, tag = 'internal scratch']
  #allocation2 [shape = 'f32[1,1]{1,0:T(1,128)S(1)}', space=vmem, size = 0x200, scoped, tag = 'scoped memory for _lambda_.7']
  #allocation3 [shape = 'f32[1,1]{1,0:T(1,128)S(1)}', space=vmem, size = 0x200, scoped, tag = 'scoped memory for _lambda_.7']
  #allocation4 [shape = 'f32[1,1]{1,0:T(1,128)S(1)}', space=vmem, size = 0x200, scoped, tag = 'scoped memory for _lambda_.7']
  %s0 = inlined_call_operand.vmem [shape: f32[2,100,16], index: 0, kind: input, shape index: {}]
  %s1 = inlined_call_operand.vmem [shape: f32[1,100,1], index: 1, kind: input, shape index: {}]
  %s2 = inlined_call_operand.vmem [shape: f32[1,1,16], index: 2, kind: input, shape index: {}]
  %s3 = inlined_call_operand.vmem [shape: f32[1,1,16], index: 3, kind: input, shape index: {}]
  %s4 = inlined_call_operand.vmem [shape: f32[32,144], index: 4, kind: input, shape index: {}]
  %s5 = inlined_call_operand.vmem [shape: f32[32,144], index: 5, kind: input, shape index: {}]
  %s6 = inlined_call_operand.vmem [shape: f32[1,144], index: 6, kind: input, shape index: {}]
  %s7 = inlined_call_operand.vmem [shape: f32[1,144], index: 7, kind: input, shape index: {}]
  %s8 = inlined_call_operand.vmem [shape: bf16[144,16], index: 8, kind: input, shape index: {}]
  %s9 = inlined_call_operand.vmem [shape: f32[1,16], index: 9, kind: input, shape index: {}]
  %s10 = inlined_call_operand.vmem [shape: f32[1,16], index: 10, kind: input, shape index: {}]
  %s11 = inlined_call_operand.vmem [shape: bf16[16,8], index: 11, kind: input, shape index: {}]
  %s12 = inlined_call_operand.vmem [shape: f32[1,8], index: 12, kind: input, shape index: {}]
  %s13 = inlined_call_operand.vmem [shape: f32[1,8], index: 13, kind: input, shape index: {}]
  %s14 = inlined_call_operand.vmem [shape: bf16[8,1], index: 14, kind: input, shape index: {}]
  %s15 = inlined_call_operand.<no memory space> [shape: f32[1,1], index: 15, kind: input, shape index: {}]
  %s16 = inlined_call_operand.<no memory space> [shape: f32[1,1], index: 16, kind: input, shape index: {}, may-alias: {16,22}]
  %s17 = inlined_call_operand.vmem [shape: bf16[16,32], index: 17, kind: input, shape index: {}]
  %s18 = inlined_call_operand.vmem [shape: f32[32,32], index: 18, kind: input, shape index: {}]
  %s19 = inlined_call_operand.vmem [shape: f32[2,32], index: 19, kind: input, shape index: {}]
  %s20 = inlined_call_operand.vmem [shape: f32[1,32], index: 20, kind: input, shape index: {}]
  %s21 = inlined_call_operand.vmem [shape: bf16[32,1], index: 21, kind: input, shape index: {}]
  %s22 = inlined_call_operand.<no memory space> [shape: f32[1,1], index: 22, kind: input, shape index: {}, may-alias: {16,22}]
  %s23 = inlined_call_operand.vmem [shape: f32[2,1], index: 23, kind: output, shape index: {}]
  %s24 = sld [smem:[#allocation0]]
  $region102: #{_lambda_.7} parent=0
    _
  %s26 = ssub.s32 1, %s24
  %s27 = scalar_select 0, %s26, %s24
  %v28 = vstv %s15
  %29 = vst [vmem:[#allocation2] sm:$0x1] %v28
  %v30 = vstv %s16
  %31 = vst [vmem:[#allocation3] sm:$0x1] %v30
  %v32 = vstv %s22
  %33 = vst [vmem:[#allocation4] sm:$0x1] %v32
  // Predicated region
  $region2: #{_lambda_.7} parent=0 // pred_check
    _
  $region3: #{_lambda_.7} parent=0 // pred_check_branch
    %35 = sbr.rel (0) target = $region5
  $region4: #{_lambda_.7} parent=0 // pred_region
    _
  $region5: #{_lambda_.7} parent=0 // pred_fallthru
    _
  // Predicated region
  $region6: #{_lambda_.7} parent=0 // pred_check
    _
  $region7: #{_lambda_.7} parent=0 // pred_check_branch
    %37 = sbr.rel (0) target = $region9
  $region8: #{_lambda_.7} parent=0 // pred_region
    _
  $region9: #{_lambda_.7} parent=0 // pred_fallthru
    _
  // Predicated region
  $region10: #{_lambda_.7} parent=0 // pred_check
    _
  $region11: #{_lambda_.7} parent=0 // pred_check_branch
    %39 = sbr.rel (0) target = $region13
  $region12: #{_lambda_.7} parent=0 // pred_region
    _
  $region13: #{_lambda_.7} parent=0 // pred_fallthru
    _
  // Predicated region
  $region14: #{_lambda_.7} parent=0 // pred_check
    _
  $region15: #{_lambda_.7} parent=0 // pred_check_branch
    %41 = sbr.rel (0) target = $region17
  $region16: #{_lambda_.7} parent=0 // pred_region
    _
  $region17: #{_lambda_.7} parent=0 // pred_fallthru
    _
  // Predicated region
  $region18: #{_lambda_.7} parent=0 // pred_check
    _
  $region19: #{_lambda_.7} parent=0 // pred_check_branch
    %43 = sbr.rel (0) target = $region21
  $region20: #{_lambda_.7} parent=0 // pred_region
    _
  $region21: #{_lambda_.7} parent=0 // pred_fallthru
    _
  // Predicated region
  $region22: #{_lambda_.7} parent=0 // pred_check
    _
  $region23: #{_lambda_.7} parent=0 // pred_check_branch
    %45 = sbr.rel (0) target = $region25
  $region24: #{_lambda_.7} parent=0 // pred_region
    _
  $region25: #{_lambda_.7} parent=0 // pred_fallthru
    _
  // Predicated region
  $region26: #{_lambda_.7} parent=0 // pred_check
    _
  $region27: #{_lambda_.7} parent=0 // pred_check_branch
    %47 = sbr.rel (0) target = $region29
  $region28: #{_lambda_.7} parent=0 // pred_region
    _
  $region29: #{_lambda_.7} parent=0 // pred_fallthru
    _
  // Predicated region
  $region30: #{_lambda_.7} parent=0 // pred_check
    _
  $region31: #{_lambda_.7} parent=0 // pred_check_branch
    %49 = sbr.rel (0) target = $region33
  $region32: #{_lambda_.7} parent=0 // pred_region
    _
  $region33: #{_lambda_.7} parent=0 // pred_fallthru
    _
  // Predicated region
  $region34: #{_lambda_.7} parent=0 // pred_check
    _
  $region35: #{_lambda_.7} parent=0 // pred_check_branch
    %51 = sbr.rel (0) target = $region37
  $region36: #{_lambda_.7} parent=0 // pred_region
    _
  $region37: #{_lambda_.7} parent=0 // pred_fallthru
    _
  // Predicated region
  $region38: #{_lambda_.7} parent=0 // pred_check
    _
  $region39: #{_lambda_.7} parent=0 // pred_check_branch
    %53 = sbr.rel (0) target = $region41
  $region40: #{_lambda_.7} parent=0 // pred_region
    _
  $region41: #{_lambda_.7} parent=0 // pred_fallthru
    _
  // Predicated region
  $region42: #{_lambda_.7} parent=0 // pred_check
    _
  $region43: #{_lambda_.7} parent=0 // pred_check_branch
    %55 = sbr.rel (0) target = $region45
  $region44: #{_lambda_.7} parent=0 // pred_region
    _
  $region45: #{_lambda_.7} parent=0 // pred_fallthru
    _
  // Predicated region
  $region46: #{_lambda_.7} parent=0 // pred_check
    _
  $region47: #{_lambda_.7} parent=0 // pred_check_branch
    %57 = sbr.rel (0) target = $region49
  $region48: #{_lambda_.7} parent=0 // pred_region
    _
  $region49: #{_lambda_.7} parent=0 // pred_fallthru
    _
  // Predicated region
  $region50: #{_lambda_.7} parent=0 // pred_check
    _
  $region51: #{_lambda_.7} parent=0 // pred_check_branch
    %59 = sbr.rel (0) target = $region53
  $region52: #{_lambda_.7} parent=0 // pred_region
    _
  $region53: #{_lambda_.7} parent=0 // pred_fallthru
    _
  // Predicated region
  $region54: #{_lambda_.7} parent=0 // pred_check
    _
  $region55: #{_lambda_.7} parent=0 // pred_check_branch
    %61 = sbr.rel (0) target = $region57
  $region56: #{_lambda_.7} parent=0 // pred_region
    _
  $region57: #{_lambda_.7} parent=0 // pred_fallthru
    _
  // Predicated region
  $region58: #{_lambda_.7} parent=0 // pred_check
    _
  $region59: #{_lambda_.7} parent=0 // pred_check_branch
    %63 = sbr.rel (0) target = $region61
  $region60: #{_lambda_.7} parent=0 // pred_region
    _
  $region61: #{_lambda_.7} parent=0 // pred_fallthru
    _
  // Predicated region
  $region62: #{_lambda_.7} parent=0 // pred_check
    _
  $region63: #{_lambda_.7} parent=0 // pred_check_branch
    %65 = sbr.rel (0) target = $region65
  $region64: #{_lambda_.7} parent=0 // pred_region
    _
  $region65: #{_lambda_.7} parent=0 // pred_fallthru
    _
  // Predicated region
  $region66: #{_lambda_.7} parent=0 // pred_check
    _
  $region67: #{_lambda_.7} parent=0 // pred_check_branch
    %67 = sbr.rel (0) target = $region69
  $region68: #{_lambda_.7} parent=0 // pred_region
    _
  $region69: #{_lambda_.7} parent=0 // pred_fallthru
    _
  // Predicated region
  $region70: #{_lambda_.7} parent=0 // pred_check
    _
  $region71: #{_lambda_.7} parent=0 // pred_check_branch
    %69 = sbr.rel (0) target = $region73
  $region72: #{_lambda_.7} parent=0 // pred_region
    _
  $region73: #{_lambda_.7} parent=0 // pred_fallthru
    _
  // Predicated region
  $region74: #{_lambda_.7} parent=0 // pred_check
    _
  $region75: #{_lambda_.7} parent=0 // pred_check_branch
    %71 = sbr.rel (0) target = $region77
  $region76: #{_lambda_.7} parent=0 // pred_region
    _
  $region77: #{_lambda_.7} parent=0 // pred_fallthru
    _
  // Predicated region
  $region78: #{_lambda_.7} parent=0 // pred_check
    _
  $region79: #{_lambda_.7} parent=0 // pred_check_branch
    %73 = sbr.rel (0) target = $region81
  $region80: #{_lambda_.7} parent=0 // pred_region
    _
  $region81: #{_lambda_.7} parent=0 // pred_fallthru
    _
  // Predicated region
  $region82: #{_lambda_.7} parent=0 // pred_check
    _
  $region83: #{_lambda_.7} parent=0 // pred_check_branch
    %75 = sbr.rel (0) target = $region85
  $region84: #{_lambda_.7} parent=0 // pred_region
    _
  $region85: #{_lambda_.7} parent=0 // pred_fallthru
    _
  // Predicated region
  $region86: #{_lambda_.7} parent=0 // pred_check
    _
  $region87: #{_lambda_.7} parent=0 // pred_check_branch
    %77 = sbr.rel (0) target = $region89
  $region88: #{_lambda_.7} parent=0 // pred_region
    _
  $region89: #{_lambda_.7} parent=0 // pred_fallthru
    _
  // Predicated region
  $region90: #{_lambda_.7} parent=0 // pred_check
    _
  $region91: #{_lambda_.7} parent=0 // pred_check_branch
    %79 = sbr.rel (0) target = $region93
  $region92: #{_lambda_.7} parent=0 // pred_region
    _
  $region93: #{_lambda_.7} parent=0 // pred_fallthru
    _
  %v81 = vld [vmem:[%s0] sm:$0xff]
  %v82 = vld [vmem:[%s0 + $0x8] sm:$0xff]
  %v83 = vld [vmem:[%s0 + $0x10] sm:$0xff]
  %v84 = vld [vmem:[%s0 + $0x18] sm:$0xff]
  %v85 = vld [vmem:[%s0 + $0x20] sm:$0xff]
  %v86 = vld [vmem:[%s0 + $0x28] sm:$0xff]
  %v87 = vld [vmem:[%s0 + $0x30] sm:$0xff]
  %v88 = vld [vmem:[%s0 + $0x38] sm:$0xff]
  %v89 = vld [vmem:[%s0 + $0x40] sm:$0xff]
  %v90 = vld [vmem:[%s0 + $0x48] sm:$0xff]
  %v91 = vld [vmem:[%s0 + $0x50] sm:$0xff]
  %v92 = vld [vmem:[%s0 + $0x58] sm:$0xff]
  %v93 = vld [vmem:[%s0 + $0x60] sm:$0xf]
  %v94 = vld [vmem:[%s0 + $0x68] sm:$0xff]
  %v95 = vld [vmem:[%s0 + $0x70] sm:$0xff]
  %v96 = vld [vmem:[%s0 + $0x78] sm:$0xff]
  %v97 = vld [vmem:[%s0 + $0x80] sm:$0xff]
  %v98 = vld [vmem:[%s0 + $0x88] sm:$0xff]
  %v99 = vld [vmem:[%s0 + $0x90] sm:$0xff]
  %v100 = vld [vmem:[%s0 + $0x98] sm:$0xff]
  %v101 = vld [vmem:[%s0 + $0xa0] sm:$0xff]
  %v102 = vld [vmem:[%s0 + $0xa8] sm:$0xff]
  %v103 = vld [vmem:[%s0 + $0xb0] sm:$0xff]
  %v104 = vld [vmem:[%s0 + $0xb8] sm:$0xff]
  %v105 = vld [vmem:[%s0 + $0xc0] sm:$0xff]
  %v106 = vld [vmem:[%s0 + $0xc8] sm:$0xf]
  %v107 = vld [vmem:[%s2] sm:$0x1]
  %v109 = vlaneseq
  %v110 = vshrl.u32 %v109, 7
  %v111 = vsub.s32 0, %v110
  %v112 = vrot.slane %v107, %v111
  %v114 = vmul.f32 %v81, %v112
  %v115 = vmul.f32 %v82, %v112
  %v116 = vmul.f32 %v83, %v112
  %v117 = vmul.f32 %v84, %v112
  %v118 = vmul.f32 %v85, %v112
  %v119 = vmul.f32 %v86, %v112
  %v120 = vmul.f32 %v87, %v112
  %v121 = vmul.f32 %v88, %v112
  %v122 = vmul.f32 %v89, %v112
  %v123 = vmul.f32 %v90, %v112
  %v124 = vmul.f32 %v91, %v112
  %v125 = vmul.f32 %v92, %v112
  %v126 = vmul.f32 %v93, %v112
  %v127 = vmul.f32 %v94, %v112
  %v128 = vmul.f32 %v95, %v112
  %v129 = vmul.f32 %v96, %v112
  %v130 = vmul.f32 %v97, %v112
  %v131 = vmul.f32 %v98, %v112
  %v132 = vmul.f32 %v99, %v112
  %v133 = vmul.f32 %v100, %v112
  %v134 = vmul.f32 %v101, %v112
  %v135 = vmul.f32 %v102, %v112
  %v136 = vmul.f32 %v103, %v112
  %v137 = vmul.f32 %v104, %v112
  %v138 = vmul.f32 %v105, %v112
  %v139 = vmul.f32 %v106, %v112
  %v140 = vld [vmem:[%s3] sm:$0x1]
  %v142 = vlaneseq
  %v143 = vshrl.u32 %v142, 7
  %v144 = vsub.s32 0, %v143
  %v145 = vrot.slane %v140, %v144
  %v147 = vadd.f32 %v114, %v145
  %v148 = vadd.f32 %v115, %v145
  %v149 = vadd.f32 %v116, %v145
  %v150 = vadd.f32 %v117, %v145
  %v151 = vadd.f32 %v118, %v145
  %v152 = vadd.f32 %v119, %v145
  %v153 = vadd.f32 %v120, %v145
  %v154 = vadd.f32 %v121, %v145
  %v155 = vadd.f32 %v122, %v145
  %v156 = vadd.f32 %v123, %v145
  %v157 = vadd.f32 %v124, %v145
  %v158 = vadd.f32 %v125, %v145
  %v159 = vadd.f32 %v126, %v145
  %v160 = vadd.f32 %v127, %v145
  %v161 = vadd.f32 %v128, %v145
  %v162 = vadd.f32 %v129, %v145
  %v163 = vadd.f32 %v130, %v145
  %v164 = vadd.f32 %v131, %v145
  %v165 = vadd.f32 %v132, %v145
  %v166 = vadd.f32 %v133, %v145
  %v167 = vadd.f32 %v134, %v145
  %v168 = vadd.f32 %v135, %v145
  %v169 = vadd.f32 %v136, %v145
  %v170 = vadd.f32 %v137, %v145
  %v171 = vadd.f32 %v138, %v145
  %v172 = vadd.f32 %v139, %v145
  %vm173 = vcmp.gt.f32.partialorder %v147, 0.0
  %vm174 = vcmp.gt.f32.partialorder %v148, 0.0
  %vm175 = vcmp.gt.f32.partialorder %v149, 0.0
  %vm176 = vcmp.gt.f32.partialorder %v150, 0.0
  %vm177 = vcmp.gt.f32.partialorder %v151, 0.0
  %vm178 = vcmp.gt.f32.partialorder %v152, 0.0
  %vm179 = vcmp.gt.f32.partialorder %v153, 0.0
  %vm180 = vcmp.gt.f32.partialorder %v154, 0.0
  %vm181 = vcmp.gt.f32.partialorder %v155, 0.0
  %vm182 = vcmp.gt.f32.partialorder %v156, 0.0
  %vm183 = vcmp.gt.f32.partialorder %v157, 0.0
  %vm184 = vcmp.gt.f32.partialorder %v158, 0.0
  %vm185 = vcmp.gt.f32.partialorder %v159, 0.0
  %vm186 = vcmp.gt.f32.partialorder %v160, 0.0
  %vm187 = vcmp.gt.f32.partialorder %v161, 0.0
  %vm188 = vcmp.gt.f32.partialorder %v162, 0.0
  %vm189 = vcmp.gt.f32.partialorder %v163, 0.0
  %vm190 = vcmp.gt.f32.partialorder %v164, 0.0
  %vm191 = vcmp.gt.f32.partialorder %v165, 0.0
  %vm192 = vcmp.gt.f32.partialorder %v166, 0.0
  %vm193 = vcmp.gt.f32.partialorder %v167, 0.0
  %vm194 = vcmp.gt.f32.partialorder %v168, 0.0
  %vm195 = vcmp.gt.f32.partialorder %v169, 0.0
  %vm196 = vcmp.gt.f32.partialorder %v170, 0.0
  %vm197 = vcmp.gt.f32.partialorder %v171, 0.0
  %vm198 = vcmp.gt.f32.partialorder %v172, 0.0
  %v199 = vmul.f32 %v147, 0.01
  %v200 = vmul.f32 %v148, 0.01
  %v201 = vmul.f32 %v149, 0.01
  %v202 = vmul.f32 %v150, 0.01
  %v203 = vmul.f32 %v151, 0.01
  %v204 = vmul.f32 %v152, 0.01
  %v205 = vmul.f32 %v153, 0.01
  %v206 = vmul.f32 %v154, 0.01
  %v207 = vmul.f32 %v155, 0.01
  %v208 = vmul.f32 %v156, 0.01
  %v209 = vmul.f32 %v157, 0.01
  %v210 = vmul.f32 %v158, 0.01
  %v211 = vmul.f32 %v159, 0.01
  %v212 = vmul.f32 %v160, 0.01
  %v213 = vmul.f32 %v161, 0.01
  %v214 = vmul.f32 %v162, 0.01
  %v215 = vmul.f32 %v163, 0.01
  %v216 = vmul.f32 %v164, 0.01
  %v217 = vmul.f32 %v165, 0.01
  %v218 = vmul.f32 %v166, 0.01
  %v219 = vmul.f32 %v167, 0.01
  %v220 = vmul.f32 %v168, 0.01
  %v221 = vmul.f32 %v169, 0.01
  %v222 = vmul.f32 %v170, 0.01
  %v223 = vmul.f32 %v171, 0.01
  %v224 = vmul.f32 %v172, 0.01
  %v225 = vsel %vm173, %v147, %v199
  %v226 = vsel %vm174, %v148, %v200
  %v227 = vsel %vm175, %v149, %v201
  %v228 = vsel %vm176, %v150, %v202
  %v229 = vsel %vm177, %v151, %v203
  %v230 = vsel %vm178, %v152, %v204
  %v231 = vsel %vm179, %v153, %v205
  %v232 = vsel %vm180, %v154, %v206
  %v233 = vsel %vm181, %v155, %v207
  %v234 = vsel %vm182, %v156, %v208
  %v235 = vsel %vm183, %v157, %v209
  %v236 = vsel %vm184, %v158, %v210
  %v237 = vsel %vm185, %v159, %v211
  %v238 = vsel %vm186, %v160, %v212
  %v239 = vsel %vm187, %v161, %v213
  %v240 = vsel %vm188, %v162, %v214
  %v241 = vsel %vm189, %v163, %v215
  %v242 = vsel %vm190, %v164, %v216
  %v243 = vsel %vm191, %v165, %v217
  %v244 = vsel %vm192, %v166, %v218
  %v245 = vsel %vm193, %v167, %v219
  %v246 = vsel %vm194, %v168, %v220
  %v247 = vsel %vm195, %v169, %v221
  %v248 = vsel %vm196, %v170, %v222
  %v249 = vsel %vm197, %v171, %v223
  %v250 = vsel %vm198, %v172, %v224
  %v251 = vld [vmem:[%s1] sm:$0xff]
  %v252 = vld [vmem:[%s1 + $0x8] sm:$0xff]
  %v253 = vld [vmem:[%s1 + $0x10] sm:$0xff]
  %v254 = vld [vmem:[%s1 + $0x18] sm:$0xff]
  %v255 = vld [vmem:[%s1 + $0x20] sm:$0xff]
  %v256 = vld [vmem:[%s1 + $0x28] sm:$0xff]
  %v257 = vld [vmem:[%s1 + $0x30] sm:$0xff]
  %v258 = vld [vmem:[%s1 + $0x38] sm:$0xff]
  %v259 = vld [vmem:[%s1 + $0x40] sm:$0xff]
  %v260 = vld [vmem:[%s1 + $0x48] sm:$0xff]
  %v261 = vld [vmem:[%s1 + $0x50] sm:$0xff]
  %v262 = vld [vmem:[%s1 + $0x58] sm:$0xff]
  %v263 = vld [vmem:[%s1 + $0x60] sm:$0xf]
  %265 = vset.pattern.permute.xlu0 0
  %266 = vperm.xlu0 %265, %v251
  %v267 = vpop.permute.xlu0 %266
  %270 = vset.pattern.permute.xlu0 0
  %271 = vperm.xlu0 %270, %v252
  %v272 = vpop.permute.xlu0 %271
  %275 = vset.pattern.permute.xlu0 0
  %276 = vperm.xlu0 %275, %v253
  %v277 = vpop.permute.xlu0 %276
  %280 = vset.pattern.permute.xlu0 0
  %281 = vperm.xlu0 %280, %v254
  %v282 = vpop.permute.xlu0 %281
  %285 = vset.pattern.permute.xlu0 0
  %286 = vperm.xlu0 %285, %v255
  %v287 = vpop.permute.xlu0 %286
  %290 = vset.pattern.permute.xlu0 0
  %291 = vperm.xlu0 %290, %v256
  %v292 = vpop.permute.xlu0 %291
  %295 = vset.pattern.permute.xlu0 0
  %296 = vperm.xlu0 %295, %v257
  %v297 = vpop.permute.xlu0 %296
  %300 = vset.pattern.permute.xlu0 0
  %301 = vperm.xlu0 %300, %v258
  %v302 = vpop.permute.xlu0 %301
  %305 = vset.pattern.permute.xlu0 0
  %306 = vperm.xlu0 %305, %v259
  %v307 = vpop.permute.xlu0 %306
  %310 = vset.pattern.permute.xlu0 0
  %311 = vperm.xlu0 %310, %v260
  %v312 = vpop.permute.xlu0 %311
  %315 = vset.pattern.permute.xlu0 0
  %316 = vperm.xlu0 %315, %v261
  %v317 = vpop.permute.xlu0 %316
  %320 = vset.pattern.permute.xlu0 0
  %321 = vperm.xlu0 %320, %v262
  %v322 = vpop.permute.xlu0 %321
  %325 = vset.pattern.permute.xlu0 0
  %326 = vperm.xlu0 %325, %v263
  %v327 = vpop.permute.xlu0 %326
  %v329 = vmul.f32 %v225, %v267
  %v330 = vmul.f32 %v226, %v272
  %v331 = vmul.f32 %v227, %v277
  %v332 = vmul.f32 %v228, %v282
  %v333 = vmul.f32 %v229, %v287
  %v334 = vmul.f32 %v230, %v292
  %v335 = vmul.f32 %v231, %v297
  %v336 = vmul.f32 %v232, %v302
  %v337 = vmul.f32 %v233, %v307
  %v338 = vmul.f32 %v234, %v312
  %v339 = vmul.f32 %v235, %v317
  %v340 = vmul.f32 %v236, %v322
  %v341 = vmul.f32 %v237, %v327
  %v342 = vmul.f32 %v238, %v267
  %v343 = vmul.f32 %v239, %v272
  %v344 = vmul.f32 %v240, %v277
  %v345 = vmul.f32 %v241, %v282
  %v346 = vmul.f32 %v242, %v287
  %v347 = vmul.f32 %v243, %v292
  %v348 = vmul.f32 %v244, %v297
  %v349 = vmul.f32 %v245, %v302
  %v350 = vmul.f32 %v246, %v307
  %v351 = vmul.f32 %v247, %v312
  %v352 = vmul.f32 %v248, %v317
  %v353 = vmul.f32 %v249, %v322
  %v354 = vmul.f32 %v250, %v327
  %vm355 = vcmask 130048
  %v356 = vsel %vm355, %v329, 0.0
  %v357 = vsel %vm355, %v330, 0.0
  %v358 = vadd.f32 %v356, %v357
  %v359 = vsel %vm355, %v331, 0.0
  %v360 = vadd.f32 %v358, %v359
  %v361 = vsel %vm355, %v332, 0.0
  %v362 = vadd.f32 %v360, %v361
  %v363 = vsel %vm355, %v333, 0.0
  %v364 = vadd.f32 %v362, %v363
  %v365 = vsel %vm355, %v334, 0.0
  %v366 = vadd.f32 %v364, %v365
  %v367 = vsel %vm355, %v335, 0.0
  %v368 = vadd.f32 %v366, %v367
  %v369 = vsel %vm355, %v336, 0.0
  %v370 = vadd.f32 %v368, %v369
  %v371 = vsel %vm355, %v337, 0.0
  %v372 = vadd.f32 %v370, %v371
  %v373 = vsel %vm355, %v338, 0.0
  %v374 = vadd.f32 %v372, %v373
  %v375 = vsel %vm355, %v339, 0.0
  %v376 = vadd.f32 %v374, %v375
  %v377 = vsel %vm355, %v340, 0.0
  %v378 = vadd.f32 %v376, %v377
  %vm379 = vcmask 125952
  %v380 = vsel %vm379, %v341, 0.0
  %v381 = vadd.f32 %v378, %v380
  %v382 = vrot.slane %v381, 4
  %v383 = vadd.f32 %v381, %v382
  %v384 = vrot.slane %v383, 2
  %v385 = vadd.f32 %v383, %v384
  %v386 = vrot.slane %v385, 1
  %v387 = vadd.f32 %v385, %v386
  %v388 = vsel %vm355, %v342, 0.0
  %v389 = vsel %vm355, %v343, 0.0
  %v390 = vadd.f32 %v388, %v389
  %v391 = vsel %vm355, %v344, 0.0
  %v392 = vadd.f32 %v390, %v391
  %v393 = vsel %vm355, %v345, 0.0
  %v394 = vadd.f32 %v392, %v393
  %v395 = vsel %vm355, %v346, 0.0
  %v396 = vadd.f32 %v394, %v395
  %v397 = vsel %vm355, %v347, 0.0
  %v398 = vadd.f32 %v396, %v397
  %v399 = vsel %vm355, %v348, 0.0
  %v400 = vadd.f32 %v398, %v399
  %v401 = vsel %vm355, %v349, 0.0
  %v402 = vadd.f32 %v400, %v401
  %v403 = vsel %vm355, %v350, 0.0
  %v404 = vadd.f32 %v402, %v403
  %v405 = vsel %vm355, %v351, 0.0
  %v406 = vadd.f32 %v404, %v405
  %v407 = vsel %vm355, %v352, 0.0
  %v408 = vadd.f32 %v406, %v407
  %v409 = vsel %vm355, %v353, 0.0
  %v410 = vadd.f32 %v408, %v409
  %v411 = vsel %vm379, %v354, 0.0
  %v412 = vadd.f32 %v410, %v411
  %v413 = vrot.slane %v412, 4
  %v414 = vadd.f32 %v412, %v413
  %v415 = vrot.slane %v414, 2
  %v416 = vadd.f32 %v414, %v415
  %v417 = vrot.slane %v416, 1
  %v418 = vadd.f32 %v416, %v417
  %v419 = vmul.f32 %v387, 0.015625
  %v420 = vmul.f32 %v418, 0.015625
  %v421 = vld [vmem:[%s4] sm:$0xff]
  %v422 = vld [vmem:[%s4 + $0x8] sm:$0xff]
  %v423 = vld [vmem:[%s4 + $0x10] sm:$0xff]
  %v424 = vld [vmem:[%s4 + $0x18] sm:$0xff]
  %v425 = vld [vmem:[%s4 + $0x20] sm:$0xff]
  %v426 = vld [vmem:[%s4 + $0x28] sm:$0xff]
  %v427 = vld [vmem:[%s4 + $0x30] sm:$0xff]
  %v428 = vld [vmem:[%s4 + $0x38] sm:$0xff]
  %v429 = vld [vmem:[%s6] sm:$0x3]
  %v431 = vlaneseq
  %v432 = vshrl.u32 %v431, 7
  %v433 = vsub.s32 0, %v432
  %v434 = vrot.slane %v429, %v433
  %v435 = vlaneseq
  %v436 = vshrl.u32 %v435, 7
  %v437 = vsub.s32 1, %v436
  %v438 = vrot.slane %v429, %v437
  %v441 = vmul.f32 %v421, %v434
  %v442 = vmul.f32 %v422, %v438
  %v443 = vmul.f32 %v423, %v434
  %v444 = vmul.f32 %v424, %v438
  %v445 = vmul.f32 %v425, %v434
  %v446 = vmul.f32 %v426, %v438
  %v447 = vmul.f32 %v427, %v434
  %v448 = vmul.f32 %v428, %v438
  %v449 = vld [vmem:[%s7] sm:$0x3]
  %v451 = vlaneseq
  %v452 = vshrl.u32 %v451, 7
  %v453 = vsub.s32 0, %v452
  %v454 = vrot.slane %v449, %v453
  %v455 = vlaneseq
  %v456 = vshrl.u32 %v455, 7
  %v457 = vsub.s32 1, %v456
  %v458 = vrot.slane %v449, %v457
  %v461 = vadd.f32 %v441, %v454
  %v462 = vadd.f32 %v442, %v458
  %v463 = vadd.f32 %v443, %v454
  %v464 = vadd.f32 %v444, %v458
  %v465 = vadd.f32 %v445, %v454
  %v466 = vadd.f32 %v446, %v458
  %v467 = vadd.f32 %v447, %v454
  %v468 = vadd.f32 %v448, %v458
  %vm469 = vcmp.gt.f32.partialorder %v461, 0.0
  %vm470 = vcmp.gt.f32.partialorder %v462, 0.0
  %vm471 = vcmp.gt.f32.partialorder %v463, 0.0
  %vm472 = vcmp.gt.f32.partialorder %v464, 0.0
  %vm473 = vcmp.gt.f32.partialorder %v465, 0.0
  %vm474 = vcmp.gt.f32.partialorder %v466, 0.0
  %vm475 = vcmp.gt.f32.partialorder %v467, 0.0
  %vm476 = vcmp.gt.f32.partialorder %v468, 0.0
  %v477 = vmul.f32 %v461, 0.01
  %v478 = vmul.f32 %v462, 0.01
  %v479 = vmul.f32 %v463, 0.01
  %v480 = vmul.f32 %v464, 0.01
  %v481 = vmul.f32 %v465, 0.01
  %v482 = vmul.f32 %v466, 0.01
  %v483 = vmul.f32 %v467, 0.01
  %v484 = vmul.f32 %v468, 0.01
  %v485 = vsel %vm469, %v461, %v477
  %v486 = vsel %vm470, %v462, %v478
  %v487 = vsel %vm471, %v463, %v479
  %v488 = vsel %vm472, %v464, %v480
  %v489 = vsel %vm473, %v465, %v481
  %v490 = vsel %vm474, %v466, %v482
  %v491 = vsel %vm475, %v467, %v483
  %v492 = vsel %vm476, %v468, %v484
  %v493 = vld [vmem:[%s5] sm:$0xff]
  %v494 = vld [vmem:[%s5 + $0x8] sm:$0xff]
  %v495 = vld [vmem:[%s5 + $0x10] sm:$0xff]
  %v496 = vld [vmem:[%s5 + $0x18] sm:$0xff]
  %v497 = vld [vmem:[%s5 + $0x20] sm:$0xff]
  %v498 = vld [vmem:[%s5 + $0x28] sm:$0xff]
  %v499 = vld [vmem:[%s5 + $0x30] sm:$0xff]
  %v500 = vld [vmem:[%s5 + $0x38] sm:$0xff]
  %v501 = vmul.f32 %v485, %v493
  %v502 = vmul.f32 %v486, %v494
  %v503 = vmul.f32 %v487, %v495
  %v504 = vmul.f32 %v488, %v496
  %v505 = vmul.f32 %v489, %v497
  %v506 = vmul.f32 %v490, %v498
  %v507 = vmul.f32 %v491, %v499
  %v508 = vmul.f32 %v492, %v500
  %v509 = vpack.c.bf16 %v503, %v501
  %v510 = vpack.c.bf16 %v504, %v502
  %v511 = vpack.c.bf16 %v507, %v505
  %v512 = vpack.c.bf16 %v508, %v506
  %v513 = vld [vmem:[%s8] sm:$0xf]
  %v514 = vld [vmem:[%s8 + $0x4] sm:$0xf]
  %v515 = vld [vmem:[%s8 + $0x8] sm:$0xf]
  %v516 = vld [vmem:[%s8 + $0xc] sm:$0xf]
  %v517 = vld [vmem:[%s8 + $0x10] sm:$0xf]
  %v518 = vld [vmem:[%s8 + $0x14] sm:$0xf]
  %v519 = vld [vmem:[%s8 + $0x18] sm:$0xf]
  %v520 = vld [vmem:[%s8 + $0x1c] sm:$0xf]
  %v521 = vld [vmem:[%s8 + $0x20] sm:$0xf]
  %v522 = vld [vmem:[%s8 + $0x24] sm:$0xf]
  %v523 = vld [vmem:[%s8 + $0x28] sm:$0xf]
  %v524 = vld [vmem:[%s8 + $0x2c] sm:$0xf]
  %v525 = vld [vmem:[%s8 + $0x30] sm:$0xf]
  %v526 = vld [vmem:[%s8 + $0x34] sm:$0xf]
  %v527 = vld [vmem:[%s8 + $0x38] sm:$0xf]
  %v528 = vld [vmem:[%s8 + $0x3c] sm:$0xf]
  %v529 = vld [vmem:[%s8 + $0x40] sm:$0xf]
  %v530 = vld [vmem:[%s8 + $0x44] sm:$0xf]
  %v549 = vunpack.c.l.b16 %v513
  %v550 = vunpack.c.l.b16 %v514
  %v551 = vunpack.c.l.b16 %v515
  %v552 = vunpack.c.l.b16 %v516
  %v553 = vunpack.c.l.b16 %v517
  %v554 = vunpack.c.l.b16 %v518
  %v555 = vunpack.c.l.b16 %v519
  %v556 = vunpack.c.l.b16 %v520
  %v557 = vunpack.c.l.b16 %v521
  %v558 = vunpack.c.l.b16 %v522
  %v559 = vunpack.c.l.b16 %v523
  %v560 = vunpack.c.l.b16 %v524
  %v561 = vunpack.c.l.b16 %v525
  %v562 = vunpack.c.l.b16 %v526
  %v563 = vunpack.c.l.b16 %v527
  %v564 = vunpack.c.l.b16 %v528
  %v565 = vunpack.c.l.b16 %v529
  %v566 = vunpack.c.l.b16 %v530
  %v567 = vpack.c.b16 %v550, %v549
  %v568 = vpack.c.b16 %v552, %v551
  %v569 = vpack.c.b16 %v554, %v553
  %v570 = vpack.c.b16 %v556, %v555
  %v571 = vpack.c.b16 %v558, %v557
  %v572 = vpack.c.b16 %v560, %v559
  %v573 = vpack.c.b16 %v562, %v561
  %v574 = vpack.c.b16 %v564, %v563
  %v575 = vpack.c.b16 %v566, %v565
  %v586 = vsel %vm355, %v510, 0
  %v589 = vsel %vm355, %v512, 0
  %591 = vmatprep.subr.bf16.mxu0 0
  %592 = vmatpush1.bf16.msra.mxu0 %v567
  %593 = vmatprep.subr.bf16.mxu0 0
  %594 = vmatpush1.bf16.msra.mxu0 %v568
  %595 = vmatprep.subr.bf16.mxu0 0
  %596 = vmatpush1.bf16.msra.mxu0 %v569
  %597 = vmatprep.subr.bf16.mxu0 0
  %598 = vmatpush1.bf16.msra.mxu0 %v570
  %599 = vmatprep.subr.bf16.mxu0 0
  %600 = vmatpush1.bf16.msra.mxu0 %v571
  %601 = vmatprep.subr.bf16.mxu0 0
  %602 = vmatpush1.bf16.msra.mxu0 %v572
  %603 = vmatprep.subr.bf16.mxu0 0
  %604 = vmatpush1.bf16.msra.mxu0 %v573
  %605 = vmatprep.subr.bf16.mxu0 0
  %606 = vmatpush1.bf16.msra.mxu0 %v574
  %607 = vmatprep.subr.bf16.mxu0 0
  %608 = vmatpush1.bf16.msra.mxu0 %v575
  %609 = vmatprep.subr.bf16.mxu0 0
  %610 = vmatpush1.bf16.msra.mxu0 0
  %611 = vmatprep.subr.bf16.mxu0 0
  %612 = vmatpush1.bf16.msra.mxu0 0
  %613 = vmatprep.subr.bf16.mxu0 0
  %614 = vmatpush1.bf16.msra.mxu0 0
  %615 = vmatprep.subr.bf16.mxu0 0
  %616 = vmatpush1.bf16.msra.mxu0 0
  %617 = vmatprep.subr.bf16.mxu0 0
  %618 = vmatpush1.bf16.msra.mxu0 0
  %619 = vmatprep.subr.bf16.mxu0 0
  %620 = vmatpush1.bf16.msra.mxu0 0
  %621 = vmatprep.subr.bf16.mxu0 0
  %622 = vmatpush1.bf16.msra.mxu0 0
  %623 = vmatprep.mubr.bf16.mxu0 %v586
  %624 = vmatmul.mubr.bf16.gmra.mrb[0].mxu0 %v509
  %v625 = vpop.f32.mrb[0].mxu0
  %v626 = vadd.f32 0.0, %v625
  %v627 = vpop.f32.mrb[0].mxu0
  %v628 = vpop.f32.mrb[0].mxu0
  %v629 = vadd.f32 0.0, %v628
  %v630 = vpop.f32.mrb[0].mxu0
  %631 = vmatprep.mubr.bf16.mxu0 %v589
  %632 = vmatmul.mubr.bf16.gmra.mrb[0].mxu0 %v511
  %v633 = vpop.f32.mrb[0].mxu0
  %v634 = vadd.f32 0.0, %v633
  %v635 = vpop.f32.mrb[0].mxu0
  %v636 = vpop.f32.mrb[0].mxu0
  %v637 = vadd.f32 0.0, %v636
  %v638 = vpop.f32.mrb[0].mxu0
  %639 = vdwg.mxu0
  %v640 = vld [vmem:[%s9] sm:$0x1]
  %v642 = vlaneseq
  %v643 = vshrl.u32 %v642, 7
  %v644 = vsub.s32 0, %v643
  %v645 = vrot.slane %v640, %v644
  %v647 = vmul.f32 %v626, %v645
  %v648 = vmul.f32 %v629, %v645
  %v649 = vmul.f32 %v634, %v645
  %v650 = vmul.f32 %v637, %v645
  %v651 = vld [vmem:[%s10] sm:$0x1]
  %v653 = vlaneseq
  %v654 = vshrl.u32 %v653, 7
  %v655 = vsub.s32 0, %v654
  %v656 = vrot.slane %v651, %v655
  %v658 = vadd.f32 %v647, %v656
  %v659 = vadd.f32 %v648, %v656
  %v660 = vadd.f32 %v649, %v656
  %v661 = vadd.f32 %v650, %v656
  %vm662 = vcmp.gt.f32.partialorder %v658, 0.0
  %vm663 = vcmp.gt.f32.partialorder %v659, 0.0
  %vm664 = vcmp.gt.f32.partialorder %v660, 0.0
  %vm665 = vcmp.gt.f32.partialorder %v661, 0.0
  %v666 = vmul.f32 %v658, 0.01
  %v667 = vmul.f32 %v659, 0.01
  %v668 = vmul.f32 %v660, 0.01
  %v669 = vmul.f32 %v661, 0.01
  %v670 = vsel %vm662, %v658, %v666
  %v671 = vsel %vm663, %v659, %v667
  %v672 = vsel %vm664, %v660, %v668
  %v673 = vsel %vm665, %v661, %v669
  %v674 = vpack.c.bf16 %v671, %v670
  %v675 = vpack.c.bf16 %v673, %v672
  %v676 = vld [vmem:[%s11] sm:$0xf]
  %v677 = vld [vmem:[%s11 + $0x4] sm:$0xf]
  %v680 = vunpack.c.l.b16 %v676
  %v681 = vunpack.c.l.b16 %v677
  %v682 = vpack.c.b16 %v681, %v680
  %v685 = vsel %vm355, %v674, 0
  %v688 = vsel %vm355, %v675, 0
  %690 = vmatprep.subr.bf16.mxu0 0
  %691 = vmatpush1.bf16.msra.mxu0 %v682
  %692 = vmatprep.subr.bf16.mxu0 0
  %693 = vmatpush1.bf16.msra.mxu0 0
  %694 = vmatprep.subr.bf16.mxu0 0
  %695 = vmatpush1.bf16.msra.mxu0 0
  %696 = vmatprep.subr.bf16.mxu0 0
  %697 = vmatpush1.bf16.msra.mxu0 0
  %698 = vmatprep.subr.bf16.mxu0 0
  %699 = vmatpush1.bf16.msra.mxu0 0
  %700 = vmatprep.subr.bf16.mxu0 0
  %701 = vmatpush1.bf16.msra.mxu0 0
  %702 = vmatprep.subr.bf16.mxu0 0
  %703 = vmatpush1.bf16.msra.mxu0 0
  %704 = vmatprep.subr.bf16.mxu0 0
  %705 = vmatpush1.bf16.msra.mxu0 0
  %706 = vmatprep.subr.bf16.mxu0 0
  %707 = vmatpush1.bf16.msra.mxu0 0
  %708 = vmatprep.subr.bf16.mxu0 0
  %709 = vmatpush1.bf16.msra.mxu0 0
  %710 = vmatprep.subr.bf16.mxu0 0
  %711 = vmatpush1.bf16.msra.mxu0 0
  %712 = vmatprep.subr.bf16.mxu0 0
  %713 = vmatpush1.bf16.msra.mxu0 0
  %714 = vmatprep.subr.bf16.mxu0 0
  %715 = vmatpush1.bf16.msra.mxu0 0
  %716 = vmatprep.subr.bf16.mxu0 0
  %717 = vmatpush1.bf16.msra.mxu0 0
  %718 = vmatprep.subr.bf16.mxu0 0
  %719 = vmatpush1.bf16.msra.mxu0 0
  %720 = vmatprep.subr.bf16.mxu0 0
  %721 = vmatpush1.bf16.msra.mxu0 0
  %722 = vmatprep.mubr.bf16.mxu0 0
  %723 = vmatmul.mubr.bf16.gmra.mrb[0].mxu0 %v685
  %v724 = vpop.f32.mrb[0].mxu0
  %v725 = vadd.f32 0.0, %v724
  %v726 = vpop.f32.mrb[0].mxu0
  %v727 = vpop.f32.mrb[0].mxu0
  %v728 = vadd.f32 0.0, %v727
  %v729 = vpop.f32.mrb[0].mxu0
  %730 = vmatprep.mubr.bf16.mxu0 0
  %731 = vmatmul.mubr.bf16.gmra.mrb[0].mxu0 %v688
  %v732 = vpop.f32.mrb[0].mxu0
  %v733 = vadd.f32 0.0, %v732
  %v734 = vpop.f32.mrb[0].mxu0
  %v735 = vpop.f32.mrb[0].mxu0
  %v736 = vadd.f32 0.0, %v735
  %v737 = vpop.f32.mrb[0].mxu0
  %738 = vdwg.mxu0
  %v739 = vld [vmem:[%s12] sm:$0x1]
  %v741 = vlaneseq
  %v742 = vshrl.u32 %v741, 7
  %v743 = vsub.s32 0, %v742
  %v744 = vrot.slane %v739, %v743
  %v746 = vmul.f32 %v725, %v744
  %v747 = vmul.f32 %v728, %v744
  %v748 = vmul.f32 %v733, %v744
  %v749 = vmul.f32 %v736, %v744
  %v750 = vld [vmem:[%s13] sm:$0x1]
  %v752 = vlaneseq
  %v753 = vshrl.u32 %v752, 7
  %v754 = vsub.s32 0, %v753
  %v755 = vrot.slane %v750, %v754
  %v757 = vadd.f32 %v746, %v755
  %v758 = vadd.f32 %v747, %v755
  %v759 = vadd.f32 %v748, %v755
  %v760 = vadd.f32 %v749, %v755
  %vm761 = vcmp.gt.f32.partialorder %v757, 0.0
  %vm762 = vcmp.gt.f32.partialorder %v758, 0.0
  %vm763 = vcmp.gt.f32.partialorder %v759, 0.0
  %vm764 = vcmp.gt.f32.partialorder %v760, 0.0
  %v765 = vmul.f32 %v757, 0.01
  %v766 = vmul.f32 %v758, 0.01
  %v767 = vmul.f32 %v759, 0.01
  %v768 = vmul.f32 %v760, 0.01
  %v769 = vsel %vm761, %v757, %v765
  %v770 = vsel %vm762, %v758, %v766
  %v771 = vsel %vm763, %v759, %v767
  %v772 = vsel %vm764, %v760, %v768
  %v773 = vpack.c.bf16 %v770, %v769
  %v774 = vpack.c.bf16 %v772, %v771
  %v775 = vld [vmem:[%s14] sm:$0xf]
  %vm776 = vcmask 64512
  %v778 = vsel %vm776, %v773, 0
  %v781 = vsel %vm776, %v774, 0
  %vm783 = vcmask 1043456
  %v785 = vsel %vm783, %v775, 0
  %787 = vmatprep.subr.bf16.mxu0 0
  %788 = vmatpush1.bf16.msra.mxu0 %v785
  %789 = vmatprep.subr.bf16.mxu0 0
  %790 = vmatpush1.bf16.msra.mxu0 0
  %791 = vmatprep.subr.bf16.mxu0 0
  %792 = vmatpush1.bf16.msra.mxu0 0
  %793 = vmatprep.subr.bf16.mxu0 0
  %794 = vmatpush1.bf16.msra.mxu0 0
  %795 = vmatprep.subr.bf16.mxu0 0
  %796 = vmatpush1.bf16.msra.mxu0 0
  %797 = vmatprep.subr.bf16.mxu0 0
  %798 = vmatpush1.bf16.msra.mxu0 0
  %799 = vmatprep.subr.bf16.mxu0 0
  %800 = vmatpush1.bf16.msra.mxu0 0
  %801 = vmatprep.subr.bf16.mxu0 0
  %802 = vmatpush1.bf16.msra.mxu0 0
  %803 = vmatprep.subr.bf16.mxu0 0
  %804 = vmatpush1.bf16.msra.mxu0 0
  %805 = vmatprep.subr.bf16.mxu0 0
  %806 = vmatpush1.bf16.msra.mxu0 0
  %807 = vmatprep.subr.bf16.mxu0 0
  %808 = vmatpush1.bf16.msra.mxu0 0
  %809 = vmatprep.subr.bf16.mxu0 0
  %810 = vmatpush1.bf16.msra.mxu0 0
  %811 = vmatprep.subr.bf16.mxu0 0
  %812 = vmatpush1.bf16.msra.mxu0 0
  %813 = vmatprep.subr.bf16.mxu0 0
  %814 = vmatpush1.bf16.msra.mxu0 0
  %815 = vmatprep.subr.bf16.mxu0 0
  %816 = vmatpush1.bf16.msra.mxu0 0
  %817 = vmatprep.subr.bf16.mxu0 0
  %818 = vmatpush1.bf16.msra.mxu0 0
  %819 = vmatprep.mubr.bf16.mxu0 0
  %820 = vmatmul.mubr.bf16.gmra.mrb[0].mxu0 %v778
  %v821 = vpop.f32.mrb[0].mxu0
  %v822 = vadd.f32 0.0, %v821
  %v823 = vpop.f32.mrb[0].mxu0
  %v824 = vpop.f32.mrb[0].mxu0
  %v825 = vadd.f32 0.0, %v824
  %v826 = vpop.f32.mrb[0].mxu0
  %827 = vmatprep.mubr.bf16.mxu0 0
  %828 = vmatmul.mubr.bf16.gmra.mrb[0].mxu0 %v781
  %v829 = vpop.f32.mrb[0].mxu0
  %v830 = vadd.f32 0.0, %v829
  %v831 = vpop.f32.mrb[0].mxu0
  %v832 = vpop.f32.mrb[0].mxu0
  %v833 = vadd.f32 0.0, %v832
  %v834 = vpop.f32.mrb[0].mxu0
  %835 = vdwg.mxu0
  %v836 = vld [vmem:[#allocation2] sm:$0x1]
  %v838 = vlaneseq
  %v839 = vshrl.u32 %v838, 7
  %v840 = vsub.s32 0, %v839
  %v841 = vrot.slane %v836, %v840
  %v843 = vmul.f32 %v822, %v841
  %v844 = vmul.f32 %v825, %v841
  %v845 = vmul.f32 %v830, %v841
  %v846 = vmul.f32 %v833, %v841
  %v847 = vld [vmem:[#allocation3] sm:$0x1]
  %v849 = vlaneseq
  %v850 = vshrl.u32 %v849, 7
  %v851 = vsub.s32 0, %v850
  %v852 = vrot.slane %v847, %v851
  %v854 = vadd.f32 %v843, %v852
  %v855 = vadd.f32 %v844, %v852
  %v856 = vadd.f32 %v845, %v852
  %v857 = vadd.f32 %v846, %v852
  %vm858 = vcmp.gt.f32.partialorder %v854, 0.0
  %vm859 = vcmp.gt.f32.partialorder %v855, 0.0
  %vm860 = vcmp.gt.f32.partialorder %v856, 0.0
  %vm861 = vcmp.gt.f32.partialorder %v857, 0.0
  %v862 = vmul.f32 %v854, 0.01
  %v863 = vmul.f32 %v855, 0.01
  %v864 = vmul.f32 %v856, 0.01
  %v865 = vmul.f32 %v857, 0.01
  %v866 = vsel %vm858, %v854, %v862
  %v867 = vsel %vm859, %v855, %v863
  %v868 = vsel %vm860, %v856, %v864
  %v869 = vsel %vm861, %v857, %v865
  %v870 = vld [vmem:[%s19] sm:$0x3]
  %v871 = vld [vmem:[%s18] sm:$0xff]
  %v872 = vld [vmem:[%s18 + $0x8] sm:$0xff]
  %v873 = vld [vmem:[%s18 + $0x10] sm:$0xff]
  %v874 = vld [vmem:[%s18 + $0x18] sm:$0xff]
  %876 = vset.pattern.permute.xlu0 0
  %877 = vperm.xlu0 %876, %v866
  %v878 = vpop.permute.xlu0 %877
  %881 = vset.pattern.permute.xlu0 0
  %882 = vperm.xlu0 %881, %v867
  %v883 = vpop.permute.xlu0 %882
  %886 = vset.pattern.permute.xlu0 0
  %887 = vperm.xlu0 %886, %v868
  %v888 = vpop.permute.xlu0 %887
  %891 = vset.pattern.permute.xlu0 0
  %892 = vperm.xlu0 %891, %v869
  %v893 = vpop.permute.xlu0 %892
  %v895 = vmul.f32 %v878, %v871
  %v896 = vmul.f32 %v883, %v872
  %v897 = vmul.f32 %v888, %v873
  %v898 = vmul.f32 %v893, %v874
  %vm899 = vcmask 261120
  %v901 = vsel %vm899, %v870, 0
  %903 = vmatprep.subr.mxu0 0.0
  %904 = vmatpush1.msra.mxu0 %v895
  %905 = vmatprep.subr.mxu0 0.0
  %906 = vmatpush1.msra.mxu0 %v896
  %907 = vmatprep.subr.mxu0 0.0
  %908 = vmatpush1.msra.mxu0 %v897
  %909 = vmatprep.subr.mxu0 0.0
  %910 = vmatpush1.msra.mxu0 %v898
  %911 = vmatprep.subr.mxu0 0.0
  %912 = vmatpush1.msra.mxu0 0.0
  %913 = vmatprep.subr.mxu0 0.0
  %914 = vmatpush1.msra.mxu0 0.0
  %915 = vmatprep.subr.mxu0 0.0
  %916 = vmatpush1.msra.mxu0 0.0
  %917 = vmatprep.subr.mxu0 0.0
  %918 = vmatpush1.msra.mxu0 0.0
  %919 = vmatprep.subr.mxu0 0.0
  %920 = vmatpush1.msra.mxu0 0.0
  %921 = vmatprep.subr.mxu0 0.0
  %922 = vmatpush1.msra.mxu0 0.0
  %923 = vmatprep.subr.mxu0 0.0
  %924 = vmatpush1.msra.mxu0 0.0
  %925 = vmatprep.subr.mxu0 0.0
  %926 = vmatpush1.msra.mxu0 0.0
  %927 = vmatprep.subr.mxu0 0.0
  %928 = vmatpush1.msra.mxu0 0.0
  %929 = vmatprep.subr.mxu0 0.0
  %930 = vmatpush1.msra.mxu0 0.0
  %931 = vmatprep.subr.mxu0 0.0
  %932 = vmatpush1.msra.mxu0 0.0
  %933 = vmatprep.subr.mxu0 0.0
  %934 = vmatpush1.msra.mxu0 0.0
  %935 = vmatprep.subr.mxu0 0.0
  %936 = vmatpush1.msra.mxu0 0.0
  %937 = vmatprep.subr.mxu0 0.0
  %938 = vmatpush1.msra.mxu0 0.0
  %939 = vmatprep.subr.mxu0 0.0
  %940 = vmatpush1.msra.mxu0 0.0
  %941 = vmatprep.subr.mxu0 0.0
  %942 = vmatpush1.msra.mxu0 0.0
  %943 = vmatprep.subr.mxu0 0.0
  %944 = vmatpush1.msra.mxu0 0.0
  %945 = vmatprep.subr.mxu0 0.0
  %946 = vmatpush1.msra.mxu0 0.0
  %947 = vmatprep.subr.mxu0 0.0
  %948 = vmatpush1.msra.mxu0 0.0
  %949 = vmatprep.subr.mxu0 0.0
  %950 = vmatpush1.msra.mxu0 0.0
  %951 = vmatprep.subr.mxu0 0.0
  %952 = vmatpush1.msra.mxu0 0.0
  %953 = vmatprep.subr.mxu0 0.0
  %954 = vmatpush1.msra.mxu0 0.0
  %955 = vmatprep.subr.mxu0 0.0
  %956 = vmatpush1.msra.mxu0 0.0
  %957 = vmatprep.subr.mxu0 0.0
  %958 = vmatpush1.msra.mxu0 0.0
  %959 = vmatprep.subr.mxu0 0.0
  %960 = vmatpush1.msra.mxu0 0.0
  %961 = vmatprep.subr.mxu0 0.0
  %962 = vmatpush1.msra.mxu0 0.0
  %963 = vmatprep.subr.mxu0 0.0
  %964 = vmatpush1.msra.mxu0 0.0
  %965 = vmatprep.subr.mxu0 0.0
  %966 = vmatpush1.msra.mxu0 0.0
  %967 = vmatprep.mubr.f32.mxu0 0.0
  %968 = vmatmul.mubr.f32.gmra.mrb[0].mxu0 %v901
  %v969 = vpop.f32.mrb[0].mxu0
  %v970 = vadd.f32 0.0, %v969
  %v971 = vpop.f32.mrb[0].mxu0
  %972 = vdwg.mxu0
  %v973 = vpack.c.bf16 %v419, %v419
  %v974 = vpack.c.bf16 %v420, %v420
  %v975 = vld [vmem:[%s17] sm:$0xf]
  %v976 = vld [vmem:[%s17 + $0x4] sm:$0xf]
  %v979 = vunpack.c.l.b16 %v973
  %v980 = vunpack.c.l.b16 %v974
  %vm981 = vcmask 1041409
  %v982 = vsel %vm981, %v980, %v979
  %v983 = vpack.c.b16 %v982, %v982
  %v986 = vunpack.c.l.b16 %v975
  %v987 = vunpack.c.l.b16 %v976
  %v988 = vpack.c.b16 %v987, %v986
  %v991 = vsel %vm355, %v983, 0
  %993 = vmatprep.subr.bf16.mxu0 0
  %994 = vmatpush1.bf16.msra.mxu0 %v988
  %995 = vmatprep.subr.bf16.mxu0 0
  %996 = vmatpush1.bf16.msra.mxu0 0
  %997 = vmatprep.subr.bf16.mxu0 0
  %998 = vmatpush1.bf16.msra.mxu0 0
  %999 = vmatprep.subr.bf16.mxu0 0
  %1000 = vmatpush1.bf16.msra.mxu0 0
  %1001 = vmatprep.subr.bf16.mxu0 0
  %1002 = vmatpush1.bf16.msra.mxu0 0
  %1003 = vmatprep.subr.bf16.mxu0 0
  %1004 = vmatpush1.bf16.msra.mxu0 0
  %1005 = vmatprep.subr.bf16.mxu0 0
  %1006 = vmatpush1.bf16.msra.mxu0 0
  %1007 = vmatprep.subr.bf16.mxu0 0
  %1008 = vmatpush1.bf16.msra.mxu0 0
  %1009 = vmatprep.subr.bf16.mxu0 0
  %1010 = vmatpush1.bf16.msra.mxu0 0
  %1011 = vmatprep.subr.bf16.mxu0 0
  %1012 = vmatpush1.bf16.msra.mxu0 0
  %1013 = vmatprep.subr.bf16.mxu0 0
  %1014 = vmatpush1.bf16.msra.mxu0 0
  %1015 = vmatprep.subr.bf16.mxu0 0
  %1016 = vmatpush1.bf16.msra.mxu0 0
  %1017 = vmatprep.subr.bf16.mxu0 0
  %1018 = vmatpush1.bf16.msra.mxu0 0
  %1019 = vmatprep.subr.bf16.mxu0 0
  %1020 = vmatpush1.bf16.msra.mxu0 0
  %1021 = vmatprep.subr.bf16.mxu0 0
  %1022 = vmatpush1.bf16.msra.mxu0 0
  %1023 = vmatprep.subr.bf16.mxu0 0
  %1024 = vmatpush1.bf16.msra.mxu0 0
  %1025 = vmatprep.mubr.bf16.mxu0 0
  %1026 = vmatmul.mubr.bf16.gmra.mrb[0].mxu0 %v991
  %v1027 = vpop.f32.mrb[0].mxu0
  %v1028 = vadd.f32 %v970, %v1027
  %v1029 = vpop.f32.mrb[0].mxu0
  %v1030 = vpop.f32.mrb[0].mxu0
  %v1031 = vpop.f32.mrb[0].mxu0
  %1032 = vdwg.mxu0
  %v1033 = vld [vmem:[%s20] sm:$0x1]
  %v1035 = vlaneseq
  %v1036 = vshrl.u32 %v1035, 7
  %v1037 = vsub.s32 0, %v1036
  %v1038 = vrot.slane %v1033, %v1037
  %v1040 = vadd.f32 %v1028, %v1038
  %vm1041 = vcmp.gt.f32.partialorder %v1040, 0.0
  %v1042 = vmul.f32 %v1040, 0.01
  %v1043 = vsel %vm1041, %v1040, %v1042
  %v1044 = vpack.c.bf16 %v1043, %v1043
  %v1045 = vld [vmem:[%s21] sm:$0xf]
  %v1046 = vld [vmem:[%s21 + $0x4] sm:$0xf]
  %v1047 = vld [vmem:[%s21 + $0x8] sm:$0xf]
  %v1048 = vld [vmem:[%s21 + $0xc] sm:$0xf]
  %v1049 = vld [vmem:[#allocation4] sm:$0x1]
  %v1051 = vlaneseq
  %v1052 = vshrl.u32 %v1051, 7
  %v1053 = vsub.s32 0, %v1052
  %v1054 = vrot.slane %v1049, %v1053
  %v1060 = vunpack.c.l.b16 %v1045
  %v1061 = vunpack.c.l.b16 %v1046
  %v1062 = vunpack.c.l.b16 %v1047
  %v1063 = vunpack.c.l.b16 %v1048
  %v1064 = vpack.c.b16 %v1061, %v1060
  %v1065 = vpack.c.b16 %v1063, %v1062
  %v1069 = vsel %vm899, %v1044, 0
  %1071 = vmatprep.subr.bf16.mxu0 0
  %1072 = vmatpush1.bf16.msra.mxu0 %v1064
  %1073 = vmatprep.subr.bf16.mxu0 0
  %1074 = vmatpush1.bf16.msra.mxu0 %v1065
  %1075 = vmatprep.subr.bf16.mxu0 0
  %1076 = vmatpush1.bf16.msra.mxu0 0
  %1077 = vmatprep.subr.bf16.mxu0 0
  %1078 = vmatpush1.bf16.msra.mxu0 0
  %1079 = vmatprep.subr.bf16.mxu0 0
  %1080 = vmatpush1.bf16.msra.mxu0 0
  %1081 = vmatprep.subr.bf16.mxu0 0
  %1082 = vmatpush1.bf16.msra.mxu0 0
  %1083 = vmatprep.subr.bf16.mxu0 0
  %1084 = vmatpush1.bf16.msra.mxu0 0
  %1085 = vmatprep.subr.bf16.mxu0 0
  %1086 = vmatpush1.bf16.msra.mxu0 0
  %1087 = vmatprep.subr.bf16.mxu0 0
  %1088 = vmatpush1.bf16.msra.mxu0 0
  %1089 = vmatprep.subr.bf16.mxu0 0
  %1090 = vmatpush1.bf16.msra.mxu0 0
  %1091 = vmatprep.subr.bf16.mxu0 0
  %1092 = vmatpush1.bf16.msra.mxu0 0
  %1093 = vmatprep.subr.bf16.mxu0 0
  %1094 = vmatpush1.bf16.msra.mxu0 0
  %1095 = vmatprep.subr.bf16.mxu0 0
  %1096 = vmatpush1.bf16.msra.mxu0 0
  %1097 = vmatprep.subr.bf16.mxu0 0
  %1098 = vmatpush1.bf16.msra.mxu0 0
  %1099 = vmatprep.subr.bf16.mxu0 0
  %1100 = vmatpush1.bf16.msra.mxu0 0
  %1101 = vmatprep.subr.bf16.mxu0 0
  %1102 = vmatpush1.bf16.msra.mxu0 0
  %1103 = vmatprep.mubr.bf16.mxu0 0
  %1104 = vmatmul.mubr.bf16.gmra.mrb[0].mxu0 %v1069
  %v1105 = vpop.f32.mrb[0].mxu0
  %v1106 = vadd.f32 %v1054, %v1105
  %v1107 = vpop.f32.mrb[0].mxu0
  %v1108 = vpop.f32.mrb[0].mxu0
  %v1109 = vpop.f32.mrb[0].mxu0
  %1110 = vdwg.mxu0
  %vm1111 = vcmask 1024
  %1112 = vst.msk [vmem:[%s23] sm:$0x3] %vm1111, %v1106
  // Predicated region
  $region94: #{_lambda_.7} parent=0 // pred_check
    _
  $region95: #{_lambda_.7} parent=0 // pred_check_branch
    %1114 = sbr.rel (0) target = $region97
  $region96: #{_lambda_.7} parent=0 // pred_region
    _
  $region97: #{_lambda_.7} parent=0 // pred_fallthru
    _
  // Predicated region
  $region98: #{_lambda_.7} parent=0 // pred_check
    _
  $region99: #{_lambda_.7} parent=0 // pred_check_branch
    %1116 = sbr.rel (0) target = $region101
  $region100: #{_lambda_.7} parent=0 // pred_region
    _
  $region101: #{_lambda_.7} parent=0 // pred_fallthru
    _

// kernel: _lambda_.4
$region0: #{_lambda_.4}
  #allocation0 [shape = 'u32[]', space=smem, size = 0x4, offset = 0x4, fixed_abs, tag = 'smem constant byte address 0x4 - core index']
  #allocation1 [shape = 'u32[144,128]{1,0:T(1,128)}', space=vmem, size = 0x12000, scoped, tag = 'internal scratch']
  #allocation2 [shape = 'f32[132,8]{1,0:T(8,128)}', space=vmem, size = 0x11000, scoped, tag = 'scratch operand']
  %s0 = inlined_call_operand.vmem [shape: f32[2,100,16], index: 0, kind: input, shape index: {}]
  %s1 = inlined_call_operand.vmem [shape: f32[100,1], index: 1, kind: input, shape index: {}]
  %s2 = inlined_call_operand.vmem [shape: f32[1,16], index: 2, kind: input, shape index: {}]
  %s3 = inlined_call_operand.vmem [shape: f32[1,16], index: 3, kind: input, shape index: {}]
  %s4 = inlined_call_operand.vmem [shape: bf16[16,8], index: 4, kind: input, shape index: {}]
  %s5 = inlined_call_operand.vmem [shape: f32[4,1,8], index: 5, kind: input, shape index: {}]
  %s6 = inlined_call_operand.vmem [shape: f32[4,1,8], index: 6, kind: input, shape index: {}]
  %s7 = inlined_call_operand.vmem [shape: bf16[36,8,8], index: 7, kind: input, shape index: {}]
  %s8 = inlined_call_operand.vmem [shape: f32[1,8], index: 8, kind: input, shape index: {}]
  %s9 = inlined_call_operand.vmem [shape: f32[1,8], index: 9, kind: input, shape index: {}]
  %s10 = inlined_call_operand.vmem [shape: bf16[8,16], index: 10, kind: input, shape index: {}]
  %s11 = inlined_call_operand.vmem [shape: f32[2,100,16], index: 11, kind: output, shape index: {}]
  %s12 = sld [smem:[#allocation0]]
  $region77: #{_lambda_.4} parent=0
    _
  %s14 = ssub.s32 1, %s12
  %s15 = scalar_select 0, %s14, %s12
  loop: start=0, step=1, limit=4
  $region2: #{_lambda_.4} parent=0 // loop_pre_header
    _
  $region3: #{_lambda_.4} parent=0 // loop_header
    %s17 = sphi 0, %s21
    %p18 = scmp.ge.s32.totalorder %s17, 4
    %s27 = sphi 0, %s29
    %s30 = sphi 0, %s27
    %s31 = sphi 0, %s30
    %s47 = sphi 0, %s31
    %s51 = sphi 0, %s51
    %s53 = sphi 0, %s51
    %s54 = sphi 0, %s53
    %s68 = sphi 0, %s54
    %s72 = sphi 0, %s72
    %s74 = sphi 0, %s72
    %s75 = sphi 0, %s74
    %s89 = sphi 0, %s75
    %s93 = sphi 0, %s93
    %s95 = sphi 0, %s93
    %s96 = sphi 0, %s95
    %s110 = sphi 0, %s96
    %s114 = sphi 0, %s114
    %s116 = sphi 0, %s114
    %s117 = sphi 0, %s116
    %s131 = sphi 0, %s117
    %s135 = sphi 0, %s135
    %s137 = sphi 0, %s135
    %s138 = sphi 0, %s137
    %s152 = sphi 0, %s138
    %s156 = sphi 0, %s156
    %s158 = sphi 0, %s156
    %s159 = sphi 0, %s158
    %s173 = sphi 0, %s159
    %s177 = sphi 0, %s177
    %s179 = sphi 0, %s177
    %s180 = sphi 0, %s179
    %s194 = sphi 0, %s180
    %s198 = sphi 0, %s198
    %s200 = sphi 0, %s198
    %s201 = sphi 0, %s200
    %s215 = sphi 0, %s201
    %s219 = sphi 0, %s219
    %s221 = sphi 0, %s219
    %s222 = sphi 0, %s221
    %s236 = sphi 0, %s222
    %s240 = sphi 0, %s240
    %s242 = sphi 0, %s240
    %s243 = sphi 0, %s242
    %s257 = sphi 0, %s243
    %s263 = sphi 0, %s265
    %s266 = sphi 0, %s263
    %s267 = sphi 0, %s266
    %s283 = sphi 0, %s267
  $region4: #{_lambda_.4} parent=0 // loop_header_branch
    %20 = sbr.rel (%p18) target = $region8
  $region5: #{_lambda_.4} parent=0 // loop_body
    %s22 = ssub.s32 %s17, 1
    %s23 = ssub.s32 %s17, 2
    %s24 = sadd.s32 %s17, 1
    %s25 = ssub.s32 %s17, %s24
    %p26 = scmp.eq.s32.totalorder %s25, 0
    %s28 = sadd.s32 %s27, 1
    %s29 = scalar_select %p26, %s27, %s28
    %p32 = pneg %p26
    %p33 = scmp.eq.s32.totalorder %s17, 1
    %p34 = por %p32, %p33
    %p35 = scmp.ne.s32.totalorder %s27, %s30
    %p36 = scmp.eq.s32.totalorder %s17, 0
    %p37 = por %p35, %p36
    %p38 = scmp.ne.s32.totalorder %s27, %s30
    %p39 = scmp.eq.s32.totalorder %s22, 1
    %p40 = por %p38, %p39
    %p41 = scmp.ne.s32.totalorder %s30, %s31
    %p42 = scmp.eq.s32.totalorder %s22, 0
    %p43 = por %p41, %p42
    %p44 = scmp.ne.s32.totalorder %s30, %s31
    %p45 = scmp.eq.s32.totalorder %s23, 1
    %p46 = por %p44, %p45
    %p48 = scmp.ne.s32.totalorder %s31, %s47
    %p49 = scmp.eq.s32.totalorder %s23, 0
    %p50 = por %p48, %p49
    %s52 = sadd.s32 %s51, 1
    %p55 = scmp.eq.s32.totalorder %s17, 1
    %p56 = scmp.ne.s32.totalorder %s51, %s53
    %p57 = scmp.eq.s32.totalorder %s17, 0
    %p58 = por %p56, %p57
    %p59 = scmp.ne.s32.totalorder %s51, %s53
    %p60 = scmp.eq.s32.totalorder %s22, 1
    %p61 = por %p59, %p60
    %p62 = scmp.ne.s32.totalorder %s53, %s54
    %p63 = scmp.eq.s32.totalorder %s22, 0
    %p64 = por %p62, %p63
    %p65 = scmp.ne.s32.totalorder %s53, %s54
    %p66 = scmp.eq.s32.totalorder %s23, 1
    %p67 = por %p65, %p66
    %p69 = scmp.ne.s32.totalorder %s54, %s68
    %p70 = scmp.eq.s32.totalorder %s23, 0
    %p71 = por %p69, %p70
    %s73 = sadd.s32 %s72, 1
    %p76 = scmp.eq.s32.totalorder %s17, 1
    %p77 = scmp.ne.s32.totalorder %s72, %s74
    %p78 = scmp.eq.s32.totalorder %s17, 0
    %p79 = por %p77, %p78
    %p80 = scmp.ne.s32.totalorder %s72, %s74
    %p81 = scmp.eq.s32.totalorder %s22, 1
    %p82 = por %p80, %p81
    %p83 = scmp.ne.s32.totalorder %s74, %s75
    %p84 = scmp.eq.s32.totalorder %s22, 0
    %p85 = por %p83, %p84
    %p86 = scmp.ne.s32.totalorder %s74, %s75
    %p87 = scmp.eq.s32.totalorder %s23, 1
    %p88 = por %p86, %p87
    %p90 = scmp.ne.s32.totalorder %s75, %s89
    %p91 = scmp.eq.s32.totalorder %s23, 0
    %p92 = por %p90, %p91
    %s94 = sadd.s32 %s93, 1
    %p97 = scmp.eq.s32.totalorder %s17, 1
    %p98 = scmp.ne.s32.totalorder %s93, %s95
    %p99 = scmp.eq.s32.totalorder %s17, 0
    %p100 = por %p98, %p99
    %p101 = scmp.ne.s32.totalorder %s93, %s95
    %p102 = scmp.eq.s32.totalorder %s22, 1
    %p103 = por %p101, %p102
    %p104 = scmp.ne.s32.totalorder %s95, %s96
    %p105 = scmp.eq.s32.totalorder %s22, 0
    %p106 = por %p104, %p105
    %p107 = scmp.ne.s32.totalorder %s95, %s96
    %p108 = scmp.eq.s32.totalorder %s23, 1
    %p109 = por %p107, %p108
    %p111 = scmp.ne.s32.totalorder %s96, %s110
    %p112 = scmp.eq.s32.totalorder %s23, 0
    %p113 = por %p111, %p112
    %s115 = sadd.s32 %s114, 1
    %p118 = scmp.eq.s32.totalorder %s17, 1
    %p119 = scmp.ne.s32.totalorder %s114, %s116
    %p120 = scmp.eq.s32.totalorder %s17, 0
    %p121 = por %p119, %p120
    %p122 = scmp.ne.s32.totalorder %s114, %s116
    %p123 = scmp.eq.s32.totalorder %s22, 1
    %p124 = por %p122, %p123
    %p125 = scmp.ne.s32.totalorder %s116, %s117
    %p126 = scmp.eq.s32.totalorder %s22, 0
    %p127 = por %p125, %p126
    %p128 = scmp.ne.s32.totalorder %s116, %s117
    %p129 = scmp.eq.s32.totalorder %s23, 1
    %p130 = por %p128, %p129
    %p132 = scmp.ne.s32.totalorder %s117, %s131
    %p133 = scmp.eq.s32.totalorder %s23, 0
    %p134 = por %p132, %p133
    %s136 = sadd.s32 %s135, 1
    %p139 = scmp.eq.s32.totalorder %s17, 1
    %p140 = scmp.ne.s32.totalorder %s135, %s137
    %p141 = scmp.eq.s32.totalorder %s17, 0
    %p142 = por %p140, %p141
    %p143 = scmp.ne.s32.totalorder %s135, %s137
    %p144 = scmp.eq.s32.totalorder %s22, 1
    %p145 = por %p143, %p144
    %p146 = scmp.ne.s32.totalorder %s137, %s138
    %p147 = scmp.eq.s32.totalorder %s22, 0
    %p148 = por %p146, %p147
    %p149 = scmp.ne.s32.totalorder %s137, %s138
    %p150 = scmp.eq.s32.totalorder %s23, 1
    %p151 = por %p149, %p150
    %p153 = scmp.ne.s32.totalorder %s138, %s152
    %p154 = scmp.eq.s32.totalorder %s23, 0
    %p155 = por %p153, %p154
    %s157 = sadd.s32 %s156, 1
    %p160 = scmp.eq.s32.totalorder %s17, 1
    %p161 = scmp.ne.s32.totalorder %s156, %s158
    %p162 = scmp.eq.s32.totalorder %s17, 0
    %p163 = por %p161, %p162
    %p164 = scmp.ne.s32.totalorder %s156, %s158
    %p165 = scmp.eq.s32.totalorder %s22, 1
    %p166 = por %p164, %p165
    %p167 = scmp.ne.s32.totalorder %s158, %s159
    %p168 = scmp.eq.s32.totalorder %s22, 0
    %p169 = por %p167, %p168
    %p170 = scmp.ne.s32.totalorder %s158, %s159
    %p171 = scmp.eq.s32.totalorder %s23, 1
    %p172 = por %p170, %p171
    %p174 = scmp.ne.s32.totalorder %s159, %s173
    %p175 = scmp.eq.s32.totalorder %s23, 0
    %p176 = por %p174, %p175
    %s178 = sadd.s32 %s177, 1
    %p181 = scmp.eq.s32.totalorder %s17, 1
    %p182 = scmp.ne.s32.totalorder %s177, %s179
    %p183 = scmp.eq.s32.totalorder %s17, 0
    %p184 = por %p182, %p183
    %p185 = scmp.ne.s32.totalorder %s177, %s179
    %p186 = scmp.eq.s32.totalorder %s22, 1
    %p187 = por %p185, %p186
    %p188 = scmp.ne.s32.totalorder %s179, %s180
    %p189 = scmp.eq.s32.totalorder %s22, 0
    %p190 = por %p188, %p189
    %p191 = scmp.ne.s32.totalorder %s179, %s180
    %p192 = scmp.eq.s32.totalorder %s23, 1
    %p193 = por %p191, %p192
    %p195 = scmp.ne.s32.totalorder %s180, %s194
    %p196 = scmp.eq.s32.totalorder %s23, 0
    %p197 = por %p195, %p196
    %s199 = sadd.s32 %s198, 1
    %p202 = scmp.eq.s32.totalorder %s17, 1
    %p203 = scmp.ne.s32.totalorder %s198, %s200
    %p204 = scmp.eq.s32.totalorder %s17, 0
    %p205 = por %p203, %p204
    %p206 = scmp.ne.s32.totalorder %s198, %s200
    %p207 = scmp.eq.s32.totalorder %s22, 1
    %p208 = por %p206, %p207
    %p209 = scmp.ne.s32.totalorder %s200, %s201
    %p210 = scmp.eq.s32.totalorder %s22, 0
    %p211 = por %p209, %p210
    %p212 = scmp.ne.s32.totalorder %s200, %s201
    %p213 = scmp.eq.s32.totalorder %s23, 1
    %p214 = por %p212, %p213
    %p216 = scmp.ne.s32.totalorder %s201, %s215
    %p217 = scmp.eq.s32.totalorder %s23, 0
    %p218 = por %p216, %p217
    %s220 = sadd.s32 %s219, 1
    %p223 = scmp.eq.s32.totalorder %s17, 1
    %p224 = scmp.ne.s32.totalorder %s219, %s221
    %p225 = scmp.eq.s32.totalorder %s17, 0
    %p226 = por %p224, %p225
    %p227 = scmp.ne.s32.totalorder %s219, %s221
    %p228 = scmp.eq.s32.totalorder %s22, 1
    %p229 = por %p227, %p228
    %p230 = scmp.ne.s32.totalorder %s221, %s222
    %p231 = scmp.eq.s32.totalorder %s22, 0
    %p232 = por %p230, %p231
    %p233 = scmp.ne.s32.totalorder %s221, %s222
    %p234 = scmp.eq.s32.totalorder %s23, 1
    %p235 = por %p233, %p234
    %p237 = scmp.ne.s32.totalorder %s222, %s236
    %p238 = scmp.eq.s32.totalorder %s23, 0
    %p239 = por %p237, %p238
    %s241 = sadd.s32 %s240, 1
    %p244 = scmp.eq.s32.totalorder %s17, 1
    %p245 = scmp.ne.s32.totalorder %s240, %s242
    %p246 = scmp.eq.s32.totalorder %s17, 0
    %p247 = por %p245, %p246
    %p248 = scmp.ne.s32.totalorder %s240, %s242
    %p249 = scmp.eq.s32.totalorder %s22, 1
    %p250 = por %p248, %p249
    %p251 = scmp.ne.s32.totalorder %s242, %s243
    %p252 = scmp.eq.s32.totalorder %s22, 0
    %p253 = por %p251, %p252
    %p254 = scmp.ne.s32.totalorder %s242, %s243
    %p255 = scmp.eq.s32.totalorder %s23, 1
    %p256 = por %p254, %p255
    %p258 = scmp.ne.s32.totalorder %s243, %s257
    %p259 = scmp.eq.s32.totalorder %s23, 0
    %p260 = por %p258, %p259
    %s261 = ssub.s32 %s17, %s24
    %p262 = scmp.eq.s32.totalorder %s261, 0
    %s264 = sadd.s32 %s263, 1
    %s265 = scalar_select %p262, %s263, %s264
    %p268 = pneg %p262
    %p269 = scmp.eq.s32.totalorder %s17, 1
    %p270 = por %p268, %p269
    %p271 = scmp.ne.s32.totalorder %s263, %s266
    %p272 = scmp.eq.s32.totalorder %s17, 0
    %p273 = por %p271, %p272
    %p274 = scmp.ne.s32.totalorder %s263, %s266
    %p275 = scmp.eq.s32.totalorder %s22, 1
    %p276 = por %p274, %p275
    %p277 = scmp.ne.s32.totalorder %s266, %s267
    %p278 = scmp.eq.s32.totalorder %s22, 0
    %p279 = por %p277, %p278
    %p280 = scmp.ne.s32.totalorder %s266, %s267
    %p281 = scmp.eq.s32.totalorder %s23, 1
    %p282 = por %p280, %p281
    %p284 = scmp.ne.s32.totalorder %s267, %s283
    %p285 = scmp.eq.s32.totalorder %s23, 0
    %p286 = por %p284, %p285
    %p287 = scmp.le.s32.totalorder 1, %s17
    %p288 = scmp.lt.s32.totalorder %s17, 3
    %p289 = pnand %p287, %p288
    %p290 = pneg %p289
    // Predicated region
    $region9: #{_lambda_.4} parent=5 // pred_check
      _
    $region10: #{_lambda_.4} parent=5 // pred_check_branch
      %292 = sbr.rel (%p289) target = $region12
    $region11: #{_lambda_.4} parent=5 // pred_region
      %s293 = ssub.s32 %s17, 1
      // Predicated region
      $region13: #{_lambda_.4} parent=11 // pred_check
        %p294 = pneg %p64
      $region14: #{_lambda_.4} parent=11 // pred_check_branch
        %296 = sbr.rel (%p294) target = $region16
      $region15: #{_lambda_.4} parent=11 // pred_region
        _
      $region16: #{_lambda_.4} parent=11 // pred_fallthru
        _
      // Predicated region
      $region17: #{_lambda_.4} parent=11 // pred_check
        %p297 = pneg %p85
      $region18: #{_lambda_.4} parent=11 // pred_check_branch
        %299 = sbr.rel (%p297) target = $region20
      $region19: #{_lambda_.4} parent=11 // pred_region
        _
      $region20: #{_lambda_.4} parent=11 // pred_fallthru
        _
      // Predicated region
      $region21: #{_lambda_.4} parent=11 // pred_check
        %p300 = pneg %p106
      $region22: #{_lambda_.4} parent=11 // pred_check_branch
        %302 = sbr.rel (%p300) target = $region24
      $region23: #{_lambda_.4} parent=11 // pred_region
        _
      $region24: #{_lambda_.4} parent=11 // pred_fallthru
        _
      // Predicated region
      $region25: #{_lambda_.4} parent=11 // pred_check
        %p303 = pneg %p127
      $region26: #{_lambda_.4} parent=11 // pred_check_branch
        %305 = sbr.rel (%p303) target = $region28
      $region27: #{_lambda_.4} parent=11 // pred_region
        _
      $region28: #{_lambda_.4} parent=11 // pred_fallthru
        _
      // Predicated region
      $region29: #{_lambda_.4} parent=11 // pred_check
        %p306 = pneg %p148
      $region30: #{_lambda_.4} parent=11 // pred_check_branch
        %308 = sbr.rel (%p306) target = $region32
      $region31: #{_lambda_.4} parent=11 // pred_region
        _
      $region32: #{_lambda_.4} parent=11 // pred_fallthru
        _
      // Predicated region
      $region33: #{_lambda_.4} parent=11 // pred_check
        %p309 = pneg %p169
      $region34: #{_lambda_.4} parent=11 // pred_check_branch
        %311 = sbr.rel (%p309) target = $region36
      $region35: #{_lambda_.4} parent=11 // pred_region
        _
      $region36: #{_lambda_.4} parent=11 // pred_fallthru
        _
      // Predicated region
      $region37: #{_lambda_.4} parent=11 // pred_check
        %p312 = pneg %p190
      $region38: #{_lambda_.4} parent=11 // pred_check_branch
        %314 = sbr.rel (%p312) target = $region40
      $region39: #{_lambda_.4} parent=11 // pred_region
        _
      $region40: #{_lambda_.4} parent=11 // pred_fallthru
        _
      // Predicated region
      $region41: #{_lambda_.4} parent=11 // pred_check
        %p315 = pneg %p211
      $region42: #{_lambda_.4} parent=11 // pred_check_branch
        %317 = sbr.rel (%p315) target = $region44
      $region43: #{_lambda_.4} parent=11 // pred_region
        _
      $region44: #{_lambda_.4} parent=11 // pred_fallthru
        _
      // Predicated region
      $region45: #{_lambda_.4} parent=11 // pred_check
        %p318 = pneg %p232
      $region46: #{_lambda_.4} parent=11 // pred_check_branch
        %320 = sbr.rel (%p318) target = $region48
      $region47: #{_lambda_.4} parent=11 // pred_region
        _
      $region48: #{_lambda_.4} parent=11 // pred_fallthru
        _
      // Predicated region
      $region49: #{_lambda_.4} parent=11 // pred_check
        %p321 = pneg %p253
      $region50: #{_lambda_.4} parent=11 // pred_check_branch
        %323 = sbr.rel (%p321) target = $region52
      $region51: #{_lambda_.4} parent=11 // pred_region
        _
      $region52: #{_lambda_.4} parent=11 // pred_fallthru
        _
    $region12: #{_lambda_.4} parent=5 // pred_fallthru
      _
    %p324 = scmp.lt.s32.totalorder %s17, 2
    // Predicated region
    $region53: #{_lambda_.4} parent=5 // pred_check
      %p325 = pneg %p324
    $region54: #{_lambda_.4} parent=5 // pred_check_branch
      %327 = sbr.rel (%p325) target = $region56
    $region55: #{_lambda_.4} parent=5 // pred_region
      // Predicated region
      $region57: #{_lambda_.4} parent=55 // pred_check
        %p328 = pneg %p37
      $region58: #{_lambda_.4} parent=55 // pred_check_branch
        %330 = sbr.rel (%p328) target = $region60
      $region59: #{_lambda_.4} parent=55 // pred_region
        %p331 = scmp.lt.s32.totalorder %s17, 1
        %s332 = scalar_select %p331, %s17, 1
        %s333 = smul.addr %s332, 13
        %s334 = smul.addr %s333, 8
        %s335 = scalar_lea.vmem %s0, %s334
      $region60: #{_lambda_.4} parent=55 // pred_fallthru
        _
    $region56: #{_lambda_.4} parent=5 // pred_fallthru
      _
    %p336 = scmp.le.s32.totalorder 1, %s17
    %p337 = scmp.lt.s32.totalorder %s17, 3
    %p338 = pnand %p336, %p337
    %p339 = pneg %p338
    // Predicated region
    $region61: #{_lambda_.4} parent=5 // pred_check
      _
    $region62: #{_lambda_.4} parent=5 // pred_check_branch
      %341 = sbr.rel (%p338) target = $region64
    $region63: #{_lambda_.4} parent=5 // pred_region
      %s342 = ssub.s32 %s17, 1
      %p343 = scmp.lt.s32.totalorder %s22, 1
      %s344 = scalar_select %p343, %s22, 1
      %s345 = smul.addr %s344, 13
      %s346 = smul.addr %s345, 8
      %s347 = scalar_lea.vmem %s0, %s346
      %p348 = pneg %p43
      %p349 = pneg %p40
      %p350 = pneg %p64
      %p351 = pneg %p61
      %p352 = pneg %p85
      %p353 = pneg %p82
      %p354 = pneg %p106
      %p355 = pneg %p103
      %p356 = pneg %p127
      %p357 = pneg %p124
      %p358 = pneg %p148
      %p359 = pneg %p145
      %p360 = pneg %p169
      %p361 = pneg %p166
      %p362 = pneg %p190
      %p363 = pneg %p187
      %p364 = pneg %p211
      %p365 = pneg %p208
      %p366 = pneg %p232
      %p367 = pneg %p229
      %p368 = pneg %p253
      %p369 = pneg %p250
      %p370 = pneg %p279
      %p371 = pneg %p276
      %p372 = scmp.lt.s32.totalorder %s22, 1
      %s373 = scalar_select %p372, %s22, 1
      %s374 = smul.addr %s373, 13
      %s375 = smul.addr %s374, 8
      %s376 = scalar_lea.vmem %s11, %s375
      %p377 = scmp.lt.s32.totalorder %s22, 1
      %s378 = scalar_select %p377, %s22, 1
      %s379 = smul.addr %s378, 13
      %s380 = smul.addr %s379, 8
      %s381 = scalar_lea.vmem %s0, %s380
      %p382 = scmp.lt.s32.totalorder %s22, 1
      %s383 = scalar_select %p382, %s22, 1
      %s384 = smul.addr %s383, 13
      %s385 = smul.addr %s384, 8
      %s386 = scalar_lea.vmem %s11, %s385
      %v388 = vld [vmem:[%s381] sm:$0xff]
      %v389 = vld [vmem:[%s381 + $0x8] sm:$0xff]
      %v390 = vld [vmem:[%s381 + $0x10] sm:$0xff]
      %v391 = vld [vmem:[%s381 + $0x18] sm:$0xff]
      %v392 = vld [vmem:[%s381 + $0x20] sm:$0xff]
      %v393 = vld [vmem:[%s381 + $0x28] sm:$0xff]
      %v394 = vld [vmem:[%s381 + $0x30] sm:$0xff]
      %v395 = vld [vmem:[%s381 + $0x38] sm:$0xff]
      %v396 = vld [vmem:[%s381 + $0x40] sm:$0xff]
      %v397 = vld [vmem:[%s381 + $0x48] sm:$0xff]
      %v398 = vld [vmem:[%s381 + $0x50] sm:$0xff]
      %v399 = vld [vmem:[%s381 + $0x58] sm:$0xff]
      %v400 = vld [vmem:[%s381 + $0x60] sm:$0xf]
      %v401 = vld [vmem:[%s1] sm:$0xff]
      %v402 = vld [vmem:[%s1 + $0x8] sm:$0xff]
      %v403 = vld [vmem:[%s1 + $0x10] sm:$0xff]
      %v404 = vld [vmem:[%s1 + $0x18] sm:$0xff]
      %v405 = vld [vmem:[%s1 + $0x20] sm:$0xff]
      %v406 = vld [vmem:[%s1 + $0x28] sm:$0xff]
      %v407 = vld [vmem:[%s1 + $0x30] sm:$0xff]
      %v408 = vld [vmem:[%s1 + $0x38] sm:$0xff]
      %v409 = vld [vmem:[%s1 + $0x40] sm:$0xff]
      %v410 = vld [vmem:[%s1 + $0x48] sm:$0xff]
      %v411 = vld [vmem:[%s1 + $0x50] sm:$0xff]
      %v412 = vld [vmem:[%s1 + $0x58] sm:$0xff]
      %v413 = vld [vmem:[%s1 + $0x60] sm:$0xf]
      %vm414 = vcmask 64512
      %415 = vst.msk [vmem:[#allocation2] sm:$0xff] %vm414, 0.0
      %416 = vst.msk [vmem:[#allocation2 + $0x8] sm:$0xff] %vm414, 0.0
      %417 = vst.msk [vmem:[#allocation2 + $0x10] sm:$0xff] %vm414, 0.0
      %418 = vst.msk [vmem:[#allocation2 + $0x18] sm:$0xff] %vm414, 0.0
      %419 = vst.msk [vmem:[#allocation2 + $0x20] sm:$0xff] %vm414, 0.0
      %420 = vst.msk [vmem:[#allocation2 + $0x28] sm:$0xff] %vm414, 0.0
      %421 = vst.msk [vmem:[#allocation2 + $0x30] sm:$0xff] %vm414, 0.0
      %422 = vst.msk [vmem:[#allocation2 + $0x38] sm:$0xff] %vm414, 0.0
      %423 = vst.msk [vmem:[#allocation2 + $0x40] sm:$0xff] %vm414, 0.0
      %424 = vst.msk [vmem:[#allocation2 + $0x48] sm:$0xff] %vm414, 0.0
      %425 = vst.msk [vmem:[#allocation2 + $0x50] sm:$0xff] %vm414, 0.0
      %426 = vst.msk [vmem:[#allocation2 + $0x58] sm:$0xff] %vm414, 0.0
      %427 = vst.msk [vmem:[#allocation2 + $0x60] sm:$0xff] %vm414, 0.0
      %428 = vst.msk [vmem:[#allocation2 + $0x68] sm:$0xff] %vm414, 0.0
      %429 = vst.msk [vmem:[#allocation2 + $0x70] sm:$0xff] %vm414, 0.0
      %430 = vst.msk [vmem:[#allocation2 + $0x78] sm:$0xff] %vm414, 0.0
      %vm431 = vcmask 60416
      %432 = vst.msk [vmem:[#allocation2 + $0x80] sm:$0xf] %vm431, 0.0
      %v433 = vld [vmem:[%s2] sm:$0x1]
      %v434 = vld [vmem:[%s3] sm:$0x1]
      %v436 = vlaneseq
      %v437 = vshrl.u32 %v436, 7
      %v438 = vsub.s32 0, %v437
      %v439 = vrot.slane %v433, %v438
      %v441 = vmul.f32 %v388, %v439
      %v442 = vmul.f32 %v389, %v439
      %v443 = vmul.f32 %v390, %v439
      %v444 = vmul.f32 %v391, %v439
      %v445 = vmul.f32 %v392, %v439
      %v446 = vmul.f32 %v393, %v439
      %v447 = vmul.f32 %v394, %v439
      %v448 = vmul.f32 %v395, %v439
      %v449 = vmul.f32 %v396, %v439
      %v450 = vmul.f32 %v397, %v439
      %v451 = vmul.f32 %v398, %v439
      %v452 = vmul.f32 %v399, %v439
      %v453 = vmul.f32 %v400, %v439
      %v455 = vlaneseq
      %v456 = vshrl.u32 %v455, 7
      %v457 = vsub.s32 0, %v456
      %v458 = vrot.slane %v434, %v457
      %v460 = vadd.f32 %v441, %v458
      %v461 = vadd.f32 %v442, %v458
      %v462 = vadd.f32 %v443, %v458
      %v463 = vadd.f32 %v444, %v458
      %v464 = vadd.f32 %v445, %v458
      %v465 = vadd.f32 %v446, %v458
      %v466 = vadd.f32 %v447, %v458
      %v467 = vadd.f32 %v448, %v458
      %v468 = vadd.f32 %v449, %v458
      %v469 = vadd.f32 %v450, %v458
      %v470 = vadd.f32 %v451, %v458
      %v471 = vadd.f32 %v452, %v458
      %v472 = vadd.f32 %v453, %v458
      %vm473 = vcmp.gt.f32.partialorder %v460, 0.0
      %vm474 = vcmp.gt.f32.partialorder %v461, 0.0
      %vm475 = vcmp.gt.f32.partialorder %v462, 0.0
      %vm476 = vcmp.gt.f32.partialorder %v463, 0.0
      %vm477 = vcmp.gt.f32.partialorder %v464, 0.0
      %vm478 = vcmp.gt.f32.partialorder %v465, 0.0
      %vm479 = vcmp.gt.f32.partialorder %v466, 0.0
      %vm480 = vcmp.gt.f32.partialorder %v467, 0.0
      %vm481 = vcmp.gt.f32.partialorder %v468, 0.0
      %vm482 = vcmp.gt.f32.partialorder %v469, 0.0
      %vm483 = vcmp.gt.f32.partialorder %v470, 0.0
      %vm484 = vcmp.gt.f32.partialorder %v471, 0.0
      %vm485 = vcmp.gt.f32.partialorder %v472, 0.0
      %v486 = vmul.f32 %v460, 0.01
      %v487 = vmul.f32 %v461, 0.01
      %v488 = vmul.f32 %v462, 0.01
      %v489 = vmul.f32 %v463, 0.01
      %v490 = vmul.f32 %v464, 0.01
      %v491 = vmul.f32 %v465, 0.01
      %v492 = vmul.f32 %v466, 0.01
      %v493 = vmul.f32 %v467, 0.01
      %v494 = vmul.f32 %v468, 0.01
      %v495 = vmul.f32 %v469, 0.01
      %v496 = vmul.f32 %v470, 0.01
      %v497 = vmul.f32 %v471, 0.01
      %v498 = vmul.f32 %v472, 0.01
      %v499 = vsel %vm473, %v460, %v486
      %v500 = vsel %vm474, %v461, %v487
      %v501 = vsel %vm475, %v462, %v488
      %v502 = vsel %vm476, %v463, %v489
      %v503 = vsel %vm477, %v464, %v490
      %v504 = vsel %vm478, %v465, %v491
      %v505 = vsel %vm479, %v466, %v492
      %v506 = vsel %vm480, %v467, %v493
      %v507 = vsel %vm481, %v468, %v494
      %v508 = vsel %vm482, %v469, %v495
      %v509 = vsel %vm483, %v470, %v496
      %v510 = vsel %vm484, %v471, %v497
      %v511 = vsel %vm485, %v472, %v498
      %513 = vset.pattern.permute.xlu0 0
      %514 = vperm.xlu0 %513, %v401
      %v515 = vpop.permute.xlu0 %514
      %518 = vset.pattern.permute.xlu0 0
      %519 = vperm.xlu0 %518, %v402
      %v520 = vpop.permute.xlu0 %519
      %523 = vset.pattern.permute.xlu0 0
      %524 = vperm.xlu0 %523, %v403
      %v525 = vpop.permute.xlu0 %524
      %528 = vset.pattern.permute.xlu0 0
      %529 = vperm.xlu0 %528, %v404
      %v530 = vpop.permute.xlu0 %529
      %533 = vset.pattern.permute.xlu0 0
      %534 = vperm.xlu0 %533, %v405
      %v535 = vpop.permute.xlu0 %534
      %538 = vset.pattern.permute.xlu0 0
      %539 = vperm.xlu0 %538, %v406
      %v540 = vpop.permute.xlu0 %539
      %543 = vset.pattern.permute.xlu0 0
      %544 = vperm.xlu0 %543, %v407
      %v545 = vpop.permute.xlu0 %544
      %548 = vset.pattern.permute.xlu0 0
      %549 = vperm.xlu0 %548, %v408
      %v550 = vpop.permute.xlu0 %549
      %553 = vset.pattern.permute.xlu0 0
      %554 = vperm.xlu0 %553, %v409
      %v555 = vpop.permute.xlu0 %554
      %558 = vset.pattern.permute.xlu0 0
      %559 = vperm.xlu0 %558, %v410
      %v560 = vpop.permute.xlu0 %559
      %563 = vset.pattern.permute.xlu0 0
      %564 = vperm.xlu0 %563, %v411
      %v565 = vpop.permute.xlu0 %564
      %568 = vset.pattern.permute.xlu0 0
      %569 = vperm.xlu0 %568, %v412
      %v570 = vpop.permute.xlu0 %569
      %573 = vset.pattern.permute.xlu0 0
      %574 = vperm.xlu0 %573, %v413
      %v575 = vpop.permute.xlu0 %574
      %v577 = vmul.f32 %v499, %v515
      %v578 = vmul.f32 %v500, %v520
      %v579 = vmul.f32 %v501, %v525
      %v580 = vmul.f32 %v502, %v530
      %v581 = vmul.f32 %v503, %v535
      %v582 = vmul.f32 %v504, %v540
      %v583 = vmul.f32 %v505, %v545
      %v584 = vmul.f32 %v506, %v550
      %v585 = vmul.f32 %v507, %v555
      %v586 = vmul.f32 %v508, %v560
      %v587 = vmul.f32 %v509, %v565
      %v588 = vmul.f32 %v510, %v570
      %v589 = vmul.f32 %v511, %v575
      %v590 = vld [vmem:[%s4] sm:$0xf]
      %v591 = vld [vmem:[%s4 + $0x4] sm:$0xf]
      %v592 = vpack.c.bf16 %v578, %v577
      %v593 = vpack.c.bf16 %v580, %v579
      %v594 = vpack.c.bf16 %v582, %v581
      %v595 = vpack.c.bf16 %v584, %v583
      %v596 = vpack.c.bf16 %v586, %v585
      %v597 = vpack.c.bf16 %v588, %v587
      %v598 = vpack.c.bf16 %v589, %v589
      %v601 = vunpack.c.l.b16 %v590
      %v602 = vunpack.c.l.b16 %v591
      %v603 = vpack.c.b16 %v602, %v601
      %vm605 = vcmask 130048
      %v607 = vsel %vm605, %v592, 0
      %v610 = vsel %vm605, %v593, 0
      %v613 = vsel %vm605, %v594, 0
      %v616 = vsel %vm605, %v595, 0
      %v619 = vsel %vm605, %v596, 0
      %v622 = vsel %vm605, %v597, 0
      %v625 = vsel %vm605, %v598, 0
      %627 = vmatprep.subr.bf16.mxu0 0
      %628 = vmatpush1.bf16.msra.mxu0 %v603
      %629 = vmatprep.subr.bf16.mxu0 0
      %630 = vmatpush1.bf16.msra.mxu0 0
      %631 = vmatprep.subr.bf16.mxu0 0
      %632 = vmatpush1.bf16.msra.mxu0 0
      %633 = vmatprep.subr.bf16.mxu0 0
      %634 = vmatpush1.bf16.msra.mxu0 0
      %635 = vmatprep.subr.bf16.mxu0 0
      %636 = vmatpush1.bf16.msra.mxu0 0
      %637 = vmatprep.subr.bf16.mxu0 0
      %638 = vmatpush1.bf16.msra.mxu0 0
      %639 = vmatprep.subr.bf16.mxu0 0
      %640 = vmatpush1.bf16.msra.mxu0 0
      %641 = vmatprep.subr.bf16.mxu0 0
      %642 = vmatpush1.bf16.msra.mxu0 0
      %643 = vmatprep.subr.bf16.mxu0 0
      %644 = vmatpush1.bf16.msra.mxu0 0
      %645 = vmatprep.subr.bf16.mxu0 0
      %646 = vmatpush1.bf16.msra.mxu0 0
      %647 = vmatprep.subr.bf16.mxu0 0
      %648 = vmatpush1.bf16.msra.mxu0 0
      %649 = vmatprep.subr.bf16.mxu0 0
      %650 = vmatpush1.bf16.msra.mxu0 0
      %651 = vmatprep.subr.bf16.mxu0 0
      %652 = vmatpush1.bf16.msra.mxu0 0
      %653 = vmatprep.subr.bf16.mxu0 0
      %654 = vmatpush1.bf16.msra.mxu0 0
      %655 = vmatprep.subr.bf16.mxu0 0
      %656 = vmatpush1.bf16.msra.mxu0 0
      %657 = vmatprep.subr.bf16.mxu0 0
      %658 = vmatpush1.bf16.msra.mxu0 0
      %659 = vmatprep.mubr.bf16.mxu0 0
      %660 = vmatmul.mubr.bf16.gmra.mrb[0].mxu0 %v607
      %v661 = vpop.f32.mrb[0].mxu0
      %v662 = vadd.f32 0.0, %v661
      %v663 = vpop.f32.mrb[0].mxu0
      %v664 = vpop.f32.mrb[0].mxu0
      %v665 = vadd.f32 0.0, %v664
      %v666 = vpop.f32.mrb[0].mxu0
      %667 = vmatprep.mubr.bf16.mxu0 0
      %668 = vmatmul.mubr.bf16.gmra.mrb[0].mxu0 %v610
      %v669 = vpop.f32.mrb[0].mxu0
      %v670 = vadd.f32 0.0, %v669
      %v671 = vpop.f32.mrb[0].mxu0
      %v672 = vpop.f32.mrb[0].mxu0
      %v673 = vadd.f32 0.0, %v672
      %v674 = vpop.f32.mrb[0].mxu0
      %675 = vmatprep.mubr.bf16.mxu0 0
      %676 = vmatmul.mubr.bf16.gmra.mrb[0].mxu0 %v613
      %v677 = vpop.f32.mrb[0].mxu0
      %v678 = vadd.f32 0.0, %v677
      %v679 = vpop.f32.mrb[0].mxu0
      %v680 = vpop.f32.mrb[0].mxu0
      %v681 = vadd.f32 0.0, %v680
      %v682 = vpop.f32.mrb[0].mxu0
      %683 = vmatprep.mubr.bf16.mxu0 0
      %684 = vmatmul.mubr.bf16.gmra.mrb[0].mxu0 %v616
      %v685 = vpop.f32.mrb[0].mxu0
      %v686 = vadd.f32 0.0, %v685
      %v687 = vpop.f32.mrb[0].mxu0
      %v688 = vpop.f32.mrb[0].mxu0
      %v689 = vadd.f32 0.0, %v688
      %v690 = vpop.f32.mrb[0].mxu0
      %691 = vmatprep.mubr.bf16.mxu0 0
      %692 = vmatmul.mubr.bf16.gmra.mrb[0].mxu0 %v619
      %v693 = vpop.f32.mrb[0].mxu0
      %v694 = vadd.f32 0.0, %v693
      %v695 = vpop.f32.mrb[0].mxu0
      %v696 = vpop.f32.mrb[0].mxu0
      %v697 = vadd.f32 0.0, %v696
      %v698 = vpop.f32.mrb[0].mxu0
      %699 = vmatprep.mubr.bf16.mxu0 0
      %700 = vmatmul.mubr.bf16.gmra.mrb[0].mxu0 %v622
      %v701 = vpop.f32.mrb[0].mxu0
      %v702 = vadd.f32 0.0, %v701
      %v703 = vpop.f32.mrb[0].mxu0
      %v704 = vpop.f32.mrb[0].mxu0
      %v705 = vadd.f32 0.0, %v704
      %v706 = vpop.f32.mrb[0].mxu0
      %707 = vmatprep.mubr.bf16.mxu0 0
      %708 = vmatmul.mubr.bf16.gmra.mrb[0].mxu0 %v625
      %v709 = vpop.f32.mrb[0].mxu0
      %v710 = vadd.f32 0.0, %v709
      %v711 = vpop.f32.mrb[0].mxu0
      %v712 = vpop.f32.mrb[0].mxu0
      %v713 = vpop.f32.mrb[0].mxu0
      %714 = vdwg.mxu0
      %v715 = vld [vmem:[%s5] sm:$0x1]
      %v716 = vld [vmem:[%s6] sm:$0x1]
      %v718 = vlaneseq
      %v719 = vshrl.u32 %v718, 7
      %v720 = vsub.s32 0, %v719
      %v721 = vrot.slane %v715, %v720
      %v723 = vmul.f32 %v662, %v721
      %v724 = vmul.f32 %v665, %v721
      %v725 = vmul.f32 %v670, %v721
      %v726 = vmul.f32 %v673, %v721
      %v727 = vmul.f32 %v678, %v721
      %v728 = vmul.f32 %v681, %v721
      %v729 = vmul.f32 %v686, %v721
      %v730 = vmul.f32 %v689, %v721
      %v731 = vmul.f32 %v694, %v721
      %v732 = vmul.f32 %v697, %v721
      %v733 = vmul.f32 %v702, %v721
      %v734 = vmul.f32 %v705, %v721
      %v735 = vmul.f32 %v710, %v721
      %v737 = vlaneseq
      %v738 = vshrl.u32 %v737, 7
      %v739 = vsub.s32 0, %v738
      %v740 = vrot.slane %v716, %v739
      %v742 = vadd.f32 %v723, %v740
      %v743 = vadd.f32 %v724, %v740
      %v744 = vadd.f32 %v725, %v740
      %v745 = vadd.f32 %v726, %v740
      %v746 = vadd.f32 %v727, %v740
      %v747 = vadd.f32 %v728, %v740
      %v748 = vadd.f32 %v729, %v740
      %v749 = vadd.f32 %v730, %v740
      %v750 = vadd.f32 %v731, %v740
      %v751 = vadd.f32 %v732, %v740
      %v752 = vadd.f32 %v733, %v740
      %v753 = vadd.f32 %v734, %v740
      %v754 = vadd.f32 %v735, %v740
      %vm755 = vcmp.gt.f32.partialorder %v742, 0.0
      %vm756 = vcmp.gt.f32.partialorder %v743, 0.0
      %vm757 = vcmp.gt.f32.partialorder %v744, 0.0
      %vm758 = vcmp.gt.f32.partialorder %v745, 0.0
      %vm759 = vcmp.gt.f32.partialorder %v746, 0.0
      %vm760 = vcmp.gt.f32.partialorder %v747, 0.0
      %vm761 = vcmp.gt.f32.partialorder %v748, 0.0
      %vm762 = vcmp.gt.f32.partialorder %v749, 0.0
      %vm763 = vcmp.gt.f32.partialorder %v750, 0.0
      %vm764 = vcmp.gt.f32.partialorder %v751, 0.0
      %vm765 = vcmp.gt.f32.partialorder %v752, 0.0
      %vm766 = vcmp.gt.f32.partialorder %v753, 0.0
      %vm767 = vcmp.gt.f32.partialorder %v754, 0.0
      %v768 = vmul.f32 %v742, 0.01
      %v769 = vmul.f32 %v743, 0.01
      %v770 = vmul.f32 %v744, 0.01
      %v771 = vmul.f32 %v745, 0.01
      %v772 = vmul.f32 %v746, 0.01
      %v773 = vmul.f32 %v747, 0.01
      %v774 = vmul.f32 %v748, 0.01
      %v775 = vmul.f32 %v749, 0.01
      %v776 = vmul.f32 %v750, 0.01
      %v777 = vmul.f32 %v751, 0.01
      %v778 = vmul.f32 %v752, 0.01
      %v779 = vmul.f32 %v753, 0.01
      %v780 = vmul.f32 %v754, 0.01
      %v781 = vsel %vm755, %v742, %v768
      %v782 = vsel %vm756, %v743, %v769
      %v783 = vsel %vm757, %v744, %v770
      %v784 = vsel %vm758, %v745, %v771
      %v785 = vsel %vm759, %v746, %v772
      %v786 = vsel %vm760, %v747, %v773
      %v787 = vsel %vm761, %v748, %v774
      %v788 = vsel %vm762, %v749, %v775
      %v789 = vsel %vm763, %v750, %v776
      %v790 = vsel %vm764, %v751, %v777
      %v791 = vsel %vm765, %v752, %v778
      %v792 = vsel %vm766, %v753, %v779
      %v793 = vsel %vm767, %v754, %v780
      %v794 = vmul.f32 %v781, %v515
      %v795 = vmul.f32 %v782, %v520
      %v796 = vmul.f32 %v783, %v525
      %v797 = vmul.f32 %v784, %v530
      %v798 = vmul.f32 %v785, %v535
      %v799 = vmul.f32 %v786, %v540
      %v800 = vmul.f32 %v787, %v545
      %v801 = vmul.f32 %v788, %v550
      %v802 = vmul.f32 %v789, %v555
      %v803 = vmul.f32 %v790, %v560
      %v804 = vmul.f32 %v791, %v565
      %v805 = vmul.f32 %v792, %v570
      %v806 = vmul.f32 %v793, %v575
      %807 = vst.msk [vmem:[#allocation2 + $0x10] sm:$0xff] %vm414, %v794
      %808 = vst.msk [vmem:[#allocation2 + $0x18] sm:$0xff] %vm414, %v795
      %809 = vst.msk [vmem:[#allocation2 + $0x20] sm:$0xff] %vm414, %v796
      %810 = vst.msk [vmem:[#allocation2 + $0x28] sm:$0xff] %vm414, %v797
      %811 = vst.msk [vmem:[#allocation2 + $0x30] sm:$0xff] %vm414, %v798
      %812 = vst.msk [vmem:[#allocation2 + $0x38] sm:$0xff] %vm414, %v799
      %813 = vst.msk [vmem:[#allocation2 + $0x40] sm:$0xff] %vm414, %v800
      %814 = vst.msk [vmem:[#allocation2 + $0x48] sm:$0xff] %vm414, %v801
      %815 = vst.msk [vmem:[#allocation2 + $0x50] sm:$0xff] %vm414, %v802
      %816 = vst.msk [vmem:[#allocation2 + $0x58] sm:$0xff] %vm414, %v803
      %817 = vst.msk [vmem:[#allocation2 + $0x60] sm:$0xff] %vm414, %v804
      %818 = vst.msk [vmem:[#allocation2 + $0x68] sm:$0xff] %vm414, %v805
      %819 = vst.msk [vmem:[#allocation2 + $0x70] sm:$0xf] %vm431, %v806
      %v820 = vld [vmem:[#allocation2 + $0x5] sm:$0xff]
      %v821 = vld [vmem:[#allocation2 + $0xd] sm:$0xff]
      %v822 = vld [vmem:[#allocation2 + $0x15] sm:$0xff]
      %v823 = vld [vmem:[#allocation2 + $0x1d] sm:$0xff]
      %v824 = vld [vmem:[#allocation2 + $0x25] sm:$0xff]
      %v825 = vld [vmem:[#allocation2 + $0x2d] sm:$0xff]
      %v826 = vld [vmem:[#allocation2 + $0x35] sm:$0xff]
      %v827 = vld [vmem:[#allocation2 + $0x3d] sm:$0xff]
      %v828 = vld [vmem:[#allocation2 + $0x45] sm:$0xff]
      %v829 = vld [vmem:[#allocation2 + $0x4d] sm:$0xff]
      %v830 = vld [vmem:[#allocation2 + $0x55] sm:$0xff]
      %v831 = vld [vmem:[#allocation2 + $0x5d] sm:$0xff]
      %v832 = vld [vmem:[#allocation2 + $0x65] sm:$0xf]
      %v833 = vpack.c.bf16 %v821, %v820
      %v834 = vpack.c.bf16 %v823, %v822
      %v835 = vpack.c.bf16 %v825, %v824
      %v836 = vpack.c.bf16 %v827, %v826
      %v837 = vpack.c.bf16 %v829, %v828
      %v838 = vpack.c.bf16 %v831, %v830
      %v839 = vpack.c.bf16 %v832, %v832
      %v840 = vld [vmem:[%s7] sm:$0xf]
      %v841 = vld [vmem:[#allocation2 + $0x6] sm:$0xff]
      %v842 = vld [vmem:[#allocation2 + $0xe] sm:$0xff]
      %v843 = vld [vmem:[#allocation2 + $0x16] sm:$0xff]
      %v844 = vld [vmem:[#allocation2 + $0x1e] sm:$0xff]
      %v845 = vld [vmem:[#allocation2 + $0x26] sm:$0xff]
      %v846 = vld [vmem:[#allocation2 + $0x2e] sm:$0xff]
      %v847 = vld [vmem:[#allocation2 + $0x36] sm:$0xff]
      %v848 = vld [vmem:[#allocation2 + $0x3e] sm:$0xff]
      %v849 = vld [vmem:[#allocation2 + $0x46] sm:$0xff]
      %v850 = vld [vmem:[#allocation2 + $0x4e] sm:$0xff]
      %v851 = vld [vmem:[#allocation2 + $0x56] sm:$0xff]
      %v852 = vld [vmem:[#allocation2 + $0x5e] sm:$0xff]
      %v853 = vld [vmem:[#allocation2 + $0x66] sm:$0xf]
      %v854 = vpack.c.bf16 %v842, %v841
      %v855 = vpack.c.bf16 %v844, %v843
      %v856 = vpack.c.bf16 %v846, %v845
      %v857 = vpack.c.bf16 %v848, %v847
      %v858 = vpack.c.bf16 %v850, %v849
      %v859 = vpack.c.bf16 %v852, %v851
      %v860 = vpack.c.bf16 %v853, %v853
      %s861 = scalar_lea.vmem %s7, 4
      %v862 = vld [vmem:[%s861] sm:$0xf]
      %v864 = vsel %vm414, %v854, 0
      %v867 = vsel %vm414, %v855, 0
      %v870 = vsel %vm414, %v856, 0
      %v873 = vsel %vm414, %v857, 0
      %v876 = vsel %vm414, %v858, 0
      %v879 = vsel %vm414, %v859, 0
      %v882 = vsel %vm414, %v860, 0
      %vm884 = vcmask 1043456
      %v886 = vsel %vm884, %v862, 0
      %888 = vmatprep.subr.bf16.mxu0 0
      %889 = vmatpush1.bf16.msra.mxu0 %v886
      %890 = vmatprep.subr.bf16.mxu0 0
      %891 = vmatpush1.bf16.msra.mxu0 0
      %892 = vmatprep.subr.bf16.mxu0 0
      %893 = vmatpush1.bf16.msra.mxu0 0
      %894 = vmatprep.subr.bf16.mxu0 0
      %895 = vmatpush1.bf16.msra.mxu0 0
      %896 = vmatprep.subr.bf16.mxu0 0
      %897 = vmatpush1.bf16.msra.mxu0 0
      %898 = vmatprep.subr.bf16.mxu0 0
      %899 = vmatpush1.bf16.msra.mxu0 0
      %900 = vmatprep.subr.bf16.mxu0 0
      %901 = vmatpush1.bf16.msra.mxu0 0
      %902 = vmatprep.subr.bf16.mxu0 0
      %903 = vmatpush1.bf16.msra.mxu0 0
      %904 = vmatprep.subr.bf16.mxu0 0
      %905 = vmatpush1.bf16.msra.mxu0 0
      %906 = vmatprep.subr.bf16.mxu0 0
      %907 = vmatpush1.bf16.msra.mxu0 0
      %908 = vmatprep.subr.bf16.mxu0 0
      %909 = vmatpush1.bf16.msra.mxu0 0
      %910 = vmatprep.subr.bf16.mxu0 0
      %911 = vmatpush1.bf16.msra.mxu0 0
      %912 = vmatprep.subr.bf16.mxu0 0
      %913 = vmatpush1.bf16.msra.mxu0 0
      %914 = vmatprep.subr.bf16.mxu0 0
      %915 = vmatpush1.bf16.msra.mxu0 0
      %916 = vmatprep.subr.bf16.mxu0 0
      %917 = vmatpush1.bf16.msra.mxu0 0
      %918 = vmatprep.subr.bf16.mxu0 0
      %919 = vmatpush1.bf16.msra.mxu0 0
      %920 = vmatprep.mubr.bf16.mxu0 0
      %921 = vmatmul.mubr.bf16.gmra.mrb[0].mxu0 %v864
      %v922 = vpop.f32.mrb[0].mxu0
      %v923 = vadd.f32 0.0, %v922
      %v924 = vpop.f32.mrb[0].mxu0
      %v925 = vpop.f32.mrb[0].mxu0
      %v926 = vadd.f32 0.0, %v925
      %v927 = vpop.f32.mrb[0].mxu0
      %928 = vmatprep.mubr.bf16.mxu0 0
      %929 = vmatmul.mubr.bf16.gmra.mrb[0].mxu0 %v867
      %v930 = vpop.f32.mrb[0].mxu0
      %v931 = vadd.f32 0.0, %v930
      %v932 = vpop.f32.mrb[0].mxu0
      %v933 = vpop.f32.mrb[0].mxu0
      %v934 = vadd.f32 0.0, %v933
      %v935 = vpop.f32.mrb[0].mxu0
      %936 = vmatprep.mubr.bf16.mxu0 0
      %937 = vmatmul.mubr.bf16.gmra.mrb[0].mxu0 %v870
      %v938 = vpop.f32.mrb[0].mxu0
      %v939 = vadd.f32 0.0, %v938
      %v940 = vpop.f32.mrb[0].mxu0
      %v941 = vpop.f32.mrb[0].mxu0
      %v942 = vadd.f32 0.0, %v941
      %v943 = vpop.f32.mrb[0].mxu0
      %944 = vmatprep.mubr.bf16.mxu0 0
      %945 = vmatmul.mubr.bf16.gmra.mrb[0].mxu0 %v873
      %v946 = vpop.f32.mrb[0].mxu0
      %v947 = vadd.f32 0.0, %v946
      %v948 = vpop.f32.mrb[0].mxu0
      %v949 = vpop.f32.mrb[0].mxu0
      %v950 = vadd.f32 0.0, %v949
      %v951 = vpop.f32.mrb[0].mxu0
      %952 = vmatprep.mubr.bf16.mxu0 0
      %953 = vmatmul.mubr.bf16.gmra.mrb[0].mxu0 %v876
      %v954 = vpop.f32.mrb[0].mxu0
      %v955 = vadd.f32 0.0, %v954
      %v956 = vpop.f32.mrb[0].mxu0
      %v957 = vpop.f32.mrb[0].mxu0
      %v958 = vadd.f32 0.0, %v957
      %v959 = vpop.f32.mrb[0].mxu0
      %960 = vmatprep.mubr.bf16.mxu0 0
      %961 = vmatmul.mubr.bf16.gmra.mrb[0].mxu0 %v879
      %v962 = vpop.f32.mrb[0].mxu0
      %v963 = vadd.f32 0.0, %v962
      %v964 = vpop.f32.mrb[0].mxu0
      %v965 = vpop.f32.mrb[0].mxu0
      %v966 = vadd.f32 0.0, %v965
      %v967 = vpop.f32.mrb[0].mxu0
      %968 = vmatprep.mubr.bf16.mxu0 0
      %969 = vmatmul.mubr.bf16.gmra.mrb[0].mxu0 %v882
      %v970 = vpop.f32.mrb[0].mxu0
      %v971 = vadd.f32 0.0, %v970
      %v972 = vpop.f32.mrb[0].mxu0
      %v973 = vpop.f32.mrb[0].mxu0
      %v974 = vpop.f32.mrb[0].mxu0
      %975 = vdwg.mxu0
      %v977 = vsel %vm414, %v833, 0
      %v980 = vsel %vm414, %v834, 0
      %v983 = vsel %vm414, %v835, 0
      %v986 = vsel %vm414, %v836, 0
      %v989 = vsel %vm414, %v837, 0
      %v992 = vsel %vm414, %v838, 0
      %v995 = vsel %vm414, %v839, 0
      %v998 = vsel %vm884, %v840, 0
      %1000 = vmatprep.subr.bf16.mxu0 0
      %1001 = vmatpush1.bf16.msra.mxu0 %v998
      %1002 = vmatprep.subr.bf16.mxu0 0
      %1003 = vmatpush1.bf16.msra.mxu0 0
      %1004 = vmatprep.subr.bf16.mxu0 0
      %1005 = vmatpush1.bf16.msra.mxu0 0
      %1006 = vmatprep.subr.bf16.mxu0 0
      %1007 = vmatpush1.bf16.msra.mxu0 0
      %1008 = vmatprep.subr.bf16.mxu0 0
      %1009 = vmatpush1.bf16.msra.mxu0 0
      %1010 = vmatprep.subr.bf16.mxu0 0
      %1011 = vmatpush1.bf16.msra.mxu0 0
      %1012 = vmatprep.subr.bf16.mxu0 0
      %1013 = vmatpush1.bf16.msra.mxu0 0
      %1014 = vmatprep.subr.bf16.mxu0 0
      %1015 = vmatpush1.bf16.msra.mxu0 0
      %1016 = vmatprep.subr.bf16.mxu0 0
      %1017 = vmatpush1.bf16.msra.mxu0 0
      %1018 = vmatprep.subr.bf16.mxu0 0
      %1019 = vmatpush1.bf16.msra.mxu0 0
      %1020 = vmatprep.subr.bf16.mxu0 0
      %1021 = vmatpush1.bf16.msra.mxu0 0
      %1022 = vmatprep.subr.bf16.mxu0 0
      %1023 = vmatpush1.bf16.msra.mxu0 0
      %1024 = vmatprep.subr.bf16.mxu0 0
      %1025 = vmatpush1.bf16.msra.mxu0 0
      %1026 = vmatprep.subr.bf16.mxu0 0
      %1027 = vmatpush1.bf16.msra.mxu0 0
      %1028 = vmatprep.subr.bf16.mxu0 0
      %1029 = vmatpush1.bf16.msra.mxu0 0
      %1030 = vmatprep.subr.bf16.mxu0 0
      %1031 = vmatpush1.bf16.msra.mxu0 0
      %1032 = vmatprep.mubr.bf16.mxu0 0
      %1033 = vmatmul.mubr.bf16.gmra.mrb[0].mxu0 %v977
      %v1034 = vpop.f32.mrb[0].mxu0
      %v1035 = vadd.f32 %v923, %v1034
      %v1036 = vpop.f32.mrb[0].mxu0
      %v1037 = vpop.f32.mrb[0].mxu0
      %v1038 = vadd.f32 %v926, %v1037
      %v1039 = vpop.f32.mrb[0].mxu0
      %1040 = vmatprep.mubr.bf16.mxu0 0
      %1041 = vmatmul.mubr.bf16.gmra.mrb[0].mxu0 %v980
      %v1042 = vpop.f32.mrb[0].mxu0
      %v1043 = vadd.f32 %v931, %v1042
      %v1044 = vpop.f32.mrb[0].mxu0
      %v1045 = vpop.f32.mrb[0].mxu0
      %v1046 = vadd.f32 %v934, %v1045
      %v1047 = vpop.f32.mrb[0].mxu0
      %1048 = vmatprep.mubr.bf16.mxu0 0
      %1049 = vmatmul.mubr.bf16.gmra.mrb[0].mxu0 %v983
      %v1050 = vpop.f32.mrb[0].mxu0
      %v1051 = vadd.f32 %v939, %v1050
      %v1052 = vpop.f32.mrb[0].mxu0
      %v1053 = vpop.f32.mrb[0].mxu0
      %v1054 = vadd.f32 %v942, %v1053
      %v1055 = vpop.f32.mrb[0].mxu0
      %1056 = vmatprep.mubr.bf16.mxu0 0
      %1057 = vmatmul.mubr.bf16.gmra.mrb[0].mxu0 %v986
      %v1058 = vpop.f32.mrb[0].mxu0
      %v1059 = vadd.f32 %v947, %v1058
      %v1060 = vpop.f32.mrb[0].mxu0
      %v1061 = vpop.f32.mrb[0].mxu0
      %v1062 = vadd.f32 %v950, %v1061
      %v1063 = vpop.f32.mrb[0].mxu0
      %1064 = vmatprep.mubr.bf16.mxu0 0
      %1065 = vmatmul.mubr.bf16.gmra.mrb[0].mxu0 %v989
      %v1066 = vpop.f32.mrb[0].mxu0
      %v1067 = vadd.f32 %v955, %v1066
      %v1068 = vpop.f32.mrb[0].mxu0
      %v1069 = vpop.f32.mrb[0].mxu0
      %v1070 = vadd.f32 %v958, %v1069
      %v1071 = vpop.f32.mrb[0].mxu0
      %1072 = vmatprep.mubr.bf16.mxu0 0
      %1073 = vmatmul.mubr.bf16.gmra.mrb[0].mxu0 %v992
      %v1074 = vpop.f32.mrb[0].mxu0
      %v1075 = vadd.f32 %v963, %v1074
      %v1076 = vpop.f32.mrb[0].mxu0
      %v1077 = vpop.f32.mrb[0].mxu0
      %v1078 = vadd.f32 %v966, %v1077
      %v1079 = vpop.f32.mrb[0].mxu0
      %1080 = vmatprep.mubr.bf16.mxu0 0
      %1081 = vmatmul.mubr.bf16.gmra.mrb[0].mxu0 %v995
      %v1082 = vpop.f32.mrb[0].mxu0
      %v1083 = vadd.f32 %v971, %v1082
      %v1084 = vpop.f32.mrb[0].mxu0
      %v1085 = vpop.f32.mrb[0].mxu0
      %v1086 = vpop.f32.mrb[0].mxu0
      %1087 = vdwg.mxu0
      %v1088 = vld [vmem:[#allocation2 + $0x7] sm:$0xff]
      %v1089 = vld [vmem:[#allocation2 + $0xf] sm:$0xff]
      %v1090 = vld [vmem:[#allocation2 + $0x17] sm:$0xff]
      %v1091 = vld [vmem:[#allocation2 + $0x1f] sm:$0xff]
      %v1092 = vld [vmem:[#allocation2 + $0x27] sm:$0xff]
      %v1093 = vld [vmem:[#allocation2 + $0x2f] sm:$0xff]
      %v1094 = vld [vmem:[#allocation2 + $0x37] sm:$0xff]
      %v1095 = vld [vmem:[#allocation2 + $0x3f] sm:$0xff]
      %v1096 = vld [vmem:[#allocation2 + $0x47] sm:$0xff]
      %v1097 = vld [vmem:[#allocation2 + $0x4f] sm:$0xff]
      %v1098 = vld [vmem:[#allocation2 + $0x57] sm:$0xff]
      %v1099 = vld [vmem:[#allocation2 + $0x5f] sm:$0xff]
      %v1100 = vld [vmem:[#allocation2 + $0x67] sm:$0xf]
      %v1101 = vpack.c.bf16 %v1089, %v1088
      %v1102 = vpack.c.bf16 %v1091, %v1090
      %v1103 = vpack.c.bf16 %v1093, %v1092
      %v1104 = vpack.c.bf16 %v1095, %v1094
      %v1105 = vpack.c.bf16 %v1097, %v1096
      %v1106 = vpack.c.bf16 %v1099, %v1098
      %v1107 = vpack.c.bf16 %v1100, %v1100
      %s1108 = scalar_lea.vmem %s7, 8
      %v1109 = vld [vmem:[%s1108] sm:$0xf]
      %v1111 = vsel %vm414, %v1101, 0
      %v1114 = vsel %vm414, %v1102, 0
      %v1117 = vsel %vm414, %v1103, 0
      %v1120 = vsel %vm414, %v1104, 0
      %v1123 = vsel %vm414, %v1105, 0
      %v1126 = vsel %vm414, %v1106, 0
      %v1129 = vsel %vm414, %v1107, 0
      %v1132 = vsel %vm884, %v1109, 0
      %1134 = vmatprep.subr.bf16.mxu0 0
      %1135 = vmatpush1.bf16.msra.mxu0 %v1132
      %1136 = vmatprep.subr.bf16.mxu0 0
      %1137 = vmatpush1.bf16.msra.mxu0 0
      %1138 = vmatprep.subr.bf16.mxu0 0
      %1139 = vmatpush1.bf16.msra.mxu0 0
      %1140 = vmatprep.subr.bf16.mxu0 0
      %1141 = vmatpush1.bf16.msra.mxu0 0
      %1142 = vmatprep.subr.bf16.mxu0 0
      %1143 = vmatpush1.bf16.msra.mxu0 0
      %1144 = vmatprep.subr.bf16.mxu0 0
      %1145 = vmatpush1.bf16.msra.mxu0 0
      %1146 = vmatprep.subr.bf16.mxu0 0
      %1147 = vmatpush1.bf16.msra.mxu0 0
      %1148 = vmatprep.subr.bf16.mxu0 0
      %1149 = vmatpush1.bf16.msra.mxu0 0
      %1150 = vmatprep.subr.bf16.mxu0 0
      %1151 = vmatpush1.bf16.msra.mxu0 0
      %1152 = vmatprep.subr.bf16.mxu0 0
      %1153 = vmatpush1.bf16.msra.mxu0 0
      %1154 = vmatprep.subr.bf16.mxu0 0
      %1155 = vmatpush1.bf16.msra.mxu0 0
      %1156 = vmatprep.subr.bf16.mxu0 0
      %1157 = vmatpush1.bf16.msra.mxu0 0
      %1158 = vmatprep.subr.bf16.mxu0 0
      %1159 = vmatpush1.bf16.msra.mxu0 0
      %1160 = vmatprep.subr.bf16.mxu0 0
      %1161 = vmatpush1.bf16.msra.mxu0 0
      %1162 = vmatprep.subr.bf16.mxu0 0
      %1163 = vmatpush1.bf16.msra.mxu0 0
      %1164 = vmatprep.subr.bf16.mxu0 0
      %1165 = vmatpush1.bf16.msra.mxu0 0
      %1166 = vmatprep.mubr.bf16.mxu0 0
      %1167 = vmatmul.mubr.bf16.gmra.mrb[0].mxu0 %v1111
      %v1168 = vpop.f32.mrb[0].mxu0
      %v1169 = vadd.f32 0.0, %v1168
      %v1170 = vpop.f32.mrb[0].mxu0
      %v1171 = vpop.f32.mrb[0].mxu0
      %v1172 = vadd.f32 0.0, %v1171
      %v1173 = vpop.f32.mrb[0].mxu0
      %1174 = vmatprep.mubr.bf16.mxu0 0
      %1175 = vmatmul.mubr.bf16.gmra.mrb[0].mxu0 %v1114
      %v1176 = vpop.f32.mrb[0].mxu0
      %v1177 = vadd.f32 0.0, %v1176
      %v1178 = vpop.f32.mrb[0].mxu0
      %v1179 = vpop.f32.mrb[0].mxu0
      %v1180 = vadd.f32 0.0, %v1179
      %v1181 = vpop.f32.mrb[0].mxu0
      %1182 = vmatprep.mubr.bf16.mxu0 0
      %1183 = vmatmul.mubr.bf16.gmra.mrb[0].mxu0 %v1117
      %v1184 = vpop.f32.mrb[0].mxu0
      %v1185 = vadd.f32 0.0, %v1184
      %v1186 = vpop.f32.mrb[0].mxu0
      %v1187 = vpop.f32.mrb[0].mxu0
      %v1188 = vadd.f32 0.0, %v1187
      %v1189 = vpop.f32.mrb[0].mxu0
      %1190 = vmatprep.mubr.bf16.mxu0 0
      %1191 = vmatmul.mubr.bf16.gmra.mrb[0].mxu0 %v1120
      %v1192 = vpop.f32.mrb[0].mxu0
      %v1193 = vadd.f32 0.0, %v1192
      %v1194 = vpop.f32.mrb[0].mxu0
      %v1195 = vpop.f32.mrb[0].mxu0
      %v1196 = vadd.f32 0.0, %v1195
      %v1197 = vpop.f32.mrb[0].mxu0
      %1198 = vmatprep.mubr.bf16.mxu0 0
      %1199 = vmatmul.mubr.bf16.gmra.mrb[0].mxu0 %v1123
      %v1200 = vpop.f32.mrb[0].mxu0
      %v1201 = vadd.f32 0.0, %v1200
      %v1202 = vpop.f32.mrb[0].mxu0
      %v1203 = vpop.f32.mrb[0].mxu0
      %v1204 = vadd.f32 0.0, %v1203
      %v1205 = vpop.f32.mrb[0].mxu0
      %1206 = vmatprep.mubr.bf16.mxu0 0
      %1207 = vmatmul.mubr.bf16.gmra.mrb[0].mxu0 %v1126
      %v1208 = vpop.f32.mrb[0].mxu0
      %v1209 = vadd.f32 0.0, %v1208
      %v1210 = vpop.f32.mrb[0].mxu0
      %v1211 = vpop.f32.mrb[0].mxu0
      %v1212 = vadd.f32 0.0, %v1211
      %v1213 = vpop.f32.mrb[0].mxu0
      %1214 = vmatprep.mubr.bf16.mxu0 0
      %1215 = vmatmul.mubr.bf16.gmra.mrb[0].mxu0 %v1129
      %v1216 = vpop.f32.mrb[0].mxu0
      %v1217 = vadd.f32 0.0, %v1216
      %v1218 = vpop.f32.mrb[0].mxu0
      %v1219 = vpop.f32.mrb[0].mxu0
      %v1220 = vpop.f32.mrb[0].mxu0
      %1221 = vdwg.mxu0
      %v1222 = vadd.f32 %v1035, %v1169
      %v1223 = vadd.f32 %v1038, %v1172
      %v1224 = vadd.f32 %v1043, %v1177
      %v1225 = vadd.f32 %v1046, %v1180
      %v1226 = vadd.f32 %v1051, %v1185
      %v1227 = vadd.f32 %v1054, %v1188
      %v1228 = vadd.f32 %v1059, %v1193
      %v1229 = vadd.f32 %v1062, %v1196
      %v1230 = vadd.f32 %v1067, %v1201
      %v1231 = vadd.f32 %v1070, %v1204
      %v1232 = vadd.f32 %v1075, %v1209
      %v1233 = vadd.f32 %v1078, %v1212
      %v1234 = vadd.f32 %v1083, %v1217
      %v1235 = vld [vmem:[#allocation2 + $0xf] sm:$0xff]
      %v1236 = vld [vmem:[#allocation2 + $0x17] sm:$0xff]
      %v1237 = vld [vmem:[#allocation2 + $0x1f] sm:$0xff]
      %v1238 = vld [vmem:[#allocation2 + $0x27] sm:$0xff]
      %v1239 = vld [vmem:[#allocation2 + $0x2f] sm:$0xff]
      %v1240 = vld [vmem:[#allocation2 + $0x37] sm:$0xff]
      %v1241 = vld [vmem:[#allocation2 + $0x3f] sm:$0xff]
      %v1242 = vld [vmem:[#allocation2 + $0x47] sm:$0xff]
      %v1243 = vld [vmem:[#allocation2 + $0x4f] sm:$0xff]
      %v1244 = vld [vmem:[#allocation2 + $0x57] sm:$0xff]
      %v1245 = vld [vmem:[#allocation2 + $0x5f] sm:$0xff]
      %v1246 = vld [vmem:[#allocation2 + $0x67] sm:$0xff]
      %v1247 = vld [vmem:[#allocation2 + $0x6f] sm:$0xf]
      %v1248 = vpack.c.bf16 %v1236, %v1235
      %v1249 = vpack.c.bf16 %v1238, %v1237
      %v1250 = vpack.c.bf16 %v1240, %v1239
      %v1251 = vpack.c.bf16 %v1242, %v1241
      %v1252 = vpack.c.bf16 %v1244, %v1243
      %v1253 = vpack.c.bf16 %v1246, %v1245
      %v1254 = vpack.c.bf16 %v1247, %v1247
      %s1255 = scalar_lea.vmem %s7, 12
      %v1256 = vld [vmem:[%s1255] sm:$0xf]
      %v1258 = vsel %vm414, %v1248, 0
      %v1261 = vsel %vm414, %v1249, 0
      %v1264 = vsel %vm414, %v1250, 0
      %v1267 = vsel %vm414, %v1251, 0
      %v1270 = vsel %vm414, %v1252, 0
      %v1273 = vsel %vm414, %v1253, 0
      %v1276 = vsel %vm414, %v1254, 0
      %v1279 = vsel %vm884, %v1256, 0
      %1281 = vmatprep.subr.bf16.mxu0 0
      %1282 = vmatpush1.bf16.msra.mxu0 %v1279
      %1283 = vmatprep.subr.bf16.mxu0 0
      %1284 = vmatpush1.bf16.msra.mxu0 0
      %1285 = vmatprep.subr.bf16.mxu0 0
      %1286 = vmatpush1.bf16.msra.mxu0 0
      %1287 = vmatprep.subr.bf16.mxu0 0
      %1288 = vmatpush1.bf16.msra.mxu0 0
      %1289 = vmatprep.subr.bf16.mxu0 0
      %1290 = vmatpush1.bf16.msra.mxu0 0
      %1291 = vmatprep.subr.bf16.mxu0 0
      %1292 = vmatpush1.bf16.msra.mxu0 0
      %1293 = vmatprep.subr.bf16.mxu0 0
      %1294 = vmatpush1.bf16.msra.mxu0 0
      %1295 = vmatprep.subr.bf16.mxu0 0
      %1296 = vmatpush1.bf16.msra.mxu0 0
      %1297 = vmatprep.subr.bf16.mxu0 0
      %1298 = vmatpush1.bf16.msra.mxu0 0
      %1299 = vmatprep.subr.bf16.mxu0 0
      %1300 = vmatpush1.bf16.msra.mxu0 0
      %1301 = vmatprep.subr.bf16.mxu0 0
      %1302 = vmatpush1.bf16.msra.mxu0 0
      %1303 = vmatprep.subr.bf16.mxu0 0
      %1304 = vmatpush1.bf16.msra.mxu0 0
      %1305 = vmatprep.subr.bf16.mxu0 0
      %1306 = vmatpush1.bf16.msra.mxu0 0
      %1307 = vmatprep.subr.bf16.mxu0 0
      %1308 = vmatpush1.bf16.msra.mxu0 0
      %1309 = vmatprep.subr.bf16.mxu0 0
      %1310 = vmatpush1.bf16.msra.mxu0 0
      %1311 = vmatprep.subr.bf16.mxu0 0
      %1312 = vmatpush1.bf16.msra.mxu0 0
      %1313 = vmatprep.mubr.bf16.mxu0 0
      %1314 = vmatmul.mubr.bf16.gmra.mrb[0].mxu0 %v1258
      %v1315 = vpop.f32.mrb[0].mxu0
      %v1316 = vadd.f32 0.0, %v1315
      %v1317 = vpop.f32.mrb[0].mxu0
      %v1318 = vpop.f32.mrb[0].mxu0
      %v1319 = vadd.f32 0.0, %v1318
      %v1320 = vpop.f32.mrb[0].mxu0
      %1321 = vmatprep.mubr.bf16.mxu0 0
      %1322 = vmatmul.mubr.bf16.gmra.mrb[0].mxu0 %v1261
      %v1323 = vpop.f32.mrb[0].mxu0
      %v1324 = vadd.f32 0.0, %v1323
      %v1325 = vpop.f32.mrb[0].mxu0
      %v1326 = vpop.f32.mrb[0].mxu0
      %v1327 = vadd.f32 0.0, %v1326
      %v1328 = vpop.f32.mrb[0].mxu0
      %1329 = vmatprep.mubr.bf16.mxu0 0
      %1330 = vmatmul.mubr.bf16.gmra.mrb[0].mxu0 %v1264
      %v1331 = vpop.f32.mrb[0].mxu0
      %v1332 = vadd.f32 0.0, %v1331
      %v1333 = vpop.f32.mrb[0].mxu0
      %v1334 = vpop.f32.mrb[0].mxu0
      %v1335 = vadd.f32 0.0, %v1334
      %v1336 = vpop.f32.mrb[0].mxu0
      %1337 = vmatprep.mubr.bf16.mxu0 0
      %1338 = vmatmul.mubr.bf16.gmra.mrb[0].mxu0 %v1267
      %v1339 = vpop.f32.mrb[0].mxu0
      %v1340 = vadd.f32 0.0, %v1339
      %v1341 = vpop.f32.mrb[0].mxu0
      %v1342 = vpop.f32.mrb[0].mxu0
      %v1343 = vadd.f32 0.0, %v1342
      %v1344 = vpop.f32.mrb[0].mxu0
      %1345 = vmatprep.mubr.bf16.mxu0 0
      %1346 = vmatmul.mubr.bf16.gmra.mrb[0].mxu0 %v1270
      %v1347 = vpop.f32.mrb[0].mxu0
      %v1348 = vadd.f32 0.0, %v1347
      %v1349 = vpop.f32.mrb[0].mxu0
      %v1350 = vpop.f32.mrb[0].mxu0
      %v1351 = vadd.f32 0.0, %v1350
      %v1352 = vpop.f32.mrb[0].mxu0
      %1353 = vmatprep.mubr.bf16.mxu0 0
      %1354 = vmatmul.mubr.bf16.gmra.mrb[0].mxu0 %v1273
      %v1355 = vpop.f32.mrb[0].mxu0
      %v1356 = vadd.f32 0.0, %v1355
      %v1357 = vpop.f32.mrb[0].mxu0
      %v1358 = vpop.f32.mrb[0].mxu0
      %v1359 = vadd.f32 0.0, %v1358
      %v1360 = vpop.f32.mrb[0].mxu0
      %1361 = vmatprep.mubr.bf16.mxu0 0
      %1362 = vmatmul.mubr.bf16.gmra.mrb[0].mxu0 %v1276
      %v1363 = vpop.f32.mrb[0].mxu0
      %v1364 = vadd.f32 0.0, %v1363
      %v1365 = vpop.f32.mrb[0].mxu0
      %v1366 = vpop.f32.mrb[0].mxu0
      %v1367 = vpop.f32.mrb[0].mxu0
      %1368 = vdwg.mxu0
      %v1369 = vadd.f32 %v1222, %v1316
      %v1370 = vadd.f32 %v1223, %v1319
      %v1371 = vadd.f32 %v1224, %v1324
      %v1372 = vadd.f32 %v1225, %v1327
      %v1373 = vadd.f32 %v1226, %v1332
      %v1374 = vadd.f32 %v1227, %v1335
      %v1375 = vadd.f32 %v1228, %v1340
      %v1376 = vadd.f32 %v1229, %v1343
      %v1377 = vadd.f32 %v1230, %v1348
      %v1378 = vadd.f32 %v1231, %v1351
      %v1379 = vadd.f32 %v1232, %v1356
      %v1380 = vadd.f32 %v1233, %v1359
      %v1381 = vadd.f32 %v1234, %v1364
      %v1382 = vld [vmem:[#allocation2 + $0x10] sm:$0xff]
      %v1383 = vld [vmem:[#allocation2 + $0x18] sm:$0xff]
      %v1384 = vld [vmem:[#allocation2 + $0x20] sm:$0xff]
      %v1385 = vld [vmem:[#allocation2 + $0x28] sm:$0xff]
      %v1386 = vld [vmem:[#allocation2 + $0x30] sm:$0xff]
      %v1387 = vld [vmem:[#allocation2 + $0x38] sm:$0xff]
      %v1388 = vld [vmem:[#allocation2 + $0x40] sm:$0xff]
      %v1389 = vld [vmem:[#allocation2 + $0x48] sm:$0xff]
      %v1390 = vld [vmem:[#allocation2 + $0x50] sm:$0xff]
      %v1391 = vld [vmem:[#allocation2 + $0x58] sm:$0xff]
      %v1392 = vld [vmem:[#allocation2 + $0x60] sm:$0xff]
      %v1393 = vld [vmem:[#allocation2 + $0x68] sm:$0xff]
      %v1394 = vld [vmem:[#allocation2 + $0x70] sm:$0xf]
      %v1395 = vpack.c.bf16 %v1383, %v1382
      %v1396 = vpack.c.bf16 %v1385, %v1384
      %v1397 = vpack.c.bf16 %v1387, %v1386
      %v1398 = vpack.c.bf16 %v1389, %v1388
      %v1399 = vpack.c.bf16 %v1391, %v1390
      %v1400 = vpack.c.bf16 %v1393, %v1392
      %v1401 = vpack.c.bf16 %v1394, %v1394
      %s1402 = scalar_lea.vmem %s7, 16
      %v1403 = vld [vmem:[%s1402] sm:$0xf]
      %v1405 = vsel %vm414, %v1395, 0
      %v1408 = vsel %vm414, %v1396, 0
      %v1411 = vsel %vm414, %v1397, 0
      %v1414 = vsel %vm414, %v1398, 0
      %v1417 = vsel %vm414, %v1399, 0
      %v1420 = vsel %vm414, %v1400, 0
      %v1423 = vsel %vm414, %v1401, 0
      %v1426 = vsel %vm884, %v1403, 0
      %1428 = vmatprep.subr.bf16.mxu0 0
      %1429 = vmatpush1.bf16.msra.mxu0 %v1426
      %1430 = vmatprep.subr.bf16.mxu0 0
      %1431 = vmatpush1.bf16.msra.mxu0 0
      %1432 = vmatprep.subr.bf16.mxu0 0
      %1433 = vmatpush1.bf16.msra.mxu0 0
      %1434 = vmatprep.subr.bf16.mxu0 0
      %1435 = vmatpush1.bf16.msra.mxu0 0
      %1436 = vmatprep.subr.bf16.mxu0 0
      %1437 = vmatpush1.bf16.msra.mxu0 0
      %1438 = vmatprep.subr.bf16.mxu0 0
      %1439 = vmatpush1.bf16.msra.mxu0 0
      %1440 = vmatprep.subr.bf16.mxu0 0
      %1441 = vmatpush1.bf16.msra.mxu0 0
      %1442 = vmatprep.subr.bf16.mxu0 0
      %1443 = vmatpush1.bf16.msra.mxu0 0
      %1444 = vmatprep.subr.bf16.mxu0 0
      %1445 = vmatpush1.bf16.msra.mxu0 0
      %1446 = vmatprep.subr.bf16.mxu0 0
      %1447 = vmatpush1.bf16.msra.mxu0 0
      %1448 = vmatprep.subr.bf16.mxu0 0
      %1449 = vmatpush1.bf16.msra.mxu0 0
      %1450 = vmatprep.subr.bf16.mxu0 0
      %1451 = vmatpush1.bf16.msra.mxu0 0
      %1452 = vmatprep.subr.bf16.mxu0 0
      %1453 = vmatpush1.bf16.msra.mxu0 0
      %1454 = vmatprep.subr.bf16.mxu0 0
      %1455 = vmatpush1.bf16.msra.mxu0 0
      %1456 = vmatprep.subr.bf16.mxu0 0
      %1457 = vmatpush1.bf16.msra.mxu0 0
      %1458 = vmatprep.subr.bf16.mxu0 0
      %1459 = vmatpush1.bf16.msra.mxu0 0
      %1460 = vmatprep.mubr.bf16.mxu0 0
      %1461 = vmatmul.mubr.bf16.gmra.mrb[0].mxu0 %v1405
      %v1462 = vpop.f32.mrb[0].mxu0
      %v1463 = vadd.f32 0.0, %v1462
      %v1464 = vpop.f32.mrb[0].mxu0
      %v1465 = vpop.f32.mrb[0].mxu0
      %v1466 = vadd.f32 0.0, %v1465
      %v1467 = vpop.f32.mrb[0].mxu0
      %1468 = vmatprep.mubr.bf16.mxu0 0
      %1469 = vmatmul.mubr.bf16.gmra.mrb[0].mxu0 %v1408
      %v1470 = vpop.f32.mrb[0].mxu0
      %v1471 = vadd.f32 0.0, %v1470
      %v1472 = vpop.f32.mrb[0].mxu0
      %v1473 = vpop.f32.mrb[0].mxu0
      %v1474 = vadd.f32 0.0, %v1473
      %v1475 = vpop.f32.mrb[0].mxu0
      %1476 = vmatprep.mubr.bf16.mxu0 0
      %1477 = vmatmul.mubr.bf16.gmra.mrb[0].mxu0 %v1411
      %v1478 = vpop.f32.mrb[0].mxu0
      %v1479 = vadd.f32 0.0, %v1478
      %v1480 = vpop.f32.mrb[0].mxu0
      %v1481 = vpop.f32.mrb[0].mxu0
      %v1482 = vadd.f32 0.0, %v1481
      %v1483 = vpop.f32.mrb[0].mxu0
      %1484 = vmatprep.mubr.bf16.mxu0 0
      %1485 = vmatmul.mubr.bf16.gmra.mrb[0].mxu0 %v1414
      %v1486 = vpop.f32.mrb[0].mxu0
      %v1487 = vadd.f32 0.0, %v1486
      %v1488 = vpop.f32.mrb[0].mxu0
      %v1489 = vpop.f32.mrb[0].mxu0
      %v1490 = vadd.f32 0.0, %v1489
      %v1491 = vpop.f32.mrb[0].mxu0
      %1492 = vmatprep.mubr.bf16.mxu0 0
      %1493 = vmatmul.mubr.bf16.gmra.mrb[0].mxu0 %v1417
      %v1494 = vpop.f32.mrb[0].mxu0
      %v1495 = vadd.f32 0.0, %v1494
      %v1496 = vpop.f32.mrb[0].mxu0
      %v1497 = vpop.f32.mrb[0].mxu0
      %v1498 = vadd.f32 0.0, %v1497
      %v1499 = vpop.f32.mrb[0].mxu0
      %1500 = vmatprep.mubr.bf16.mxu0 0
      %1501 = vmatmul.mubr.bf16.gmra.mrb[0].mxu0 %v1420
      %v1502 = vpop.f32.mrb[0].mxu0
      %v1503 = vadd.f32 0.0, %v1502
      %v1504 = vpop.f32.mrb[0].mxu0
      %v1505 = vpop.f32.mrb[0].mxu0
      %v1506 = vadd.f32 0.0, %v1505
      %v1507 = vpop.f32.mrb[0].mxu0
      %1508 = vmatprep.mubr.bf16.mxu0 0
      %1509 = vmatmul.mubr.bf16.gmra.mrb[0].mxu0 %v1423
      %v1510 = vpop.f32.mrb[0].mxu0
      %v1511 = vadd.f32 0.0, %v1510
      %v1512 = vpop.f32.mrb[0].mxu0
      %v1513 = vpop.f32.mrb[0].mxu0
      %v1514 = vpop.f32.mrb[0].mxu0
      %1515 = vdwg.mxu0
      %v1516 = vadd.f32 %v1369, %v1463
      %v1517 = vadd.f32 %v1370, %v1466
      %v1518 = vadd.f32 %v1371, %v1471
      %v1519 = vadd.f32 %v1372, %v1474
      %v1520 = vadd.f32 %v1373, %v1479
      %v1521 = vadd.f32 %v1374, %v1482
      %v1522 = vadd.f32 %v1375, %v1487
      %v1523 = vadd.f32 %v1376, %v1490
      %v1524 = vadd.f32 %v1377, %v1495
      %v1525 = vadd.f32 %v1378, %v1498
      %v1526 = vadd.f32 %v1379, %v1503
      %v1527 = vadd.f32 %v1380, %v1506
      %v1528 = vadd.f32 %v1381, %v1511
      %v1529 = vld [vmem:[#allocation2 + $0x11] sm:$0xff]
      %v1530 = vld [vmem:[#allocation2 + $0x19] sm:$0xff]
      %v1531 = vld [vmem:[#allocation2 + $0x21] sm:$0xff]
      %v1532 = vld [vmem:[#allocation2 + $0x29] sm:$0xff]
      %v1533 = vld [vmem:[#allocation2 + $0x31] sm:$0xff]
      %v1534 = vld [vmem:[#allocation2 + $0x39] sm:$0xff]
      %v1535 = vld [vmem:[#allocation2 + $0x41] sm:$0xff]
      %v1536 = vld [vmem:[#allocation2 + $0x49] sm:$0xff]
      %v1537 = vld [vmem:[#allocation2 + $0x51] sm:$0xff]
      %v1538 = vld [vmem:[#allocation2 + $0x59] sm:$0xff]
      %v1539 = vld [vmem:[#allocation2 + $0x61] sm:$0xff]
      %v1540 = vld [vmem:[#allocation2 + $0x69] sm:$0xff]
      %v1541 = vld [vmem:[#allocation2 + $0x71] sm:$0xf]
      %v1542 = vpack.c.bf16 %v1530, %v1529
      %v1543 = vpack.c.bf16 %v1532, %v1531
      %v1544 = vpack.c.bf16 %v1534, %v1533
      %v1545 = vpack.c.bf16 %v1536, %v1535
      %v1546 = vpack.c.bf16 %v1538, %v1537
      %v1547 = vpack.c.bf16 %v1540, %v1539
      %v1548 = vpack.c.bf16 %v1541, %v1541
      %s1549 = scalar_lea.vmem %s7, 20
      %v1550 = vld [vmem:[%s1549] sm:$0xf]
      %v1552 = vsel %vm414, %v1542, 0
      %v1555 = vsel %vm414, %v1543, 0
      %v1558 = vsel %vm414, %v1544, 0
      %v1561 = vsel %vm414, %v1545, 0
      %v1564 = vsel %vm414, %v1546, 0
      %v1567 = vsel %vm414, %v1547, 0
      %v1570 = vsel %vm414, %v1548, 0
      %v1573 = vsel %vm884, %v1550, 0
      %1575 = vmatprep.subr.bf16.mxu0 0
      %1576 = vmatpush1.bf16.msra.mxu0 %v1573
      %1577 = vmatprep.subr.bf16.mxu0 0
      %1578 = vmatpush1.bf16.msra.mxu0 0
      %1579 = vmatprep.subr.bf16.mxu0 0
      %1580 = vmatpush1.bf16.msra.mxu0 0
      %1581 = vmatprep.subr.bf16.mxu0 0
      %1582 = vmatpush1.bf16.msra.mxu0 0
      %1583 = vmatprep.subr.bf16.mxu0 0
      %1584 = vmatpush1.bf16.msra.mxu0 0
      %1585 = vmatprep.subr.bf16.mxu0 0
      %1586 = vmatpush1.bf16.msra.mxu0 0
      %1587 = vmatprep.subr.bf16.mxu0 0
      %1588 = vmatpush1.bf16.msra.mxu0 0
      %1589 = vmatprep.subr.bf16.mxu0 0
      %1590 = vmatpush1.bf16.msra.mxu0 0
      %1591 = vmatprep.subr.bf16.mxu0 0
      %1592 = vmatpush1.bf16.msra.mxu0 0
      %1593 = vmatprep.subr.bf16.mxu0 0
      %1594 = vmatpush1.bf16.msra.mxu0 0
      %1595 = vmatprep.subr.bf16.mxu0 0
      %1596 = vmatpush1.bf16.msra.mxu0 0
      %1597 = vmatprep.subr.bf16.mxu0 0
      %1598 = vmatpush1.bf16.msra.mxu0 0
      %1599 = vmatprep.subr.bf16.mxu0 0
      %1600 = vmatpush1.bf16.msra.mxu0 0
      %1601 = vmatprep.subr.bf16.mxu0 0
      %1602 = vmatpush1.bf16.msra.mxu0 0
      %1603 = vmatprep.subr.bf16.mxu0 0
      %1604 = vmatpush1.bf16.msra.mxu0 0
      %1605 = vmatprep.subr.bf16.mxu0 0
      %1606 = vmatpush1.bf16.msra.mxu0 0
      %1607 = vmatprep.mubr.bf16.mxu0 0
      %1608 = vmatmul.mubr.bf16.gmra.mrb[0].mxu0 %v1552
      %v1609 = vpop.f32.mrb[0].mxu0
      %v1610 = vadd.f32 0.0, %v1609
      %v1611 = vpop.f32.mrb[0].mxu0
      %v1612 = vpop.f32.mrb[0].mxu0
      %v1613 = vadd.f32 0.0, %v1612
      %v1614 = vpop.f32.mrb[0].mxu0
      %1615 = vmatprep.mubr.bf16.mxu0 0
      %1616 = vmatmul.mubr.bf16.gmra.mrb[0].mxu0 %v1555
      %v1617 = vpop.f32.mrb[0].mxu0
      %v1618 = vadd.f32 0.0, %v1617
      %v1619 = vpop.f32.mrb[0].mxu0
      %v1620 = vpop.f32.mrb[0].mxu0
      %v1621 = vadd.f32 0.0, %v1620
      %v1622 = vpop.f32.mrb[0].mxu0
      %1623 = vmatprep.mubr.bf16.mxu0 0
      %1624 = vmatmul.mubr.bf16.gmra.mrb[0].mxu0 %v1558
      %v1625 = vpop.f32.mrb[0].mxu0
      %v1626 = vadd.f32 0.0, %v1625
      %v1627 = vpop.f32.mrb[0].mxu0
      %v1628 = vpop.f32.mrb[0].mxu0
      %v1629 = vadd.f32 0.0, %v1628
      %v1630 = vpop.f32.mrb[0].mxu0
      %1631 = vmatprep.mubr.bf16.mxu0 0
      %1632 = vmatmul.mubr.bf16.gmra.mrb[0].mxu0 %v1561
      %v1633 = vpop.f32.mrb[0].mxu0
      %v1634 = vadd.f32 0.0, %v1633
      %v1635 = vpop.f32.mrb[0].mxu0
      %v1636 = vpop.f32.mrb[0].mxu0
      %v1637 = vadd.f32 0.0, %v1636
      %v1638 = vpop.f32.mrb[0].mxu0
      %1639 = vmatprep.mubr.bf16.mxu0 0
      %1640 = vmatmul.mubr.bf16.gmra.mrb[0].mxu0 %v1564
      %v1641 = vpop.f32.mrb[0].mxu0
      %v1642 = vadd.f32 0.0, %v1641
      %v1643 = vpop.f32.mrb[0].mxu0
      %v1644 = vpop.f32.mrb[0].mxu0
      %v1645 = vadd.f32 0.0, %v1644
      %v1646 = vpop.f32.mrb[0].mxu0
      %1647 = vmatprep.mubr.bf16.mxu0 0
      %1648 = vmatmul.mubr.bf16.gmra.mrb[0].mxu0 %v1567
      %v1649 = vpop.f32.mrb[0].mxu0
      %v1650 = vadd.f32 0.0, %v1649
      %v1651 = vpop.f32.mrb[0].mxu0
      %v1652 = vpop.f32.mrb[0].mxu0
      %v1653 = vadd.f32 0.0, %v1652
      %v1654 = vpop.f32.mrb[0].mxu0
      %1655 = vmatprep.mubr.bf16.mxu0 0
      %1656 = vmatmul.mubr.bf16.gmra.mrb[0].mxu0 %v1570
      %v1657 = vpop.f32.mrb[0].mxu0
      %v1658 = vadd.f32 0.0, %v1657
      %v1659 = vpop.f32.mrb[0].mxu0
      %v1660 = vpop.f32.mrb[0].mxu0
      %v1661 = vpop.f32.mrb[0].mxu0
      %1662 = vdwg.mxu0
      %v1663 = vadd.f32 %v1516, %v1610
      %v1664 = vadd.f32 %v1517, %v1613
      %v1665 = vadd.f32 %v1518, %v1618
      %v1666 = vadd.f32 %v1519, %v1621
      %v1667 = vadd.f32 %v1520, %v1626
      %v1668 = vadd.f32 %v1521, %v1629
      %v1669 = vadd.f32 %v1522, %v1634
      %v1670 = vadd.f32 %v1523, %v1637
      %v1671 = vadd.f32 %v1524, %v1642
      %v1672 = vadd.f32 %v1525, %v1645
      %v1673 = vadd.f32 %v1526, %v1650
      %v1674 = vadd.f32 %v1527, %v1653
      %v1675 = vadd.f32 %v1528, %v1658
      %v1676 = vld [vmem:[#allocation2 + $0x19] sm:$0xff]
      %v1677 = vld [vmem:[#allocation2 + $0x21] sm:$0xff]
      %v1678 = vld [vmem:[#allocation2 + $0x29] sm:$0xff]
      %v1679 = vld [vmem:[#allocation2 + $0x31] sm:$0xff]
      %v1680 = vld [vmem:[#allocation2 + $0x39] sm:$0xff]
      %v1681 = vld [vmem:[#allocation2 + $0x41] sm:$0xff]
      %v1682 = vld [vmem:[#allocation2 + $0x49] sm:$0xff]
      %v1683 = vld [vmem:[#allocation2 + $0x51] sm:$0xff]
      %v1684 = vld [vmem:[#allocation2 + $0x59] sm:$0xff]
      %v1685 = vld [vmem:[#allocation2 + $0x61] sm:$0xff]
      %v1686 = vld [vmem:[#allocation2 + $0x69] sm:$0xff]
      %v1687 = vld [vmem:[#allocation2 + $0x71] sm:$0xff]
      %v1688 = vld [vmem:[#allocation2 + $0x79] sm:$0xf]
      %v1689 = vpack.c.bf16 %v1677, %v1676
      %v1690 = vpack.c.bf16 %v1679, %v1678
      %v1691 = vpack.c.bf16 %v1681, %v1680
      %v1692 = vpack.c.bf16 %v1683, %v1682
      %v1693 = vpack.c.bf16 %v1685, %v1684
      %v1694 = vpack.c.bf16 %v1687, %v1686
      %v1695 = vpack.c.bf16 %v1688, %v1688
      %s1696 = scalar_lea.vmem %s7, 24
      %v1697 = vld [vmem:[%s1696] sm:$0xf]
      %v1699 = vsel %vm414, %v1689, 0
      %v1702 = vsel %vm414, %v1690, 0
      %v1705 = vsel %vm414, %v1691, 0
      %v1708 = vsel %vm414, %v1692, 0
      %v1711 = vsel %vm414, %v1693, 0
      %v1714 = vsel %vm414, %v1694, 0
      %v1717 = vsel %vm414, %v1695, 0
      %v1720 = vsel %vm884, %v1697, 0
      %1722 = vmatprep.subr.bf16.mxu0 0
      %1723 = vmatpush1.bf16.msra.mxu0 %v1720
      %1724 = vmatprep.subr.bf16.mxu0 0
      %1725 = vmatpush1.bf16.msra.mxu0 0
      %1726 = vmatprep.subr.bf16.mxu0 0
      %1727 = vmatpush1.bf16.msra.mxu0 0
      %1728 = vmatprep.subr.bf16.mxu0 0
      %1729 = vmatpush1.bf16.msra.mxu0 0
      %1730 = vmatprep.subr.bf16.mxu0 0
      %1731 = vmatpush1.bf16.msra.mxu0 0
      %1732 = vmatprep.subr.bf16.mxu0 0
      %1733 = vmatpush1.bf16.msra.mxu0 0
      %1734 = vmatprep.subr.bf16.mxu0 0
      %1735 = vmatpush1.bf16.msra.mxu0 0
      %1736 = vmatprep.subr.bf16.mxu0 0
      %1737 = vmatpush1.bf16.msra.mxu0 0
      %1738 = vmatprep.subr.bf16.mxu0 0
      %1739 = vmatpush1.bf16.msra.mxu0 0
      %1740 = vmatprep.subr.bf16.mxu0 0
      %1741 = vmatpush1.bf16.msra.mxu0 0
      %1742 = vmatprep.subr.bf16.mxu0 0
      %1743 = vmatpush1.bf16.msra.mxu0 0
      %1744 = vmatprep.subr.bf16.mxu0 0
      %1745 = vmatpush1.bf16.msra.mxu0 0
      %1746 = vmatprep.subr.bf16.mxu0 0
      %1747 = vmatpush1.bf16.msra.mxu0 0
      %1748 = vmatprep.subr.bf16.mxu0 0
      %1749 = vmatpush1.bf16.msra.mxu0 0
      %1750 = vmatprep.subr.bf16.mxu0 0
      %1751 = vmatpush1.bf16.msra.mxu0 0
      %1752 = vmatprep.subr.bf16.mxu0 0
      %1753 = vmatpush1.bf16.msra.mxu0 0
      %1754 = vmatprep.mubr.bf16.mxu0 0
      %1755 = vmatmul.mubr.bf16.gmra.mrb[0].mxu0 %v1699
      %v1756 = vpop.f32.mrb[0].mxu0
      %v1757 = vadd.f32 0.0, %v1756
      %v1758 = vpop.f32.mrb[0].mxu0
      %v1759 = vpop.f32.mrb[0].mxu0
      %v1760 = vadd.f32 0.0, %v1759
      %v1761 = vpop.f32.mrb[0].mxu0
      %1762 = vmatprep.mubr.bf16.mxu0 0
      %1763 = vmatmul.mubr.bf16.gmra.mrb[0].mxu0 %v1702
      %v1764 = vpop.f32.mrb[0].mxu0
      %v1765 = vadd.f32 0.0, %v1764
      %v1766 = vpop.f32.mrb[0].mxu0
      %v1767 = vpop.f32.mrb[0].mxu0
      %v1768 = vadd.f32 0.0, %v1767
      %v1769 = vpop.f32.mrb[0].mxu0
      %1770 = vmatprep.mubr.bf16.mxu0 0
      %1771 = vmatmul.mubr.bf16.gmra.mrb[0].mxu0 %v1705
      %v1772 = vpop.f32.mrb[0].mxu0
      %v1773 = vadd.f32 0.0, %v1772
      %v1774 = vpop.f32.mrb[0].mxu0
      %v1775 = vpop.f32.mrb[0].mxu0
      %v1776 = vadd.f32 0.0, %v1775
      %v1777 = vpop.f32.mrb[0].mxu0
      %1778 = vmatprep.mubr.bf16.mxu0 0
      %1779 = vmatmul.mubr.bf16.gmra.mrb[0].mxu0 %v1708
      %v1780 = vpop.f32.mrb[0].mxu0
      %v1781 = vadd.f32 0.0, %v1780
      %v1782 = vpop.f32.mrb[0].mxu0
      %v1783 = vpop.f32.mrb[0].mxu0
      %v1784 = vadd.f32 0.0, %v1783
      %v1785 = vpop.f32.mrb[0].mxu0
      %1786 = vmatprep.mubr.bf16.mxu0 0
      %1787 = vmatmul.mubr.bf16.gmra.mrb[0].mxu0 %v1711
      %v1788 = vpop.f32.mrb[0].mxu0
      %v1789 = vadd.f32 0.0, %v1788
      %v1790 = vpop.f32.mrb[0].mxu0
      %v1791 = vpop.f32.mrb[0].mxu0
      %v1792 = vadd.f32 0.0, %v1791
      %v1793 = vpop.f32.mrb[0].mxu0
      %1794 = vmatprep.mubr.bf16.mxu0 0
      %1795 = vmatmul.mubr.bf16.gmra.mrb[0].mxu0 %v1714
      %v1796 = vpop.f32.mrb[0].mxu0
      %v1797 = vadd.f32 0.0, %v1796
      %v1798 = vpop.f32.mrb[0].mxu0
      %v1799 = vpop.f32.mrb[0].mxu0
      %v1800 = vadd.f32 0.0, %v1799
      %v1801 = vpop.f32.mrb[0].mxu0
      %1802 = vmatprep.mubr.bf16.mxu0 0
      %1803 = vmatmul.mubr.bf16.gmra.mrb[0].mxu0 %v1717
      %v1804 = vpop.f32.mrb[0].mxu0
      %v1805 = vadd.f32 0.0, %v1804
      %v1806 = vpop.f32.mrb[0].mxu0
      %v1807 = vpop.f32.mrb[0].mxu0
      %v1808 = vpop.f32.mrb[0].mxu0
      %1809 = vdwg.mxu0
      %v1810 = vadd.f32 %v1663, %v1757
      %v1811 = vadd.f32 %v1664, %v1760
      %v1812 = vadd.f32 %v1665, %v1765
      %v1813 = vadd.f32 %v1666, %v1768
      %v1814 = vadd.f32 %v1667, %v1773
      %v1815 = vadd.f32 %v1668, %v1776
      %v1816 = vadd.f32 %v1669, %v1781
      %v1817 = vadd.f32 %v1670, %v1784
      %v1818 = vadd.f32 %v1671, %v1789
      %v1819 = vadd.f32 %v1672, %v1792
      %v1820 = vadd.f32 %v1673, %v1797
      %v1821 = vadd.f32 %v1674, %v1800
      %v1822 = vadd.f32 %v1675, %v1805
      %v1823 = vld [vmem:[#allocation2 + $0x1a] sm:$0xff]
      %v1824 = vld [vmem:[#allocation2 + $0x22] sm:$0xff]
      %v1825 = vld [vmem:[#allocation2 + $0x2a] sm:$0xff]
      %v1826 = vld [vmem:[#allocation2 + $0x32] sm:$0xff]
      %v1827 = vld [vmem:[#allocation2 + $0x3a] sm:$0xff]
      %v1828 = vld [vmem:[#allocation2 + $0x42] sm:$0xff]
      %v1829 = vld [vmem:[#allocation2 + $0x4a] sm:$0xff]
      %v1830 = vld [vmem:[#allocation2 + $0x52] sm:$0xff]
      %v1831 = vld [vmem:[#allocation2 + $0x5a] sm:$0xff]
      %v1832 = vld [vmem:[#allocation2 + $0x62] sm:$0xff]
      %v1833 = vld [vmem:[#allocation2 + $0x6a] sm:$0xff]
      %v1834 = vld [vmem:[#allocation2 + $0x72] sm:$0xff]
      %v1835 = vld [vmem:[#allocation2 + $0x7a] sm:$0xf]
      %v1836 = vpack.c.bf16 %v1824, %v1823
      %v1837 = vpack.c.bf16 %v1826, %v1825
      %v1838 = vpack.c.bf16 %v1828, %v1827
      %v1839 = vpack.c.bf16 %v1830, %v1829
      %v1840 = vpack.c.bf16 %v1832, %v1831
      %v1841 = vpack.c.bf16 %v1834, %v1833
      %v1842 = vpack.c.bf16 %v1835, %v1835
      %s1843 = scalar_lea.vmem %s7, 28
      %v1844 = vld [vmem:[%s1843] sm:$0xf]
      %v1846 = vsel %vm414, %v1836, 0
      %v1849 = vsel %vm414, %v1837, 0
      %v1852 = vsel %vm414, %v1838, 0
      %v1855 = vsel %vm414, %v1839, 0
      %v1858 = vsel %vm414, %v1840, 0
      %v1861 = vsel %vm414, %v1841, 0
      %v1864 = vsel %vm414, %v1842, 0
      %v1867 = vsel %vm884, %v1844, 0
      %1869 = vmatprep.subr.bf16.mxu0 0
      %1870 = vmatpush1.bf16.msra.mxu0 %v1867
      %1871 = vmatprep.subr.bf16.mxu0 0
      %1872 = vmatpush1.bf16.msra.mxu0 0
      %1873 = vmatprep.subr.bf16.mxu0 0
      %1874 = vmatpush1.bf16.msra.mxu0 0
      %1875 = vmatprep.subr.bf16.mxu0 0
      %1876 = vmatpush1.bf16.msra.mxu0 0
      %1877 = vmatprep.subr.bf16.mxu0 0
      %1878 = vmatpush1.bf16.msra.mxu0 0
      %1879 = vmatprep.subr.bf16.mxu0 0
      %1880 = vmatpush1.bf16.msra.mxu0 0
      %1881 = vmatprep.subr.bf16.mxu0 0
      %1882 = vmatpush1.bf16.msra.mxu0 0
      %1883 = vmatprep.subr.bf16.mxu0 0
      %1884 = vmatpush1.bf16.msra.mxu0 0
      %1885 = vmatprep.subr.bf16.mxu0 0
      %1886 = vmatpush1.bf16.msra.mxu0 0
      %1887 = vmatprep.subr.bf16.mxu0 0
      %1888 = vmatpush1.bf16.msra.mxu0 0
      %1889 = vmatprep.subr.bf16.mxu0 0
      %1890 = vmatpush1.bf16.msra.mxu0 0
      %1891 = vmatprep.subr.bf16.mxu0 0
      %1892 = vmatpush1.bf16.msra.mxu0 0
      %1893 = vmatprep.subr.bf16.mxu0 0
      %1894 = vmatpush1.bf16.msra.mxu0 0
      %1895 = vmatprep.subr.bf16.mxu0 0
      %1896 = vmatpush1.bf16.msra.mxu0 0
      %1897 = vmatprep.subr.bf16.mxu0 0
      %1898 = vmatpush1.bf16.msra.mxu0 0
      %1899 = vmatprep.subr.bf16.mxu0 0
      %1900 = vmatpush1.bf16.msra.mxu0 0
      %1901 = vmatprep.mubr.bf16.mxu0 0
      %1902 = vmatmul.mubr.bf16.gmra.mrb[0].mxu0 %v1846
      %v1903 = vpop.f32.mrb[0].mxu0
      %v1904 = vadd.f32 0.0, %v1903
      %v1905 = vpop.f32.mrb[0].mxu0
      %v1906 = vpop.f32.mrb[0].mxu0
      %v1907 = vadd.f32 0.0, %v1906
      %v1908 = vpop.f32.mrb[0].mxu0
      %1909 = vmatprep.mubr.bf16.mxu0 0
      %1910 = vmatmul.mubr.bf16.gmra.mrb[0].mxu0 %v1849
      %v1911 = vpop.f32.mrb[0].mxu0
      %v1912 = vadd.f32 0.0, %v1911
      %v1913 = vpop.f32.mrb[0].mxu0
      %v1914 = vpop.f32.mrb[0].mxu0
      %v1915 = vadd.f32 0.0, %v1914
      %v1916 = vpop.f32.mrb[0].mxu0
      %1917 = vmatprep.mubr.bf16.mxu0 0
      %1918 = vmatmul.mubr.bf16.gmra.mrb[0].mxu0 %v1852
      %v1919 = vpop.f32.mrb[0].mxu0
      %v1920 = vadd.f32 0.0, %v1919
      %v1921 = vpop.f32.mrb[0].mxu0
      %v1922 = vpop.f32.mrb[0].mxu0
      %v1923 = vadd.f32 0.0, %v1922
      %v1924 = vpop.f32.mrb[0].mxu0
      %1925 = vmatprep.mubr.bf16.mxu0 0
      %1926 = vmatmul.mubr.bf16.gmra.mrb[0].mxu0 %v1855
      %v1927 = vpop.f32.mrb[0].mxu0
      %v1928 = vadd.f32 0.0, %v1927
      %v1929 = vpop.f32.mrb[0].mxu0
      %v1930 = vpop.f32.mrb[0].mxu0
      %v1931 = vadd.f32 0.0, %v1930
      %v1932 = vpop.f32.mrb[0].mxu0
      %1933 = vmatprep.mubr.bf16.mxu0 0
      %1934 = vmatmul.mubr.bf16.gmra.mrb[0].mxu0 %v1858
      %v1935 = vpop.f32.mrb[0].mxu0
      %v1936 = vadd.f32 0.0, %v1935
      %v1937 = vpop.f32.mrb[0].mxu0
      %v1938 = vpop.f32.mrb[0].mxu0
      %v1939 = vadd.f32 0.0, %v1938
      %v1940 = vpop.f32.mrb[0].mxu0
      %1941 = vmatprep.mubr.bf16.mxu0 0
      %1942 = vmatmul.mubr.bf16.gmra.mrb[0].mxu0 %v1861
      %v1943 = vpop.f32.mrb[0].mxu0
      %v1944 = vadd.f32 0.0, %v1943
      %v1945 = vpop.f32.mrb[0].mxu0
      %v1946 = vpop.f32.mrb[0].mxu0
      %v1947 = vadd.f32 0.0, %v1946
      %v1948 = vpop.f32.mrb[0].mxu0
      %1949 = vmatprep.mubr.bf16.mxu0 0
      %1950 = vmatmul.mubr.bf16.gmra.mrb[0].mxu0 %v1864
      %v1951 = vpop.f32.mrb[0].mxu0
      %v1952 = vadd.f32 0.0, %v1951
      %v1953 = vpop.f32.mrb[0].mxu0
      %v1954 = vpop.f32.mrb[0].mxu0
      %v1955 = vpop.f32.mrb[0].mxu0
      %1956 = vdwg.mxu0
      %v1957 = vadd.f32 %v1810, %v1904
      %v1958 = vadd.f32 %v1811, %v1907
      %v1959 = vadd.f32 %v1812, %v1912
      %v1960 = vadd.f32 %v1813, %v1915
      %v1961 = vadd.f32 %v1814, %v1920
      %v1962 = vadd.f32 %v1815, %v1923
      %v1963 = vadd.f32 %v1816, %v1928
      %v1964 = vadd.f32 %v1817, %v1931
      %v1965 = vadd.f32 %v1818, %v1936
      %v1966 = vadd.f32 %v1819, %v1939
      %v1967 = vadd.f32 %v1820, %v1944
      %v1968 = vadd.f32 %v1821, %v1947
      %v1969 = vadd.f32 %v1822, %v1952
      %v1970 = vld [vmem:[#allocation2 + $0x1b] sm:$0xff]
      %v1971 = vld [vmem:[#allocation2 + $0x23] sm:$0xff]
      %v1972 = vld [vmem:[#allocation2 + $0x2b] sm:$0xff]
      %v1973 = vld [vmem:[#allocation2 + $0x33] sm:$0xff]
      %v1974 = vld [vmem:[#allocation2 + $0x3b] sm:$0xff]
      %v1975 = vld [vmem:[#allocation2 + $0x43] sm:$0xff]
      %v1976 = vld [vmem:[#allocation2 + $0x4b] sm:$0xff]
      %v1977 = vld [vmem:[#allocation2 + $0x53] sm:$0xff]
      %v1978 = vld [vmem:[#allocation2 + $0x5b] sm:$0xff]
      %v1979 = vld [vmem:[#allocation2 + $0x63] sm:$0xff]
      %v1980 = vld [vmem:[#allocation2 + $0x6b] sm:$0xff]
      %v1981 = vld [vmem:[#allocation2 + $0x73] sm:$0xff]
      %v1982 = vld [vmem:[#allocation2 + $0x7b] sm:$0xf]
      %v1983 = vpack.c.bf16 %v1971, %v1970
      %v1984 = vpack.c.bf16 %v1973, %v1972
      %v1985 = vpack.c.bf16 %v1975, %v1974
      %v1986 = vpack.c.bf16 %v1977, %v1976
      %v1987 = vpack.c.bf16 %v1979, %v1978
      %v1988 = vpack.c.bf16 %v1981, %v1980
      %v1989 = vpack.c.bf16 %v1982, %v1982
      %s1990 = scalar_lea.vmem %s7, 32
      %v1991 = vld [vmem:[%s1990] sm:$0xf]
      %v1993 = vsel %vm414, %v1983, 0
      %v1996 = vsel %vm414, %v1984, 0
      %v1999 = vsel %vm414, %v1985, 0
      %v2002 = vsel %vm414, %v1986, 0
      %v2005 = vsel %vm414, %v1987, 0
      %v2008 = vsel %vm414, %v1988, 0
      %v2011 = vsel %vm414, %v1989, 0
      %v2014 = vsel %vm884, %v1991, 0
      %2016 = vmatprep.subr.bf16.mxu0 0
      %2017 = vmatpush1.bf16.msra.mxu0 %v2014
      %2018 = vmatprep.subr.bf16.mxu0 0
      %2019 = vmatpush1.bf16.msra.mxu0 0
      %2020 = vmatprep.subr.bf16.mxu0 0
      %2021 = vmatpush1.bf16.msra.mxu0 0
      %2022 = vmatprep.subr.bf16.mxu0 0
      %2023 = vmatpush1.bf16.msra.mxu0 0
      %2024 = vmatprep.subr.bf16.mxu0 0
      %2025 = vmatpush1.bf16.msra.mxu0 0
      %2026 = vmatprep.subr.bf16.mxu0 0
      %2027 = vmatpush1.bf16.msra.mxu0 0
      %2028 = vmatprep.subr.bf16.mxu0 0
      %2029 = vmatpush1.bf16.msra.mxu0 0
      %2030 = vmatprep.subr.bf16.mxu0 0
      %2031 = vmatpush1.bf16.msra.mxu0 0
      %2032 = vmatprep.subr.bf16.mxu0 0
      %2033 = vmatpush1.bf16.msra.mxu0 0
      %2034 = vmatprep.subr.bf16.mxu0 0
      %2035 = vmatpush1.bf16.msra.mxu0 0
      %2036 = vmatprep.subr.bf16.mxu0 0
      %2037 = vmatpush1.bf16.msra.mxu0 0
      %2038 = vmatprep.subr.bf16.mxu0 0
      %2039 = vmatpush1.bf16.msra.mxu0 0
      %2040 = vmatprep.subr.bf16.mxu0 0
      %2041 = vmatpush1.bf16.msra.mxu0 0
      %2042 = vmatprep.subr.bf16.mxu0 0
      %2043 = vmatpush1.bf16.msra.mxu0 0
      %2044 = vmatprep.subr.bf16.mxu0 0
      %2045 = vmatpush1.bf16.msra.mxu0 0
      %2046 = vmatprep.subr.bf16.mxu0 0
      %2047 = vmatpush1.bf16.msra.mxu0 0
      %2048 = vmatprep.mubr.bf16.mxu0 0
      %2049 = vmatmul.mubr.bf16.gmra.mrb[0].mxu0 %v1993
      %v2050 = vpop.f32.mrb[0].mxu0
      %v2051 = vadd.f32 0.0, %v2050
      %v2052 = vpop.f32.mrb[0].mxu0
      %v2053 = vpop.f32.mrb[0].mxu0
      %v2054 = vadd.f32 0.0, %v2053
      %v2055 = vpop.f32.mrb[0].mxu0
      %2056 = vmatprep.mubr.bf16.mxu0 0
      %2057 = vmatmul.mubr.bf16.gmra.mrb[0].mxu0 %v1996
      %v2058 = vpop.f32.mrb[0].mxu0
      %v2059 = vadd.f32 0.0, %v2058
      %v2060 = vpop.f32.mrb[0].mxu0
      %v2061 = vpop.f32.mrb[0].mxu0
      %v2062 = vadd.f32 0.0, %v2061
      %v2063 = vpop.f32.mrb[0].mxu0
      %2064 = vmatprep.mubr.bf16.mxu0 0
      %2065 = vmatmul.mubr.bf16.gmra.mrb[0].mxu0 %v1999
      %v2066 = vpop.f32.mrb[0].mxu0
      %v2067 = vadd.f32 0.0, %v2066
      %v2068 = vpop.f32.mrb[0].mxu0
      %v2069 = vpop.f32.mrb[0].mxu0
      %v2070 = vadd.f32 0.0, %v2069
      %v2071 = vpop.f32.mrb[0].mxu0
      %2072 = vmatprep.mubr.bf16.mxu0 0
      %2073 = vmatmul.mubr.bf16.gmra.mrb[0].mxu0 %v2002
      %v2074 = vpop.f32.mrb[0].mxu0
      %v2075 = vadd.f32 0.0, %v2074
      %v2076 = vpop.f32.mrb[0].mxu0
      %v2077 = vpop.f32.mrb[0].mxu0
      %v2078 = vadd.f32 0.0, %v2077
      %v2079 = vpop.f32.mrb[0].mxu0
      %2080 = vmatprep.mubr.bf16.mxu0 0
      %2081 = vmatmul.mubr.bf16.gmra.mrb[0].mxu0 %v2005
      %v2082 = vpop.f32.mrb[0].mxu0
      %v2083 = vadd.f32 0.0, %v2082
      %v2084 = vpop.f32.mrb[0].mxu0
      %v2085 = vpop.f32.mrb[0].mxu0
      %v2086 = vadd.f32 0.0, %v2085
      %v2087 = vpop.f32.mrb[0].mxu0
      %2088 = vmatprep.mubr.bf16.mxu0 0
      %2089 = vmatmul.mubr.bf16.gmra.mrb[0].mxu0 %v2008
      %v2090 = vpop.f32.mrb[0].mxu0
      %v2091 = vadd.f32 0.0, %v2090
      %v2092 = vpop.f32.mrb[0].mxu0
      %v2093 = vpop.f32.mrb[0].mxu0
      %v2094 = vadd.f32 0.0, %v2093
      %v2095 = vpop.f32.mrb[0].mxu0
      %2096 = vmatprep.mubr.bf16.mxu0 0
      %2097 = vmatmul.mubr.bf16.gmra.mrb[0].mxu0 %v2011
      %v2098 = vpop.f32.mrb[0].mxu0
      %v2099 = vadd.f32 0.0, %v2098
      %v2100 = vpop.f32.mrb[0].mxu0
      %v2101 = vpop.f32.mrb[0].mxu0
      %v2102 = vpop.f32.mrb[0].mxu0
      %2103 = vdwg.mxu0
      %v2104 = vadd.f32 %v1957, %v2051
      %v2105 = vadd.f32 %v1958, %v2054
      %v2106 = vadd.f32 %v1959, %v2059
      %v2107 = vadd.f32 %v1960, %v2062
      %v2108 = vadd.f32 %v1961, %v2067
      %v2109 = vadd.f32 %v1962, %v2070
      %v2110 = vadd.f32 %v1963, %v2075
      %v2111 = vadd.f32 %v1964, %v2078
      %v2112 = vadd.f32 %v1965, %v2083
      %v2113 = vadd.f32 %v1966, %v2086
      %v2114 = vadd.f32 %v1967, %v2091
      %v2115 = vadd.f32 %v1968, %v2094
      %v2116 = vadd.f32 %v1969, %v2099
      %s2117 = scalar_lea.vmem %s5, 1
      %v2118 = vld [vmem:[%s2117] sm:$0x1]
      %s2119 = scalar_lea.vmem %s6, 1
      %v2120 = vld [vmem:[%s2119] sm:$0x1]
      %v2122 = vlaneseq
      %v2123 = vshrl.u32 %v2122, 7
      %v2124 = vsub.s32 0, %v2123
      %v2125 = vrot.slane %v2118, %v2124
      %v2127 = vmul.f32 %v2104, %v2125
      %v2128 = vmul.f32 %v2105, %v2125
      %v2129 = vmul.f32 %v2106, %v2125
      %v2130 = vmul.f32 %v2107, %v2125
      %v2131 = vmul.f32 %v2108, %v2125
      %v2132 = vmul.f32 %v2109, %v2125
      %v2133 = vmul.f32 %v2110, %v2125
      %v2134 = vmul.f32 %v2111, %v2125
      %v2135 = vmul.f32 %v2112, %v2125
      %v2136 = vmul.f32 %v2113, %v2125
      %v2137 = vmul.f32 %v2114, %v2125
      %v2138 = vmul.f32 %v2115, %v2125
      %v2139 = vmul.f32 %v2116, %v2125
      %v2141 = vlaneseq
      %v2142 = vshrl.u32 %v2141, 7
      %v2143 = vsub.s32 0, %v2142
      %v2144 = vrot.slane %v2120, %v2143
      %v2146 = vadd.f32 %v2127, %v2144
      %v2147 = vadd.f32 %v2128, %v2144
      %v2148 = vadd.f32 %v2129, %v2144
      %v2149 = vadd.f32 %v2130, %v2144
      %v2150 = vadd.f32 %v2131, %v2144
      %v2151 = vadd.f32 %v2132, %v2144
      %v2152 = vadd.f32 %v2133, %v2144
      %v2153 = vadd.f32 %v2134, %v2144
      %v2154 = vadd.f32 %v2135, %v2144
      %v2155 = vadd.f32 %v2136, %v2144
      %v2156 = vadd.f32 %v2137, %v2144
      %v2157 = vadd.f32 %v2138, %v2144
      %v2158 = vadd.f32 %v2139, %v2144
      %vm2159 = vcmp.gt.f32.partialorder %v2146, 0.0
      %vm2160 = vcmp.gt.f32.partialorder %v2147, 0.0
      %vm2161 = vcmp.gt.f32.partialorder %v2148, 0.0
      %vm2162 = vcmp.gt.f32.partialorder %v2149, 0.0
      %vm2163 = vcmp.gt.f32.partialorder %v2150, 0.0
      %vm2164 = vcmp.gt.f32.partialorder %v2151, 0.0
      %vm2165 = vcmp.gt.f32.partialorder %v2152, 0.0
      %vm2166 = vcmp.gt.f32.partialorder %v2153, 0.0
      %vm2167 = vcmp.gt.f32.partialorder %v2154, 0.0
      %vm2168 = vcmp.gt.f32.partialorder %v2155, 0.0
      %vm2169 = vcmp.gt.f32.partialorder %v2156, 0.0
      %vm2170 = vcmp.gt.f32.partialorder %v2157, 0.0
      %vm2171 = vcmp.gt.f32.partialorder %v2158, 0.0
      %v2172 = vmul.f32 %v2146, 0.01
      %v2173 = vmul.f32 %v2147, 0.01
      %v2174 = vmul.f32 %v2148, 0.01
      %v2175 = vmul.f32 %v2149, 0.01
      %v2176 = vmul.f32 %v2150, 0.01
      %v2177 = vmul.f32 %v2151, 0.01
      %v2178 = vmul.f32 %v2152, 0.01
      %v2179 = vmul.f32 %v2153, 0.01
      %v2180 = vmul.f32 %v2154, 0.01
      %v2181 = vmul.f32 %v2155, 0.01
      %v2182 = vmul.f32 %v2156, 0.01
      %v2183 = vmul.f32 %v2157, 0.01
      %v2184 = vmul.f32 %v2158, 0.01
      %v2185 = vsel %vm2159, %v2146, %v2172
      %v2186 = vsel %vm2160, %v2147, %v2173
      %v2187 = vsel %vm2161, %v2148, %v2174
      %v2188 = vsel %vm2162, %v2149, %v2175
      %v2189 = vsel %vm2163, %v2150, %v2176
      %v2190 = vsel %vm2164, %v2151, %v2177
      %v2191 = vsel %vm2165, %v2152, %v2178
      %v2192 = vsel %vm2166, %v2153, %v2179
      %v2193 = vsel %vm2167, %v2154, %v2180
      %v2194 = vsel %vm2168, %v2155, %v2181
      %v2195 = vsel %vm2169, %v2156, %v2182
      %v2196 = vsel %vm2170, %v2157, %v2183
      %v2197 = vsel %vm2171, %v2158, %v2184
      %v2198 = vmul.f32 %v2185, %v515
      %v2199 = vmul.f32 %v2186, %v520
      %v2200 = vmul.f32 %v2187, %v525
      %v2201 = vmul.f32 %v2188, %v530
      %v2202 = vmul.f32 %v2189, %v535
      %v2203 = vmul.f32 %v2190, %v540
      %v2204 = vmul.f32 %v2191, %v545
      %v2205 = vmul.f32 %v2192, %v550
      %v2206 = vmul.f32 %v2193, %v555
      %v2207 = vmul.f32 %v2194, %v560
      %v2208 = vmul.f32 %v2195, %v565
      %v2209 = vmul.f32 %v2196, %v570
      %v2210 = vmul.f32 %v2197, %v575
      %2211 = vst.msk [vmem:[#allocation2 + $0x10] sm:$0xff] %vm414, %v2198
      %2212 = vst.msk [vmem:[#allocation2 + $0x18] sm:$0xff] %vm414, %v2199
      %2213 = vst.msk [vmem:[#allocation2 + $0x20] sm:$0xff] %vm414, %v2200
      %2214 = vst.msk [vmem:[#allocation2 + $0x28] sm:$0xff] %vm414, %v2201
      %2215 = vst.msk [vmem:[#allocation2 + $0x30] sm:$0xff] %vm414, %v2202
      %2216 = vst.msk [vmem:[#allocation2 + $0x38] sm:$0xff] %vm414, %v2203
      %2217 = vst.msk [vmem:[#allocation2 + $0x40] sm:$0xff] %vm414, %v2204
      %2218 = vst.msk [vmem:[#allocation2 + $0x48] sm:$0xff] %vm414, %v2205
      %2219 = vst.msk [vmem:[#allocation2 + $0x50] sm:$0xff] %vm414, %v2206
      %2220 = vst.msk [vmem:[#allocation2 + $0x58] sm:$0xff] %vm414, %v2207
      %2221 = vst.msk [vmem:[#allocation2 + $0x60] sm:$0xff] %vm414, %v2208
      %2222 = vst.msk [vmem:[#allocation2 + $0x68] sm:$0xff] %vm414, %v2209
      %2223 = vst.msk [vmem:[#allocation2 + $0x70] sm:$0xf] %vm431, %v2210
      %v2224 = vld [vmem:[#allocation2 + $0x5] sm:$0xff]
      %v2225 = vld [vmem:[#allocation2 + $0xd] sm:$0xff]
      %v2226 = vld [vmem:[#allocation2 + $0x15] sm:$0xff]
      %v2227 = vld [vmem:[#allocation2 + $0x1d] sm:$0xff]
      %v2228 = vld [vmem:[#allocation2 + $0x25] sm:$0xff]
      %v2229 = vld [vmem:[#allocation2 + $0x2d] sm:$0xff]
      %v2230 = vld [vmem:[#allocation2 + $0x35] sm:$0xff]
      %v2231 = vld [vmem:[#allocation2 + $0x3d] sm:$0xff]
      %v2232 = vld [vmem:[#allocation2 + $0x45] sm:$0xff]
      %v2233 = vld [vmem:[#allocation2 + $0x4d] sm:$0xff]
      %v2234 = vld [vmem:[#allocation2 + $0x55] sm:$0xff]
      %v2235 = vld [vmem:[#allocation2 + $0x5d] sm:$0xff]
      %v2236 = vld [vmem:[#allocation2 + $0x65] sm:$0xf]
      %v2237 = vpack.c.bf16 %v2225, %v2224
      %v2238 = vpack.c.bf16 %v2227, %v2226
      %v2239 = vpack.c.bf16 %v2229, %v2228
      %v2240 = vpack.c.bf16 %v2231, %v2230
      %v2241 = vpack.c.bf16 %v2233, %v2232
      %v2242 = vpack.c.bf16 %v2235, %v2234
      %v2243 = vpack.c.bf16 %v2236, %v2236
      %s2244 = scalar_lea.vmem %s7, 36
      %v2245 = vld [vmem:[%s2244] sm:$0xf]
      %v2246 = vld [vmem:[#allocation2 + $0x6] sm:$0xff]
      %v2247 = vld [vmem:[#allocation2 + $0xe] sm:$0xff]
      %v2248 = vld [vmem:[#allocation2 + $0x16] sm:$0xff]
      %v2249 = vld [vmem:[#allocation2 + $0x1e] sm:$0xff]
      %v2250 = vld [vmem:[#allocation2 + $0x26] sm:$0xff]
      %v2251 = vld [vmem:[#allocation2 + $0x2e] sm:$0xff]
      %v2252 = vld [vmem:[#allocation2 + $0x36] sm:$0xff]
      %v2253 = vld [vmem:[#allocation2 + $0x3e] sm:$0xff]
      %v2254 = vld [vmem:[#allocation2 + $0x46] sm:$0xff]
      %v2255 = vld [vmem:[#allocation2 + $0x4e] sm:$0xff]
      %v2256 = vld [vmem:[#allocation2 + $0x56] sm:$0xff]
      %v2257 = vld [vmem:[#allocation2 + $0x5e] sm:$0xff]
      %v2258 = vld [vmem:[#allocation2 + $0x66] sm:$0xf]
      %v2259 = vpack.c.bf16 %v2247, %v2246
      %v2260 = vpack.c.bf16 %v2249, %v2248
      %v2261 = vpack.c.bf16 %v2251, %v2250
      %v2262 = vpack.c.bf16 %v2253, %v2252
      %v2263 = vpack.c.bf16 %v2255, %v2254
      %v2264 = vpack.c.bf16 %v2257, %v2256
      %v2265 = vpack.c.bf16 %v2258, %v2258
      %s2266 = scalar_lea.vmem %s7, 40
      %v2267 = vld [vmem:[%s2266] sm:$0xf]
      %v2269 = vsel %vm414, %v2259, 0
      %v2272 = vsel %vm414, %v2260, 0
      %v2275 = vsel %vm414, %v2261, 0
      %v2278 = vsel %vm414, %v2262, 0
      %v2281 = vsel %vm414, %v2263, 0
      %v2284 = vsel %vm414, %v2264, 0
      %v2287 = vsel %vm414, %v2265, 0
      %v2290 = vsel %vm884, %v2267, 0
      %2292 = vmatprep.subr.bf16.mxu0 0
      %2293 = vmatpush1.bf16.msra.mxu0 %v2290
      %2294 = vmatprep.subr.bf16.mxu0 0
      %2295 = vmatpush1.bf16.msra.mxu0 0
      %2296 = vmatprep.subr.bf16.mxu0 0
      %2297 = vmatpush1.bf16.msra.mxu0 0
      %2298 = vmatprep.subr.bf16.mxu0 0
      %2299 = vmatpush1.bf16.msra.mxu0 0
      %2300 = vmatprep.subr.bf16.mxu0 0
      %2301 = vmatpush1.bf16.msra.mxu0 0
      %2302 = vmatprep.subr.bf16.mxu0 0
      %2303 = vmatpush1.bf16.msra.mxu0 0
      %2304 = vmatprep.subr.bf16.mxu0 0
      %2305 = vmatpush1.bf16.msra.mxu0 0
      %2306 = vmatprep.subr.bf16.mxu0 0
      %2307 = vmatpush1.bf16.msra.mxu0 0
      %2308 = vmatprep.subr.bf16.mxu0 0
      %2309 = vmatpush1.bf16.msra.mxu0 0
      %2310 = vmatprep.subr.bf16.mxu0 0
      %2311 = vmatpush1.bf16.msra.mxu0 0
      %2312 = vmatprep.subr.bf16.mxu0 0
      %2313 = vmatpush1.bf16.msra.mxu0 0
      %2314 = vmatprep.subr.bf16.mxu0 0
      %2315 = vmatpush1.bf16.msra.mxu0 0
      %2316 = vmatprep.subr.bf16.mxu0 0
      %2317 = vmatpush1.bf16.msra.mxu0 0
      %2318 = vmatprep.subr.bf16.mxu0 0
      %2319 = vmatpush1.bf16.msra.mxu0 0
      %2320 = vmatprep.subr.bf16.mxu0 0
      %2321 = vmatpush1.bf16.msra.mxu0 0
      %2322 = vmatprep.subr.bf16.mxu0 0
      %2323 = vmatpush1.bf16.msra.mxu0 0
      %2324 = vmatprep.mubr.bf16.mxu0 0
      %2325 = vmatmul.mubr.bf16.gmra.mrb[0].mxu0 %v2269
      %v2326 = vpop.f32.mrb[0].mxu0
      %v2327 = vadd.f32 0.0, %v2326
      %v2328 = vpop.f32.mrb[0].mxu0
      %v2329 = vpop.f32.mrb[0].mxu0
      %v2330 = vadd.f32 0.0, %v2329
      %v2331 = vpop.f32.mrb[0].mxu0
      %2332 = vmatprep.mubr.bf16.mxu0 0
      %2333 = vmatmul.mubr.bf16.gmra.mrb[0].mxu0 %v2272
      %v2334 = vpop.f32.mrb[0].mxu0
      %v2335 = vadd.f32 0.0, %v2334
      %v2336 = vpop.f32.mrb[0].mxu0
      %v2337 = vpop.f32.mrb[0].mxu0
      %v2338 = vadd.f32 0.0, %v2337
      %v2339 = vpop.f32.mrb[0].mxu0
      %2340 = vmatprep.mubr.bf16.mxu0 0
      %2341 = vmatmul.mubr.bf16.gmra.mrb[0].mxu0 %v2275
      %v2342 = vpop.f32.mrb[0].mxu0
      %v2343 = vadd.f32 0.0, %v2342
      %v2344 = vpop.f32.mrb[0].mxu0
      %v2345 = vpop.f32.mrb[0].mxu0
      %v2346 = vadd.f32 0.0, %v2345
      %v2347 = vpop.f32.mrb[0].mxu0
      %2348 = vmatprep.mubr.bf16.mxu0 0
      %2349 = vmatmul.mubr.bf16.gmra.mrb[0].mxu0 %v2278
      %v2350 = vpop.f32.mrb[0].mxu0
      %v2351 = vadd.f32 0.0, %v2350
      %v2352 = vpop.f32.mrb[0].mxu0
      %v2353 = vpop.f32.mrb[0].mxu0
      %v2354 = vadd.f32 0.0, %v2353
      %v2355 = vpop.f32.mrb[0].mxu0
      %2356 = vmatprep.mubr.bf16.mxu0 0
      %2357 = vmatmul.mubr.bf16.gmra.mrb[0].mxu0 %v2281
      %v2358 = vpop.f32.mrb[0].mxu0
      %v2359 = vadd.f32 0.0, %v2358
      %v2360 = vpop.f32.mrb[0].mxu0
      %v2361 = vpop.f32.mrb[0].mxu0
      %v2362 = vadd.f32 0.0, %v2361
      %v2363 = vpop.f32.mrb[0].mxu0
      %2364 = vmatprep.mubr.bf16.mxu0 0
      %2365 = vmatmul.mubr.bf16.gmra.mrb[0].mxu0 %v2284
      %v2366 = vpop.f32.mrb[0].mxu0
      %v2367 = vadd.f32 0.0, %v2366
      %v2368 = vpop.f32.mrb[0].mxu0
      %v2369 = vpop.f32.mrb[0].mxu0
      %v2370 = vadd.f32 0.0, %v2369
      %v2371 = vpop.f32.mrb[0].mxu0
      %2372 = vmatprep.mubr.bf16.mxu0 0
      %2373 = vmatmul.mubr.bf16.gmra.mrb[0].mxu0 %v2287
      %v2374 = vpop.f32.mrb[0].mxu0
      %v2375 = vadd.f32 0.0, %v2374
      %v2376 = vpop.f32.mrb[0].mxu0
      %v2377 = vpop.f32.mrb[0].mxu0
      %v2378 = vpop.f32.mrb[0].mxu0
      %2379 = vdwg.mxu0
      %v2381 = vsel %vm414, %v2237, 0
      %v2384 = vsel %vm414, %v2238, 0
      %v2387 = vsel %vm414, %v2239, 0
      %v2390 = vsel %vm414, %v2240, 0
      %v2393 = vsel %vm414, %v2241, 0
      %v2396 = vsel %vm414, %v2242, 0
      %v2399 = vsel %vm414, %v2243, 0
      %v2402 = vsel %vm884, %v2245, 0
      %2404 = vmatprep.subr.bf16.mxu0 0
      %2405 = vmatpush1.bf16.msra.mxu0 %v2402
      %2406 = vmatprep.subr.bf16.mxu0 0
      %2407 = vmatpush1.bf16.msra.mxu0 0
      %2408 = vmatprep.subr.bf16.mxu0 0
      %2409 = vmatpush1.bf16.msra.mxu0 0
      %2410 = vmatprep.subr.bf16.mxu0 0
      %2411 = vmatpush1.bf16.msra.mxu0 0
      %2412 = vmatprep.subr.bf16.mxu0 0
      %2413 = vmatpush1.bf16.msra.mxu0 0
      %2414 = vmatprep.subr.bf16.mxu0 0
      %2415 = vmatpush1.bf16.msra.mxu0 0
      %2416 = vmatprep.subr.bf16.mxu0 0
      %2417 = vmatpush1.bf16.msra.mxu0 0
      %2418 = vmatprep.subr.bf16.mxu0 0
      %2419 = vmatpush1.bf16.msra.mxu0 0
      %2420 = vmatprep.subr.bf16.mxu0 0
      %2421 = vmatpush1.bf16.msra.mxu0 0
      %2422 = vmatprep.subr.bf16.mxu0 0
      %2423 = vmatpush1.bf16.msra.mxu0 0
      %2424 = vmatprep.subr.bf16.mxu0 0
      %2425 = vmatpush1.bf16.msra.mxu0 0
      %2426 = vmatprep.subr.bf16.mxu0 0
      %2427 = vmatpush1.bf16.msra.mxu0 0
      %2428 = vmatprep.subr.bf16.mxu0 0
      %2429 = vmatpush1.bf16.msra.mxu0 0
      %2430 = vmatprep.subr.bf16.mxu0 0
      %2431 = vmatpush1.bf16.msra.mxu0 0
      %2432 = vmatprep.subr.bf16.mxu0 0
      %2433 = vmatpush1.bf16.msra.mxu0 0
      %2434 = vmatprep.subr.bf16.mxu0 0
      %2435 = vmatpush1.bf16.msra.mxu0 0
      %2436 = vmatprep.mubr.bf16.mxu0 0
      %2437 = vmatmul.mubr.bf16.gmra.mrb[0].mxu0 %v2381
      %v2438 = vpop.f32.mrb[0].mxu0
      %v2439 = vadd.f32 %v2327, %v2438
      %v2440 = vpop.f32.mrb[0].mxu0
      %v2441 = vpop.f32.mrb[0].mxu0
      %v2442 = vadd.f32 %v2330, %v2441
      %v2443 = vpop.f32.mrb[0].mxu0
      %2444 = vmatprep.mubr.bf16.mxu0 0
      %2445 = vmatmul.mubr.bf16.gmra.mrb[0].mxu0 %v2384
      %v2446 = vpop.f32.mrb[0].mxu0
      %v2447 = vadd.f32 %v2335, %v2446
      %v2448 = vpop.f32.mrb[0].mxu0
      %v2449 = vpop.f32.mrb[0].mxu0
      %v2450 = vadd.f32 %v2338, %v2449
      %v2451 = vpop.f32.mrb[0].mxu0
      %2452 = vmatprep.mubr.bf16.mxu0 0
      %2453 = vmatmul.mubr.bf16.gmra.mrb[0].mxu0 %v2387
      %v2454 = vpop.f32.mrb[0].mxu0
      %v2455 = vadd.f32 %v2343, %v2454
      %v2456 = vpop.f32.mrb[0].mxu0
      %v2457 = vpop.f32.mrb[0].mxu0
      %v2458 = vadd.f32 %v2346, %v2457
      %v2459 = vpop.f32.mrb[0].mxu0
      %2460 = vmatprep.mubr.bf16.mxu0 0
      %2461 = vmatmul.mubr.bf16.gmra.mrb[0].mxu0 %v2390
      %v2462 = vpop.f32.mrb[0].mxu0
      %v2463 = vadd.f32 %v2351, %v2462
      %v2464 = vpop.f32.mrb[0].mxu0
      %v2465 = vpop.f32.mrb[0].mxu0
      %v2466 = vadd.f32 %v2354, %v2465
      %v2467 = vpop.f32.mrb[0].mxu0
      %2468 = vmatprep.mubr.bf16.mxu0 0
      %2469 = vmatmul.mubr.bf16.gmra.mrb[0].mxu0 %v2393
      %v2470 = vpop.f32.mrb[0].mxu0
      %v2471 = vadd.f32 %v2359, %v2470
      %v2472 = vpop.f32.mrb[0].mxu0
      %v2473 = vpop.f32.mrb[0].mxu0
      %v2474 = vadd.f32 %v2362, %v2473
      %v2475 = vpop.f32.mrb[0].mxu0
      %2476 = vmatprep.mubr.bf16.mxu0 0
      %2477 = vmatmul.mubr.bf16.gmra.mrb[0].mxu0 %v2396
      %v2478 = vpop.f32.mrb[0].mxu0
      %v2479 = vadd.f32 %v2367, %v2478
      %v2480 = vpop.f32.mrb[0].mxu0
      %v2481 = vpop.f32.mrb[0].mxu0
      %v2482 = vadd.f32 %v2370, %v2481
      %v2483 = vpop.f32.mrb[0].mxu0
      %2484 = vmatprep.mubr.bf16.mxu0 0
      %2485 = vmatmul.mubr.bf16.gmra.mrb[0].mxu0 %v2399
      %v2486 = vpop.f32.mrb[0].mxu0
      %v2487 = vadd.f32 %v2375, %v2486
      %v2488 = vpop.f32.mrb[0].mxu0
      %v2489 = vpop.f32.mrb[0].mxu0
      %v2490 = vpop.f32.mrb[0].mxu0
      %2491 = vdwg.mxu0
      %v2492 = vld [vmem:[#allocation2 + $0x7] sm:$0xff]
      %v2493 = vld [vmem:[#allocation2 + $0xf] sm:$0xff]
      %v2494 = vld [vmem:[#allocation2 + $0x17] sm:$0xff]
      %v2495 = vld [vmem:[#allocation2 + $0x1f] sm:$0xff]
      %v2496 = vld [vmem:[#allocation2 + $0x27] sm:$0xff]
      %v2497 = vld [vmem:[#allocation2 + $0x2f] sm:$0xff]
      %v2498 = vld [vmem:[#allocation2 + $0x37] sm:$0xff]
      %v2499 = vld [vmem:[#allocation2 + $0x3f] sm:$0xff]
      %v2500 = vld [vmem:[#allocation2 + $0x47] sm:$0xff]
      %v2501 = vld [vmem:[#allocation2 + $0x4f] sm:$0xff]
      %v2502 = vld [vmem:[#allocation2 + $0x57] sm:$0xff]
      %v2503 = vld [vmem:[#allocation2 + $0x5f] sm:$0xff]
      %v2504 = vld [vmem:[#allocation2 + $0x67] sm:$0xf]
      %v2505 = vpack.c.bf16 %v2493, %v2492
      %v2506 = vpack.c.bf16 %v2495, %v2494
      %v2507 = vpack.c.bf16 %v2497, %v2496
      %v2508 = vpack.c.bf16 %v2499, %v2498
      %v2509 = vpack.c.bf16 %v2501, %v2500
      %v2510 = vpack.c.bf16 %v2503, %v2502
      %v2511 = vpack.c.bf16 %v2504, %v2504
      %s2512 = scalar_lea.vmem %s7, 44
      %v2513 = vld [vmem:[%s2512] sm:$0xf]
      %v2515 = vsel %vm414, %v2505, 0
      %v2518 = vsel %vm414, %v2506, 0
      %v2521 = vsel %vm414, %v2507, 0
      %v2524 = vsel %vm414, %v2508, 0
      %v2527 = vsel %vm414, %v2509, 0
      %v2530 = vsel %vm414, %v2510, 0
      %v2533 = vsel %vm414, %v2511, 0
      %v2536 = vsel %vm884, %v2513, 0
      %2538 = vmatprep.subr.bf16.mxu0 0
      %2539 = vmatpush1.bf16.msra.mxu0 %v2536
      %2540 = vmatprep.subr.bf16.mxu0 0
      %2541 = vmatpush1.bf16.msra.mxu0 0
      %2542 = vmatprep.subr.bf16.mxu0 0
      %2543 = vmatpush1.bf16.msra.mxu0 0
      %2544 = vmatprep.subr.bf16.mxu0 0
      %2545 = vmatpush1.bf16.msra.mxu0 0
      %2546 = vmatprep.subr.bf16.mxu0 0
      %2547 = vmatpush1.bf16.msra.mxu0 0
      %2548 = vmatprep.subr.bf16.mxu0 0
      %2549 = vmatpush1.bf16.msra.mxu0 0
      %2550 = vmatprep.subr.bf16.mxu0 0
      %2551 = vmatpush1.bf16.msra.mxu0 0
      %2552 = vmatprep.subr.bf16.mxu0 0
      %2553 = vmatpush1.bf16.msra.mxu0 0
      %2554 = vmatprep.subr.bf16.mxu0 0
      %2555 = vmatpush1.bf16.msra.mxu0 0
      %2556 = vmatprep.subr.bf16.mxu0 0
      %2557 = vmatpush1.bf16.msra.mxu0 0
      %2558 = vmatprep.subr.bf16.mxu0 0
      %2559 = vmatpush1.bf16.msra.mxu0 0
      %2560 = vmatprep.subr.bf16.mxu0 0
      %2561 = vmatpush1.bf16.msra.mxu0 0
      %2562 = vmatprep.subr.bf16.mxu0 0
      %2563 = vmatpush1.bf16.msra.mxu0 0
      %2564 = vmatprep.subr.bf16.mxu0 0
      %2565 = vmatpush1.bf16.msra.mxu0 0
      %2566 = vmatprep.subr.bf16.mxu0 0
      %2567 = vmatpush1.bf16.msra.mxu0 0
      %2568 = vmatprep.subr.bf16.mxu0 0
      %2569 = vmatpush1.bf16.msra.mxu0 0
      %2570 = vmatprep.mubr.bf16.mxu0 0
      %2571 = vmatmul.mubr.bf16.gmra.mrb[0].mxu0 %v2515
      %v2572 = vpop.f32.mrb[0].mxu0
      %v2573 = vadd.f32 0.0, %v2572
      %v2574 = vpop.f32.mrb[0].mxu0
      %v2575 = vpop.f32.mrb[0].mxu0
      %v2576 = vadd.f32 0.0, %v2575
      %v2577 = vpop.f32.mrb[0].mxu0
      %2578 = vmatprep.mubr.bf16.mxu0 0
      %2579 = vmatmul.mubr.bf16.gmra.mrb[0].mxu0 %v2518
      %v2580 = vpop.f32.mrb[0].mxu0
      %v2581 = vadd.f32 0.0, %v2580
      %v2582 = vpop.f32.mrb[0].mxu0
      %v2583 = vpop.f32.mrb[0].mxu0
      %v2584 = vadd.f32 0.0, %v2583
      %v2585 = vpop.f32.mrb[0].mxu0
      %2586 = vmatprep.mubr.bf16.mxu0 0
      %2587 = vmatmul.mubr.bf16.gmra.mrb[0].mxu0 %v2521
      %v2588 = vpop.f32.mrb[0].mxu0
      %v2589 = vadd.f32 0.0, %v2588
      %v2590 = vpop.f32.mrb[0].mxu0
      %v2591 = vpop.f32.mrb[0].mxu0
      %v2592 = vadd.f32 0.0, %v2591
      %v2593 = vpop.f32.mrb[0].mxu0
      %2594 = vmatprep.mubr.bf16.mxu0 0
      %2595 = vmatmul.mubr.bf16.gmra.mrb[0].mxu0 %v2524
      %v2596 = vpop.f32.mrb[0].mxu0
      %v2597 = vadd.f32 0.0, %v2596
      %v2598 = vpop.f32.mrb[0].mxu0
      %v2599 = vpop.f32.mrb[0].mxu0
      %v2600 = vadd.f32 0.0, %v2599
      %v2601 = vpop.f32.mrb[0].mxu0
      %2602 = vmatprep.mubr.bf16.mxu0 0
      %2603 = vmatmul.mubr.bf16.gmra.mrb[0].mxu0 %v2527
      %v2604 = vpop.f32.mrb[0].mxu0
      %v2605 = vadd.f32 0.0, %v2604
      %v2606 = vpop.f32.mrb[0].mxu0
      %v2607 = vpop.f32.mrb[0].mxu0
      %v2608 = vadd.f32 0.0, %v2607
      %v2609 = vpop.f32.mrb[0].mxu0
      %2610 = vmatprep.mubr.bf16.mxu0 0
      %2611 = vmatmul.mubr.bf16.gmra.mrb[0].mxu0 %v2530
      %v2612 = vpop.f32.mrb[0].mxu0
      %v2613 = vadd.f32 0.0, %v2612
      %v2614 = vpop.f32.mrb[0].mxu0
      %v2615 = vpop.f32.mrb[0].mxu0
      %v2616 = vadd.f32 0.0, %v2615
      %v2617 = vpop.f32.mrb[0].mxu0
      %2618 = vmatprep.mubr.bf16.mxu0 0
      %2619 = vmatmul.mubr.bf16.gmra.mrb[0].mxu0 %v2533
      %v2620 = vpop.f32.mrb[0].mxu0
      %v2621 = vadd.f32 0.0, %v2620
      %v2622 = vpop.f32.mrb[0].mxu0
      %v2623 = vpop.f32.mrb[0].mxu0
      %v2624 = vpop.f32.mrb[0].mxu0
      %2625 = vdwg.mxu0
      %v2626 = vadd.f32 %v2439, %v2573
      %v2627 = vadd.f32 %v2442, %v2576
      %v2628 = vadd.f32 %v2447, %v2581
      %v2629 = vadd.f32 %v2450, %v2584
      %v2630 = vadd.f32 %v2455, %v2589
      %v2631 = vadd.f32 %v2458, %v2592
      %v2632 = vadd.f32 %v2463, %v2597
      %v2633 = vadd.f32 %v2466, %v2600
      %v2634 = vadd.f32 %v2471, %v2605
      %v2635 = vadd.f32 %v2474, %v2608
      %v2636 = vadd.f32 %v2479, %v2613
      %v2637 = vadd.f32 %v2482, %v2616
      %v2638 = vadd.f32 %v2487, %v2621
      %v2639 = vld [vmem:[#allocation2 + $0xf] sm:$0xff]
      %v2640 = vld [vmem:[#allocation2 + $0x17] sm:$0xff]
      %v2641 = vld [vmem:[#allocation2 + $0x1f] sm:$0xff]
      %v2642 = vld [vmem:[#allocation2 + $0x27] sm:$0xff]
      %v2643 = vld [vmem:[#allocation2 + $0x2f] sm:$0xff]
      %v2644 = vld [vmem:[#allocation2 + $0x37] sm:$0xff]
      %v2645 = vld [vmem:[#allocation2 + $0x3f] sm:$0xff]
      %v2646 = vld [vmem:[#allocation2 + $0x47] sm:$0xff]
      %v2647 = vld [vmem:[#allocation2 + $0x4f] sm:$0xff]
      %v2648 = vld [vmem:[#allocation2 + $0x57] sm:$0xff]
      %v2649 = vld [vmem:[#allocation2 + $0x5f] sm:$0xff]
      %v2650 = vld [vmem:[#allocation2 + $0x67] sm:$0xff]
      %v2651 = vld [vmem:[#allocation2 + $0x6f] sm:$0xf]
      %v2652 = vpack.c.bf16 %v2640, %v2639
      %v2653 = vpack.c.bf16 %v2642, %v2641
      %v2654 = vpack.c.bf16 %v2644, %v2643
      %v2655 = vpack.c.bf16 %v2646, %v2645
      %v2656 = vpack.c.bf16 %v2648, %v2647
      %v2657 = vpack.c.bf16 %v2650, %v2649
      %v2658 = vpack.c.bf16 %v2651, %v2651
      %s2659 = scalar_lea.vmem %s7, 48
      %v2660 = vld [vmem:[%s2659] sm:$0xf]
      %v2662 = vsel %vm414, %v2652, 0
      %v2665 = vsel %vm414, %v2653, 0
      %v2668 = vsel %vm414, %v2654, 0
      %v2671 = vsel %vm414, %v2655, 0
      %v2674 = vsel %vm414, %v2656, 0
      %v2677 = vsel %vm414, %v2657, 0
      %v2680 = vsel %vm414, %v2658, 0
      %v2683 = vsel %vm884, %v2660, 0
      %2685 = vmatprep.subr.bf16.mxu0 0
      %2686 = vmatpush1.bf16.msra.mxu0 %v2683
      %2687 = vmatprep.subr.bf16.mxu0 0
      %2688 = vmatpush1.bf16.msra.mxu0 0
      %2689 = vmatprep.subr.bf16.mxu0 0
      %2690 = vmatpush1.bf16.msra.mxu0 0
      %2691 = vmatprep.subr.bf16.mxu0 0
      %2692 = vmatpush1.bf16.msra.mxu0 0
      %2693 = vmatprep.subr.bf16.mxu0 0
      %2694 = vmatpush1.bf16.msra.mxu0 0
      %2695 = vmatprep.subr.bf16.mxu0 0
      %2696 = vmatpush1.bf16.msra.mxu0 0
      %2697 = vmatprep.subr.bf16.mxu0 0
      %2698 = vmatpush1.bf16.msra.mxu0 0
      %2699 = vmatprep.subr.bf16.mxu0 0
      %2700 = vmatpush1.bf16.msra.mxu0 0
      %2701 = vmatprep.subr.bf16.mxu0 0
      %2702 = vmatpush1.bf16.msra.mxu0 0
      %2703 = vmatprep.subr.bf16.mxu0 0
      %2704 = vmatpush1.bf16.msra.mxu0 0
      %2705 = vmatprep.subr.bf16.mxu0 0
      %2706 = vmatpush1.bf16.msra.mxu0 0
      %2707 = vmatprep.subr.bf16.mxu0 0
      %2708 = vmatpush1.bf16.msra.mxu0 0
      %2709 = vmatprep.subr.bf16.mxu0 0
      %2710 = vmatpush1.bf16.msra.mxu0 0
      %2711 = vmatprep.subr.bf16.mxu0 0
      %2712 = vmatpush1.bf16.msra.mxu0 0
      %2713 = vmatprep.subr.bf16.mxu0 0
      %2714 = vmatpush1.bf16.msra.mxu0 0
      %2715 = vmatprep.subr.bf16.mxu0 0
      %2716 = vmatpush1.bf16.msra.mxu0 0
      %2717 = vmatprep.mubr.bf16.mxu0 0
      %2718 = vmatmul.mubr.bf16.gmra.mrb[0].mxu0 %v2662
      %v2719 = vpop.f32.mrb[0].mxu0
      %v2720 = vadd.f32 0.0, %v2719
      %v2721 = vpop.f32.mrb[0].mxu0
      %v2722 = vpop.f32.mrb[0].mxu0
      %v2723 = vadd.f32 0.0, %v2722
      %v2724 = vpop.f32.mrb[0].mxu0
      %2725 = vmatprep.mubr.bf16.mxu0 0
      %2726 = vmatmul.mubr.bf16.gmra.mrb[0].mxu0 %v2665
      %v2727 = vpop.f32.mrb[0].mxu0
      %v2728 = vadd.f32 0.0, %v2727
      %v2729 = vpop.f32.mrb[0].mxu0
      %v2730 = vpop.f32.mrb[0].mxu0
      %v2731 = vadd.f32 0.0, %v2730
      %v2732 = vpop.f32.mrb[0].mxu0
      %2733 = vmatprep.mubr.bf16.mxu0 0
      %2734 = vmatmul.mubr.bf16.gmra.mrb[0].mxu0 %v2668
      %v2735 = vpop.f32.mrb[0].mxu0
      %v2736 = vadd.f32 0.0, %v2735
      %v2737 = vpop.f32.mrb[0].mxu0
      %v2738 = vpop.f32.mrb[0].mxu0
      %v2739 = vadd.f32 0.0, %v2738
      %v2740 = vpop.f32.mrb[0].mxu0
      %2741 = vmatprep.mubr.bf16.mxu0 0
      %2742 = vmatmul.mubr.bf16.gmra.mrb[0].mxu0 %v2671
      %v2743 = vpop.f32.mrb[0].mxu0
      %v2744 = vadd.f32 0.0, %v2743
      %v2745 = vpop.f32.mrb[0].mxu0
      %v2746 = vpop.f32.mrb[0].mxu0
      %v2747 = vadd.f32 0.0, %v2746
      %v2748 = vpop.f32.mrb[0].mxu0
      %2749 = vmatprep.mubr.bf16.mxu0 0
      %2750 = vmatmul.mubr.bf16.gmra.mrb[0].mxu0 %v2674
      %v2751 = vpop.f32.mrb[0].mxu0
      %v2752 = vadd.f32 0.0, %v2751
      %v2753 = vpop.f32.mrb[0].mxu0
      %v2754 = vpop.f32.mrb[0].mxu0
      %v2755 = vadd.f32 0.0, %v2754
      %v2756 = vpop.f32.mrb[0].mxu0
      %2757 = vmatprep.mubr.bf16.mxu0 0
      %2758 = vmatmul.mubr.bf16.gmra.mrb[0].mxu0 %v2677
      %v2759 = vpop.f32.mrb[0].mxu0
      %v2760 = vadd.f32 0.0, %v2759
      %v2761 = vpop.f32.mrb[0].mxu0
      %v2762 = vpop.f32.mrb[0].mxu0
      %v2763 = vadd.f32 0.0, %v2762
      %v2764 = vpop.f32.mrb[0].mxu0
      %2765 = vmatprep.mubr.bf16.mxu0 0
      %2766 = vmatmul.mubr.bf16.gmra.mrb[0].mxu0 %v2680
      %v2767 = vpop.f32.mrb[0].mxu0
      %v2768 = vadd.f32 0.0, %v2767
      %v2769 = vpop.f32.mrb[0].mxu0
      %v2770 = vpop.f32.mrb[0].mxu0
      %v2771 = vpop.f32.mrb[0].mxu0
      %2772 = vdwg.mxu0
      %v2773 = vadd.f32 %v2626, %v2720
      %v2774 = vadd.f32 %v2627, %v2723
      %v2775 = vadd.f32 %v2628, %v2728
      %v2776 = vadd.f32 %v2629, %v2731
      %v2777 = vadd.f32 %v2630, %v2736
      %v2778 = vadd.f32 %v2631, %v2739
      %v2779 = vadd.f32 %v2632, %v2744
      %v2780 = vadd.f32 %v2633, %v2747
      %v2781 = vadd.f32 %v2634, %v2752
      %v2782 = vadd.f32 %v2635, %v2755
      %v2783 = vadd.f32 %v2636, %v2760
      %v2784 = vadd.f32 %v2637, %v2763
      %v2785 = vadd.f32 %v2638, %v2768
      %v2786 = vld [vmem:[#allocation2 + $0x10] sm:$0xff]
      %v2787 = vld [vmem:[#allocation2 + $0x18] sm:$0xff]
      %v2788 = vld [vmem:[#allocation2 + $0x20] sm:$0xff]
      %v2789 = vld [vmem:[#allocation2 + $0x28] sm:$0xff]
      %v2790 = vld [vmem:[#allocation2 + $0x30] sm:$0xff]
      %v2791 = vld [vmem:[#allocation2 + $0x38] sm:$0xff]
      %v2792 = vld [vmem:[#allocation2 + $0x40] sm:$0xff]
      %v2793 = vld [vmem:[#allocation2 + $0x48] sm:$0xff]
      %v2794 = vld [vmem:[#allocation2 + $0x50] sm:$0xff]
      %v2795 = vld [vmem:[#allocation2 + $0x58] sm:$0xff]
      %v2796 = vld [vmem:[#allocation2 + $0x60] sm:$0xff]
      %v2797 = vld [vmem:[#allocation2 + $0x68] sm:$0xff]
      %v2798 = vld [vmem:[#allocation2 + $0x70] sm:$0xf]
      %v2799 = vpack.c.bf16 %v2787, %v2786
      %v2800 = vpack.c.bf16 %v2789, %v2788
      %v2801 = vpack.c.bf16 %v2791, %v2790
      %v2802 = vpack.c.bf16 %v2793, %v2792
      %v2803 = vpack.c.bf16 %v2795, %v2794
      %v2804 = vpack.c.bf16 %v2797, %v2796
      %v2805 = vpack.c.bf16 %v2798, %v2798
      %s2806 = scalar_lea.vmem %s7, 52
      %v2807 = vld [vmem:[%s2806] sm:$0xf]
      %v2809 = vsel %vm414, %v2799, 0
      %v2812 = vsel %vm414, %v2800, 0
      %v2815 = vsel %vm414, %v2801, 0
      %v2818 = vsel %vm414, %v2802, 0
      %v2821 = vsel %vm414, %v2803, 0
      %v2824 = vsel %vm414, %v2804, 0
      %v2827 = vsel %vm414, %v2805, 0
      %v2830 = vsel %vm884, %v2807, 0
      %2832 = vmatprep.subr.bf16.mxu0 0
      %2833 = vmatpush1.bf16.msra.mxu0 %v2830
      %2834 = vmatprep.subr.bf16.mxu0 0
      %2835 = vmatpush1.bf16.msra.mxu0 0
      %2836 = vmatprep.subr.bf16.mxu0 0
      %2837 = vmatpush1.bf16.msra.mxu0 0
      %2838 = vmatprep.subr.bf16.mxu0 0
      %2839 = vmatpush1.bf16.msra.mxu0 0
      %2840 = vmatprep.subr.bf16.mxu0 0
      %2841 = vmatpush1.bf16.msra.mxu0 0
      %2842 = vmatprep.subr.bf16.mxu0 0
      %2843 = vmatpush1.bf16.msra.mxu0 0
      %2844 = vmatprep.subr.bf16.mxu0 0
      %2845 = vmatpush1.bf16.msra.mxu0 0
      %2846 = vmatprep.subr.bf16.mxu0 0
      %2847 = vmatpush1.bf16.msra.mxu0 0
      %2848 = vmatprep.subr.bf16.mxu0 0
      %2849 = vmatpush1.bf16.msra.mxu0 0
      %2850 = vmatprep.subr.bf16.mxu0 0
      %2851 = vmatpush1.bf16.msra.mxu0 0
      %2852 = vmatprep.subr.bf16.mxu0 0
      %2853 = vmatpush1.bf16.msra.mxu0 0
      %2854 = vmatprep.subr.bf16.mxu0 0
      %2855 = vmatpush1.bf16.msra.mxu0 0
      %2856 = vmatprep.subr.bf16.mxu0 0
      %2857 = vmatpush1.bf16.msra.mxu0 0
      %2858 = vmatprep.subr.bf16.mxu0 0
      %2859 = vmatpush1.bf16.msra.mxu0 0
      %2860 = vmatprep.subr.bf16.mxu0 0
      %2861 = vmatpush1.bf16.msra.mxu0 0
      %2862 = vmatprep.subr.bf16.mxu0 0
      %2863 = vmatpush1.bf16.msra.mxu0 0
      %2864 = vmatprep.mubr.bf16.mxu0 0
      %2865 = vmatmul.mubr.bf16.gmra.mrb[0].mxu0 %v2809
      %v2866 = vpop.f32.mrb[0].mxu0
      %v2867 = vadd.f32 0.0, %v2866
      %v2868 = vpop.f32.mrb[0].mxu0
      %v2869 = vpop.f32.mrb[0].mxu0
      %v2870 = vadd.f32 0.0, %v2869
      %v2871 = vpop.f32.mrb[0].mxu0
      %2872 = vmatprep.mubr.bf16.mxu0 0
      %2873 = vmatmul.mubr.bf16.gmra.mrb[0].mxu0 %v2812
      %v2874 = vpop.f32.mrb[0].mxu0
      %v2875 = vadd.f32 0.0, %v2874
      %v2876 = vpop.f32.mrb[0].mxu0
      %v2877 = vpop.f32.mrb[0].mxu0
      %v2878 = vadd.f32 0.0, %v2877
      %v2879 = vpop.f32.mrb[0].mxu0
      %2880 = vmatprep.mubr.bf16.mxu0 0
      %2881 = vmatmul.mubr.bf16.gmra.mrb[0].mxu0 %v2815
      %v2882 = vpop.f32.mrb[0].mxu0
      %v2883 = vadd.f32 0.0, %v2882
      %v2884 = vpop.f32.mrb[0].mxu0
      %v2885 = vpop.f32.mrb[0].mxu0
      %v2886 = vadd.f32 0.0, %v2885
      %v2887 = vpop.f32.mrb[0].mxu0
      %2888 = vmatprep.mubr.bf16.mxu0 0
      %2889 = vmatmul.mubr.bf16.gmra.mrb[0].mxu0 %v2818
      %v2890 = vpop.f32.mrb[0].mxu0
      %v2891 = vadd.f32 0.0, %v2890
      %v2892 = vpop.f32.mrb[0].mxu0
      %v2893 = vpop.f32.mrb[0].mxu0
      %v2894 = vadd.f32 0.0, %v2893
      %v2895 = vpop.f32.mrb[0].mxu0
      %2896 = vmatprep.mubr.bf16.mxu0 0
      %2897 = vmatmul.mubr.bf16.gmra.mrb[0].mxu0 %v2821
      %v2898 = vpop.f32.mrb[0].mxu0
      %v2899 = vadd.f32 0.0, %v2898
      %v2900 = vpop.f32.mrb[0].mxu0
      %v2901 = vpop.f32.mrb[0].mxu0
      %v2902 = vadd.f32 0.0, %v2901
      %v2903 = vpop.f32.mrb[0].mxu0
      %2904 = vmatprep.mubr.bf16.mxu0 0
      %2905 = vmatmul.mubr.bf16.gmra.mrb[0].mxu0 %v2824
      %v2906 = vpop.f32.mrb[0].mxu0
      %v2907 = vadd.f32 0.0, %v2906
      %v2908 = vpop.f32.mrb[0].mxu0
      %v2909 = vpop.f32.mrb[0].mxu0
      %v2910 = vadd.f32 0.0, %v2909
      %v2911 = vpop.f32.mrb[0].mxu0
      %2912 = vmatprep.mubr.bf16.mxu0 0
      %2913 = vmatmul.mubr.bf16.gmra.mrb[0].mxu0 %v2827
      %v2914 = vpop.f32.mrb[0].mxu0
      %v2915 = vadd.f32 0.0, %v2914
      %v2916 = vpop.f32.mrb[0].mxu0
      %v2917 = vpop.f32.mrb[0].mxu0
      %v2918 = vpop.f32.mrb[0].mxu0
      %2919 = vdwg.mxu0
      %v2920 = vadd.f32 %v2773, %v2867
      %v2921 = vadd.f32 %v2774, %v2870
      %v2922 = vadd.f32 %v2775, %v2875
      %v2923 = vadd.f32 %v2776, %v2878
      %v2924 = vadd.f32 %v2777, %v2883
      %v2925 = vadd.f32 %v2778, %v2886
      %v2926 = vadd.f32 %v2779, %v2891
      %v2927 = vadd.f32 %v2780, %v2894
      %v2928 = vadd.f32 %v2781, %v2899
      %v2929 = vadd.f32 %v2782, %v2902
      %v2930 = vadd.f32 %v2783, %v2907
      %v2931 = vadd.f32 %v2784, %v2910
      %v2932 = vadd.f32 %v2785, %v2915
      %v2933 = vld [vmem:[#allocation2 + $0x11] sm:$0xff]
      %v2934 = vld [vmem:[#allocation2 + $0x19] sm:$0xff]
      %v2935 = vld [vmem:[#allocation2 + $0x21] sm:$0xff]
      %v2936 = vld [vmem:[#allocation2 + $0x29] sm:$0xff]
      %v2937 = vld [vmem:[#allocation2 + $0x31] sm:$0xff]
      %v2938 = vld [vmem:[#allocation2 + $0x39] sm:$0xff]
      %v2939 = vld [vmem:[#allocation2 + $0x41] sm:$0xff]
      %v2940 = vld [vmem:[#allocation2 + $0x49] sm:$0xff]
      %v2941 = vld [vmem:[#allocation2 + $0x51] sm:$0xff]
      %v2942 = vld [vmem:[#allocation2 + $0x59] sm:$0xff]
      %v2943 = vld [vmem:[#allocation2 + $0x61] sm:$0xff]
      %v2944 = vld [vmem:[#allocation2 + $0x69] sm:$0xff]
      %v2945 = vld [vmem:[#allocation2 + $0x71] sm:$0xf]
      %v2946 = vpack.c.bf16 %v2934, %v2933
      %v2947 = vpack.c.bf16 %v2936, %v2935
      %v2948 = vpack.c.bf16 %v2938, %v2937
      %v2949 = vpack.c.bf16 %v2940, %v2939
      %v2950 = vpack.c.bf16 %v2942, %v2941
      %v2951 = vpack.c.bf16 %v2944, %v2943
      %v2952 = vpack.c.bf16 %v2945, %v2945
      %s2953 = scalar_lea.vmem %s7, 56
      %v2954 = vld [vmem:[%s2953] sm:$0xf]
      %v2956 = vsel %vm414, %v2946, 0
      %v2959 = vsel %vm414, %v2947, 0
      %v2962 = vsel %vm414, %v2948, 0
      %v2965 = vsel %vm414, %v2949, 0
      %v2968 = vsel %vm414, %v2950, 0
      %v2971 = vsel %vm414, %v2951, 0
      %v2974 = vsel %vm414, %v2952, 0
      %v2977 = vsel %vm884, %v2954, 0
      %2979 = vmatprep.subr.bf16.mxu0 0
      %2980 = vmatpush1.bf16.msra.mxu0 %v2977
      %2981 = vmatprep.subr.bf16.mxu0 0
      %2982 = vmatpush1.bf16.msra.mxu0 0
      %2983 = vmatprep.subr.bf16.mxu0 0
      %2984 = vmatpush1.bf16.msra.mxu0 0
      %2985 = vmatprep.subr.bf16.mxu0 0
      %2986 = vmatpush1.bf16.msra.mxu0 0
      %2987 = vmatprep.subr.bf16.mxu0 0
      %2988 = vmatpush1.bf16.msra.mxu0 0
      %2989 = vmatprep.subr.bf16.mxu0 0
      %2990 = vmatpush1.bf16.msra.mxu0 0
      %2991 = vmatprep.subr.bf16.mxu0 0
      %2992 = vmatpush1.bf16.msra.mxu0 0
      %2993 = vmatprep.subr.bf16.mxu0 0
      %2994 = vmatpush1.bf16.msra.mxu0 0
      %2995 = vmatprep.subr.bf16.mxu0 0
      %2996 = vmatpush1.bf16.msra.mxu0 0
      %2997 = vmatprep.subr.bf16.mxu0 0
      %2998 = vmatpush1.bf16.msra.mxu0 0
      %2999 = vmatprep.subr.bf16.mxu0 0
      %3000 = vmatpush1.bf16.msra.mxu0 0
      %3001 = vmatprep.subr.bf16.mxu0 0
      %3002 = vmatpush1.bf16.msra.mxu0 0
      %3003 = vmatprep.subr.bf16.mxu0 0
      %3004 = vmatpush1.bf16.msra.mxu0 0
      %3005 = vmatprep.subr.bf16.mxu0 0
      %3006 = vmatpush1.bf16.msra.mxu0 0
      %3007 = vmatprep.subr.bf16.mxu0 0
      %3008 = vmatpush1.bf16.msra.mxu0 0
      %3009 = vmatprep.subr.bf16.mxu0 0
      %3010 = vmatpush1.bf16.msra.mxu0 0
      %3011 = vmatprep.mubr.bf16.mxu0 0
      %3012 = vmatmul.mubr.bf16.gmra.mrb[0].mxu0 %v2956
      %v3013 = vpop.f32.mrb[0].mxu0
      %v3014 = vadd.f32 0.0, %v3013
      %v3015 = vpop.f32.mrb[0].mxu0
      %v3016 = vpop.f32.mrb[0].mxu0
      %v3017 = vadd.f32 0.0, %v3016
      %v3018 = vpop.f32.mrb[0].mxu0
      %3019 = vmatprep.mubr.bf16.mxu0 0
      %3020 = vmatmul.mubr.bf16.gmra.mrb[0].mxu0 %v2959
      %v3021 = vpop.f32.mrb[0].mxu0
      %v3022 = vadd.f32 0.0, %v3021
      %v3023 = vpop.f32.mrb[0].mxu0
      %v3024 = vpop.f32.mrb[0].mxu0
      %v3025 = vadd.f32 0.0, %v3024
      %v3026 = vpop.f32.mrb[0].mxu0
      %3027 = vmatprep.mubr.bf16.mxu0 0
      %3028 = vmatmul.mubr.bf16.gmra.mrb[0].mxu0 %v2962
      %v3029 = vpop.f32.mrb[0].mxu0
      %v3030 = vadd.f32 0.0, %v3029
      %v3031 = vpop.f32.mrb[0].mxu0
      %v3032 = vpop.f32.mrb[0].mxu0
      %v3033 = vadd.f32 0.0, %v3032
      %v3034 = vpop.f32.mrb[0].mxu0
      %3035 = vmatprep.mubr.bf16.mxu0 0
      %3036 = vmatmul.mubr.bf16.gmra.mrb[0].mxu0 %v2965
      %v3037 = vpop.f32.mrb[0].mxu0
      %v3038 = vadd.f32 0.0, %v3037
      %v3039 = vpop.f32.mrb[0].mxu0
      %v3040 = vpop.f32.mrb[0].mxu0
      %v3041 = vadd.f32 0.0, %v3040
      %v3042 = vpop.f32.mrb[0].mxu0
      %3043 = vmatprep.mubr.bf16.mxu0 0
      %3044 = vmatmul.mubr.bf16.gmra.mrb[0].mxu0 %v2968
      %v3045 = vpop.f32.mrb[0].mxu0
      %v3046 = vadd.f32 0.0, %v3045
      %v3047 = vpop.f32.mrb[0].mxu0
      %v3048 = vpop.f32.mrb[0].mxu0
      %v3049 = vadd.f32 0.0, %v3048
      %v3050 = vpop.f32.mrb[0].mxu0
      %3051 = vmatprep.mubr.bf16.mxu0 0
      %3052 = vmatmul.mubr.bf16.gmra.mrb[0].mxu0 %v2971
      %v3053 = vpop.f32.mrb[0].mxu0
      %v3054 = vadd.f32 0.0, %v3053
      %v3055 = vpop.f32.mrb[0].mxu0
      %v3056 = vpop.f32.mrb[0].mxu0
      %v3057 = vadd.f32 0.0, %v3056
      %v3058 = vpop.f32.mrb[0].mxu0
      %3059 = vmatprep.mubr.bf16.mxu0 0
      %3060 = vmatmul.mubr.bf16.gmra.mrb[0].mxu0 %v2974
      %v3061 = vpop.f32.mrb[0].mxu0
      %v3062 = vadd.f32 0.0, %v3061
      %v3063 = vpop.f32.mrb[0].mxu0
      %v3064 = vpop.f32.mrb[0].mxu0
      %v3065 = vpop.f32.mrb[0].mxu0
      %3066 = vdwg.mxu0
      %v3067 = vadd.f32 %v2920, %v3014
      %v3068 = vadd.f32 %v2921, %v3017
      %v3069 = vadd.f32 %v2922, %v3022
      %v3070 = vadd.f32 %v2923, %v3025
      %v3071 = vadd.f32 %v2924, %v3030
      %v3072 = vadd.f32 %v2925, %v3033
      %v3073 = vadd.f32 %v2926, %v3038
      %v3074 = vadd.f32 %v2927, %v3041
      %v3075 = vadd.f32 %v2928, %v3046
      %v3076 = vadd.f32 %v2929, %v3049
      %v3077 = vadd.f32 %v2930, %v3054
      %v3078 = vadd.f32 %v2931, %v3057
      %v3079 = vadd.f32 %v2932, %v3062
      %v3080 = vld [vmem:[#allocation2 + $0x19] sm:$0xff]
      %v3081 = vld [vmem:[#allocation2 + $0x21] sm:$0xff]
      %v3082 = vld [vmem:[#allocation2 + $0x29] sm:$0xff]
      %v3083 = vld [vmem:[#allocation2 + $0x31] sm:$0xff]
      %v3084 = vld [vmem:[#allocation2 + $0x39] sm:$0xff]
      %v3085 = vld [vmem:[#allocation2 + $0x41] sm:$0xff]
      %v3086 = vld [vmem:[#allocation2 + $0x49] sm:$0xff]
      %v3087 = vld [vmem:[#allocation2 + $0x51] sm:$0xff]
      %v3088 = vld [vmem:[#allocation2 + $0x59] sm:$0xff]
      %v3089 = vld [vmem:[#allocation2 + $0x61] sm:$0xff]
      %v3090 = vld [vmem:[#allocation2 + $0x69] sm:$0xff]
      %v3091 = vld [vmem:[#allocation2 + $0x71] sm:$0xff]
      %v3092 = vld [vmem:[#allocation2 + $0x79] sm:$0xf]
      %v3093 = vpack.c.bf16 %v3081, %v3080
      %v3094 = vpack.c.bf16 %v3083, %v3082
      %v3095 = vpack.c.bf16 %v3085, %v3084
      %v3096 = vpack.c.bf16 %v3087, %v3086
      %v3097 = vpack.c.bf16 %v3089, %v3088
      %v3098 = vpack.c.bf16 %v3091, %v3090
      %v3099 = vpack.c.bf16 %v3092, %v3092
      %s3100 = scalar_lea.vmem %s7, 60
      %v3101 = vld [vmem:[%s3100] sm:$0xf]
      %v3103 = vsel %vm414, %v3093, 0
      %v3106 = vsel %vm414, %v3094, 0
      %v3109 = vsel %vm414, %v3095, 0
      %v3112 = vsel %vm414, %v3096, 0
      %v3115 = vsel %vm414, %v3097, 0
      %v3118 = vsel %vm414, %v3098, 0
      %v3121 = vsel %vm414, %v3099, 0
      %v3124 = vsel %vm884, %v3101, 0
      %3126 = vmatprep.subr.bf16.mxu0 0
      %3127 = vmatpush1.bf16.msra.mxu0 %v3124
      %3128 = vmatprep.subr.bf16.mxu0 0
      %3129 = vmatpush1.bf16.msra.mxu0 0
      %3130 = vmatprep.subr.bf16.mxu0 0
      %3131 = vmatpush1.bf16.msra.mxu0 0
      %3132 = vmatprep.subr.bf16.mxu0 0
      %3133 = vmatpush1.bf16.msra.mxu0 0
      %3134 = vmatprep.subr.bf16.mxu0 0
      %3135 = vmatpush1.bf16.msra.mxu0 0
      %3136 = vmatprep.subr.bf16.mxu0 0
      %3137 = vmatpush1.bf16.msra.mxu0 0
      %3138 = vmatprep.subr.bf16.mxu0 0
      %3139 = vmatpush1.bf16.msra.mxu0 0
      %3140 = vmatprep.subr.bf16.mxu0 0
      %3141 = vmatpush1.bf16.msra.mxu0 0
      %3142 = vmatprep.subr.bf16.mxu0 0
      %3143 = vmatpush1.bf16.msra.mxu0 0
      %3144 = vmatprep.subr.bf16.mxu0 0
      %3145 = vmatpush1.bf16.msra.mxu0 0
      %3146 = vmatprep.subr.bf16.mxu0 0
      %3147 = vmatpush1.bf16.msra.mxu0 0
      %3148 = vmatprep.subr.bf16.mxu0 0
      %3149 = vmatpush1.bf16.msra.mxu0 0
      %3150 = vmatprep.subr.bf16.mxu0 0
      %3151 = vmatpush1.bf16.msra.mxu0 0
      %3152 = vmatprep.subr.bf16.mxu0 0
      %3153 = vmatpush1.bf16.msra.mxu0 0
      %3154 = vmatprep.subr.bf16.mxu0 0
      %3155 = vmatpush1.bf16.msra.mxu0 0
      %3156 = vmatprep.subr.bf16.mxu0 0
      %3157 = vmatpush1.bf16.msra.mxu0 0
      %3158 = vmatprep.mubr.bf16.mxu0 0
      %3159 = vmatmul.mubr.bf16.gmra.mrb[0].mxu0 %v3103
      %v3160 = vpop.f32.mrb[0].mxu0
      %v3161 = vadd.f32 0.0, %v3160
      %v3162 = vpop.f32.mrb[0].mxu0
      %v3163 = vpop.f32.mrb[0].mxu0
      %v3164 = vadd.f32 0.0, %v3163
      %v3165 = vpop.f32.mrb[0].mxu0
      %3166 = vmatprep.mubr.bf16.mxu0 0
      %3167 = vmatmul.mubr.bf16.gmra.mrb[0].mxu0 %v3106
      %v3168 = vpop.f32.mrb[0].mxu0
      %v3169 = vadd.f32 0.0, %v3168
      %v3170 = vpop.f32.mrb[0].mxu0
      %v3171 = vpop.f32.mrb[0].mxu0
      %v3172 = vadd.f32 0.0, %v3171
      %v3173 = vpop.f32.mrb[0].mxu0
      %3174 = vmatprep.mubr.bf16.mxu0 0
      %3175 = vmatmul.mubr.bf16.gmra.mrb[0].mxu0 %v3109
      %v3176 = vpop.f32.mrb[0].mxu0
      %v3177 = vadd.f32 0.0, %v3176
      %v3178 = vpop.f32.mrb[0].mxu0
      %v3179 = vpop.f32.mrb[0].mxu0
      %v3180 = vadd.f32 0.0, %v3179
      %v3181 = vpop.f32.mrb[0].mxu0
      %3182 = vmatprep.mubr.bf16.mxu0 0
      %3183 = vmatmul.mubr.bf16.gmra.mrb[0].mxu0 %v3112
      %v3184 = vpop.f32.mrb[0].mxu0
      %v3185 = vadd.f32 0.0, %v3184
      %v3186 = vpop.f32.mrb[0].mxu0
      %v3187 = vpop.f32.mrb[0].mxu0
      %v3188 = vadd.f32 0.0, %v3187
      %v3189 = vpop.f32.mrb[0].mxu0
      %3190 = vmatprep.mubr.bf16.mxu0 0
      %3191 = vmatmul.mubr.bf16.gmra.mrb[0].mxu0 %v3115
      %v3192 = vpop.f32.mrb[0].mxu0
      %v3193 = vadd.f32 0.0, %v3192
      %v3194 = vpop.f32.mrb[0].mxu0
      %v3195 = vpop.f32.mrb[0].mxu0
      %v3196 = vadd.f32 0.0, %v3195
      %v3197 = vpop.f32.mrb[0].mxu0
      %3198 = vmatprep.mubr.bf16.mxu0 0
      %3199 = vmatmul.mubr.bf16.gmra.mrb[0].mxu0 %v3118
      %v3200 = vpop.f32.mrb[0].mxu0
      %v3201 = vadd.f32 0.0, %v3200
      %v3202 = vpop.f32.mrb[0].mxu0
      %v3203 = vpop.f32.mrb[0].mxu0
      %v3204 = vadd.f32 0.0, %v3203
      %v3205 = vpop.f32.mrb[0].mxu0
      %3206 = vmatprep.mubr.bf16.mxu0 0
      %3207 = vmatmul.mubr.bf16.gmra.mrb[0].mxu0 %v3121
      %v3208 = vpop.f32.mrb[0].mxu0
      %v3209 = vadd.f32 0.0, %v3208
      %v3210 = vpop.f32.mrb[0].mxu0
      %v3211 = vpop.f32.mrb[0].mxu0
      %v3212 = vpop.f32.mrb[0].mxu0
      %3213 = vdwg.mxu0
      %v3214 = vadd.f32 %v3067, %v3161
      %v3215 = vadd.f32 %v3068, %v3164
      %v3216 = vadd.f32 %v3069, %v3169
      %v3217 = vadd.f32 %v3070, %v3172
      %v3218 = vadd.f32 %v3071, %v3177
      %v3219 = vadd.f32 %v3072, %v3180
      %v3220 = vadd.f32 %v3073, %v3185
      %v3221 = vadd.f32 %v3074, %v3188
      %v3222 = vadd.f32 %v3075, %v3193
      %v3223 = vadd.f32 %v3076, %v3196
      %v3224 = vadd.f32 %v3077, %v3201
      %v3225 = vadd.f32 %v3078, %v3204
      %v3226 = vadd.f32 %v3079, %v3209
      %v3227 = vld [vmem:[#allocation2 + $0x1a] sm:$0xff]
      %v3228 = vld [vmem:[#allocation2 + $0x22] sm:$0xff]
      %v3229 = vld [vmem:[#allocation2 + $0x2a] sm:$0xff]
      %v3230 = vld [vmem:[#allocation2 + $0x32] sm:$0xff]
      %v3231 = vld [vmem:[#allocation2 + $0x3a] sm:$0xff]
      %v3232 = vld [vmem:[#allocation2 + $0x42] sm:$0xff]
      %v3233 = vld [vmem:[#allocation2 + $0x4a] sm:$0xff]
      %v3234 = vld [vmem:[#allocation2 + $0x52] sm:$0xff]
      %v3235 = vld [vmem:[#allocation2 + $0x5a] sm:$0xff]
      %v3236 = vld [vmem:[#allocation2 + $0x62] sm:$0xff]
      %v3237 = vld [vmem:[#allocation2 + $0x6a] sm:$0xff]
      %v3238 = vld [vmem:[#allocation2 + $0x72] sm:$0xff]
      %v3239 = vld [vmem:[#allocation2 + $0x7a] sm:$0xf]
      %v3240 = vpack.c.bf16 %v3228, %v3227
      %v3241 = vpack.c.bf16 %v3230, %v3229
      %v3242 = vpack.c.bf16 %v3232, %v3231
      %v3243 = vpack.c.bf16 %v3234, %v3233
      %v3244 = vpack.c.bf16 %v3236, %v3235
      %v3245 = vpack.c.bf16 %v3238, %v3237
      %v3246 = vpack.c.bf16 %v3239, %v3239
      %s3247 = scalar_lea.vmem %s7, 64
      %v3248 = vld [vmem:[%s3247] sm:$0xf]
      %v3250 = vsel %vm414, %v3240, 0
      %v3253 = vsel %vm414, %v3241, 0
      %v3256 = vsel %vm414, %v3242, 0
      %v3259 = vsel %vm414, %v3243, 0
      %v3262 = vsel %vm414, %v3244, 0
      %v3265 = vsel %vm414, %v3245, 0
      %v3268 = vsel %vm414, %v3246, 0
      %v3271 = vsel %vm884, %v3248, 0
      %3273 = vmatprep.subr.bf16.mxu0 0
      %3274 = vmatpush1.bf16.msra.mxu0 %v3271
      %3275 = vmatprep.subr.bf16.mxu0 0
      %3276 = vmatpush1.bf16.msra.mxu0 0
      %3277 = vmatprep.subr.bf16.mxu0 0
      %3278 = vmatpush1.bf16.msra.mxu0 0
      %3279 = vmatprep.subr.bf16.mxu0 0
      %3280 = vmatpush1.bf16.msra.mxu0 0
      %3281 = vmatprep.subr.bf16.mxu0 0
      %3282 = vmatpush1.bf16.msra.mxu0 0
      %3283 = vmatprep.subr.bf16.mxu0 0
      %3284 = vmatpush1.bf16.msra.mxu0 0
      %3285 = vmatprep.subr.bf16.mxu0 0
      %3286 = vmatpush1.bf16.msra.mxu0 0
      %3287 = vmatprep.subr.bf16.mxu0 0
      %3288 = vmatpush1.bf16.msra.mxu0 0
      %3289 = vmatprep.subr.bf16.mxu0 0
      %3290 = vmatpush1.bf16.msra.mxu0 0
      %3291 = vmatprep.subr.bf16.mxu0 0
      %3292 = vmatpush1.bf16.msra.mxu0 0
      %3293 = vmatprep.subr.bf16.mxu0 0
      %3294 = vmatpush1.bf16.msra.mxu0 0
      %3295 = vmatprep.subr.bf16.mxu0 0
      %3296 = vmatpush1.bf16.msra.mxu0 0
      %3297 = vmatprep.subr.bf16.mxu0 0
      %3298 = vmatpush1.bf16.msra.mxu0 0
      %3299 = vmatprep.subr.bf16.mxu0 0
      %3300 = vmatpush1.bf16.msra.mxu0 0
      %3301 = vmatprep.subr.bf16.mxu0 0
      %3302 = vmatpush1.bf16.msra.mxu0 0
      %3303 = vmatprep.subr.bf16.mxu0 0
      %3304 = vmatpush1.bf16.msra.mxu0 0
      %3305 = vmatprep.mubr.bf16.mxu0 0
      %3306 = vmatmul.mubr.bf16.gmra.mrb[0].mxu0 %v3250
      %v3307 = vpop.f32.mrb[0].mxu0
      %v3308 = vadd.f32 0.0, %v3307
      %v3309 = vpop.f32.mrb[0].mxu0
      %v3310 = vpop.f32.mrb[0].mxu0
      %v3311 = vadd.f32 0.0, %v3310
      %v3312 = vpop.f32.mrb[0].mxu0
      %3313 = vmatprep.mubr.bf16.mxu0 0
      %3314 = vmatmul.mubr.bf16.gmra.mrb[0].mxu0 %v3253
      %v3315 = vpop.f32.mrb[0].mxu0
      %v3316 = vadd.f32 0.0, %v3315
      %v3317 = vpop.f32.mrb[0].mxu0
      %v3318 = vpop.f32.mrb[0].mxu0
      %v3319 = vadd.f32 0.0, %v3318
      %v3320 = vpop.f32.mrb[0].mxu0
      %3321 = vmatprep.mubr.bf16.mxu0 0
      %3322 = vmatmul.mubr.bf16.gmra.mrb[0].mxu0 %v3256
      %v3323 = vpop.f32.mrb[0].mxu0
      %v3324 = vadd.f32 0.0, %v3323
      %v3325 = vpop.f32.mrb[0].mxu0
      %v3326 = vpop.f32.mrb[0].mxu0
      %v3327 = vadd.f32 0.0, %v3326
      %v3328 = vpop.f32.mrb[0].mxu0
      %3329 = vmatprep.mubr.bf16.mxu0 0
      %3330 = vmatmul.mubr.bf16.gmra.mrb[0].mxu0 %v3259
      %v3331 = vpop.f32.mrb[0].mxu0
      %v3332 = vadd.f32 0.0, %v3331
      %v3333 = vpop.f32.mrb[0].mxu0
      %v3334 = vpop.f32.mrb[0].mxu0
      %v3335 = vadd.f32 0.0, %v3334
      %v3336 = vpop.f32.mrb[0].mxu0
      %3337 = vmatprep.mubr.bf16.mxu0 0
      %3338 = vmatmul.mubr.bf16.gmra.mrb[0].mxu0 %v3262
      %v3339 = vpop.f32.mrb[0].mxu0
      %v3340 = vadd.f32 0.0, %v3339
      %v3341 = vpop.f32.mrb[0].mxu0
      %v3342 = vpop.f32.mrb[0].mxu0
      %v3343 = vadd.f32 0.0, %v3342
      %v3344 = vpop.f32.mrb[0].mxu0
      %3345 = vmatprep.mubr.bf16.mxu0 0
      %3346 = vmatmul.mubr.bf16.gmra.mrb[0].mxu0 %v3265
      %v3347 = vpop.f32.mrb[0].mxu0
      %v3348 = vadd.f32 0.0, %v3347
      %v3349 = vpop.f32.mrb[0].mxu0
      %v3350 = vpop.f32.mrb[0].mxu0
      %v3351 = vadd.f32 0.0, %v3350
      %v3352 = vpop.f32.mrb[0].mxu0
      %3353 = vmatprep.mubr.bf16.mxu0 0
      %3354 = vmatmul.mubr.bf16.gmra.mrb[0].mxu0 %v3268
      %v3355 = vpop.f32.mrb[0].mxu0
      %v3356 = vadd.f32 0.0, %v3355
      %v3357 = vpop.f32.mrb[0].mxu0
      %v3358 = vpop.f32.mrb[0].mxu0
      %v3359 = vpop.f32.mrb[0].mxu0
      %3360 = vdwg.mxu0
      %v3361 = vadd.f32 %v3214, %v3308
      %v3362 = vadd.f32 %v3215, %v3311
      %v3363 = vadd.f32 %v3216, %v3316
      %v3364 = vadd.f32 %v3217, %v3319
      %v3365 = vadd.f32 %v3218, %v3324
      %v3366 = vadd.f32 %v3219, %v3327
      %v3367 = vadd.f32 %v3220, %v3332
      %v3368 = vadd.f32 %v3221, %v3335
      %v3369 = vadd.f32 %v3222, %v3340
      %v3370 = vadd.f32 %v3223, %v3343
      %v3371 = vadd.f32 %v3224, %v3348
      %v3372 = vadd.f32 %v3225, %v3351
      %v3373 = vadd.f32 %v3226, %v3356
      %v3374 = vld [vmem:[#allocation2 + $0x1b] sm:$0xff]
      %v3375 = vld [vmem:[#allocation2 + $0x23] sm:$0xff]
      %v3376 = vld [vmem:[#allocation2 + $0x2b] sm:$0xff]
      %v3377 = vld [vmem:[#allocation2 + $0x33] sm:$0xff]
      %v3378 = vld [vmem:[#allocation2 + $0x3b] sm:$0xff]
      %v3379 = vld [vmem:[#allocation2 + $0x43] sm:$0xff]
      %v3380 = vld [vmem:[#allocation2 + $0x4b] sm:$0xff]
      %v3381 = vld [vmem:[#allocation2 + $0x53] sm:$0xff]
      %v3382 = vld [vmem:[#allocation2 + $0x5b] sm:$0xff]
      %v3383 = vld [vmem:[#allocation2 + $0x63] sm:$0xff]
      %v3384 = vld [vmem:[#allocation2 + $0x6b] sm:$0xff]
      %v3385 = vld [vmem:[#allocation2 + $0x73] sm:$0xff]
      %v3386 = vld [vmem:[#allocation2 + $0x7b] sm:$0xf]
      %v3387 = vpack.c.bf16 %v3375, %v3374
      %v3388 = vpack.c.bf16 %v3377, %v3376
      %v3389 = vpack.c.bf16 %v3379, %v3378
      %v3390 = vpack.c.bf16 %v3381, %v3380
      %v3391 = vpack.c.bf16 %v3383, %v3382
      %v3392 = vpack.c.bf16 %v3385, %v3384
      %v3393 = vpack.c.bf16 %v3386, %v3386
      %s3394 = scalar_lea.vmem %s7, 68
      %v3395 = vld [vmem:[%s3394] sm:$0xf]
      %v3397 = vsel %vm414, %v3387, 0
      %v3400 = vsel %vm414, %v3388, 0
      %v3403 = vsel %vm414, %v3389, 0
      %v3406 = vsel %vm414, %v3390, 0
      %v3409 = vsel %vm414, %v3391, 0
      %v3412 = vsel %vm414, %v3392, 0
      %v3415 = vsel %vm414, %v3393, 0
      %v3418 = vsel %vm884, %v3395, 0
      %3420 = vmatprep.subr.bf16.mxu0 0
      %3421 = vmatpush1.bf16.msra.mxu0 %v3418
      %3422 = vmatprep.subr.bf16.mxu0 0
      %3423 = vmatpush1.bf16.msra.mxu0 0
      %3424 = vmatprep.subr.bf16.mxu0 0
      %3425 = vmatpush1.bf16.msra.mxu0 0
      %3426 = vmatprep.subr.bf16.mxu0 0
      %3427 = vmatpush1.bf16.msra.mxu0 0
      %3428 = vmatprep.subr.bf16.mxu0 0
      %3429 = vmatpush1.bf16.msra.mxu0 0
      %3430 = vmatprep.subr.bf16.mxu0 0
      %3431 = vmatpush1.bf16.msra.mxu0 0
      %3432 = vmatprep.subr.bf16.mxu0 0
      %3433 = vmatpush1.bf16.msra.mxu0 0
      %3434 = vmatprep.subr.bf16.mxu0 0
      %3435 = vmatpush1.bf16.msra.mxu0 0
      %3436 = vmatprep.subr.bf16.mxu0 0
      %3437 = vmatpush1.bf16.msra.mxu0 0
      %3438 = vmatprep.subr.bf16.mxu0 0
      %3439 = vmatpush1.bf16.msra.mxu0 0
      %3440 = vmatprep.subr.bf16.mxu0 0
      %3441 = vmatpush1.bf16.msra.mxu0 0
      %3442 = vmatprep.subr.bf16.mxu0 0
      %3443 = vmatpush1.bf16.msra.mxu0 0
      %3444 = vmatprep.subr.bf16.mxu0 0
      %3445 = vmatpush1.bf16.msra.mxu0 0
      %3446 = vmatprep.subr.bf16.mxu0 0
      %3447 = vmatpush1.bf16.msra.mxu0 0
      %3448 = vmatprep.subr.bf16.mxu0 0
      %3449 = vmatpush1.bf16.msra.mxu0 0
      %3450 = vmatprep.subr.bf16.mxu0 0
      %3451 = vmatpush1.bf16.msra.mxu0 0
      %3452 = vmatprep.mubr.bf16.mxu0 0
      %3453 = vmatmul.mubr.bf16.gmra.mrb[0].mxu0 %v3397
      %v3454 = vpop.f32.mrb[0].mxu0
      %v3455 = vadd.f32 0.0, %v3454
      %v3456 = vpop.f32.mrb[0].mxu0
      %v3457 = vpop.f32.mrb[0].mxu0
      %v3458 = vadd.f32 0.0, %v3457
      %v3459 = vpop.f32.mrb[0].mxu0
      %3460 = vmatprep.mubr.bf16.mxu0 0
      %3461 = vmatmul.mubr.bf16.gmra.mrb[0].mxu0 %v3400
      %v3462 = vpop.f32.mrb[0].mxu0
      %v3463 = vadd.f32 0.0, %v3462
      %v3464 = vpop.f32.mrb[0].mxu0
      %v3465 = vpop.f32.mrb[0].mxu0
      %v3466 = vadd.f32 0.0, %v3465
      %v3467 = vpop.f32.mrb[0].mxu0
      %3468 = vmatprep.mubr.bf16.mxu0 0
      %3469 = vmatmul.mubr.bf16.gmra.mrb[0].mxu0 %v3403
      %v3470 = vpop.f32.mrb[0].mxu0
      %v3471 = vadd.f32 0.0, %v3470
      %v3472 = vpop.f32.mrb[0].mxu0
      %v3473 = vpop.f32.mrb[0].mxu0
      %v3474 = vadd.f32 0.0, %v3473
      %v3475 = vpop.f32.mrb[0].mxu0
      %3476 = vmatprep.mubr.bf16.mxu0 0
      %3477 = vmatmul.mubr.bf16.gmra.mrb[0].mxu0 %v3406
      %v3478 = vpop.f32.mrb[0].mxu0
      %v3479 = vadd.f32 0.0, %v3478
      %v3480 = vpop.f32.mrb[0].mxu0
      %v3481 = vpop.f32.mrb[0].mxu0
      %v3482 = vadd.f32 0.0, %v3481
      %v3483 = vpop.f32.mrb[0].mxu0
      %3484 = vmatprep.mubr.bf16.mxu0 0
      %3485 = vmatmul.mubr.bf16.gmra.mrb[0].mxu0 %v3409
      %v3486 = vpop.f32.mrb[0].mxu0
      %v3487 = vadd.f32 0.0, %v3486
      %v3488 = vpop.f32.mrb[0].mxu0
      %v3489 = vpop.f32.mrb[0].mxu0
      %v3490 = vadd.f32 0.0, %v3489
      %v3491 = vpop.f32.mrb[0].mxu0
      %3492 = vmatprep.mubr.bf16.mxu0 0
      %3493 = vmatmul.mubr.bf16.gmra.mrb[0].mxu0 %v3412
      %v3494 = vpop.f32.mrb[0].mxu0
      %v3495 = vadd.f32 0.0, %v3494
      %v3496 = vpop.f32.mrb[0].mxu0
      %v3497 = vpop.f32.mrb[0].mxu0
      %v3498 = vadd.f32 0.0, %v3497
      %v3499 = vpop.f32.mrb[0].mxu0
      %3500 = vmatprep.mubr.bf16.mxu0 0
      %3501 = vmatmul.mubr.bf16.gmra.mrb[0].mxu0 %v3415
      %v3502 = vpop.f32.mrb[0].mxu0
      %v3503 = vadd.f32 0.0, %v3502
      %v3504 = vpop.f32.mrb[0].mxu0
      %v3505 = vpop.f32.mrb[0].mxu0
      %v3506 = vpop.f32.mrb[0].mxu0
      %3507 = vdwg.mxu0
      %v3508 = vadd.f32 %v3361, %v3455
      %v3509 = vadd.f32 %v3362, %v3458
      %v3510 = vadd.f32 %v3363, %v3463
      %v3511 = vadd.f32 %v3364, %v3466
      %v3512 = vadd.f32 %v3365, %v3471
      %v3513 = vadd.f32 %v3366, %v3474
      %v3514 = vadd.f32 %v3367, %v3479
      %v3515 = vadd.f32 %v3368, %v3482
      %v3516 = vadd.f32 %v3369, %v3487
      %v3517 = vadd.f32 %v3370, %v3490
      %v3518 = vadd.f32 %v3371, %v3495
      %v3519 = vadd.f32 %v3372, %v3498
      %v3520 = vadd.f32 %v3373, %v3503
      %v3521 = vadd.f32 %v662, %v3508
      %v3522 = vadd.f32 %v665, %v3509
      %v3523 = vadd.f32 %v670, %v3510
      %v3524 = vadd.f32 %v673, %v3511
      %v3525 = vadd.f32 %v678, %v3512
      %v3526 = vadd.f32 %v681, %v3513
      %v3527 = vadd.f32 %v686, %v3514
      %v3528 = vadd.f32 %v689, %v3515
      %v3529 = vadd.f32 %v694, %v3516
      %v3530 = vadd.f32 %v697, %v3517
      %v3531 = vadd.f32 %v702, %v3518
      %v3532 = vadd.f32 %v705, %v3519
      %v3533 = vadd.f32 %v710, %v3520
      %s3534 = scalar_lea.vmem %s5, 2
      %v3535 = vld [vmem:[%s3534] sm:$0x1]
      %s3536 = scalar_lea.vmem %s6, 2
      %v3537 = vld [vmem:[%s3536] sm:$0x1]
      %v3539 = vlaneseq
      %v3540 = vshrl.u32 %v3539, 7
      %v3541 = vsub.s32 0, %v3540
      %v3542 = vrot.slane %v3535, %v3541
      %v3544 = vmul.f32 %v3521, %v3542
      %v3545 = vmul.f32 %v3522, %v3542
      %v3546 = vmul.f32 %v3523, %v3542
      %v3547 = vmul.f32 %v3524, %v3542
      %v3548 = vmul.f32 %v3525, %v3542
      %v3549 = vmul.f32 %v3526, %v3542
      %v3550 = vmul.f32 %v3527, %v3542
      %v3551 = vmul.f32 %v3528, %v3542
      %v3552 = vmul.f32 %v3529, %v3542
      %v3553 = vmul.f32 %v3530, %v3542
      %v3554 = vmul.f32 %v3531, %v3542
      %v3555 = vmul.f32 %v3532, %v3542
      %v3556 = vmul.f32 %v3533, %v3542
      %v3558 = vlaneseq
      %v3559 = vshrl.u32 %v3558, 7
      %v3560 = vsub.s32 0, %v3559
      %v3561 = vrot.slane %v3537, %v3560
      %v3563 = vadd.f32 %v3544, %v3561
      %v3564 = vadd.f32 %v3545, %v3561
      %v3565 = vadd.f32 %v3546, %v3561
      %v3566 = vadd.f32 %v3547, %v3561
      %v3567 = vadd.f32 %v3548, %v3561
      %v3568 = vadd.f32 %v3549, %v3561
      %v3569 = vadd.f32 %v3550, %v3561
      %v3570 = vadd.f32 %v3551, %v3561
      %v3571 = vadd.f32 %v3552, %v3561
      %v3572 = vadd.f32 %v3553, %v3561
      %v3573 = vadd.f32 %v3554, %v3561
      %v3574 = vadd.f32 %v3555, %v3561
      %v3575 = vadd.f32 %v3556, %v3561
      %vm3576 = vcmp.gt.f32.partialorder %v3563, 0.0
      %vm3577 = vcmp.gt.f32.partialorder %v3564, 0.0
      %vm3578 = vcmp.gt.f32.partialorder %v3565, 0.0
      %vm3579 = vcmp.gt.f32.partialorder %v3566, 0.0
      %vm3580 = vcmp.gt.f32.partialorder %v3567, 0.0
      %vm3581 = vcmp.gt.f32.partialorder %v3568, 0.0
      %vm3582 = vcmp.gt.f32.partialorder %v3569, 0.0
      %vm3583 = vcmp.gt.f32.partialorder %v3570, 0.0
      %vm3584 = vcmp.gt.f32.partialorder %v3571, 0.0
      %vm3585 = vcmp.gt.f32.partialorder %v3572, 0.0
      %vm3586 = vcmp.gt.f32.partialorder %v3573, 0.0
      %vm3587 = vcmp.gt.f32.partialorder %v3574, 0.0
      %vm3588 = vcmp.gt.f32.partialorder %v3575, 0.0
      %v3589 = vmul.f32 %v3563, 0.01
      %v3590 = vmul.f32 %v3564, 0.01
      %v3591 = vmul.f32 %v3565, 0.01
      %v3592 = vmul.f32 %v3566, 0.01
      %v3593 = vmul.f32 %v3567, 0.01
      %v3594 = vmul.f32 %v3568, 0.01
      %v3595 = vmul.f32 %v3569, 0.01
      %v3596 = vmul.f32 %v3570, 0.01
      %v3597 = vmul.f32 %v3571, 0.01
      %v3598 = vmul.f32 %v3572, 0.01
      %v3599 = vmul.f32 %v3573, 0.01
      %v3600 = vmul.f32 %v3574, 0.01
      %v3601 = vmul.f32 %v3575, 0.01
      %v3602 = vsel %vm3576, %v3563, %v3589
      %v3603 = vsel %vm3577, %v3564, %v3590
      %v3604 = vsel %vm3578, %v3565, %v3591
      %v3605 = vsel %vm3579, %v3566, %v3592
      %v3606 = vsel %vm3580, %v3567, %v3593
      %v3607 = vsel %vm3581, %v3568, %v3594
      %v3608 = vsel %vm3582, %v3569, %v3595
      %v3609 = vsel %vm3583, %v3570, %v3596
      %v3610 = vsel %vm3584, %v3571, %v3597
      %v3611 = vsel %vm3585, %v3572, %v3598
      %v3612 = vsel %vm3586, %v3573, %v3599
      %v3613 = vsel %vm3587, %v3574, %v3600
      %v3614 = vsel %vm3588, %v3575, %v3601
      %v3615 = vmul.f32 %v3602, %v515
      %v3616 = vmul.f32 %v3603, %v520
      %v3617 = vmul.f32 %v3604, %v525
      %v3618 = vmul.f32 %v3605, %v530
      %v3619 = vmul.f32 %v3606, %v535
      %v3620 = vmul.f32 %v3607, %v540
      %v3621 = vmul.f32 %v3608, %v545
      %v3622 = vmul.f32 %v3609, %v550
      %v3623 = vmul.f32 %v3610, %v555
      %v3624 = vmul.f32 %v3611, %v560
      %v3625 = vmul.f32 %v3612, %v565
      %v3626 = vmul.f32 %v3613, %v570
      %v3627 = vmul.f32 %v3614, %v575
      %3628 = vst.msk [vmem:[#allocation2 + $0x10] sm:$0xff] %vm414, %v3615
      %3629 = vst.msk [vmem:[#allocation2 + $0x18] sm:$0xff] %vm414, %v3616
      %3630 = vst.msk [vmem:[#allocation2 + $0x20] sm:$0xff] %vm414, %v3617
      %3631 = vst.msk [vmem:[#allocation2 + $0x28] sm:$0xff] %vm414, %v3618
      %3632 = vst.msk [vmem:[#allocation2 + $0x30] sm:$0xff] %vm414, %v3619
      %3633 = vst.msk [vmem:[#allocation2 + $0x38] sm:$0xff] %vm414, %v3620
      %3634 = vst.msk [vmem:[#allocation2 + $0x40] sm:$0xff] %vm414, %v3621
      %3635 = vst.msk [vmem:[#allocation2 + $0x48] sm:$0xff] %vm414, %v3622
      %3636 = vst.msk [vmem:[#allocation2 + $0x50] sm:$0xff] %vm414, %v3623
      %3637 = vst.msk [vmem:[#allocation2 + $0x58] sm:$0xff] %vm414, %v3624
      %3638 = vst.msk [vmem:[#allocation2 + $0x60] sm:$0xff] %vm414, %v3625
      %3639 = vst.msk [vmem:[#allocation2 + $0x68] sm:$0xff] %vm414, %v3626
      %3640 = vst.msk [vmem:[#allocation2 + $0x70] sm:$0xf] %vm431, %v3627
      %v3641 = vld [vmem:[#allocation2 + $0x5] sm:$0xff]
      %v3642 = vld [vmem:[#allocation2 + $0xd] sm:$0xff]
      %v3643 = vld [vmem:[#allocation2 + $0x15] sm:$0xff]
      %v3644 = vld [vmem:[#allocation2 + $0x1d] sm:$0xff]
      %v3645 = vld [vmem:[#allocation2 + $0x25] sm:$0xff]
      %v3646 = vld [vmem:[#allocation2 + $0x2d] sm:$0xff]
      %v3647 = vld [vmem:[#allocation2 + $0x35] sm:$0xff]
      %v3648 = vld [vmem:[#allocation2 + $0x3d] sm:$0xff]
      %v3649 = vld [vmem:[#allocation2 + $0x45] sm:$0xff]
      %v3650 = vld [vmem:[#allocation2 + $0x4d] sm:$0xff]
      %v3651 = vld [vmem:[#allocation2 + $0x55] sm:$0xff]
      %v3652 = vld [vmem:[#allocation2 + $0x5d] sm:$0xff]
      %v3653 = vld [vmem:[#allocation2 + $0x65] sm:$0xf]
      %v3654 = vpack.c.bf16 %v3642, %v3641
      %v3655 = vpack.c.bf16 %v3644, %v3643
      %v3656 = vpack.c.bf16 %v3646, %v3645
      %v3657 = vpack.c.bf16 %v3648, %v3647
      %v3658 = vpack.c.bf16 %v3650, %v3649
      %v3659 = vpack.c.bf16 %v3652, %v3651
      %v3660 = vpack.c.bf16 %v3653, %v3653
      %s3661 = scalar_lea.vmem %s7, 72
      %v3662 = vld [vmem:[%s3661] sm:$0xf]
      %v3663 = vld [vmem:[#allocation2 + $0x6] sm:$0xff]
      %v3664 = vld [vmem:[#allocation2 + $0xe] sm:$0xff]
      %v3665 = vld [vmem:[#allocation2 + $0x16] sm:$0xff]
      %v3666 = vld [vmem:[#allocation2 + $0x1e] sm:$0xff]
      %v3667 = vld [vmem:[#allocation2 + $0x26] sm:$0xff]
      %v3668 = vld [vmem:[#allocation2 + $0x2e] sm:$0xff]
      %v3669 = vld [vmem:[#allocation2 + $0x36] sm:$0xff]
      %v3670 = vld [vmem:[#allocation2 + $0x3e] sm:$0xff]
      %v3671 = vld [vmem:[#allocation2 + $0x46] sm:$0xff]
      %v3672 = vld [vmem:[#allocation2 + $0x4e] sm:$0xff]
      %v3673 = vld [vmem:[#allocation2 + $0x56] sm:$0xff]
      %v3674 = vld [vmem:[#allocation2 + $0x5e] sm:$0xff]
      %v3675 = vld [vmem:[#allocation2 + $0x66] sm:$0xf]
      %v3676 = vpack.c.bf16 %v3664, %v3663
      %v3677 = vpack.c.bf16 %v3666, %v3665
      %v3678 = vpack.c.bf16 %v3668, %v3667
      %v3679 = vpack.c.bf16 %v3670, %v3669
      %v3680 = vpack.c.bf16 %v3672, %v3671
      %v3681 = vpack.c.bf16 %v3674, %v3673
      %v3682 = vpack.c.bf16 %v3675, %v3675
      %s3683 = scalar_lea.vmem %s7, 76
      %v3684 = vld [vmem:[%s3683] sm:$0xf]
      %v3686 = vsel %vm414, %v3676, 0
      %v3689 = vsel %vm414, %v3677, 0
      %v3692 = vsel %vm414, %v3678, 0
      %v3695 = vsel %vm414, %v3679, 0
      %v3698 = vsel %vm414, %v3680, 0
      %v3701 = vsel %vm414, %v3681, 0
      %v3704 = vsel %vm414, %v3682, 0
      %v3707 = vsel %vm884, %v3684, 0
      %3709 = vmatprep.subr.bf16.mxu0 0
      %3710 = vmatpush1.bf16.msra.mxu0 %v3707
      %3711 = vmatprep.subr.bf16.mxu0 0
      %3712 = vmatpush1.bf16.msra.mxu0 0
      %3713 = vmatprep.subr.bf16.mxu0 0
      %3714 = vmatpush1.bf16.msra.mxu0 0
      %3715 = vmatprep.subr.bf16.mxu0 0
      %3716 = vmatpush1.bf16.msra.mxu0 0
      %3717 = vmatprep.subr.bf16.mxu0 0
      %3718 = vmatpush1.bf16.msra.mxu0 0
      %3719 = vmatprep.subr.bf16.mxu0 0
      %3720 = vmatpush1.bf16.msra.mxu0 0
      %3721 = vmatprep.subr.bf16.mxu0 0
      %3722 = vmatpush1.bf16.msra.mxu0 0
      %3723 = vmatprep.subr.bf16.mxu0 0
      %3724 = vmatpush1.bf16.msra.mxu0 0
      %3725 = vmatprep.subr.bf16.mxu0 0
      %3726 = vmatpush1.bf16.msra.mxu0 0
      %3727 = vmatprep.subr.bf16.mxu0 0
      %3728 = vmatpush1.bf16.msra.mxu0 0
      %3729 = vmatprep.subr.bf16.mxu0 0
      %3730 = vmatpush1.bf16.msra.mxu0 0
      %3731 = vmatprep.subr.bf16.mxu0 0
      %3732 = vmatpush1.bf16.msra.mxu0 0
      %3733 = vmatprep.subr.bf16.mxu0 0
      %3734 = vmatpush1.bf16.msra.mxu0 0
      %3735 = vmatprep.subr.bf16.mxu0 0
      %3736 = vmatpush1.bf16.msra.mxu0 0
      %3737 = vmatprep.subr.bf16.mxu0 0
      %3738 = vmatpush1.bf16.msra.mxu0 0
      %3739 = vmatprep.subr.bf16.mxu0 0
      %3740 = vmatpush1.bf16.msra.mxu0 0
      %3741 = vmatprep.mubr.bf16.mxu0 0
      %3742 = vmatmul.mubr.bf16.gmra.mrb[0].mxu0 %v3686
      %v3743 = vpop.f32.mrb[0].mxu0
      %v3744 = vadd.f32 0.0, %v3743
      %v3745 = vpop.f32.mrb[0].mxu0
      %v3746 = vpop.f32.mrb[0].mxu0
      %v3747 = vadd.f32 0.0, %v3746
      %v3748 = vpop.f32.mrb[0].mxu0
      %3749 = vmatprep.mubr.bf16.mxu0 0
      %3750 = vmatmul.mubr.bf16.gmra.mrb[0].mxu0 %v3689
      %v3751 = vpop.f32.mrb[0].mxu0
      %v3752 = vadd.f32 0.0, %v3751
      %v3753 = vpop.f32.mrb[0].mxu0
      %v3754 = vpop.f32.mrb[0].mxu0
      %v3755 = vadd.f32 0.0, %v3754
      %v3756 = vpop.f32.mrb[0].mxu0
      %3757 = vmatprep.mubr.bf16.mxu0 0
      %3758 = vmatmul.mubr.bf16.gmra.mrb[0].mxu0 %v3692
      %v3759 = vpop.f32.mrb[0].mxu0
      %v3760 = vadd.f32 0.0, %v3759
      %v3761 = vpop.f32.mrb[0].mxu0
      %v3762 = vpop.f32.mrb[0].mxu0
      %v3763 = vadd.f32 0.0, %v3762
      %v3764 = vpop.f32.mrb[0].mxu0
      %3765 = vmatprep.mubr.bf16.mxu0 0
      %3766 = vmatmul.mubr.bf16.gmra.mrb[0].mxu0 %v3695
      %v3767 = vpop.f32.mrb[0].mxu0
      %v3768 = vadd.f32 0.0, %v3767
      %v3769 = vpop.f32.mrb[0].mxu0
      %v3770 = vpop.f32.mrb[0].mxu0
      %v3771 = vadd.f32 0.0, %v3770
      %v3772 = vpop.f32.mrb[0].mxu0
      %3773 = vmatprep.mubr.bf16.mxu0 0
      %3774 = vmatmul.mubr.bf16.gmra.mrb[0].mxu0 %v3698
      %v3775 = vpop.f32.mrb[0].mxu0
      %v3776 = vadd.f32 0.0, %v3775
      %v3777 = vpop.f32.mrb[0].mxu0
      %v3778 = vpop.f32.mrb[0].mxu0
      %v3779 = vadd.f32 0.0, %v3778
      %v3780 = vpop.f32.mrb[0].mxu0
      %3781 = vmatprep.mubr.bf16.mxu0 0
      %3782 = vmatmul.mubr.bf16.gmra.mrb[0].mxu0 %v3701
      %v3783 = vpop.f32.mrb[0].mxu0
      %v3784 = vadd.f32 0.0, %v3783
      %v3785 = vpop.f32.mrb[0].mxu0
      %v3786 = vpop.f32.mrb[0].mxu0
      %v3787 = vadd.f32 0.0, %v3786
      %v3788 = vpop.f32.mrb[0].mxu0
      %3789 = vmatprep.mubr.bf16.mxu0 0
      %3790 = vmatmul.mubr.bf16.gmra.mrb[0].mxu0 %v3704
      %v3791 = vpop.f32.mrb[0].mxu0
      %v3792 = vadd.f32 0.0, %v3791
      %v3793 = vpop.f32.mrb[0].mxu0
      %v3794 = vpop.f32.mrb[0].mxu0
      %v3795 = vpop.f32.mrb[0].mxu0
      %3796 = vdwg.mxu0
      %v3798 = vsel %vm414, %v3654, 0
      %v3801 = vsel %vm414, %v3655, 0
      %v3804 = vsel %vm414, %v3656, 0
      %v3807 = vsel %vm414, %v3657, 0
      %v3810 = vsel %vm414, %v3658, 0
      %v3813 = vsel %vm414, %v3659, 0
      %v3816 = vsel %vm414, %v3660, 0
      %v3819 = vsel %vm884, %v3662, 0
      %3821 = vmatprep.subr.bf16.mxu0 0
      %3822 = vmatpush1.bf16.msra.mxu0 %v3819
      %3823 = vmatprep.subr.bf16.mxu0 0
      %3824 = vmatpush1.bf16.msra.mxu0 0
      %3825 = vmatprep.subr.bf16.mxu0 0
      %3826 = vmatpush1.bf16.msra.mxu0 0
      %3827 = vmatprep.subr.bf16.mxu0 0
      %3828 = vmatpush1.bf16.msra.mxu0 0
      %3829 = vmatprep.subr.bf16.mxu0 0
      %3830 = vmatpush1.bf16.msra.mxu0 0
      %3831 = vmatprep.subr.bf16.mxu0 0
      %3832 = vmatpush1.bf16.msra.mxu0 0
      %3833 = vmatprep.subr.bf16.mxu0 0
      %3834 = vmatpush1.bf16.msra.mxu0 0
      %3835 = vmatprep.subr.bf16.mxu0 0
      %3836 = vmatpush1.bf16.msra.mxu0 0
      %3837 = vmatprep.subr.bf16.mxu0 0
      %3838 = vmatpush1.bf16.msra.mxu0 0
      %3839 = vmatprep.subr.bf16.mxu0 0
      %3840 = vmatpush1.bf16.msra.mxu0 0
      %3841 = vmatprep.subr.bf16.mxu0 0
      %3842 = vmatpush1.bf16.msra.mxu0 0
      %3843 = vmatprep.subr.bf16.mxu0 0
      %3844 = vmatpush1.bf16.msra.mxu0 0
      %3845 = vmatprep.subr.bf16.mxu0 0
      %3846 = vmatpush1.bf16.msra.mxu0 0
      %3847 = vmatprep.subr.bf16.mxu0 0
      %3848 = vmatpush1.bf16.msra.mxu0 0
      %3849 = vmatprep.subr.bf16.mxu0 0
      %3850 = vmatpush1.bf16.msra.mxu0 0
      %3851 = vmatprep.subr.bf16.mxu0 0
      %3852 = vmatpush1.bf16.msra.mxu0 0
      %3853 = vmatprep.mubr.bf16.mxu0 0
      %3854 = vmatmul.mubr.bf16.gmra.mrb[0].mxu0 %v3798
      %v3855 = vpop.f32.mrb[0].mxu0
      %v3856 = vadd.f32 %v3744, %v3855
      %v3857 = vpop.f32.mrb[0].mxu0
      %v3858 = vpop.f32.mrb[0].mxu0
      %v3859 = vadd.f32 %v3747, %v3858
      %v3860 = vpop.f32.mrb[0].mxu0
      %3861 = vmatprep.mubr.bf16.mxu0 0
      %3862 = vmatmul.mubr.bf16.gmra.mrb[0].mxu0 %v3801
      %v3863 = vpop.f32.mrb[0].mxu0
      %v3864 = vadd.f32 %v3752, %v3863
      %v3865 = vpop.f32.mrb[0].mxu0
      %v3866 = vpop.f32.mrb[0].mxu0
      %v3867 = vadd.f32 %v3755, %v3866
      %v3868 = vpop.f32.mrb[0].mxu0
      %3869 = vmatprep.mubr.bf16.mxu0 0
      %3870 = vmatmul.mubr.bf16.gmra.mrb[0].mxu0 %v3804
      %v3871 = vpop.f32.mrb[0].mxu0
      %v3872 = vadd.f32 %v3760, %v3871
      %v3873 = vpop.f32.mrb[0].mxu0
      %v3874 = vpop.f32.mrb[0].mxu0
      %v3875 = vadd.f32 %v3763, %v3874
      %v3876 = vpop.f32.mrb[0].mxu0
      %3877 = vmatprep.mubr.bf16.mxu0 0
      %3878 = vmatmul.mubr.bf16.gmra.mrb[0].mxu0 %v3807
      %v3879 = vpop.f32.mrb[0].mxu0
      %v3880 = vadd.f32 %v3768, %v3879
      %v3881 = vpop.f32.mrb[0].mxu0
      %v3882 = vpop.f32.mrb[0].mxu0
      %v3883 = vadd.f32 %v3771, %v3882
      %v3884 = vpop.f32.mrb[0].mxu0
      %3885 = vmatprep.mubr.bf16.mxu0 0
      %3886 = vmatmul.mubr.bf16.gmra.mrb[0].mxu0 %v3810
      %v3887 = vpop.f32.mrb[0].mxu0
      %v3888 = vadd.f32 %v3776, %v3887
      %v3889 = vpop.f32.mrb[0].mxu0
      %v3890 = vpop.f32.mrb[0].mxu0
      %v3891 = vadd.f32 %v3779, %v3890
      %v3892 = vpop.f32.mrb[0].mxu0
      %3893 = vmatprep.mubr.bf16.mxu0 0
      %3894 = vmatmul.mubr.bf16.gmra.mrb[0].mxu0 %v3813
      %v3895 = vpop.f32.mrb[0].mxu0
      %v3896 = vadd.f32 %v3784, %v3895
      %v3897 = vpop.f32.mrb[0].mxu0
      %v3898 = vpop.f32.mrb[0].mxu0
      %v3899 = vadd.f32 %v3787, %v3898
      %v3900 = vpop.f32.mrb[0].mxu0
      %3901 = vmatprep.mubr.bf16.mxu0 0
      %3902 = vmatmul.mubr.bf16.gmra.mrb[0].mxu0 %v3816
      %v3903 = vpop.f32.mrb[0].mxu0
      %v3904 = vadd.f32 %v3792, %v3903
      %v3905 = vpop.f32.mrb[0].mxu0
      %v3906 = vpop.f32.mrb[0].mxu0
      %v3907 = vpop.f32.mrb[0].mxu0
      %3908 = vdwg.mxu0
      %v3909 = vld [vmem:[#allocation2 + $0x7] sm:$0xff]
      %v3910 = vld [vmem:[#allocation2 + $0xf] sm:$0xff]
      %v3911 = vld [vmem:[#allocation2 + $0x17] sm:$0xff]
      %v3912 = vld [vmem:[#allocation2 + $0x1f] sm:$0xff]
      %v3913 = vld [vmem:[#allocation2 + $0x27] sm:$0xff]
      %v3914 = vld [vmem:[#allocation2 + $0x2f] sm:$0xff]
      %v3915 = vld [vmem:[#allocation2 + $0x37] sm:$0xff]
      %v3916 = vld [vmem:[#allocation2 + $0x3f] sm:$0xff]
      %v3917 = vld [vmem:[#allocation2 + $0x47] sm:$0xff]
      %v3918 = vld [vmem:[#allocation2 + $0x4f] sm:$0xff]
      %v3919 = vld [vmem:[#allocation2 + $0x57] sm:$0xff]
      %v3920 = vld [vmem:[#allocation2 + $0x5f] sm:$0xff]
      %v3921 = vld [vmem:[#allocation2 + $0x67] sm:$0xf]
      %v3922 = vpack.c.bf16 %v3910, %v3909
      %v3923 = vpack.c.bf16 %v3912, %v3911
      %v3924 = vpack.c.bf16 %v3914, %v3913
      %v3925 = vpack.c.bf16 %v3916, %v3915
      %v3926 = vpack.c.bf16 %v3918, %v3917
      %v3927 = vpack.c.bf16 %v3920, %v3919
      %v3928 = vpack.c.bf16 %v3921, %v3921
      %s3929 = scalar_lea.vmem %s7, 80
      %v3930 = vld [vmem:[%s3929] sm:$0xf]
      %v3932 = vsel %vm414, %v3922, 0
      %v3935 = vsel %vm414, %v3923, 0
      %v3938 = vsel %vm414, %v3924, 0
      %v3941 = vsel %vm414, %v3925, 0
      %v3944 = vsel %vm414, %v3926, 0
      %v3947 = vsel %vm414, %v3927, 0
      %v3950 = vsel %vm414, %v3928, 0
      %v3953 = vsel %vm884, %v3930, 0
      %3955 = vmatprep.subr.bf16.mxu0 0
      %3956 = vmatpush1.bf16.msra.mxu0 %v3953
      %3957 = vmatprep.subr.bf16.mxu0 0
      %3958 = vmatpush1.bf16.msra.mxu0 0
      %3959 = vmatprep.subr.bf16.mxu0 0
      %3960 = vmatpush1.bf16.msra.mxu0 0
      %3961 = vmatprep.subr.bf16.mxu0 0
      %3962 = vmatpush1.bf16.msra.mxu0 0
      %3963 = vmatprep.subr.bf16.mxu0 0
      %3964 = vmatpush1.bf16.msra.mxu0 0
      %3965 = vmatprep.subr.bf16.mxu0 0
      %3966 = vmatpush1.bf16.msra.mxu0 0
      %3967 = vmatprep.subr.bf16.mxu0 0
      %3968 = vmatpush1.bf16.msra.mxu0 0
      %3969 = vmatprep.subr.bf16.mxu0 0
      %3970 = vmatpush1.bf16.msra.mxu0 0
      %3971 = vmatprep.subr.bf16.mxu0 0
      %3972 = vmatpush1.bf16.msra.mxu0 0
      %3973 = vmatprep.subr.bf16.mxu0 0
      %3974 = vmatpush1.bf16.msra.mxu0 0
      %3975 = vmatprep.subr.bf16.mxu0 0
      %3976 = vmatpush1.bf16.msra.mxu0 0
      %3977 = vmatprep.subr.bf16.mxu0 0
      %3978 = vmatpush1.bf16.msra.mxu0 0
      %3979 = vmatprep.subr.bf16.mxu0 0
      %3980 = vmatpush1.bf16.msra.mxu0 0
      %3981 = vmatprep.subr.bf16.mxu0 0
      %3982 = vmatpush1.bf16.msra.mxu0 0
      %3983 = vmatprep.subr.bf16.mxu0 0
      %3984 = vmatpush1.bf16.msra.mxu0 0
      %3985 = vmatprep.subr.bf16.mxu0 0
      %3986 = vmatpush1.bf16.msra.mxu0 0
      %3987 = vmatprep.mubr.bf16.mxu0 0
      %3988 = vmatmul.mubr.bf16.gmra.mrb[0].mxu0 %v3932
      %v3989 = vpop.f32.mrb[0].mxu0
      %v3990 = vadd.f32 0.0, %v3989
      %v3991 = vpop.f32.mrb[0].mxu0
      %v3992 = vpop.f32.mrb[0].mxu0
      %v3993 = vadd.f32 0.0, %v3992
      %v3994 = vpop.f32.mrb[0].mxu0
      %3995 = vmatprep.mubr.bf16.mxu0 0
      %3996 = vmatmul.mubr.bf16.gmra.mrb[0].mxu0 %v3935
      %v3997 = vpop.f32.mrb[0].mxu0
      %v3998 = vadd.f32 0.0, %v3997
      %v3999 = vpop.f32.mrb[0].mxu0
      %v4000 = vpop.f32.mrb[0].mxu0
      %v4001 = vadd.f32 0.0, %v4000
      %v4002 = vpop.f32.mrb[0].mxu0
      %4003 = vmatprep.mubr.bf16.mxu0 0
      %4004 = vmatmul.mubr.bf16.gmra.mrb[0].mxu0 %v3938
      %v4005 = vpop.f32.mrb[0].mxu0
      %v4006 = vadd.f32 0.0, %v4005
      %v4007 = vpop.f32.mrb[0].mxu0
      %v4008 = vpop.f32.mrb[0].mxu0
      %v4009 = vadd.f32 0.0, %v4008
      %v4010 = vpop.f32.mrb[0].mxu0
      %4011 = vmatprep.mubr.bf16.mxu0 0
      %4012 = vmatmul.mubr.bf16.gmra.mrb[0].mxu0 %v3941
      %v4013 = vpop.f32.mrb[0].mxu0
      %v4014 = vadd.f32 0.0, %v4013
      %v4015 = vpop.f32.mrb[0].mxu0
      %v4016 = vpop.f32.mrb[0].mxu0
      %v4017 = vadd.f32 0.0, %v4016
      %v4018 = vpop.f32.mrb[0].mxu0
      %4019 = vmatprep.mubr.bf16.mxu0 0
      %4020 = vmatmul.mubr.bf16.gmra.mrb[0].mxu0 %v3944
      %v4021 = vpop.f32.mrb[0].mxu0
      %v4022 = vadd.f32 0.0, %v4021
      %v4023 = vpop.f32.mrb[0].mxu0
      %v4024 = vpop.f32.mrb[0].mxu0
      %v4025 = vadd.f32 0.0, %v4024
      %v4026 = vpop.f32.mrb[0].mxu0
      %4027 = vmatprep.mubr.bf16.mxu0 0
      %4028 = vmatmul.mubr.bf16.gmra.mrb[0].mxu0 %v3947
      %v4029 = vpop.f32.mrb[0].mxu0
      %v4030 = vadd.f32 0.0, %v4029
      %v4031 = vpop.f32.mrb[0].mxu0
      %v4032 = vpop.f32.mrb[0].mxu0
      %v4033 = vadd.f32 0.0, %v4032
      %v4034 = vpop.f32.mrb[0].mxu0
      %4035 = vmatprep.mubr.bf16.mxu0 0
      %4036 = vmatmul.mubr.bf16.gmra.mrb[0].mxu0 %v3950
      %v4037 = vpop.f32.mrb[0].mxu0
      %v4038 = vadd.f32 0.0, %v4037
      %v4039 = vpop.f32.mrb[0].mxu0
      %v4040 = vpop.f32.mrb[0].mxu0
      %v4041 = vpop.f32.mrb[0].mxu0
      %4042 = vdwg.mxu0
      %v4043 = vadd.f32 %v3856, %v3990
      %v4044 = vadd.f32 %v3859, %v3993
      %v4045 = vadd.f32 %v3864, %v3998
      %v4046 = vadd.f32 %v3867, %v4001
      %v4047 = vadd.f32 %v3872, %v4006
      %v4048 = vadd.f32 %v3875, %v4009
      %v4049 = vadd.f32 %v3880, %v4014
      %v4050 = vadd.f32 %v3883, %v4017
      %v4051 = vadd.f32 %v3888, %v4022
      %v4052 = vadd.f32 %v3891, %v4025
      %v4053 = vadd.f32 %v3896, %v4030
      %v4054 = vadd.f32 %v3899, %v4033
      %v4055 = vadd.f32 %v3904, %v4038
      %v4056 = vld [vmem:[#allocation2 + $0xf] sm:$0xff]
      %v4057 = vld [vmem:[#allocation2 + $0x17] sm:$0xff]
      %v4058 = vld [vmem:[#allocation2 + $0x1f] sm:$0xff]
      %v4059 = vld [vmem:[#allocation2 + $0x27] sm:$0xff]
      %v4060 = vld [vmem:[#allocation2 + $0x2f] sm:$0xff]
      %v4061 = vld [vmem:[#allocation2 + $0x37] sm:$0xff]
      %v4062 = vld [vmem:[#allocation2 + $0x3f] sm:$0xff]
      %v4063 = vld [vmem:[#allocation2 + $0x47] sm:$0xff]
      %v4064 = vld [vmem:[#allocation2 + $0x4f] sm:$0xff]
      %v4065 = vld [vmem:[#allocation2 + $0x57] sm:$0xff]
      %v4066 = vld [vmem:[#allocation2 + $0x5f] sm:$0xff]
      %v4067 = vld [vmem:[#allocation2 + $0x67] sm:$0xff]
      %v4068 = vld [vmem:[#allocation2 + $0x6f] sm:$0xf]
      %v4069 = vpack.c.bf16 %v4057, %v4056
      %v4070 = vpack.c.bf16 %v4059, %v4058
      %v4071 = vpack.c.bf16 %v4061, %v4060
      %v4072 = vpack.c.bf16 %v4063, %v4062
      %v4073 = vpack.c.bf16 %v4065, %v4064
      %v4074 = vpack.c.bf16 %v4067, %v4066
      %v4075 = vpack.c.bf16 %v4068, %v4068
      %s4076 = scalar_lea.vmem %s7, 84
      %v4077 = vld [vmem:[%s4076] sm:$0xf]
      %v4079 = vsel %vm414, %v4069, 0
      %v4082 = vsel %vm414, %v4070, 0
      %v4085 = vsel %vm414, %v4071, 0
      %v4088 = vsel %vm414, %v4072, 0
      %v4091 = vsel %vm414, %v4073, 0
      %v4094 = vsel %vm414, %v4074, 0
      %v4097 = vsel %vm414, %v4075, 0
      %v4100 = vsel %vm884, %v4077, 0
      %4102 = vmatprep.subr.bf16.mxu0 0
      %4103 = vmatpush1.bf16.msra.mxu0 %v4100
      %4104 = vmatprep.subr.bf16.mxu0 0
      %4105 = vmatpush1.bf16.msra.mxu0 0
      %4106 = vmatprep.subr.bf16.mxu0 0
      %4107 = vmatpush1.bf16.msra.mxu0 0
      %4108 = vmatprep.subr.bf16.mxu0 0
      %4109 = vmatpush1.bf16.msra.mxu0 0
      %4110 = vmatprep.subr.bf16.mxu0 0
      %4111 = vmatpush1.bf16.msra.mxu0 0
      %4112 = vmatprep.subr.bf16.mxu0 0
      %4113 = vmatpush1.bf16.msra.mxu0 0
      %4114 = vmatprep.subr.bf16.mxu0 0
      %4115 = vmatpush1.bf16.msra.mxu0 0
      %4116 = vmatprep.subr.bf16.mxu0 0
      %4117 = vmatpush1.bf16.msra.mxu0 0
      %4118 = vmatprep.subr.bf16.mxu0 0
      %4119 = vmatpush1.bf16.msra.mxu0 0
      %4120 = vmatprep.subr.bf16.mxu0 0
      %4121 = vmatpush1.bf16.msra.mxu0 0
      %4122 = vmatprep.subr.bf16.mxu0 0
      %4123 = vmatpush1.bf16.msra.mxu0 0
      %4124 = vmatprep.subr.bf16.mxu0 0
      %4125 = vmatpush1.bf16.msra.mxu0 0
      %4126 = vmatprep.subr.bf16.mxu0 0
      %4127 = vmatpush1.bf16.msra.mxu0 0
      %4128 = vmatprep.subr.bf16.mxu0 0
      %4129 = vmatpush1.bf16.msra.mxu0 0
      %4130 = vmatprep.subr.bf16.mxu0 0
      %4131 = vmatpush1.bf16.msra.mxu0 0
      %4132 = vmatprep.subr.bf16.mxu0 0
      %4133 = vmatpush1.bf16.msra.mxu0 0
      %4134 = vmatprep.mubr.bf16.mxu0 0
      %4135 = vmatmul.mubr.bf16.gmra.mrb[0].mxu0 %v4079
      %v4136 = vpop.f32.mrb[0].mxu0
      %v4137 = vadd.f32 0.0, %v4136
      %v4138 = vpop.f32.mrb[0].mxu0
      %v4139 = vpop.f32.mrb[0].mxu0
      %v4140 = vadd.f32 0.0, %v4139
      %v4141 = vpop.f32.mrb[0].mxu0
      %4142 = vmatprep.mubr.bf16.mxu0 0
      %4143 = vmatmul.mubr.bf16.gmra.mrb[0].mxu0 %v4082
      %v4144 = vpop.f32.mrb[0].mxu0
      %v4145 = vadd.f32 0.0, %v4144
      %v4146 = vpop.f32.mrb[0].mxu0
      %v4147 = vpop.f32.mrb[0].mxu0
      %v4148 = vadd.f32 0.0, %v4147
      %v4149 = vpop.f32.mrb[0].mxu0
      %4150 = vmatprep.mubr.bf16.mxu0 0
      %4151 = vmatmul.mubr.bf16.gmra.mrb[0].mxu0 %v4085
      %v4152 = vpop.f32.mrb[0].mxu0
      %v4153 = vadd.f32 0.0, %v4152
      %v4154 = vpop.f32.mrb[0].mxu0
      %v4155 = vpop.f32.mrb[0].mxu0
      %v4156 = vadd.f32 0.0, %v4155
      %v4157 = vpop.f32.mrb[0].mxu0
      %4158 = vmatprep.mubr.bf16.mxu0 0
      %4159 = vmatmul.mubr.bf16.gmra.mrb[0].mxu0 %v4088
      %v4160 = vpop.f32.mrb[0].mxu0
      %v4161 = vadd.f32 0.0, %v4160
      %v4162 = vpop.f32.mrb[0].mxu0
      %v4163 = vpop.f32.mrb[0].mxu0
      %v4164 = vadd.f32 0.0, %v4163
      %v4165 = vpop.f32.mrb[0].mxu0
      %4166 = vmatprep.mubr.bf16.mxu0 0
      %4167 = vmatmul.mubr.bf16.gmra.mrb[0].mxu0 %v4091
      %v4168 = vpop.f32.mrb[0].mxu0
      %v4169 = vadd.f32 0.0, %v4168
      %v4170 = vpop.f32.mrb[0].mxu0
      %v4171 = vpop.f32.mrb[0].mxu0
      %v4172 = vadd.f32 0.0, %v4171
      %v4173 = vpop.f32.mrb[0].mxu0
      %4174 = vmatprep.mubr.bf16.mxu0 0
      %4175 = vmatmul.mubr.bf16.gmra.mrb[0].mxu0 %v4094
      %v4176 = vpop.f32.mrb[0].mxu0
      %v4177 = vadd.f32 0.0, %v4176
      %v4178 = vpop.f32.mrb[0].mxu0
      %v4179 = vpop.f32.mrb[0].mxu0
      %v4180 = vadd.f32 0.0, %v4179
      %v4181 = vpop.f32.mrb[0].mxu0
      %4182 = vmatprep.mubr.bf16.mxu0 0
      %4183 = vmatmul.mubr.bf16.gmra.mrb[0].mxu0 %v4097
      %v4184 = vpop.f32.mrb[0].mxu0
      %v4185 = vadd.f32 0.0, %v4184
      %v4186 = vpop.f32.mrb[0].mxu0
      %v4187 = vpop.f32.mrb[0].mxu0
      %v4188 = vpop.f32.mrb[0].mxu0
      %4189 = vdwg.mxu0
      %v4190 = vadd.f32 %v4043, %v4137
      %v4191 = vadd.f32 %v4044, %v4140
      %v4192 = vadd.f32 %v4045, %v4145
      %v4193 = vadd.f32 %v4046, %v4148
      %v4194 = vadd.f32 %v4047, %v4153
      %v4195 = vadd.f32 %v4048, %v4156
      %v4196 = vadd.f32 %v4049, %v4161
      %v4197 = vadd.f32 %v4050, %v4164
      %v4198 = vadd.f32 %v4051, %v4169
      %v4199 = vadd.f32 %v4052, %v4172
      %v4200 = vadd.f32 %v4053, %v4177
      %v4201 = vadd.f32 %v4054, %v4180
      %v4202 = vadd.f32 %v4055, %v4185
      %v4203 = vld [vmem:[#allocation2 + $0x10] sm:$0xff]
      %v4204 = vld [vmem:[#allocation2 + $0x18] sm:$0xff]
      %v4205 = vld [vmem:[#allocation2 + $0x20] sm:$0xff]
      %v4206 = vld [vmem:[#allocation2 + $0x28] sm:$0xff]
      %v4207 = vld [vmem:[#allocation2 + $0x30] sm:$0xff]
      %v4208 = vld [vmem:[#allocation2 + $0x38] sm:$0xff]
      %v4209 = vld [vmem:[#allocation2 + $0x40] sm:$0xff]
      %v4210 = vld [vmem:[#allocation2 + $0x48] sm:$0xff]
      %v4211 = vld [vmem:[#allocation2 + $0x50] sm:$0xff]
      %v4212 = vld [vmem:[#allocation2 + $0x58] sm:$0xff]
      %v4213 = vld [vmem:[#allocation2 + $0x60] sm:$0xff]
      %v4214 = vld [vmem:[#allocation2 + $0x68] sm:$0xff]
      %v4215 = vld [vmem:[#allocation2 + $0x70] sm:$0xf]
      %v4216 = vpack.c.bf16 %v4204, %v4203
      %v4217 = vpack.c.bf16 %v4206, %v4205
      %v4218 = vpack.c.bf16 %v4208, %v4207
      %v4219 = vpack.c.bf16 %v4210, %v4209
      %v4220 = vpack.c.bf16 %v4212, %v4211
      %v4221 = vpack.c.bf16 %v4214, %v4213
      %v4222 = vpack.c.bf16 %v4215, %v4215
      %s4223 = scalar_lea.vmem %s7, 88
      %v4224 = vld [vmem:[%s4223] sm:$0xf]
      %v4226 = vsel %vm414, %v4216, 0
      %v4229 = vsel %vm414, %v4217, 0
      %v4232 = vsel %vm414, %v4218, 0
      %v4235 = vsel %vm414, %v4219, 0
      %v4238 = vsel %vm414, %v4220, 0
      %v4241 = vsel %vm414, %v4221, 0
      %v4244 = vsel %vm414, %v4222, 0
      %v4247 = vsel %vm884, %v4224, 0
      %4249 = vmatprep.subr.bf16.mxu0 0
      %4250 = vmatpush1.bf16.msra.mxu0 %v4247
      %4251 = vmatprep.subr.bf16.mxu0 0
      %4252 = vmatpush1.bf16.msra.mxu0 0
      %4253 = vmatprep.subr.bf16.mxu0 0
      %4254 = vmatpush1.bf16.msra.mxu0 0
      %4255 = vmatprep.subr.bf16.mxu0 0
      %4256 = vmatpush1.bf16.msra.mxu0 0
      %4257 = vmatprep.subr.bf16.mxu0 0
      %4258 = vmatpush1.bf16.msra.mxu0 0
      %4259 = vmatprep.subr.bf16.mxu0 0
      %4260 = vmatpush1.bf16.msra.mxu0 0
      %4261 = vmatprep.subr.bf16.mxu0 0
      %4262 = vmatpush1.bf16.msra.mxu0 0
      %4263 = vmatprep.subr.bf16.mxu0 0
      %4264 = vmatpush1.bf16.msra.mxu0 0
      %4265 = vmatprep.subr.bf16.mxu0 0
      %4266 = vmatpush1.bf16.msra.mxu0 0
      %4267 = vmatprep.subr.bf16.mxu0 0
      %4268 = vmatpush1.bf16.msra.mxu0 0
      %4269 = vmatprep.subr.bf16.mxu0 0
      %4270 = vmatpush1.bf16.msra.mxu0 0
      %4271 = vmatprep.subr.bf16.mxu0 0
      %4272 = vmatpush1.bf16.msra.mxu0 0
      %4273 = vmatprep.subr.bf16.mxu0 0
      %4274 = vmatpush1.bf16.msra.mxu0 0
      %4275 = vmatprep.subr.bf16.mxu0 0
      %4276 = vmatpush1.bf16.msra.mxu0 0
      %4277 = vmatprep.subr.bf16.mxu0 0
      %4278 = vmatpush1.bf16.msra.mxu0 0
      %4279 = vmatprep.subr.bf16.mxu0 0
      %4280 = vmatpush1.bf16.msra.mxu0 0
      %4281 = vmatprep.mubr.bf16.mxu0 0
      %4282 = vmatmul.mubr.bf16.gmra.mrb[0].mxu0 %v4226
      %v4283 = vpop.f32.mrb[0].mxu0
      %v4284 = vadd.f32 0.0, %v4283
      %v4285 = vpop.f32.mrb[0].mxu0
      %v4286 = vpop.f32.mrb[0].mxu0
      %v4287 = vadd.f32 0.0, %v4286
      %v4288 = vpop.f32.mrb[0].mxu0
      %4289 = vmatprep.mubr.bf16.mxu0 0
      %4290 = vmatmul.mubr.bf16.gmra.mrb[0].mxu0 %v4229
      %v4291 = vpop.f32.mrb[0].mxu0
      %v4292 = vadd.f32 0.0, %v4291
      %v4293 = vpop.f32.mrb[0].mxu0
      %v4294 = vpop.f32.mrb[0].mxu0
      %v4295 = vadd.f32 0.0, %v4294
      %v4296 = vpop.f32.mrb[0].mxu0
      %4297 = vmatprep.mubr.bf16.mxu0 0
      %4298 = vmatmul.mubr.bf16.gmra.mrb[0].mxu0 %v4232
      %v4299 = vpop.f32.mrb[0].mxu0
      %v4300 = vadd.f32 0.0, %v4299
      %v4301 = vpop.f32.mrb[0].mxu0
      %v4302 = vpop.f32.mrb[0].mxu0
      %v4303 = vadd.f32 0.0, %v4302
      %v4304 = vpop.f32.mrb[0].mxu0
      %4305 = vmatprep.mubr.bf16.mxu0 0
      %4306 = vmatmul.mubr.bf16.gmra.mrb[0].mxu0 %v4235
      %v4307 = vpop.f32.mrb[0].mxu0
      %v4308 = vadd.f32 0.0, %v4307
      %v4309 = vpop.f32.mrb[0].mxu0
      %v4310 = vpop.f32.mrb[0].mxu0
      %v4311 = vadd.f32 0.0, %v4310
      %v4312 = vpop.f32.mrb[0].mxu0
      %4313 = vmatprep.mubr.bf16.mxu0 0
      %4314 = vmatmul.mubr.bf16.gmra.mrb[0].mxu0 %v4238
      %v4315 = vpop.f32.mrb[0].mxu0
      %v4316 = vadd.f32 0.0, %v4315
      %v4317 = vpop.f32.mrb[0].mxu0
      %v4318 = vpop.f32.mrb[0].mxu0
      %v4319 = vadd.f32 0.0, %v4318
      %v4320 = vpop.f32.mrb[0].mxu0
      %4321 = vmatprep.mubr.bf16.mxu0 0
      %4322 = vmatmul.mubr.bf16.gmra.mrb[0].mxu0 %v4241
      %v4323 = vpop.f32.mrb[0].mxu0
      %v4324 = vadd.f32 0.0, %v4323
      %v4325 = vpop.f32.mrb[0].mxu0
      %v4326 = vpop.f32.mrb[0].mxu0
      %v4327 = vadd.f32 0.0, %v4326
      %v4328 = vpop.f32.mrb[0].mxu0
      %4329 = vmatprep.mubr.bf16.mxu0 0
      %4330 = vmatmul.mubr.bf16.gmra.mrb[0].mxu0 %v4244
      %v4331 = vpop.f32.mrb[0].mxu0
      %v4332 = vadd.f32 0.0, %v4331
      %v4333 = vpop.f32.mrb[0].mxu0
      %v4334 = vpop.f32.mrb[0].mxu0
      %v4335 = vpop.f32.mrb[0].mxu0
      %4336 = vdwg.mxu0
      %v4337 = vadd.f32 %v4190, %v4284
      %v4338 = vadd.f32 %v4191, %v4287
      %v4339 = vadd.f32 %v4192, %v4292
      %v4340 = vadd.f32 %v4193, %v4295
      %v4341 = vadd.f32 %v4194, %v4300
      %v4342 = vadd.f32 %v4195, %v4303
      %v4343 = vadd.f32 %v4196, %v4308
      %v4344 = vadd.f32 %v4197, %v4311
      %v4345 = vadd.f32 %v4198, %v4316
      %v4346 = vadd.f32 %v4199, %v4319
      %v4347 = vadd.f32 %v4200, %v4324
      %v4348 = vadd.f32 %v4201, %v4327
      %v4349 = vadd.f32 %v4202, %v4332
      %v4350 = vld [vmem:[#allocation2 + $0x11] sm:$0xff]
      %v4351 = vld [vmem:[#allocation2 + $0x19] sm:$0xff]
      %v4352 = vld [vmem:[#allocation2 + $0x21] sm:$0xff]
      %v4353 = vld [vmem:[#allocation2 + $0x29] sm:$0xff]
      %v4354 = vld [vmem:[#allocation2 + $0x31] sm:$0xff]
      %v4355 = vld [vmem:[#allocation2 + $0x39] sm:$0xff]
      %v4356 = vld [vmem:[#allocation2 + $0x41] sm:$0xff]
      %v4357 = vld [vmem:[#allocation2 + $0x49] sm:$0xff]
      %v4358 = vld [vmem:[#allocation2 + $0x51] sm:$0xff]
      %v4359 = vld [vmem:[#allocation2 + $0x59] sm:$0xff]
      %v4360 = vld [vmem:[#allocation2 + $0x61] sm:$0xff]
      %v4361 = vld [vmem:[#allocation2 + $0x69] sm:$0xff]
      %v4362 = vld [vmem:[#allocation2 + $0x71] sm:$0xf]
      %v4363 = vpack.c.bf16 %v4351, %v4350
      %v4364 = vpack.c.bf16 %v4353, %v4352
      %v4365 = vpack.c.bf16 %v4355, %v4354
      %v4366 = vpack.c.bf16 %v4357, %v4356
      %v4367 = vpack.c.bf16 %v4359, %v4358
      %v4368 = vpack.c.bf16 %v4361, %v4360
      %v4369 = vpack.c.bf16 %v4362, %v4362
      %s4370 = scalar_lea.vmem %s7, 92
      %v4371 = vld [vmem:[%s4370] sm:$0xf]
      %v4373 = vsel %vm414, %v4363, 0
      %v4376 = vsel %vm414, %v4364, 0
      %v4379 = vsel %vm414, %v4365, 0
      %v4382 = vsel %vm414, %v4366, 0
      %v4385 = vsel %vm414, %v4367, 0
      %v4388 = vsel %vm414, %v4368, 0
      %v4391 = vsel %vm414, %v4369, 0
      %v4394 = vsel %vm884, %v4371, 0
      %4396 = vmatprep.subr.bf16.mxu0 0
      %4397 = vmatpush1.bf16.msra.mxu0 %v4394
      %4398 = vmatprep.subr.bf16.mxu0 0
      %4399 = vmatpush1.bf16.msra.mxu0 0
      %4400 = vmatprep.subr.bf16.mxu0 0
      %4401 = vmatpush1.bf16.msra.mxu0 0
      %4402 = vmatprep.subr.bf16.mxu0 0
      %4403 = vmatpush1.bf16.msra.mxu0 0
      %4404 = vmatprep.subr.bf16.mxu0 0
      %4405 = vmatpush1.bf16.msra.mxu0 0
      %4406 = vmatprep.subr.bf16.mxu0 0
      %4407 = vmatpush1.bf16.msra.mxu0 0
      %4408 = vmatprep.subr.bf16.mxu0 0
      %4409 = vmatpush1.bf16.msra.mxu0 0
      %4410 = vmatprep.subr.bf16.mxu0 0
      %4411 = vmatpush1.bf16.msra.mxu0 0
      %4412 = vmatprep.subr.bf16.mxu0 0
      %4413 = vmatpush1.bf16.msra.mxu0 0
      %4414 = vmatprep.subr.bf16.mxu0 0
      %4415 = vmatpush1.bf16.msra.mxu0 0
      %4416 = vmatprep.subr.bf16.mxu0 0
      %4417 = vmatpush1.bf16.msra.mxu0 0
      %4418 = vmatprep.subr.bf16.mxu0 0
      %4419 = vmatpush1.bf16.msra.mxu0 0
      %4420 = vmatprep.subr.bf16.mxu0 0
      %4421 = vmatpush1.bf16.msra.mxu0 0
      %4422 = vmatprep.subr.bf16.mxu0 0
      %4423 = vmatpush1.bf16.msra.mxu0 0
      %4424 = vmatprep.subr.bf16.mxu0 0
      %4425 = vmatpush1.bf16.msra.mxu0 0
      %4426 = vmatprep.subr.bf16.mxu0 0
      %4427 = vmatpush1.bf16.msra.mxu0 0
      %4428 = vmatprep.mubr.bf16.mxu0 0
      %4429 = vmatmul.mubr.bf16.gmra.mrb[0].mxu0 %v4373
      %v4430 = vpop.f32.mrb[0].mxu0
      %v4431 = vadd.f32 0.0, %v4430
      %v4432 = vpop.f32.mrb[0].mxu0
      %v4433 = vpop.f32.mrb[0].mxu0
      %v4434 = vadd.f32 0.0, %v4433
      %v4435 = vpop.f32.mrb[0].mxu0
      %4436 = vmatprep.mubr.bf16.mxu0 0
      %4437 = vmatmul.mubr.bf16.gmra.mrb[0].mxu0 %v4376
      %v4438 = vpop.f32.mrb[0].mxu0
      %v4439 = vadd.f32 0.0, %v4438
      %v4440 = vpop.f32.mrb[0].mxu0
      %v4441 = vpop.f32.mrb[0].mxu0
      %v4442 = vadd.f32 0.0, %v4441
      %v4443 = vpop.f32.mrb[0].mxu0
      %4444 = vmatprep.mubr.bf16.mxu0 0
      %4445 = vmatmul.mubr.bf16.gmra.mrb[0].mxu0 %v4379
      %v4446 = vpop.f32.mrb[0].mxu0
      %v4447 = vadd.f32 0.0, %v4446
      %v4448 = vpop.f32.mrb[0].mxu0
      %v4449 = vpop.f32.mrb[0].mxu0
      %v4450 = vadd.f32 0.0, %v4449
      %v4451 = vpop.f32.mrb[0].mxu0
      %4452 = vmatprep.mubr.bf16.mxu0 0
      %4453 = vmatmul.mubr.bf16.gmra.mrb[0].mxu0 %v4382
      %v4454 = vpop.f32.mrb[0].mxu0
      %v4455 = vadd.f32 0.0, %v4454
      %v4456 = vpop.f32.mrb[0].mxu0
      %v4457 = vpop.f32.mrb[0].mxu0
      %v4458 = vadd.f32 0.0, %v4457
      %v4459 = vpop.f32.mrb[0].mxu0
      %4460 = vmatprep.mubr.bf16.mxu0 0
      %4461 = vmatmul.mubr.bf16.gmra.mrb[0].mxu0 %v4385
      %v4462 = vpop.f32.mrb[0].mxu0
      %v4463 = vadd.f32 0.0, %v4462
      %v4464 = vpop.f32.mrb[0].mxu0
      %v4465 = vpop.f32.mrb[0].mxu0
      %v4466 = vadd.f32 0.0, %v4465
      %v4467 = vpop.f32.mrb[0].mxu0
      %4468 = vmatprep.mubr.bf16.mxu0 0
      %4469 = vmatmul.mubr.bf16.gmra.mrb[0].mxu0 %v4388
      %v4470 = vpop.f32.mrb[0].mxu0
      %v4471 = vadd.f32 0.0, %v4470
      %v4472 = vpop.f32.mrb[0].mxu0
      %v4473 = vpop.f32.mrb[0].mxu0
      %v4474 = vadd.f32 0.0, %v4473
      %v4475 = vpop.f32.mrb[0].mxu0
      %4476 = vmatprep.mubr.bf16.mxu0 0
      %4477 = vmatmul.mubr.bf16.gmra.mrb[0].mxu0 %v4391
      %v4478 = vpop.f32.mrb[0].mxu0
      %v4479 = vadd.f32 0.0, %v4478
      %v4480 = vpop.f32.mrb[0].mxu0
      %v4481 = vpop.f32.mrb[0].mxu0
      %v4482 = vpop.f32.mrb[0].mxu0
      %4483 = vdwg.mxu0
      %v4484 = vadd.f32 %v4337, %v4431
      %v4485 = vadd.f32 %v4338, %v4434
      %v4486 = vadd.f32 %v4339, %v4439
      %v4487 = vadd.f32 %v4340, %v4442
      %v4488 = vadd.f32 %v4341, %v4447
      %v4489 = vadd.f32 %v4342, %v4450
      %v4490 = vadd.f32 %v4343, %v4455
      %v4491 = vadd.f32 %v4344, %v4458
      %v4492 = vadd.f32 %v4345, %v4463
      %v4493 = vadd.f32 %v4346, %v4466
      %v4494 = vadd.f32 %v4347, %v4471
      %v4495 = vadd.f32 %v4348, %v4474
      %v4496 = vadd.f32 %v4349, %v4479
      %v4497 = vld [vmem:[#allocation2 + $0x19] sm:$0xff]
      %v4498 = vld [vmem:[#allocation2 + $0x21] sm:$0xff]
      %v4499 = vld [vmem:[#allocation2 + $0x29] sm:$0xff]
      %v4500 = vld [vmem:[#allocation2 + $0x31] sm:$0xff]
      %v4501 = vld [vmem:[#allocation2 + $0x39] sm:$0xff]
      %v4502 = vld [vmem:[#allocation2 + $0x41] sm:$0xff]
      %v4503 = vld [vmem:[#allocation2 + $0x49] sm:$0xff]
      %v4504 = vld [vmem:[#allocation2 + $0x51] sm:$0xff]
      %v4505 = vld [vmem:[#allocation2 + $0x59] sm:$0xff]
      %v4506 = vld [vmem:[#allocation2 + $0x61] sm:$0xff]
      %v4507 = vld [vmem:[#allocation2 + $0x69] sm:$0xff]
      %v4508 = vld [vmem:[#allocation2 + $0x71] sm:$0xff]
      %v4509 = vld [vmem:[#allocation2 + $0x79] sm:$0xf]
      %v4510 = vpack.c.bf16 %v4498, %v4497
      %v4511 = vpack.c.bf16 %v4500, %v4499
      %v4512 = vpack.c.bf16 %v4502, %v4501
      %v4513 = vpack.c.bf16 %v4504, %v4503
      %v4514 = vpack.c.bf16 %v4506, %v4505
      %v4515 = vpack.c.bf16 %v4508, %v4507
      %v4516 = vpack.c.bf16 %v4509, %v4509
      %s4517 = scalar_lea.vmem %s7, 96
      %v4518 = vld [vmem:[%s4517] sm:$0xf]
      %v4520 = vsel %vm414, %v4510, 0
      %v4523 = vsel %vm414, %v4511, 0
      %v4526 = vsel %vm414, %v4512, 0
      %v4529 = vsel %vm414, %v4513, 0
      %v4532 = vsel %vm414, %v4514, 0
      %v4535 = vsel %vm414, %v4515, 0
      %v4538 = vsel %vm414, %v4516, 0
      %v4541 = vsel %vm884, %v4518, 0
      %4543 = vmatprep.subr.bf16.mxu0 0
      %4544 = vmatpush1.bf16.msra.mxu0 %v4541
      %4545 = vmatprep.subr.bf16.mxu0 0
      %4546 = vmatpush1.bf16.msra.mxu0 0
      %4547 = vmatprep.subr.bf16.mxu0 0
      %4548 = vmatpush1.bf16.msra.mxu0 0
      %4549 = vmatprep.subr.bf16.mxu0 0
      %4550 = vmatpush1.bf16.msra.mxu0 0
      %4551 = vmatprep.subr.bf16.mxu0 0
      %4552 = vmatpush1.bf16.msra.mxu0 0
      %4553 = vmatprep.subr.bf16.mxu0 0
      %4554 = vmatpush1.bf16.msra.mxu0 0
      %4555 = vmatprep.subr.bf16.mxu0 0
      %4556 = vmatpush1.bf16.msra.mxu0 0
      %4557 = vmatprep.subr.bf16.mxu0 0
      %4558 = vmatpush1.bf16.msra.mxu0 0
      %4559 = vmatprep.subr.bf16.mxu0 0
      %4560 = vmatpush1.bf16.msra.mxu0 0
      %4561 = vmatprep.subr.bf16.mxu0 0
      %4562 = vmatpush1.bf16.msra.mxu0 0
      %4563 = vmatprep.subr.bf16.mxu0 0
      %4564 = vmatpush1.bf16.msra.mxu0 0
      %4565 = vmatprep.subr.bf16.mxu0 0
      %4566 = vmatpush1.bf16.msra.mxu0 0
      %4567 = vmatprep.subr.bf16.mxu0 0
      %4568 = vmatpush1.bf16.msra.mxu0 0
      %4569 = vmatprep.subr.bf16.mxu0 0
      %4570 = vmatpush1.bf16.msra.mxu0 0
      %4571 = vmatprep.subr.bf16.mxu0 0
      %4572 = vmatpush1.bf16.msra.mxu0 0
      %4573 = vmatprep.subr.bf16.mxu0 0
      %4574 = vmatpush1.bf16.msra.mxu0 0
      %4575 = vmatprep.mubr.bf16.mxu0 0
      %4576 = vmatmul.mubr.bf16.gmra.mrb[0].mxu0 %v4520
      %v4577 = vpop.f32.mrb[0].mxu0
      %v4578 = vadd.f32 0.0, %v4577
      %v4579 = vpop.f32.mrb[0].mxu0
      %v4580 = vpop.f32.mrb[0].mxu0
      %v4581 = vadd.f32 0.0, %v4580
      %v4582 = vpop.f32.mrb[0].mxu0
      %4583 = vmatprep.mubr.bf16.mxu0 0
      %4584 = vmatmul.mubr.bf16.gmra.mrb[0].mxu0 %v4523
      %v4585 = vpop.f32.mrb[0].mxu0
      %v4586 = vadd.f32 0.0, %v4585
      %v4587 = vpop.f32.mrb[0].mxu0
      %v4588 = vpop.f32.mrb[0].mxu0
      %v4589 = vadd.f32 0.0, %v4588
      %v4590 = vpop.f32.mrb[0].mxu0
      %4591 = vmatprep.mubr.bf16.mxu0 0
      %4592 = vmatmul.mubr.bf16.gmra.mrb[0].mxu0 %v4526
      %v4593 = vpop.f32.mrb[0].mxu0
      %v4594 = vadd.f32 0.0, %v4593
      %v4595 = vpop.f32.mrb[0].mxu0
      %v4596 = vpop.f32.mrb[0].mxu0
      %v4597 = vadd.f32 0.0, %v4596
      %v4598 = vpop.f32.mrb[0].mxu0
      %4599 = vmatprep.mubr.bf16.mxu0 0
      %4600 = vmatmul.mubr.bf16.gmra.mrb[0].mxu0 %v4529
      %v4601 = vpop.f32.mrb[0].mxu0
      %v4602 = vadd.f32 0.0, %v4601
      %v4603 = vpop.f32.mrb[0].mxu0
      %v4604 = vpop.f32.mrb[0].mxu0
      %v4605 = vadd.f32 0.0, %v4604
      %v4606 = vpop.f32.mrb[0].mxu0
      %4607 = vmatprep.mubr.bf16.mxu0 0
      %4608 = vmatmul.mubr.bf16.gmra.mrb[0].mxu0 %v4532
      %v4609 = vpop.f32.mrb[0].mxu0
      %v4610 = vadd.f32 0.0, %v4609
      %v4611 = vpop.f32.mrb[0].mxu0
      %v4612 = vpop.f32.mrb[0].mxu0
      %v4613 = vadd.f32 0.0, %v4612
      %v4614 = vpop.f32.mrb[0].mxu0
      %4615 = vmatprep.mubr.bf16.mxu0 0
      %4616 = vmatmul.mubr.bf16.gmra.mrb[0].mxu0 %v4535
      %v4617 = vpop.f32.mrb[0].mxu0
      %v4618 = vadd.f32 0.0, %v4617
      %v4619 = vpop.f32.mrb[0].mxu0
      %v4620 = vpop.f32.mrb[0].mxu0
      %v4621 = vadd.f32 0.0, %v4620
      %v4622 = vpop.f32.mrb[0].mxu0
      %4623 = vmatprep.mubr.bf16.mxu0 0
      %4624 = vmatmul.mubr.bf16.gmra.mrb[0].mxu0 %v4538
      %v4625 = vpop.f32.mrb[0].mxu0
      %v4626 = vadd.f32 0.0, %v4625
      %v4627 = vpop.f32.mrb[0].mxu0
      %v4628 = vpop.f32.mrb[0].mxu0
      %v4629 = vpop.f32.mrb[0].mxu0
      %4630 = vdwg.mxu0
      %v4631 = vadd.f32 %v4484, %v4578
      %v4632 = vadd.f32 %v4485, %v4581
      %v4633 = vadd.f32 %v4486, %v4586
      %v4634 = vadd.f32 %v4487, %v4589
      %v4635 = vadd.f32 %v4488, %v4594
      %v4636 = vadd.f32 %v4489, %v4597
      %v4637 = vadd.f32 %v4490, %v4602
      %v4638 = vadd.f32 %v4491, %v4605
      %v4639 = vadd.f32 %v4492, %v4610
      %v4640 = vadd.f32 %v4493, %v4613
      %v4641 = vadd.f32 %v4494, %v4618
      %v4642 = vadd.f32 %v4495, %v4621
      %v4643 = vadd.f32 %v4496, %v4626
      %v4644 = vld [vmem:[#allocation2 + $0x1a] sm:$0xff]
      %v4645 = vld [vmem:[#allocation2 + $0x22] sm:$0xff]
      %v4646 = vld [vmem:[#allocation2 + $0x2a] sm:$0xff]
      %v4647 = vld [vmem:[#allocation2 + $0x32] sm:$0xff]
      %v4648 = vld [vmem:[#allocation2 + $0x3a] sm:$0xff]
      %v4649 = vld [vmem:[#allocation2 + $0x42] sm:$0xff]
      %v4650 = vld [vmem:[#allocation2 + $0x4a] sm:$0xff]
      %v4651 = vld [vmem:[#allocation2 + $0x52] sm:$0xff]
      %v4652 = vld [vmem:[#allocation2 + $0x5a] sm:$0xff]
      %v4653 = vld [vmem:[#allocation2 + $0x62] sm:$0xff]
      %v4654 = vld [vmem:[#allocation2 + $0x6a] sm:$0xff]
      %v4655 = vld [vmem:[#allocation2 + $0x72] sm:$0xff]
      %v4656 = vld [vmem:[#allocation2 + $0x7a] sm:$0xf]
      %v4657 = vpack.c.bf16 %v4645, %v4644
      %v4658 = vpack.c.bf16 %v4647, %v4646
      %v4659 = vpack.c.bf16 %v4649, %v4648
      %v4660 = vpack.c.bf16 %v4651, %v4650
      %v4661 = vpack.c.bf16 %v4653, %v4652
      %v4662 = vpack.c.bf16 %v4655, %v4654
      %v4663 = vpack.c.bf16 %v4656, %v4656
      %s4664 = scalar_lea.vmem %s7, 100
      %v4665 = vld [vmem:[%s4664] sm:$0xf]
      %v4667 = vsel %vm414, %v4657, 0
      %v4670 = vsel %vm414, %v4658, 0
      %v4673 = vsel %vm414, %v4659, 0
      %v4676 = vsel %vm414, %v4660, 0
      %v4679 = vsel %vm414, %v4661, 0
      %v4682 = vsel %vm414, %v4662, 0
      %v4685 = vsel %vm414, %v4663, 0
      %v4688 = vsel %vm884, %v4665, 0
      %4690 = vmatprep.subr.bf16.mxu0 0
      %4691 = vmatpush1.bf16.msra.mxu0 %v4688
      %4692 = vmatprep.subr.bf16.mxu0 0
      %4693 = vmatpush1.bf16.msra.mxu0 0
      %4694 = vmatprep.subr.bf16.mxu0 0
      %4695 = vmatpush1.bf16.msra.mxu0 0
      %4696 = vmatprep.subr.bf16.mxu0 0
      %4697 = vmatpush1.bf16.msra.mxu0 0
      %4698 = vmatprep.subr.bf16.mxu0 0
      %4699 = vmatpush1.bf16.msra.mxu0 0
      %4700 = vmatprep.subr.bf16.mxu0 0
      %4701 = vmatpush1.bf16.msra.mxu0 0
      %4702 = vmatprep.subr.bf16.mxu0 0
      %4703 = vmatpush1.bf16.msra.mxu0 0
      %4704 = vmatprep.subr.bf16.mxu0 0
      %4705 = vmatpush1.bf16.msra.mxu0 0
      %4706 = vmatprep.subr.bf16.mxu0 0
      %4707 = vmatpush1.bf16.msra.mxu0 0
      %4708 = vmatprep.subr.bf16.mxu0 0
      %4709 = vmatpush1.bf16.msra.mxu0 0
      %4710 = vmatprep.subr.bf16.mxu0 0
      %4711 = vmatpush1.bf16.msra.mxu0 0
      %4712 = vmatprep.subr.bf16.mxu0 0
      %4713 = vmatpush1.bf16.msra.mxu0 0
      %4714 = vmatprep.subr.bf16.mxu0 0
      %4715 = vmatpush1.bf16.msra.mxu0 0
      %4716 = vmatprep.subr.bf16.mxu0 0
      %4717 = vmatpush1.bf16.msra.mxu0 0
      %4718 = vmatprep.subr.bf16.mxu0 0
      %4719 = vmatpush1.bf16.msra.mxu0 0
      %4720 = vmatprep.subr.bf16.mxu0 0
      %4721 = vmatpush1.bf16.msra.mxu0 0
      %4722 = vmatprep.mubr.bf16.mxu0 0
      %4723 = vmatmul.mubr.bf16.gmra.mrb[0].mxu0 %v4667
      %v4724 = vpop.f32.mrb[0].mxu0
      %v4725 = vadd.f32 0.0, %v4724
      %v4726 = vpop.f32.mrb[0].mxu0
      %v4727 = vpop.f32.mrb[0].mxu0
      %v4728 = vadd.f32 0.0, %v4727
      %v4729 = vpop.f32.mrb[0].mxu0
      %4730 = vmatprep.mubr.bf16.mxu0 0
      %4731 = vmatmul.mubr.bf16.gmra.mrb[0].mxu0 %v4670
      %v4732 = vpop.f32.mrb[0].mxu0
      %v4733 = vadd.f32 0.0, %v4732
      %v4734 = vpop.f32.mrb[0].mxu0
      %v4735 = vpop.f32.mrb[0].mxu0
      %v4736 = vadd.f32 0.0, %v4735
      %v4737 = vpop.f32.mrb[0].mxu0
      %4738 = vmatprep.mubr.bf16.mxu0 0
      %4739 = vmatmul.mubr.bf16.gmra.mrb[0].mxu0 %v4673
      %v4740 = vpop.f32.mrb[0].mxu0
      %v4741 = vadd.f32 0.0, %v4740
      %v4742 = vpop.f32.mrb[0].mxu0
      %v4743 = vpop.f32.mrb[0].mxu0
      %v4744 = vadd.f32 0.0, %v4743
      %v4745 = vpop.f32.mrb[0].mxu0
      %4746 = vmatprep.mubr.bf16.mxu0 0
      %4747 = vmatmul.mubr.bf16.gmra.mrb[0].mxu0 %v4676
      %v4748 = vpop.f32.mrb[0].mxu0
      %v4749 = vadd.f32 0.0, %v4748
      %v4750 = vpop.f32.mrb[0].mxu0
      %v4751 = vpop.f32.mrb[0].mxu0
      %v4752 = vadd.f32 0.0, %v4751
      %v4753 = vpop.f32.mrb[0].mxu0
      %4754 = vmatprep.mubr.bf16.mxu0 0
      %4755 = vmatmul.mubr.bf16.gmra.mrb[0].mxu0 %v4679
      %v4756 = vpop.f32.mrb[0].mxu0
      %v4757 = vadd.f32 0.0, %v4756
      %v4758 = vpop.f32.mrb[0].mxu0
      %v4759 = vpop.f32.mrb[0].mxu0
      %v4760 = vadd.f32 0.0, %v4759
      %v4761 = vpop.f32.mrb[0].mxu0
      %4762 = vmatprep.mubr.bf16.mxu0 0
      %4763 = vmatmul.mubr.bf16.gmra.mrb[0].mxu0 %v4682
      %v4764 = vpop.f32.mrb[0].mxu0
      %v4765 = vadd.f32 0.0, %v4764
      %v4766 = vpop.f32.mrb[0].mxu0
      %v4767 = vpop.f32.mrb[0].mxu0
      %v4768 = vadd.f32 0.0, %v4767
      %v4769 = vpop.f32.mrb[0].mxu0
      %4770 = vmatprep.mubr.bf16.mxu0 0
      %4771 = vmatmul.mubr.bf16.gmra.mrb[0].mxu0 %v4685
      %v4772 = vpop.f32.mrb[0].mxu0
      %v4773 = vadd.f32 0.0, %v4772
      %v4774 = vpop.f32.mrb[0].mxu0
      %v4775 = vpop.f32.mrb[0].mxu0
      %v4776 = vpop.f32.mrb[0].mxu0
      %4777 = vdwg.mxu0
      %v4778 = vadd.f32 %v4631, %v4725
      %v4779 = vadd.f32 %v4632, %v4728
      %v4780 = vadd.f32 %v4633, %v4733
      %v4781 = vadd.f32 %v4634, %v4736
      %v4782 = vadd.f32 %v4635, %v4741
      %v4783 = vadd.f32 %v4636, %v4744
      %v4784 = vadd.f32 %v4637, %v4749
      %v4785 = vadd.f32 %v4638, %v4752
      %v4786 = vadd.f32 %v4639, %v4757
      %v4787 = vadd.f32 %v4640, %v4760
      %v4788 = vadd.f32 %v4641, %v4765
      %v4789 = vadd.f32 %v4642, %v4768
      %v4790 = vadd.f32 %v4643, %v4773
      %v4791 = vld [vmem:[#allocation2 + $0x1b] sm:$0xff]
      %v4792 = vld [vmem:[#allocation2 + $0x23] sm:$0xff]
      %v4793 = vld [vmem:[#allocation2 + $0x2b] sm:$0xff]
      %v4794 = vld [vmem:[#allocation2 + $0x33] sm:$0xff]
      %v4795 = vld [vmem:[#allocation2 + $0x3b] sm:$0xff]
      %v4796 = vld [vmem:[#allocation2 + $0x43] sm:$0xff]
      %v4797 = vld [vmem:[#allocation2 + $0x4b] sm:$0xff]
      %v4798 = vld [vmem:[#allocation2 + $0x53] sm:$0xff]
      %v4799 = vld [vmem:[#allocation2 + $0x5b] sm:$0xff]
      %v4800 = vld [vmem:[#allocation2 + $0x63] sm:$0xff]
      %v4801 = vld [vmem:[#allocation2 + $0x6b] sm:$0xff]
      %v4802 = vld [vmem:[#allocation2 + $0x73] sm:$0xff]
      %v4803 = vld [vmem:[#allocation2 + $0x7b] sm:$0xf]
      %v4804 = vpack.c.bf16 %v4792, %v4791
      %v4805 = vpack.c.bf16 %v4794, %v4793
      %v4806 = vpack.c.bf16 %v4796, %v4795
      %v4807 = vpack.c.bf16 %v4798, %v4797
      %v4808 = vpack.c.bf16 %v4800, %v4799
      %v4809 = vpack.c.bf16 %v4802, %v4801
      %v4810 = vpack.c.bf16 %v4803, %v4803
      %s4811 = scalar_lea.vmem %s7, 104
      %v4812 = vld [vmem:[%s4811] sm:$0xf]
      %v4814 = vsel %vm414, %v4804, 0
      %v4817 = vsel %vm414, %v4805, 0
      %v4820 = vsel %vm414, %v4806, 0
      %v4823 = vsel %vm414, %v4807, 0
      %v4826 = vsel %vm414, %v4808, 0
      %v4829 = vsel %vm414, %v4809, 0
      %v4832 = vsel %vm414, %v4810, 0
      %v4835 = vsel %vm884, %v4812, 0
      %4837 = vmatprep.subr.bf16.mxu0 0
      %4838 = vmatpush1.bf16.msra.mxu0 %v4835
      %4839 = vmatprep.subr.bf16.mxu0 0
      %4840 = vmatpush1.bf16.msra.mxu0 0
      %4841 = vmatprep.subr.bf16.mxu0 0
      %4842 = vmatpush1.bf16.msra.mxu0 0
      %4843 = vmatprep.subr.bf16.mxu0 0
      %4844 = vmatpush1.bf16.msra.mxu0 0
      %4845 = vmatprep.subr.bf16.mxu0 0
      %4846 = vmatpush1.bf16.msra.mxu0 0
      %4847 = vmatprep.subr.bf16.mxu0 0
      %4848 = vmatpush1.bf16.msra.mxu0 0
      %4849 = vmatprep.subr.bf16.mxu0 0
      %4850 = vmatpush1.bf16.msra.mxu0 0
      %4851 = vmatprep.subr.bf16.mxu0 0
      %4852 = vmatpush1.bf16.msra.mxu0 0
      %4853 = vmatprep.subr.bf16.mxu0 0
      %4854 = vmatpush1.bf16.msra.mxu0 0
      %4855 = vmatprep.subr.bf16.mxu0 0
      %4856 = vmatpush1.bf16.msra.mxu0 0
      %4857 = vmatprep.subr.bf16.mxu0 0
      %4858 = vmatpush1.bf16.msra.mxu0 0
      %4859 = vmatprep.subr.bf16.mxu0 0
      %4860 = vmatpush1.bf16.msra.mxu0 0
      %4861 = vmatprep.subr.bf16.mxu0 0
      %4862 = vmatpush1.bf16.msra.mxu0 0
      %4863 = vmatprep.subr.bf16.mxu0 0
      %4864 = vmatpush1.bf16.msra.mxu0 0
      %4865 = vmatprep.subr.bf16.mxu0 0
      %4866 = vmatpush1.bf16.msra.mxu0 0
      %4867 = vmatprep.subr.bf16.mxu0 0
      %4868 = vmatpush1.bf16.msra.mxu0 0
      %4869 = vmatprep.mubr.bf16.mxu0 0
      %4870 = vmatmul.mubr.bf16.gmra.mrb[0].mxu0 %v4814
      %v4871 = vpop.f32.mrb[0].mxu0
      %v4872 = vadd.f32 0.0, %v4871
      %v4873 = vpop.f32.mrb[0].mxu0
      %v4874 = vpop.f32.mrb[0].mxu0
      %v4875 = vadd.f32 0.0, %v4874
      %v4876 = vpop.f32.mrb[0].mxu0
      %4877 = vmatprep.mubr.bf16.mxu0 0
      %4878 = vmatmul.mubr.bf16.gmra.mrb[0].mxu0 %v4817
      %v4879 = vpop.f32.mrb[0].mxu0
      %v4880 = vadd.f32 0.0, %v4879
      %v4881 = vpop.f32.mrb[0].mxu0
      %v4882 = vpop.f32.mrb[0].mxu0
      %v4883 = vadd.f32 0.0, %v4882
      %v4884 = vpop.f32.mrb[0].mxu0
      %4885 = vmatprep.mubr.bf16.mxu0 0
      %4886 = vmatmul.mubr.bf16.gmra.mrb[0].mxu0 %v4820
      %v4887 = vpop.f32.mrb[0].mxu0
      %v4888 = vadd.f32 0.0, %v4887
      %v4889 = vpop.f32.mrb[0].mxu0
      %v4890 = vpop.f32.mrb[0].mxu0
      %v4891 = vadd.f32 0.0, %v4890
      %v4892 = vpop.f32.mrb[0].mxu0
      %4893 = vmatprep.mubr.bf16.mxu0 0
      %4894 = vmatmul.mubr.bf16.gmra.mrb[0].mxu0 %v4823
      %v4895 = vpop.f32.mrb[0].mxu0
      %v4896 = vadd.f32 0.0, %v4895
      %v4897 = vpop.f32.mrb[0].mxu0
      %v4898 = vpop.f32.mrb[0].mxu0
      %v4899 = vadd.f32 0.0, %v4898
      %v4900 = vpop.f32.mrb[0].mxu0
      %4901 = vmatprep.mubr.bf16.mxu0 0
      %4902 = vmatmul.mubr.bf16.gmra.mrb[0].mxu0 %v4826
      %v4903 = vpop.f32.mrb[0].mxu0
      %v4904 = vadd.f32 0.0, %v4903
      %v4905 = vpop.f32.mrb[0].mxu0
      %v4906 = vpop.f32.mrb[0].mxu0
      %v4907 = vadd.f32 0.0, %v4906
      %v4908 = vpop.f32.mrb[0].mxu0
      %4909 = vmatprep.mubr.bf16.mxu0 0
      %4910 = vmatmul.mubr.bf16.gmra.mrb[0].mxu0 %v4829
      %v4911 = vpop.f32.mrb[0].mxu0
      %v4912 = vadd.f32 0.0, %v4911
      %v4913 = vpop.f32.mrb[0].mxu0
      %v4914 = vpop.f32.mrb[0].mxu0
      %v4915 = vadd.f32 0.0, %v4914
      %v4916 = vpop.f32.mrb[0].mxu0
      %4917 = vmatprep.mubr.bf16.mxu0 0
      %4918 = vmatmul.mubr.bf16.gmra.mrb[0].mxu0 %v4832
      %v4919 = vpop.f32.mrb[0].mxu0
      %v4920 = vadd.f32 0.0, %v4919
      %v4921 = vpop.f32.mrb[0].mxu0
      %v4922 = vpop.f32.mrb[0].mxu0
      %v4923 = vpop.f32.mrb[0].mxu0
      %4924 = vdwg.mxu0
      %v4925 = vadd.f32 %v4778, %v4872
      %v4926 = vadd.f32 %v4779, %v4875
      %v4927 = vadd.f32 %v4780, %v4880
      %v4928 = vadd.f32 %v4781, %v4883
      %v4929 = vadd.f32 %v4782, %v4888
      %v4930 = vadd.f32 %v4783, %v4891
      %v4931 = vadd.f32 %v4784, %v4896
      %v4932 = vadd.f32 %v4785, %v4899
      %v4933 = vadd.f32 %v4786, %v4904
      %v4934 = vadd.f32 %v4787, %v4907
      %v4935 = vadd.f32 %v4788, %v4912
      %v4936 = vadd.f32 %v4789, %v4915
      %v4937 = vadd.f32 %v4790, %v4920
      %s4938 = scalar_lea.vmem %s5, 3
      %v4939 = vld [vmem:[%s4938] sm:$0x1]
      %s4940 = scalar_lea.vmem %s6, 3
      %v4941 = vld [vmem:[%s4940] sm:$0x1]
      %v4943 = vlaneseq
      %v4944 = vshrl.u32 %v4943, 7
      %v4945 = vsub.s32 0, %v4944
      %v4946 = vrot.slane %v4939, %v4945
      %v4948 = vmul.f32 %v4925, %v4946
      %v4949 = vmul.f32 %v4926, %v4946
      %v4950 = vmul.f32 %v4927, %v4946
      %v4951 = vmul.f32 %v4928, %v4946
      %v4952 = vmul.f32 %v4929, %v4946
      %v4953 = vmul.f32 %v4930, %v4946
      %v4954 = vmul.f32 %v4931, %v4946
      %v4955 = vmul.f32 %v4932, %v4946
      %v4956 = vmul.f32 %v4933, %v4946
      %v4957 = vmul.f32 %v4934, %v4946
      %v4958 = vmul.f32 %v4935, %v4946
      %v4959 = vmul.f32 %v4936, %v4946
      %v4960 = vmul.f32 %v4937, %v4946
      %v4962 = vlaneseq
      %v4963 = vshrl.u32 %v4962, 7
      %v4964 = vsub.s32 0, %v4963
      %v4965 = vrot.slane %v4941, %v4964
      %v4967 = vadd.f32 %v4948, %v4965
      %v4968 = vadd.f32 %v4949, %v4965
      %v4969 = vadd.f32 %v4950, %v4965
      %v4970 = vadd.f32 %v4951, %v4965
      %v4971 = vadd.f32 %v4952, %v4965
      %v4972 = vadd.f32 %v4953, %v4965
      %v4973 = vadd.f32 %v4954, %v4965
      %v4974 = vadd.f32 %v4955, %v4965
      %v4975 = vadd.f32 %v4956, %v4965
      %v4976 = vadd.f32 %v4957, %v4965
      %v4977 = vadd.f32 %v4958, %v4965
      %v4978 = vadd.f32 %v4959, %v4965
      %v4979 = vadd.f32 %v4960, %v4965
      %vm4980 = vcmp.gt.f32.partialorder %v4967, 0.0
      %vm4981 = vcmp.gt.f32.partialorder %v4968, 0.0
      %vm4982 = vcmp.gt.f32.partialorder %v4969, 0.0
      %vm4983 = vcmp.gt.f32.partialorder %v4970, 0.0
      %vm4984 = vcmp.gt.f32.partialorder %v4971, 0.0
      %vm4985 = vcmp.gt.f32.partialorder %v4972, 0.0
      %vm4986 = vcmp.gt.f32.partialorder %v4973, 0.0
      %vm4987 = vcmp.gt.f32.partialorder %v4974, 0.0
      %vm4988 = vcmp.gt.f32.partialorder %v4975, 0.0
      %vm4989 = vcmp.gt.f32.partialorder %v4976, 0.0
      %vm4990 = vcmp.gt.f32.partialorder %v4977, 0.0
      %vm4991 = vcmp.gt.f32.partialorder %v4978, 0.0
      %vm4992 = vcmp.gt.f32.partialorder %v4979, 0.0
      %v4993 = vmul.f32 %v4967, 0.01
      %v4994 = vmul.f32 %v4968, 0.01
      %v4995 = vmul.f32 %v4969, 0.01
      %v4996 = vmul.f32 %v4970, 0.01
      %v4997 = vmul.f32 %v4971, 0.01
      %v4998 = vmul.f32 %v4972, 0.01
      %v4999 = vmul.f32 %v4973, 0.01
      %v5000 = vmul.f32 %v4974, 0.01
      %v5001 = vmul.f32 %v4975, 0.01
      %v5002 = vmul.f32 %v4976, 0.01
      %v5003 = vmul.f32 %v4977, 0.01
      %v5004 = vmul.f32 %v4978, 0.01
      %v5005 = vmul.f32 %v4979, 0.01
      %v5006 = vsel %vm4980, %v4967, %v4993
      %v5007 = vsel %vm4981, %v4968, %v4994
      %v5008 = vsel %vm4982, %v4969, %v4995
      %v5009 = vsel %vm4983, %v4970, %v4996
      %v5010 = vsel %vm4984, %v4971, %v4997
      %v5011 = vsel %vm4985, %v4972, %v4998
      %v5012 = vsel %vm4986, %v4973, %v4999
      %v5013 = vsel %vm4987, %v4974, %v5000
      %v5014 = vsel %vm4988, %v4975, %v5001
      %v5015 = vsel %vm4989, %v4976, %v5002
      %v5016 = vsel %vm4990, %v4977, %v5003
      %v5017 = vsel %vm4991, %v4978, %v5004
      %v5018 = vsel %vm4992, %v4979, %v5005
      %v5019 = vmul.f32 %v5006, %v515
      %v5020 = vmul.f32 %v5007, %v520
      %v5021 = vmul.f32 %v5008, %v525
      %v5022 = vmul.f32 %v5009, %v530
      %v5023 = vmul.f32 %v5010, %v535
      %v5024 = vmul.f32 %v5011, %v540
      %v5025 = vmul.f32 %v5012, %v545
      %v5026 = vmul.f32 %v5013, %v550
      %v5027 = vmul.f32 %v5014, %v555
      %v5028 = vmul.f32 %v5015, %v560
      %v5029 = vmul.f32 %v5016, %v565
      %v5030 = vmul.f32 %v5017, %v570
      %v5031 = vmul.f32 %v5018, %v575
      %5032 = vst.msk [vmem:[#allocation2 + $0x10] sm:$0xff] %vm414, %v5019
      %5033 = vst.msk [vmem:[#allocation2 + $0x18] sm:$0xff] %vm414, %v5020
      %5034 = vst.msk [vmem:[#allocation2 + $0x20] sm:$0xff] %vm414, %v5021
      %5035 = vst.msk [vmem:[#allocation2 + $0x28] sm:$0xff] %vm414, %v5022
      %5036 = vst.msk [vmem:[#allocation2 + $0x30] sm:$0xff] %vm414, %v5023
      %5037 = vst.msk [vmem:[#allocation2 + $0x38] sm:$0xff] %vm414, %v5024
      %5038 = vst.msk [vmem:[#allocation2 + $0x40] sm:$0xff] %vm414, %v5025
      %5039 = vst.msk [vmem:[#allocation2 + $0x48] sm:$0xff] %vm414, %v5026
      %5040 = vst.msk [vmem:[#allocation2 + $0x50] sm:$0xff] %vm414, %v5027
      %5041 = vst.msk [vmem:[#allocation2 + $0x58] sm:$0xff] %vm414, %v5028
      %5042 = vst.msk [vmem:[#allocation2 + $0x60] sm:$0xff] %vm414, %v5029
      %5043 = vst.msk [vmem:[#allocation2 + $0x68] sm:$0xff] %vm414, %v5030
      %5044 = vst.msk [vmem:[#allocation2 + $0x70] sm:$0xf] %vm431, %v5031
      %v5045 = vld [vmem:[#allocation2 + $0x5] sm:$0xff]
      %v5046 = vld [vmem:[#allocation2 + $0xd] sm:$0xff]
      %v5047 = vld [vmem:[#allocation2 + $0x15] sm:$0xff]
      %v5048 = vld [vmem:[#allocation2 + $0x1d] sm:$0xff]
      %v5049 = vld [vmem:[#allocation2 + $0x25] sm:$0xff]
      %v5050 = vld [vmem:[#allocation2 + $0x2d] sm:$0xff]
      %v5051 = vld [vmem:[#allocation2 + $0x35] sm:$0xff]
      %v5052 = vld [vmem:[#allocation2 + $0x3d] sm:$0xff]
      %v5053 = vld [vmem:[#allocation2 + $0x45] sm:$0xff]
      %v5054 = vld [vmem:[#allocation2 + $0x4d] sm:$0xff]
      %v5055 = vld [vmem:[#allocation2 + $0x55] sm:$0xff]
      %v5056 = vld [vmem:[#allocation2 + $0x5d] sm:$0xff]
      %v5057 = vld [vmem:[#allocation2 + $0x65] sm:$0xf]
      %v5058 = vpack.c.bf16 %v5046, %v5045
      %v5059 = vpack.c.bf16 %v5048, %v5047
      %v5060 = vpack.c.bf16 %v5050, %v5049
      %v5061 = vpack.c.bf16 %v5052, %v5051
      %v5062 = vpack.c.bf16 %v5054, %v5053
      %v5063 = vpack.c.bf16 %v5056, %v5055
      %v5064 = vpack.c.bf16 %v5057, %v5057
      %s5065 = scalar_lea.vmem %s7, 108
      %v5066 = vld [vmem:[%s5065] sm:$0xf]
      %v5067 = vld [vmem:[#allocation2 + $0x6] sm:$0xff]
      %v5068 = vld [vmem:[#allocation2 + $0xe] sm:$0xff]
      %v5069 = vld [vmem:[#allocation2 + $0x16] sm:$0xff]
      %v5070 = vld [vmem:[#allocation2 + $0x1e] sm:$0xff]
      %v5071 = vld [vmem:[#allocation2 + $0x26] sm:$0xff]
      %v5072 = vld [vmem:[#allocation2 + $0x2e] sm:$0xff]
      %v5073 = vld [vmem:[#allocation2 + $0x36] sm:$0xff]
      %v5074 = vld [vmem:[#allocation2 + $0x3e] sm:$0xff]
      %v5075 = vld [vmem:[#allocation2 + $0x46] sm:$0xff]
      %v5076 = vld [vmem:[#allocation2 + $0x4e] sm:$0xff]
      %v5077 = vld [vmem:[#allocation2 + $0x56] sm:$0xff]
      %v5078 = vld [vmem:[#allocation2 + $0x5e] sm:$0xff]
      %v5079 = vld [vmem:[#allocation2 + $0x66] sm:$0xf]
      %v5080 = vpack.c.bf16 %v5068, %v5067
      %v5081 = vpack.c.bf16 %v5070, %v5069
      %v5082 = vpack.c.bf16 %v5072, %v5071
      %v5083 = vpack.c.bf16 %v5074, %v5073
      %v5084 = vpack.c.bf16 %v5076, %v5075
      %v5085 = vpack.c.bf16 %v5078, %v5077
      %v5086 = vpack.c.bf16 %v5079, %v5079
      %s5087 = scalar_lea.vmem %s7, 112
      %v5088 = vld [vmem:[%s5087] sm:$0xf]
      %v5090 = vsel %vm414, %v5080, 0
      %v5093 = vsel %vm414, %v5081, 0
      %v5096 = vsel %vm414, %v5082, 0
      %v5099 = vsel %vm414, %v5083, 0
      %v5102 = vsel %vm414, %v5084, 0
      %v5105 = vsel %vm414, %v5085, 0
      %v5108 = vsel %vm414, %v5086, 0
      %v5111 = vsel %vm884, %v5088, 0
      %5113 = vmatprep.subr.bf16.mxu0 0
      %5114 = vmatpush1.bf16.msra.mxu0 %v5111
      %5115 = vmatprep.subr.bf16.mxu0 0
      %5116 = vmatpush1.bf16.msra.mxu0 0
      %5117 = vmatprep.subr.bf16.mxu0 0
      %5118 = vmatpush1.bf16.msra.mxu0 0
      %5119 = vmatprep.subr.bf16.mxu0 0
      %5120 = vmatpush1.bf16.msra.mxu0 0
      %5121 = vmatprep.subr.bf16.mxu0 0
      %5122 = vmatpush1.bf16.msra.mxu0 0
      %5123 = vmatprep.subr.bf16.mxu0 0
      %5124 = vmatpush1.bf16.msra.mxu0 0
      %5125 = vmatprep.subr.bf16.mxu0 0
      %5126 = vmatpush1.bf16.msra.mxu0 0
      %5127 = vmatprep.subr.bf16.mxu0 0
      %5128 = vmatpush1.bf16.msra.mxu0 0
      %5129 = vmatprep.subr.bf16.mxu0 0
      %5130 = vmatpush1.bf16.msra.mxu0 0
      %5131 = vmatprep.subr.bf16.mxu0 0
      %5132 = vmatpush1.bf16.msra.mxu0 0
      %5133 = vmatprep.subr.bf16.mxu0 0
      %5134 = vmatpush1.bf16.msra.mxu0 0
      %5135 = vmatprep.subr.bf16.mxu0 0
      %5136 = vmatpush1.bf16.msra.mxu0 0
      %5137 = vmatprep.subr.bf16.mxu0 0
      %5138 = vmatpush1.bf16.msra.mxu0 0
      %5139 = vmatprep.subr.bf16.mxu0 0
      %5140 = vmatpush1.bf16.msra.mxu0 0
      %5141 = vmatprep.subr.bf16.mxu0 0
      %5142 = vmatpush1.bf16.msra.mxu0 0
      %5143 = vmatprep.subr.bf16.mxu0 0
      %5144 = vmatpush1.bf16.msra.mxu0 0
      %5145 = vmatprep.mubr.bf16.mxu0 0
      %5146 = vmatmul.mubr.bf16.gmra.mrb[0].mxu0 %v5090
      %v5147 = vpop.f32.mrb[0].mxu0
      %v5148 = vadd.f32 0.0, %v5147
      %v5149 = vpop.f32.mrb[0].mxu0
      %v5150 = vpop.f32.mrb[0].mxu0
      %v5151 = vadd.f32 0.0, %v5150
      %v5152 = vpop.f32.mrb[0].mxu0
      %5153 = vmatprep.mubr.bf16.mxu0 0
      %5154 = vmatmul.mubr.bf16.gmra.mrb[0].mxu0 %v5093
      %v5155 = vpop.f32.mrb[0].mxu0
      %v5156 = vadd.f32 0.0, %v5155
      %v5157 = vpop.f32.mrb[0].mxu0
      %v5158 = vpop.f32.mrb[0].mxu0
      %v5159 = vadd.f32 0.0, %v5158
      %v5160 = vpop.f32.mrb[0].mxu0
      %5161 = vmatprep.mubr.bf16.mxu0 0
      %5162 = vmatmul.mubr.bf16.gmra.mrb[0].mxu0 %v5096
      %v5163 = vpop.f32.mrb[0].mxu0
      %v5164 = vadd.f32 0.0, %v5163
      %v5165 = vpop.f32.mrb[0].mxu0
      %v5166 = vpop.f32.mrb[0].mxu0
      %v5167 = vadd.f32 0.0, %v5166
      %v5168 = vpop.f32.mrb[0].mxu0
      %5169 = vmatprep.mubr.bf16.mxu0 0
      %5170 = vmatmul.mubr.bf16.gmra.mrb[0].mxu0 %v5099
      %v5171 = vpop.f32.mrb[0].mxu0
      %v5172 = vadd.f32 0.0, %v5171
      %v5173 = vpop.f32.mrb[0].mxu0
      %v5174 = vpop.f32.mrb[0].mxu0
      %v5175 = vadd.f32 0.0, %v5174
      %v5176 = vpop.f32.mrb[0].mxu0
      %5177 = vmatprep.mubr.bf16.mxu0 0
      %5178 = vmatmul.mubr.bf16.gmra.mrb[0].mxu0 %v5102
      %v5179 = vpop.f32.mrb[0].mxu0
      %v5180 = vadd.f32 0.0, %v5179
      %v5181 = vpop.f32.mrb[0].mxu0
      %v5182 = vpop.f32.mrb[0].mxu0
      %v5183 = vadd.f32 0.0, %v5182
      %v5184 = vpop.f32.mrb[0].mxu0
      %5185 = vmatprep.mubr.bf16.mxu0 0
      %5186 = vmatmul.mubr.bf16.gmra.mrb[0].mxu0 %v5105
      %v5187 = vpop.f32.mrb[0].mxu0
      %v5188 = vadd.f32 0.0, %v5187
      %v5189 = vpop.f32.mrb[0].mxu0
      %v5190 = vpop.f32.mrb[0].mxu0
      %v5191 = vadd.f32 0.0, %v5190
      %v5192 = vpop.f32.mrb[0].mxu0
      %5193 = vmatprep.mubr.bf16.mxu0 0
      %5194 = vmatmul.mubr.bf16.gmra.mrb[0].mxu0 %v5108
      %v5195 = vpop.f32.mrb[0].mxu0
      %v5196 = vadd.f32 0.0, %v5195
      %v5197 = vpop.f32.mrb[0].mxu0
      %v5198 = vpop.f32.mrb[0].mxu0
      %v5199 = vpop.f32.mrb[0].mxu0
      %5200 = vdwg.mxu0
      %v5202 = vsel %vm414, %v5058, 0
      %v5205 = vsel %vm414, %v5059, 0
      %v5208 = vsel %vm414, %v5060, 0
      %v5211 = vsel %vm414, %v5061, 0
      %v5214 = vsel %vm414, %v5062, 0
      %v5217 = vsel %vm414, %v5063, 0
      %v5220 = vsel %vm414, %v5064, 0
      %v5223 = vsel %vm884, %v5066, 0
      %5225 = vmatprep.subr.bf16.mxu0 0
      %5226 = vmatpush1.bf16.msra.mxu0 %v5223
      %5227 = vmatprep.subr.bf16.mxu0 0
      %5228 = vmatpush1.bf16.msra.mxu0 0
      %5229 = vmatprep.subr.bf16.mxu0 0
      %5230 = vmatpush1.bf16.msra.mxu0 0
      %5231 = vmatprep.subr.bf16.mxu0 0
      %5232 = vmatpush1.bf16.msra.mxu0 0
      %5233 = vmatprep.subr.bf16.mxu0 0
      %5234 = vmatpush1.bf16.msra.mxu0 0
      %5235 = vmatprep.subr.bf16.mxu0 0
      %5236 = vmatpush1.bf16.msra.mxu0 0
      %5237 = vmatprep.subr.bf16.mxu0 0
      %5238 = vmatpush1.bf16.msra.mxu0 0
      %5239 = vmatprep.subr.bf16.mxu0 0
      %5240 = vmatpush1.bf16.msra.mxu0 0
      %5241 = vmatprep.subr.bf16.mxu0 0
      %5242 = vmatpush1.bf16.msra.mxu0 0
      %5243 = vmatprep.subr.bf16.mxu0 0
      %5244 = vmatpush1.bf16.msra.mxu0 0
      %5245 = vmatprep.subr.bf16.mxu0 0
      %5246 = vmatpush1.bf16.msra.mxu0 0
      %5247 = vmatprep.subr.bf16.mxu0 0
      %5248 = vmatpush1.bf16.msra.mxu0 0
      %5249 = vmatprep.subr.bf16.mxu0 0
      %5250 = vmatpush1.bf16.msra.mxu0 0
      %5251 = vmatprep.subr.bf16.mxu0 0
      %5252 = vmatpush1.bf16.msra.mxu0 0
      %5253 = vmatprep.subr.bf16.mxu0 0
      %5254 = vmatpush1.bf16.msra.mxu0 0
      %5255 = vmatprep.subr.bf16.mxu0 0
      %5256 = vmatpush1.bf16.msra.mxu0 0
      %5257 = vmatprep.mubr.bf16.mxu0 0
      %5258 = vmatmul.mubr.bf16.gmra.mrb[0].mxu0 %v5202
      %v5259 = vpop.f32.mrb[0].mxu0
      %v5260 = vadd.f32 %v5148, %v5259
      %v5261 = vpop.f32.mrb[0].mxu0
      %v5262 = vpop.f32.mrb[0].mxu0
      %v5263 = vadd.f32 %v5151, %v5262
      %v5264 = vpop.f32.mrb[0].mxu0
      %5265 = vmatprep.mubr.bf16.mxu0 0
      %5266 = vmatmul.mubr.bf16.gmra.mrb[0].mxu0 %v5205
      %v5267 = vpop.f32.mrb[0].mxu0
      %v5268 = vadd.f32 %v5156, %v5267
      %v5269 = vpop.f32.mrb[0].mxu0
      %v5270 = vpop.f32.mrb[0].mxu0
      %v5271 = vadd.f32 %v5159, %v5270
      %v5272 = vpop.f32.mrb[0].mxu0
      %5273 = vmatprep.mubr.bf16.mxu0 0
      %5274 = vmatmul.mubr.bf16.gmra.mrb[0].mxu0 %v5208
      %v5275 = vpop.f32.mrb[0].mxu0
      %v5276 = vadd.f32 %v5164, %v5275
      %v5277 = vpop.f32.mrb[0].mxu0
      %v5278 = vpop.f32.mrb[0].mxu0
      %v5279 = vadd.f32 %v5167, %v5278
      %v5280 = vpop.f32.mrb[0].mxu0
      %5281 = vmatprep.mubr.bf16.mxu0 0
      %5282 = vmatmul.mubr.bf16.gmra.mrb[0].mxu0 %v5211
      %v5283 = vpop.f32.mrb[0].mxu0
      %v5284 = vadd.f32 %v5172, %v5283
      %v5285 = vpop.f32.mrb[0].mxu0
      %v5286 = vpop.f32.mrb[0].mxu0
      %v5287 = vadd.f32 %v5175, %v5286
      %v5288 = vpop.f32.mrb[0].mxu0
      %5289 = vmatprep.mubr.bf16.mxu0 0
      %5290 = vmatmul.mubr.bf16.gmra.mrb[0].mxu0 %v5214
      %v5291 = vpop.f32.mrb[0].mxu0
      %v5292 = vadd.f32 %v5180, %v5291
      %v5293 = vpop.f32.mrb[0].mxu0
      %v5294 = vpop.f32.mrb[0].mxu0
      %v5295 = vadd.f32 %v5183, %v5294
      %v5296 = vpop.f32.mrb[0].mxu0
      %5297 = vmatprep.mubr.bf16.mxu0 0
      %5298 = vmatmul.mubr.bf16.gmra.mrb[0].mxu0 %v5217
      %v5299 = vpop.f32.mrb[0].mxu0
      %v5300 = vadd.f32 %v5188, %v5299
      %v5301 = vpop.f32.mrb[0].mxu0
      %v5302 = vpop.f32.mrb[0].mxu0
      %v5303 = vadd.f32 %v5191, %v5302
      %v5304 = vpop.f32.mrb[0].mxu0
      %5305 = vmatprep.mubr.bf16.mxu0 0
      %5306 = vmatmul.mubr.bf16.gmra.mrb[0].mxu0 %v5220
      %v5307 = vpop.f32.mrb[0].mxu0
      %v5308 = vadd.f32 %v5196, %v5307
      %v5309 = vpop.f32.mrb[0].mxu0
      %v5310 = vpop.f32.mrb[0].mxu0
      %v5311 = vpop.f32.mrb[0].mxu0
      %5312 = vdwg.mxu0
      %v5313 = vld [vmem:[#allocation2 + $0x7] sm:$0xff]
      %v5314 = vld [vmem:[#allocation2 + $0xf] sm:$0xff]
      %v5315 = vld [vmem:[#allocation2 + $0x17] sm:$0xff]
      %v5316 = vld [vmem:[#allocation2 + $0x1f] sm:$0xff]
      %v5317 = vld [vmem:[#allocation2 + $0x27] sm:$0xff]
      %v5318 = vld [vmem:[#allocation2 + $0x2f] sm:$0xff]
      %v5319 = vld [vmem:[#allocation2 + $0x37] sm:$0xff]
      %v5320 = vld [vmem:[#allocation2 + $0x3f] sm:$0xff]
      %v5321 = vld [vmem:[#allocation2 + $0x47] sm:$0xff]
      %v5322 = vld [vmem:[#allocation2 + $0x4f] sm:$0xff]
      %v5323 = vld [vmem:[#allocation2 + $0x57] sm:$0xff]
      %v5324 = vld [vmem:[#allocation2 + $0x5f] sm:$0xff]
      %v5325 = vld [vmem:[#allocation2 + $0x67] sm:$0xf]
      %v5326 = vpack.c.bf16 %v5314, %v5313
      %v5327 = vpack.c.bf16 %v5316, %v5315
      %v5328 = vpack.c.bf16 %v5318, %v5317
      %v5329 = vpack.c.bf16 %v5320, %v5319
      %v5330 = vpack.c.bf16 %v5322, %v5321
      %v5331 = vpack.c.bf16 %v5324, %v5323
      %v5332 = vpack.c.bf16 %v5325, %v5325
      %s5333 = scalar_lea.vmem %s7, 116
      %v5334 = vld [vmem:[%s5333] sm:$0xf]
      %v5336 = vsel %vm414, %v5326, 0
      %v5339 = vsel %vm414, %v5327, 0
      %v5342 = vsel %vm414, %v5328, 0
      %v5345 = vsel %vm414, %v5329, 0
      %v5348 = vsel %vm414, %v5330, 0
      %v5351 = vsel %vm414, %v5331, 0
      %v5354 = vsel %vm414, %v5332, 0
      %v5357 = vsel %vm884, %v5334, 0
      %5359 = vmatprep.subr.bf16.mxu0 0
      %5360 = vmatpush1.bf16.msra.mxu0 %v5357
      %5361 = vmatprep.subr.bf16.mxu0 0
      %5362 = vmatpush1.bf16.msra.mxu0 0
      %5363 = vmatprep.subr.bf16.mxu0 0
      %5364 = vmatpush1.bf16.msra.mxu0 0
      %5365 = vmatprep.subr.bf16.mxu0 0
      %5366 = vmatpush1.bf16.msra.mxu0 0
      %5367 = vmatprep.subr.bf16.mxu0 0
      %5368 = vmatpush1.bf16.msra.mxu0 0
      %5369 = vmatprep.subr.bf16.mxu0 0
      %5370 = vmatpush1.bf16.msra.mxu0 0
      %5371 = vmatprep.subr.bf16.mxu0 0
      %5372 = vmatpush1.bf16.msra.mxu0 0
      %5373 = vmatprep.subr.bf16.mxu0 0
      %5374 = vmatpush1.bf16.msra.mxu0 0
      %5375 = vmatprep.subr.bf16.mxu0 0
      %5376 = vmatpush1.bf16.msra.mxu0 0
      %5377 = vmatprep.subr.bf16.mxu0 0
      %5378 = vmatpush1.bf16.msra.mxu0 0
      %5379 = vmatprep.subr.bf16.mxu0 0
      %5380 = vmatpush1.bf16.msra.mxu0 0
      %5381 = vmatprep.subr.bf16.mxu0 0
      %5382 = vmatpush1.bf16.msra.mxu0 0
      %5383 = vmatprep.subr.bf16.mxu0 0
      %5384 = vmatpush1.bf16.msra.mxu0 0
      %5385 = vmatprep.subr.bf16.mxu0 0
      %5386 = vmatpush1.bf16.msra.mxu0 0
      %5387 = vmatprep.subr.bf16.mxu0 0
      %5388 = vmatpush1.bf16.msra.mxu0 0
      %5389 = vmatprep.subr.bf16.mxu0 0
      %5390 = vmatpush1.bf16.msra.mxu0 0
      %5391 = vmatprep.mubr.bf16.mxu0 0
      %5392 = vmatmul.mubr.bf16.gmra.mrb[0].mxu0 %v5336
      %v5393 = vpop.f32.mrb[0].mxu0
      %v5394 = vadd.f32 0.0, %v5393
      %v5395 = vpop.f32.mrb[0].mxu0
      %v5396 = vpop.f32.mrb[0].mxu0
      %v5397 = vadd.f32 0.0, %v5396
      %v5398 = vpop.f32.mrb[0].mxu0
      %5399 = vmatprep.mubr.bf16.mxu0 0
      %5400 = vmatmul.mubr.bf16.gmra.mrb[0].mxu0 %v5339
      %v5401 = vpop.f32.mrb[0].mxu0
      %v5402 = vadd.f32 0.0, %v5401
      %v5403 = vpop.f32.mrb[0].mxu0
      %v5404 = vpop.f32.mrb[0].mxu0
      %v5405 = vadd.f32 0.0, %v5404
      %v5406 = vpop.f32.mrb[0].mxu0
      %5407 = vmatprep.mubr.bf16.mxu0 0
      %5408 = vmatmul.mubr.bf16.gmra.mrb[0].mxu0 %v5342
      %v5409 = vpop.f32.mrb[0].mxu0
      %v5410 = vadd.f32 0.0, %v5409
      %v5411 = vpop.f32.mrb[0].mxu0
      %v5412 = vpop.f32.mrb[0].mxu0
      %v5413 = vadd.f32 0.0, %v5412
      %v5414 = vpop.f32.mrb[0].mxu0
      %5415 = vmatprep.mubr.bf16.mxu0 0
      %5416 = vmatmul.mubr.bf16.gmra.mrb[0].mxu0 %v5345
      %v5417 = vpop.f32.mrb[0].mxu0
      %v5418 = vadd.f32 0.0, %v5417
      %v5419 = vpop.f32.mrb[0].mxu0
      %v5420 = vpop.f32.mrb[0].mxu0
      %v5421 = vadd.f32 0.0, %v5420
      %v5422 = vpop.f32.mrb[0].mxu0
      %5423 = vmatprep.mubr.bf16.mxu0 0
      %5424 = vmatmul.mubr.bf16.gmra.mrb[0].mxu0 %v5348
      %v5425 = vpop.f32.mrb[0].mxu0
      %v5426 = vadd.f32 0.0, %v5425
      %v5427 = vpop.f32.mrb[0].mxu0
      %v5428 = vpop.f32.mrb[0].mxu0
      %v5429 = vadd.f32 0.0, %v5428
      %v5430 = vpop.f32.mrb[0].mxu0
      %5431 = vmatprep.mubr.bf16.mxu0 0
      %5432 = vmatmul.mubr.bf16.gmra.mrb[0].mxu0 %v5351
      %v5433 = vpop.f32.mrb[0].mxu0
      %v5434 = vadd.f32 0.0, %v5433
      %v5435 = vpop.f32.mrb[0].mxu0
      %v5436 = vpop.f32.mrb[0].mxu0
      %v5437 = vadd.f32 0.0, %v5436
      %v5438 = vpop.f32.mrb[0].mxu0
      %5439 = vmatprep.mubr.bf16.mxu0 0
      %5440 = vmatmul.mubr.bf16.gmra.mrb[0].mxu0 %v5354
      %v5441 = vpop.f32.mrb[0].mxu0
      %v5442 = vadd.f32 0.0, %v5441
      %v5443 = vpop.f32.mrb[0].mxu0
      %v5444 = vpop.f32.mrb[0].mxu0
      %v5445 = vpop.f32.mrb[0].mxu0
      %5446 = vdwg.mxu0
      %v5447 = vadd.f32 %v5260, %v5394
      %v5448 = vadd.f32 %v5263, %v5397
      %v5449 = vadd.f32 %v5268, %v5402
      %v5450 = vadd.f32 %v5271, %v5405
      %v5451 = vadd.f32 %v5276, %v5410
      %v5452 = vadd.f32 %v5279, %v5413
      %v5453 = vadd.f32 %v5284, %v5418
      %v5454 = vadd.f32 %v5287, %v5421
      %v5455 = vadd.f32 %v5292, %v5426
      %v5456 = vadd.f32 %v5295, %v5429
      %v5457 = vadd.f32 %v5300, %v5434
      %v5458 = vadd.f32 %v5303, %v5437
      %v5459 = vadd.f32 %v5308, %v5442
      %v5460 = vld [vmem:[#allocation2 + $0xf] sm:$0xff]
      %v5461 = vld [vmem:[#allocation2 + $0x17] sm:$0xff]
      %v5462 = vld [vmem:[#allocation2 + $0x1f] sm:$0xff]
      %v5463 = vld [vmem:[#allocation2 + $0x27] sm:$0xff]
      %v5464 = vld [vmem:[#allocation2 + $0x2f] sm:$0xff]
      %v5465 = vld [vmem:[#allocation2 + $0x37] sm:$0xff]
      %v5466 = vld [vmem:[#allocation2 + $0x3f] sm:$0xff]
      %v5467 = vld [vmem:[#allocation2 + $0x47] sm:$0xff]
      %v5468 = vld [vmem:[#allocation2 + $0x4f] sm:$0xff]
      %v5469 = vld [vmem:[#allocation2 + $0x57] sm:$0xff]
      %v5470 = vld [vmem:[#allocation2 + $0x5f] sm:$0xff]
      %v5471 = vld [vmem:[#allocation2 + $0x67] sm:$0xff]
      %v5472 = vld [vmem:[#allocation2 + $0x6f] sm:$0xf]
      %v5473 = vpack.c.bf16 %v5461, %v5460
      %v5474 = vpack.c.bf16 %v5463, %v5462
      %v5475 = vpack.c.bf16 %v5465, %v5464
      %v5476 = vpack.c.bf16 %v5467, %v5466
      %v5477 = vpack.c.bf16 %v5469, %v5468
      %v5478 = vpack.c.bf16 %v5471, %v5470
      %v5479 = vpack.c.bf16 %v5472, %v5472
      %s5480 = scalar_lea.vmem %s7, 120
      %v5481 = vld [vmem:[%s5480] sm:$0xf]
      %v5483 = vsel %vm414, %v5473, 0
      %v5486 = vsel %vm414, %v5474, 0
      %v5489 = vsel %vm414, %v5475, 0
      %v5492 = vsel %vm414, %v5476, 0
      %v5495 = vsel %vm414, %v5477, 0
      %v5498 = vsel %vm414, %v5478, 0
      %v5501 = vsel %vm414, %v5479, 0
      %v5504 = vsel %vm884, %v5481, 0
      %5506 = vmatprep.subr.bf16.mxu0 0
      %5507 = vmatpush1.bf16.msra.mxu0 %v5504
      %5508 = vmatprep.subr.bf16.mxu0 0
      %5509 = vmatpush1.bf16.msra.mxu0 0
      %5510 = vmatprep.subr.bf16.mxu0 0
      %5511 = vmatpush1.bf16.msra.mxu0 0
      %5512 = vmatprep.subr.bf16.mxu0 0
      %5513 = vmatpush1.bf16.msra.mxu0 0
      %5514 = vmatprep.subr.bf16.mxu0 0
      %5515 = vmatpush1.bf16.msra.mxu0 0
      %5516 = vmatprep.subr.bf16.mxu0 0
      %5517 = vmatpush1.bf16.msra.mxu0 0
      %5518 = vmatprep.subr.bf16.mxu0 0
      %5519 = vmatpush1.bf16.msra.mxu0 0
      %5520 = vmatprep.subr.bf16.mxu0 0
      %5521 = vmatpush1.bf16.msra.mxu0 0
      %5522 = vmatprep.subr.bf16.mxu0 0
      %5523 = vmatpush1.bf16.msra.mxu0 0
      %5524 = vmatprep.subr.bf16.mxu0 0
      %5525 = vmatpush1.bf16.msra.mxu0 0
      %5526 = vmatprep.subr.bf16.mxu0 0
      %5527 = vmatpush1.bf16.msra.mxu0 0
      %5528 = vmatprep.subr.bf16.mxu0 0
      %5529 = vmatpush1.bf16.msra.mxu0 0
      %5530 = vmatprep.subr.bf16.mxu0 0
      %5531 = vmatpush1.bf16.msra.mxu0 0
      %5532 = vmatprep.subr.bf16.mxu0 0
      %5533 = vmatpush1.bf16.msra.mxu0 0
      %5534 = vmatprep.subr.bf16.mxu0 0
      %5535 = vmatpush1.bf16.msra.mxu0 0
      %5536 = vmatprep.subr.bf16.mxu0 0
      %5537 = vmatpush1.bf16.msra.mxu0 0
      %5538 = vmatprep.mubr.bf16.mxu0 0
      %5539 = vmatmul.mubr.bf16.gmra.mrb[0].mxu0 %v5483
      %v5540 = vpop.f32.mrb[0].mxu0
      %v5541 = vadd.f32 0.0, %v5540
      %v5542 = vpop.f32.mrb[0].mxu0
      %v5543 = vpop.f32.mrb[0].mxu0
      %v5544 = vadd.f32 0.0, %v5543
      %v5545 = vpop.f32.mrb[0].mxu0
      %5546 = vmatprep.mubr.bf16.mxu0 0
      %5547 = vmatmul.mubr.bf16.gmra.mrb[0].mxu0 %v5486
      %v5548 = vpop.f32.mrb[0].mxu0
      %v5549 = vadd.f32 0.0, %v5548
      %v5550 = vpop.f32.mrb[0].mxu0
      %v5551 = vpop.f32.mrb[0].mxu0
      %v5552 = vadd.f32 0.0, %v5551
      %v5553 = vpop.f32.mrb[0].mxu0
      %5554 = vmatprep.mubr.bf16.mxu0 0
      %5555 = vmatmul.mubr.bf16.gmra.mrb[0].mxu0 %v5489
      %v5556 = vpop.f32.mrb[0].mxu0
      %v5557 = vadd.f32 0.0, %v5556
      %v5558 = vpop.f32.mrb[0].mxu0
      %v5559 = vpop.f32.mrb[0].mxu0
      %v5560 = vadd.f32 0.0, %v5559
      %v5561 = vpop.f32.mrb[0].mxu0
      %5562 = vmatprep.mubr.bf16.mxu0 0
      %5563 = vmatmul.mubr.bf16.gmra.mrb[0].mxu0 %v5492
      %v5564 = vpop.f32.mrb[0].mxu0
      %v5565 = vadd.f32 0.0, %v5564
      %v5566 = vpop.f32.mrb[0].mxu0
      %v5567 = vpop.f32.mrb[0].mxu0
      %v5568 = vadd.f32 0.0, %v5567
      %v5569 = vpop.f32.mrb[0].mxu0
      %5570 = vmatprep.mubr.bf16.mxu0 0
      %5571 = vmatmul.mubr.bf16.gmra.mrb[0].mxu0 %v5495
      %v5572 = vpop.f32.mrb[0].mxu0
      %v5573 = vadd.f32 0.0, %v5572
      %v5574 = vpop.f32.mrb[0].mxu0
      %v5575 = vpop.f32.mrb[0].mxu0
      %v5576 = vadd.f32 0.0, %v5575
      %v5577 = vpop.f32.mrb[0].mxu0
      %5578 = vmatprep.mubr.bf16.mxu0 0
      %5579 = vmatmul.mubr.bf16.gmra.mrb[0].mxu0 %v5498
      %v5580 = vpop.f32.mrb[0].mxu0
      %v5581 = vadd.f32 0.0, %v5580
      %v5582 = vpop.f32.mrb[0].mxu0
      %v5583 = vpop.f32.mrb[0].mxu0
      %v5584 = vadd.f32 0.0, %v5583
      %v5585 = vpop.f32.mrb[0].mxu0
      %5586 = vmatprep.mubr.bf16.mxu0 0
      %5587 = vmatmul.mubr.bf16.gmra.mrb[0].mxu0 %v5501
      %v5588 = vpop.f32.mrb[0].mxu0
      %v5589 = vadd.f32 0.0, %v5588
      %v5590 = vpop.f32.mrb[0].mxu0
      %v5591 = vpop.f32.mrb[0].mxu0
      %v5592 = vpop.f32.mrb[0].mxu0
      %5593 = vdwg.mxu0
      %v5594 = vadd.f32 %v5447, %v5541
      %v5595 = vadd.f32 %v5448, %v5544
      %v5596 = vadd.f32 %v5449, %v5549
      %v5597 = vadd.f32 %v5450, %v5552
      %v5598 = vadd.f32 %v5451, %v5557
      %v5599 = vadd.f32 %v5452, %v5560
      %v5600 = vadd.f32 %v5453, %v5565
      %v5601 = vadd.f32 %v5454, %v5568
      %v5602 = vadd.f32 %v5455, %v5573
      %v5603 = vadd.f32 %v5456, %v5576
      %v5604 = vadd.f32 %v5457, %v5581
      %v5605 = vadd.f32 %v5458, %v5584
      %v5606 = vadd.f32 %v5459, %v5589
      %v5607 = vld [vmem:[#allocation2 + $0x10] sm:$0xff]
      %v5608 = vld [vmem:[#allocation2 + $0x18] sm:$0xff]
      %v5609 = vld [vmem:[#allocation2 + $0x20] sm:$0xff]
      %v5610 = vld [vmem:[#allocation2 + $0x28] sm:$0xff]
      %v5611 = vld [vmem:[#allocation2 + $0x30] sm:$0xff]
      %v5612 = vld [vmem:[#allocation2 + $0x38] sm:$0xff]
      %v5613 = vld [vmem:[#allocation2 + $0x40] sm:$0xff]
      %v5614 = vld [vmem:[#allocation2 + $0x48] sm:$0xff]
      %v5615 = vld [vmem:[#allocation2 + $0x50] sm:$0xff]
      %v5616 = vld [vmem:[#allocation2 + $0x58] sm:$0xff]
      %v5617 = vld [vmem:[#allocation2 + $0x60] sm:$0xff]
      %v5618 = vld [vmem:[#allocation2 + $0x68] sm:$0xff]
      %v5619 = vld [vmem:[#allocation2 + $0x70] sm:$0xf]
      %v5620 = vpack.c.bf16 %v5608, %v5607
      %v5621 = vpack.c.bf16 %v5610, %v5609
      %v5622 = vpack.c.bf16 %v5612, %v5611
      %v5623 = vpack.c.bf16 %v5614, %v5613
      %v5624 = vpack.c.bf16 %v5616, %v5615
      %v5625 = vpack.c.bf16 %v5618, %v5617
      %v5626 = vpack.c.bf16 %v5619, %v5619
      %s5627 = scalar_lea.vmem %s7, 124
      %v5628 = vld [vmem:[%s5627] sm:$0xf]
      %v5630 = vsel %vm414, %v5620, 0
      %v5633 = vsel %vm414, %v5621, 0
      %v5636 = vsel %vm414, %v5622, 0
      %v5639 = vsel %vm414, %v5623, 0
      %v5642 = vsel %vm414, %v5624, 0
      %v5645 = vsel %vm414, %v5625, 0
      %v5648 = vsel %vm414, %v5626, 0
      %v5651 = vsel %vm884, %v5628, 0
      %5653 = vmatprep.subr.bf16.mxu0 0
      %5654 = vmatpush1.bf16.msra.mxu0 %v5651
      %5655 = vmatprep.subr.bf16.mxu0 0
      %5656 = vmatpush1.bf16.msra.mxu0 0
      %5657 = vmatprep.subr.bf16.mxu0 0
      %5658 = vmatpush1.bf16.msra.mxu0 0
      %5659 = vmatprep.subr.bf16.mxu0 0
      %5660 = vmatpush1.bf16.msra.mxu0 0
      %5661 = vmatprep.subr.bf16.mxu0 0
      %5662 = vmatpush1.bf16.msra.mxu0 0
      %5663 = vmatprep.subr.bf16.mxu0 0
      %5664 = vmatpush1.bf16.msra.mxu0 0
      %5665 = vmatprep.subr.bf16.mxu0 0
      %5666 = vmatpush1.bf16.msra.mxu0 0
      %5667 = vmatprep.subr.bf16.mxu0 0
      %5668 = vmatpush1.bf16.msra.mxu0 0
      %5669 = vmatprep.subr.bf16.mxu0 0
      %5670 = vmatpush1.bf16.msra.mxu0 0
      %5671 = vmatprep.subr.bf16.mxu0 0
      %5672 = vmatpush1.bf16.msra.mxu0 0
      %5673 = vmatprep.subr.bf16.mxu0 0
      %5674 = vmatpush1.bf16.msra.mxu0 0
      %5675 = vmatprep.subr.bf16.mxu0 0
      %5676 = vmatpush1.bf16.msra.mxu0 0
      %5677 = vmatprep.subr.bf16.mxu0 0
      %5678 = vmatpush1.bf16.msra.mxu0 0
      %5679 = vmatprep.subr.bf16.mxu0 0
      %5680 = vmatpush1.bf16.msra.mxu0 0
      %5681 = vmatprep.subr.bf16.mxu0 0
      %5682 = vmatpush1.bf16.msra.mxu0 0
      %5683 = vmatprep.subr.bf16.mxu0 0
      %5684 = vmatpush1.bf16.msra.mxu0 0
      %5685 = vmatprep.mubr.bf16.mxu0 0
      %5686 = vmatmul.mubr.bf16.gmra.mrb[0].mxu0 %v5630
      %v5687 = vpop.f32.mrb[0].mxu0
      %v5688 = vadd.f32 0.0, %v5687
      %v5689 = vpop.f32.mrb[0].mxu0
      %v5690 = vpop.f32.mrb[0].mxu0
      %v5691 = vadd.f32 0.0, %v5690
      %v5692 = vpop.f32.mrb[0].mxu0
      %5693 = vmatprep.mubr.bf16.mxu0 0
      %5694 = vmatmul.mubr.bf16.gmra.mrb[0].mxu0 %v5633
      %v5695 = vpop.f32.mrb[0].mxu0
      %v5696 = vadd.f32 0.0, %v5695
      %v5697 = vpop.f32.mrb[0].mxu0
      %v5698 = vpop.f32.mrb[0].mxu0
      %v5699 = vadd.f32 0.0, %v5698
      %v5700 = vpop.f32.mrb[0].mxu0
      %5701 = vmatprep.mubr.bf16.mxu0 0
      %5702 = vmatmul.mubr.bf16.gmra.mrb[0].mxu0 %v5636
      %v5703 = vpop.f32.mrb[0].mxu0
      %v5704 = vadd.f32 0.0, %v5703
      %v5705 = vpop.f32.mrb[0].mxu0
      %v5706 = vpop.f32.mrb[0].mxu0
      %v5707 = vadd.f32 0.0, %v5706
      %v5708 = vpop.f32.mrb[0].mxu0
      %5709 = vmatprep.mubr.bf16.mxu0 0
      %5710 = vmatmul.mubr.bf16.gmra.mrb[0].mxu0 %v5639
      %v5711 = vpop.f32.mrb[0].mxu0
      %v5712 = vadd.f32 0.0, %v5711
      %v5713 = vpop.f32.mrb[0].mxu0
      %v5714 = vpop.f32.mrb[0].mxu0
      %v5715 = vadd.f32 0.0, %v5714
      %v5716 = vpop.f32.mrb[0].mxu0
      %5717 = vmatprep.mubr.bf16.mxu0 0
      %5718 = vmatmul.mubr.bf16.gmra.mrb[0].mxu0 %v5642
      %v5719 = vpop.f32.mrb[0].mxu0
      %v5720 = vadd.f32 0.0, %v5719
      %v5721 = vpop.f32.mrb[0].mxu0
      %v5722 = vpop.f32.mrb[0].mxu0
      %v5723 = vadd.f32 0.0, %v5722
      %v5724 = vpop.f32.mrb[0].mxu0
      %5725 = vmatprep.mubr.bf16.mxu0 0
      %5726 = vmatmul.mubr.bf16.gmra.mrb[0].mxu0 %v5645
      %v5727 = vpop.f32.mrb[0].mxu0
      %v5728 = vadd.f32 0.0, %v5727
      %v5729 = vpop.f32.mrb[0].mxu0
      %v5730 = vpop.f32.mrb[0].mxu0
      %v5731 = vadd.f32 0.0, %v5730
      %v5732 = vpop.f32.mrb[0].mxu0
      %5733 = vmatprep.mubr.bf16.mxu0 0
      %5734 = vmatmul.mubr.bf16.gmra.mrb[0].mxu0 %v5648
      %v5735 = vpop.f32.mrb[0].mxu0
      %v5736 = vadd.f32 0.0, %v5735
      %v5737 = vpop.f32.mrb[0].mxu0
      %v5738 = vpop.f32.mrb[0].mxu0
      %v5739 = vpop.f32.mrb[0].mxu0
      %5740 = vdwg.mxu0
      %v5741 = vadd.f32 %v5594, %v5688
      %v5742 = vadd.f32 %v5595, %v5691
      %v5743 = vadd.f32 %v5596, %v5696
      %v5744 = vadd.f32 %v5597, %v5699
      %v5745 = vadd.f32 %v5598, %v5704
      %v5746 = vadd.f32 %v5599, %v5707
      %v5747 = vadd.f32 %v5600, %v5712
      %v5748 = vadd.f32 %v5601, %v5715
      %v5749 = vadd.f32 %v5602, %v5720
      %v5750 = vadd.f32 %v5603, %v5723
      %v5751 = vadd.f32 %v5604, %v5728
      %v5752 = vadd.f32 %v5605, %v5731
      %v5753 = vadd.f32 %v5606, %v5736
      %v5754 = vld [vmem:[#allocation2 + $0x11] sm:$0xff]
      %v5755 = vld [vmem:[#allocation2 + $0x19] sm:$0xff]
      %v5756 = vld [vmem:[#allocation2 + $0x21] sm:$0xff]
      %v5757 = vld [vmem:[#allocation2 + $0x29] sm:$0xff]
      %v5758 = vld [vmem:[#allocation2 + $0x31] sm:$0xff]
      %v5759 = vld [vmem:[#allocation2 + $0x39] sm:$0xff]
      %v5760 = vld [vmem:[#allocation2 + $0x41] sm:$0xff]
      %v5761 = vld [vmem:[#allocation2 + $0x49] sm:$0xff]
      %v5762 = vld [vmem:[#allocation2 + $0x51] sm:$0xff]
      %v5763 = vld [vmem:[#allocation2 + $0x59] sm:$0xff]
      %v5764 = vld [vmem:[#allocation2 + $0x61] sm:$0xff]
      %v5765 = vld [vmem:[#allocation2 + $0x69] sm:$0xff]
      %v5766 = vld [vmem:[#allocation2 + $0x71] sm:$0xf]
      %v5767 = vpack.c.bf16 %v5755, %v5754
      %v5768 = vpack.c.bf16 %v5757, %v5756
      %v5769 = vpack.c.bf16 %v5759, %v5758
      %v5770 = vpack.c.bf16 %v5761, %v5760
      %v5771 = vpack.c.bf16 %v5763, %v5762
      %v5772 = vpack.c.bf16 %v5765, %v5764
      %v5773 = vpack.c.bf16 %v5766, %v5766
      %s5774 = scalar_lea.vmem %s7, 128
      %v5775 = vld [vmem:[%s5774] sm:$0xf]
      %v5777 = vsel %vm414, %v5767, 0
      %v5780 = vsel %vm414, %v5768, 0
      %v5783 = vsel %vm414, %v5769, 0
      %v5786 = vsel %vm414, %v5770, 0
      %v5789 = vsel %vm414, %v5771, 0
      %v5792 = vsel %vm414, %v5772, 0
      %v5795 = vsel %vm414, %v5773, 0
      %v5798 = vsel %vm884, %v5775, 0
      %5800 = vmatprep.subr.bf16.mxu0 0
      %5801 = vmatpush1.bf16.msra.mxu0 %v5798
      %5802 = vmatprep.subr.bf16.mxu0 0
      %5803 = vmatpush1.bf16.msra.mxu0 0
      %5804 = vmatprep.subr.bf16.mxu0 0
      %5805 = vmatpush1.bf16.msra.mxu0 0
      %5806 = vmatprep.subr.bf16.mxu0 0
      %5807 = vmatpush1.bf16.msra.mxu0 0
      %5808 = vmatprep.subr.bf16.mxu0 0
      %5809 = vmatpush1.bf16.msra.mxu0 0
      %5810 = vmatprep.subr.bf16.mxu0 0
      %5811 = vmatpush1.bf16.msra.mxu0 0
      %5812 = vmatprep.subr.bf16.mxu0 0
      %5813 = vmatpush1.bf16.msra.mxu0 0
      %5814 = vmatprep.subr.bf16.mxu0 0
      %5815 = vmatpush1.bf16.msra.mxu0 0
      %5816 = vmatprep.subr.bf16.mxu0 0
      %5817 = vmatpush1.bf16.msra.mxu0 0
      %5818 = vmatprep.subr.bf16.mxu0 0
      %5819 = vmatpush1.bf16.msra.mxu0 0
      %5820 = vmatprep.subr.bf16.mxu0 0
      %5821 = vmatpush1.bf16.msra.mxu0 0
      %5822 = vmatprep.subr.bf16.mxu0 0
      %5823 = vmatpush1.bf16.msra.mxu0 0
      %5824 = vmatprep.subr.bf16.mxu0 0
      %5825 = vmatpush1.bf16.msra.mxu0 0
      %5826 = vmatprep.subr.bf16.mxu0 0
      %5827 = vmatpush1.bf16.msra.mxu0 0
      %5828 = vmatprep.subr.bf16.mxu0 0
      %5829 = vmatpush1.bf16.msra.mxu0 0
      %5830 = vmatprep.subr.bf16.mxu0 0
      %5831 = vmatpush1.bf16.msra.mxu0 0
      %5832 = vmatprep.mubr.bf16.mxu0 0
      %5833 = vmatmul.mubr.bf16.gmra.mrb[0].mxu0 %v5777
      %v5834 = vpop.f32.mrb[0].mxu0
      %v5835 = vadd.f32 0.0, %v5834
      %v5836 = vpop.f32.mrb[0].mxu0
      %v5837 = vpop.f32.mrb[0].mxu0
      %v5838 = vadd.f32 0.0, %v5837
      %v5839 = vpop.f32.mrb[0].mxu0
      %5840 = vmatprep.mubr.bf16.mxu0 0
      %5841 = vmatmul.mubr.bf16.gmra.mrb[0].mxu0 %v5780
      %v5842 = vpop.f32.mrb[0].mxu0
      %v5843 = vadd.f32 0.0, %v5842
      %v5844 = vpop.f32.mrb[0].mxu0
      %v5845 = vpop.f32.mrb[0].mxu0
      %v5846 = vadd.f32 0.0, %v5845
      %v5847 = vpop.f32.mrb[0].mxu0
      %5848 = vmatprep.mubr.bf16.mxu0 0
      %5849 = vmatmul.mubr.bf16.gmra.mrb[0].mxu0 %v5783
      %v5850 = vpop.f32.mrb[0].mxu0
      %v5851 = vadd.f32 0.0, %v5850
      %v5852 = vpop.f32.mrb[0].mxu0
      %v5853 = vpop.f32.mrb[0].mxu0
      %v5854 = vadd.f32 0.0, %v5853
      %v5855 = vpop.f32.mrb[0].mxu0
      %5856 = vmatprep.mubr.bf16.mxu0 0
      %5857 = vmatmul.mubr.bf16.gmra.mrb[0].mxu0 %v5786
      %v5858 = vpop.f32.mrb[0].mxu0
      %v5859 = vadd.f32 0.0, %v5858
      %v5860 = vpop.f32.mrb[0].mxu0
      %v5861 = vpop.f32.mrb[0].mxu0
      %v5862 = vadd.f32 0.0, %v5861
      %v5863 = vpop.f32.mrb[0].mxu0
      %5864 = vmatprep.mubr.bf16.mxu0 0
      %5865 = vmatmul.mubr.bf16.gmra.mrb[0].mxu0 %v5789
      %v5866 = vpop.f32.mrb[0].mxu0
      %v5867 = vadd.f32 0.0, %v5866
      %v5868 = vpop.f32.mrb[0].mxu0
      %v5869 = vpop.f32.mrb[0].mxu0
      %v5870 = vadd.f32 0.0, %v5869
      %v5871 = vpop.f32.mrb[0].mxu0
      %5872 = vmatprep.mubr.bf16.mxu0 0
      %5873 = vmatmul.mubr.bf16.gmra.mrb[0].mxu0 %v5792
      %v5874 = vpop.f32.mrb[0].mxu0
      %v5875 = vadd.f32 0.0, %v5874
      %v5876 = vpop.f32.mrb[0].mxu0
      %v5877 = vpop.f32.mrb[0].mxu0
      %v5878 = vadd.f32 0.0, %v5877
      %v5879 = vpop.f32.mrb[0].mxu0
      %5880 = vmatprep.mubr.bf16.mxu0 0
      %5881 = vmatmul.mubr.bf16.gmra.mrb[0].mxu0 %v5795
      %v5882 = vpop.f32.mrb[0].mxu0
      %v5883 = vadd.f32 0.0, %v5882
      %v5884 = vpop.f32.mrb[0].mxu0
      %v5885 = vpop.f32.mrb[0].mxu0
      %v5886 = vpop.f32.mrb[0].mxu0
      %5887 = vdwg.mxu0
      %v5888 = vadd.f32 %v5741, %v5835
      %v5889 = vadd.f32 %v5742, %v5838
      %v5890 = vadd.f32 %v5743, %v5843
      %v5891 = vadd.f32 %v5744, %v5846
      %v5892 = vadd.f32 %v5745, %v5851
      %v5893 = vadd.f32 %v5746, %v5854
      %v5894 = vadd.f32 %v5747, %v5859
      %v5895 = vadd.f32 %v5748, %v5862
      %v5896 = vadd.f32 %v5749, %v5867
      %v5897 = vadd.f32 %v5750, %v5870
      %v5898 = vadd.f32 %v5751, %v5875
      %v5899 = vadd.f32 %v5752, %v5878
      %v5900 = vadd.f32 %v5753, %v5883
      %v5901 = vld [vmem:[#allocation2 + $0x19] sm:$0xff]
      %v5902 = vld [vmem:[#allocation2 + $0x21] sm:$0xff]
      %v5903 = vld [vmem:[#allocation2 + $0x29] sm:$0xff]
      %v5904 = vld [vmem:[#allocation2 + $0x31] sm:$0xff]
      %v5905 = vld [vmem:[#allocation2 + $0x39] sm:$0xff]
      %v5906 = vld [vmem:[#allocation2 + $0x41] sm:$0xff]
      %v5907 = vld [vmem:[#allocation2 + $0x49] sm:$0xff]
      %v5908 = vld [vmem:[#allocation2 + $0x51] sm:$0xff]
      %v5909 = vld [vmem:[#allocation2 + $0x59] sm:$0xff]
      %v5910 = vld [vmem:[#allocation2 + $0x61] sm:$0xff]
      %v5911 = vld [vmem:[#allocation2 + $0x69] sm:$0xff]
      %v5912 = vld [vmem:[#allocation2 + $0x71] sm:$0xff]
      %v5913 = vld [vmem:[#allocation2 + $0x79] sm:$0xf]
      %v5914 = vpack.c.bf16 %v5902, %v5901
      %v5915 = vpack.c.bf16 %v5904, %v5903
      %v5916 = vpack.c.bf16 %v5906, %v5905
      %v5917 = vpack.c.bf16 %v5908, %v5907
      %v5918 = vpack.c.bf16 %v5910, %v5909
      %v5919 = vpack.c.bf16 %v5912, %v5911
      %v5920 = vpack.c.bf16 %v5913, %v5913
      %s5921 = scalar_lea.vmem %s7, 132
      %v5922 = vld [vmem:[%s5921] sm:$0xf]
      %v5924 = vsel %vm414, %v5914, 0
      %v5927 = vsel %vm414, %v5915, 0
      %v5930 = vsel %vm414, %v5916, 0
      %v5933 = vsel %vm414, %v5917, 0
      %v5936 = vsel %vm414, %v5918, 0
      %v5939 = vsel %vm414, %v5919, 0
      %v5942 = vsel %vm414, %v5920, 0
      %v5945 = vsel %vm884, %v5922, 0
      %5947 = vmatprep.subr.bf16.mxu0 0
      %5948 = vmatpush1.bf16.msra.mxu0 %v5945
      %5949 = vmatprep.subr.bf16.mxu0 0
      %5950 = vmatpush1.bf16.msra.mxu0 0
      %5951 = vmatprep.subr.bf16.mxu0 0
      %5952 = vmatpush1.bf16.msra.mxu0 0
      %5953 = vmatprep.subr.bf16.mxu0 0
      %5954 = vmatpush1.bf16.msra.mxu0 0
      %5955 = vmatprep.subr.bf16.mxu0 0
      %5956 = vmatpush1.bf16.msra.mxu0 0
      %5957 = vmatprep.subr.bf16.mxu0 0
      %5958 = vmatpush1.bf16.msra.mxu0 0
      %5959 = vmatprep.subr.bf16.mxu0 0
      %5960 = vmatpush1.bf16.msra.mxu0 0
      %5961 = vmatprep.subr.bf16.mxu0 0
      %5962 = vmatpush1.bf16.msra.mxu0 0
      %5963 = vmatprep.subr.bf16.mxu0 0
      %5964 = vmatpush1.bf16.msra.mxu0 0
      %5965 = vmatprep.subr.bf16.mxu0 0
      %5966 = vmatpush1.bf16.msra.mxu0 0
      %5967 = vmatprep.subr.bf16.mxu0 0
      %5968 = vmatpush1.bf16.msra.mxu0 0
      %5969 = vmatprep.subr.bf16.mxu0 0
      %5970 = vmatpush1.bf16.msra.mxu0 0
      %5971 = vmatprep.subr.bf16.mxu0 0
      %5972 = vmatpush1.bf16.msra.mxu0 0
      %5973 = vmatprep.subr.bf16.mxu0 0
      %5974 = vmatpush1.bf16.msra.mxu0 0
      %5975 = vmatprep.subr.bf16.mxu0 0
      %5976 = vmatpush1.bf16.msra.mxu0 0
      %5977 = vmatprep.subr.bf16.mxu0 0
      %5978 = vmatpush1.bf16.msra.mxu0 0
      %5979 = vmatprep.mubr.bf16.mxu0 0
      %5980 = vmatmul.mubr.bf16.gmra.mrb[0].mxu0 %v5924
      %v5981 = vpop.f32.mrb[0].mxu0
      %v5982 = vadd.f32 0.0, %v5981
      %v5983 = vpop.f32.mrb[0].mxu0
      %v5984 = vpop.f32.mrb[0].mxu0
      %v5985 = vadd.f32 0.0, %v5984
      %v5986 = vpop.f32.mrb[0].mxu0
      %5987 = vmatprep.mubr.bf16.mxu0 0
      %5988 = vmatmul.mubr.bf16.gmra.mrb[0].mxu0 %v5927
      %v5989 = vpop.f32.mrb[0].mxu0
      %v5990 = vadd.f32 0.0, %v5989
      %v5991 = vpop.f32.mrb[0].mxu0
      %v5992 = vpop.f32.mrb[0].mxu0
      %v5993 = vadd.f32 0.0, %v5992
      %v5994 = vpop.f32.mrb[0].mxu0
      %5995 = vmatprep.mubr.bf16.mxu0 0
      %5996 = vmatmul.mubr.bf16.gmra.mrb[0].mxu0 %v5930
      %v5997 = vpop.f32.mrb[0].mxu0
      %v5998 = vadd.f32 0.0, %v5997
      %v5999 = vpop.f32.mrb[0].mxu0
      %v6000 = vpop.f32.mrb[0].mxu0
      %v6001 = vadd.f32 0.0, %v6000
      %v6002 = vpop.f32.mrb[0].mxu0
      %6003 = vmatprep.mubr.bf16.mxu0 0
      %6004 = vmatmul.mubr.bf16.gmra.mrb[0].mxu0 %v5933
      %v6005 = vpop.f32.mrb[0].mxu0
      %v6006 = vadd.f32 0.0, %v6005
      %v6007 = vpop.f32.mrb[0].mxu0
      %v6008 = vpop.f32.mrb[0].mxu0
      %v6009 = vadd.f32 0.0, %v6008
      %v6010 = vpop.f32.mrb[0].mxu0
      %6011 = vmatprep.mubr.bf16.mxu0 0
      %6012 = vmatmul.mubr.bf16.gmra.mrb[0].mxu0 %v5936
      %v6013 = vpop.f32.mrb[0].mxu0
      %v6014 = vadd.f32 0.0, %v6013
      %v6015 = vpop.f32.mrb[0].mxu0
      %v6016 = vpop.f32.mrb[0].mxu0
      %v6017 = vadd.f32 0.0, %v6016
      %v6018 = vpop.f32.mrb[0].mxu0
      %6019 = vmatprep.mubr.bf16.mxu0 0
      %6020 = vmatmul.mubr.bf16.gmra.mrb[0].mxu0 %v5939
      %v6021 = vpop.f32.mrb[0].mxu0
      %v6022 = vadd.f32 0.0, %v6021
      %v6023 = vpop.f32.mrb[0].mxu0
      %v6024 = vpop.f32.mrb[0].mxu0
      %v6025 = vadd.f32 0.0, %v6024
      %v6026 = vpop.f32.mrb[0].mxu0
      %6027 = vmatprep.mubr.bf16.mxu0 0
      %6028 = vmatmul.mubr.bf16.gmra.mrb[0].mxu0 %v5942
      %v6029 = vpop.f32.mrb[0].mxu0
      %v6030 = vadd.f32 0.0, %v6029
      %v6031 = vpop.f32.mrb[0].mxu0
      %v6032 = vpop.f32.mrb[0].mxu0
      %v6033 = vpop.f32.mrb[0].mxu0
      %6034 = vdwg.mxu0
      %v6035 = vadd.f32 %v5888, %v5982
      %v6036 = vadd.f32 %v5889, %v5985
      %v6037 = vadd.f32 %v5890, %v5990
      %v6038 = vadd.f32 %v5891, %v5993
      %v6039 = vadd.f32 %v5892, %v5998
      %v6040 = vadd.f32 %v5893, %v6001
      %v6041 = vadd.f32 %v5894, %v6006
      %v6042 = vadd.f32 %v5895, %v6009
      %v6043 = vadd.f32 %v5896, %v6014
      %v6044 = vadd.f32 %v5897, %v6017
      %v6045 = vadd.f32 %v5898, %v6022
      %v6046 = vadd.f32 %v5899, %v6025
      %v6047 = vadd.f32 %v5900, %v6030
      %v6048 = vld [vmem:[#allocation2 + $0x1a] sm:$0xff]
      %v6049 = vld [vmem:[#allocation2 + $0x22] sm:$0xff]
      %v6050 = vld [vmem:[#allocation2 + $0x2a] sm:$0xff]
      %v6051 = vld [vmem:[#allocation2 + $0x32] sm:$0xff]
      %v6052 = vld [vmem:[#allocation2 + $0x3a] sm:$0xff]
      %v6053 = vld [vmem:[#allocation2 + $0x42] sm:$0xff]
      %v6054 = vld [vmem:[#allocation2 + $0x4a] sm:$0xff]
      %v6055 = vld [vmem:[#allocation2 + $0x52] sm:$0xff]
      %v6056 = vld [vmem:[#allocation2 + $0x5a] sm:$0xff]
      %v6057 = vld [vmem:[#allocation2 + $0x62] sm:$0xff]
      %v6058 = vld [vmem:[#allocation2 + $0x6a] sm:$0xff]
      %v6059 = vld [vmem:[#allocation2 + $0x72] sm:$0xff]
      %v6060 = vld [vmem:[#allocation2 + $0x7a] sm:$0xf]
      %v6061 = vpack.c.bf16 %v6049, %v6048
      %v6062 = vpack.c.bf16 %v6051, %v6050
      %v6063 = vpack.c.bf16 %v6053, %v6052
      %v6064 = vpack.c.bf16 %v6055, %v6054
      %v6065 = vpack.c.bf16 %v6057, %v6056
      %v6066 = vpack.c.bf16 %v6059, %v6058
      %v6067 = vpack.c.bf16 %v6060, %v6060
      %s6068 = scalar_lea.vmem %s7, 136
      %v6069 = vld [vmem:[%s6068] sm:$0xf]
      %v6071 = vsel %vm414, %v6061, 0
      %v6074 = vsel %vm414, %v6062, 0
      %v6077 = vsel %vm414, %v6063, 0
      %v6080 = vsel %vm414, %v6064, 0
      %v6083 = vsel %vm414, %v6065, 0
      %v6086 = vsel %vm414, %v6066, 0
      %v6089 = vsel %vm414, %v6067, 0
      %v6092 = vsel %vm884, %v6069, 0
      %6094 = vmatprep.subr.bf16.mxu0 0
      %6095 = vmatpush1.bf16.msra.mxu0 %v6092
      %6096 = vmatprep.subr.bf16.mxu0 0
      %6097 = vmatpush1.bf16.msra.mxu0 0
      %6098 = vmatprep.subr.bf16.mxu0 0
      %6099 = vmatpush1.bf16.msra.mxu0 0
      %6100 = vmatprep.subr.bf16.mxu0 0
      %6101 = vmatpush1.bf16.msra.mxu0 0
      %6102 = vmatprep.subr.bf16.mxu0 0
      %6103 = vmatpush1.bf16.msra.mxu0 0
      %6104 = vmatprep.subr.bf16.mxu0 0
      %6105 = vmatpush1.bf16.msra.mxu0 0
      %6106 = vmatprep.subr.bf16.mxu0 0
      %6107 = vmatpush1.bf16.msra.mxu0 0
      %6108 = vmatprep.subr.bf16.mxu0 0
      %6109 = vmatpush1.bf16.msra.mxu0 0
      %6110 = vmatprep.subr.bf16.mxu0 0
      %6111 = vmatpush1.bf16.msra.mxu0 0
      %6112 = vmatprep.subr.bf16.mxu0 0
      %6113 = vmatpush1.bf16.msra.mxu0 0
      %6114 = vmatprep.subr.bf16.mxu0 0
      %6115 = vmatpush1.bf16.msra.mxu0 0
      %6116 = vmatprep.subr.bf16.mxu0 0
      %6117 = vmatpush1.bf16.msra.mxu0 0
      %6118 = vmatprep.subr.bf16.mxu0 0
      %6119 = vmatpush1.bf16.msra.mxu0 0
      %6120 = vmatprep.subr.bf16.mxu0 0
      %6121 = vmatpush1.bf16.msra.mxu0 0
      %6122 = vmatprep.subr.bf16.mxu0 0
      %6123 = vmatpush1.bf16.msra.mxu0 0
      %6124 = vmatprep.subr.bf16.mxu0 0
      %6125 = vmatpush1.bf16.msra.mxu0 0
      %6126 = vmatprep.mubr.bf16.mxu0 0
      %6127 = vmatmul.mubr.bf16.gmra.mrb[0].mxu0 %v6071
      %v6128 = vpop.f32.mrb[0].mxu0
      %v6129 = vadd.f32 0.0, %v6128
      %v6130 = vpop.f32.mrb[0].mxu0
      %v6131 = vpop.f32.mrb[0].mxu0
      %v6132 = vadd.f32 0.0, %v6131
      %v6133 = vpop.f32.mrb[0].mxu0
      %6134 = vmatprep.mubr.bf16.mxu0 0
      %6135 = vmatmul.mubr.bf16.gmra.mrb[0].mxu0 %v6074
      %v6136 = vpop.f32.mrb[0].mxu0
      %v6137 = vadd.f32 0.0, %v6136
      %v6138 = vpop.f32.mrb[0].mxu0
      %v6139 = vpop.f32.mrb[0].mxu0
      %v6140 = vadd.f32 0.0, %v6139
      %v6141 = vpop.f32.mrb[0].mxu0
      %6142 = vmatprep.mubr.bf16.mxu0 0
      %6143 = vmatmul.mubr.bf16.gmra.mrb[0].mxu0 %v6077
      %v6144 = vpop.f32.mrb[0].mxu0
      %v6145 = vadd.f32 0.0, %v6144
      %v6146 = vpop.f32.mrb[0].mxu0
      %v6147 = vpop.f32.mrb[0].mxu0
      %v6148 = vadd.f32 0.0, %v6147
      %v6149 = vpop.f32.mrb[0].mxu0
      %6150 = vmatprep.mubr.bf16.mxu0 0
      %6151 = vmatmul.mubr.bf16.gmra.mrb[0].mxu0 %v6080
      %v6152 = vpop.f32.mrb[0].mxu0
      %v6153 = vadd.f32 0.0, %v6152
      %v6154 = vpop.f32.mrb[0].mxu0
      %v6155 = vpop.f32.mrb[0].mxu0
      %v6156 = vadd.f32 0.0, %v6155
      %v6157 = vpop.f32.mrb[0].mxu0
      %6158 = vmatprep.mubr.bf16.mxu0 0
      %6159 = vmatmul.mubr.bf16.gmra.mrb[0].mxu0 %v6083
      %v6160 = vpop.f32.mrb[0].mxu0
      %v6161 = vadd.f32 0.0, %v6160
      %v6162 = vpop.f32.mrb[0].mxu0
      %v6163 = vpop.f32.mrb[0].mxu0
      %v6164 = vadd.f32 0.0, %v6163
      %v6165 = vpop.f32.mrb[0].mxu0
      %6166 = vmatprep.mubr.bf16.mxu0 0
      %6167 = vmatmul.mubr.bf16.gmra.mrb[0].mxu0 %v6086
      %v6168 = vpop.f32.mrb[0].mxu0
      %v6169 = vadd.f32 0.0, %v6168
      %v6170 = vpop.f32.mrb[0].mxu0
      %v6171 = vpop.f32.mrb[0].mxu0
      %v6172 = vadd.f32 0.0, %v6171
      %v6173 = vpop.f32.mrb[0].mxu0
      %6174 = vmatprep.mubr.bf16.mxu0 0
      %6175 = vmatmul.mubr.bf16.gmra.mrb[0].mxu0 %v6089
      %v6176 = vpop.f32.mrb[0].mxu0
      %v6177 = vadd.f32 0.0, %v6176
      %v6178 = vpop.f32.mrb[0].mxu0
      %v6179 = vpop.f32.mrb[0].mxu0
      %v6180 = vpop.f32.mrb[0].mxu0
      %6181 = vdwg.mxu0
      %v6182 = vadd.f32 %v6035, %v6129
      %v6183 = vadd.f32 %v6036, %v6132
      %v6184 = vadd.f32 %v6037, %v6137
      %v6185 = vadd.f32 %v6038, %v6140
      %v6186 = vadd.f32 %v6039, %v6145
      %v6187 = vadd.f32 %v6040, %v6148
      %v6188 = vadd.f32 %v6041, %v6153
      %v6189 = vadd.f32 %v6042, %v6156
      %v6190 = vadd.f32 %v6043, %v6161
      %v6191 = vadd.f32 %v6044, %v6164
      %v6192 = vadd.f32 %v6045, %v6169
      %v6193 = vadd.f32 %v6046, %v6172
      %v6194 = vadd.f32 %v6047, %v6177
      %v6195 = vld [vmem:[#allocation2 + $0x1b] sm:$0xff]
      %v6196 = vld [vmem:[#allocation2 + $0x23] sm:$0xff]
      %v6197 = vld [vmem:[#allocation2 + $0x2b] sm:$0xff]
      %v6198 = vld [vmem:[#allocation2 + $0x33] sm:$0xff]
      %v6199 = vld [vmem:[#allocation2 + $0x3b] sm:$0xff]
      %v6200 = vld [vmem:[#allocation2 + $0x43] sm:$0xff]
      %v6201 = vld [vmem:[#allocation2 + $0x4b] sm:$0xff]
      %v6202 = vld [vmem:[#allocation2 + $0x53] sm:$0xff]
      %v6203 = vld [vmem:[#allocation2 + $0x5b] sm:$0xff]
      %v6204 = vld [vmem:[#allocation2 + $0x63] sm:$0xff]
      %v6205 = vld [vmem:[#allocation2 + $0x6b] sm:$0xff]
      %v6206 = vld [vmem:[#allocation2 + $0x73] sm:$0xff]
      %v6207 = vld [vmem:[#allocation2 + $0x7b] sm:$0xf]
      %v6208 = vpack.c.bf16 %v6196, %v6195
      %v6209 = vpack.c.bf16 %v6198, %v6197
      %v6210 = vpack.c.bf16 %v6200, %v6199
      %v6211 = vpack.c.bf16 %v6202, %v6201
      %v6212 = vpack.c.bf16 %v6204, %v6203
      %v6213 = vpack.c.bf16 %v6206, %v6205
      %v6214 = vpack.c.bf16 %v6207, %v6207
      %s6215 = scalar_lea.vmem %s7, 140
      %v6216 = vld [vmem:[%s6215] sm:$0xf]
      %v6218 = vsel %vm414, %v6208, 0
      %v6221 = vsel %vm414, %v6209, 0
      %v6224 = vsel %vm414, %v6210, 0
      %v6227 = vsel %vm414, %v6211, 0
      %v6230 = vsel %vm414, %v6212, 0
      %v6233 = vsel %vm414, %v6213, 0
      %v6236 = vsel %vm414, %v6214, 0
      %v6239 = vsel %vm884, %v6216, 0
      %6241 = vmatprep.subr.bf16.mxu0 0
      %6242 = vmatpush1.bf16.msra.mxu0 %v6239
      %6243 = vmatprep.subr.bf16.mxu0 0
      %6244 = vmatpush1.bf16.msra.mxu0 0
      %6245 = vmatprep.subr.bf16.mxu0 0
      %6246 = vmatpush1.bf16.msra.mxu0 0
      %6247 = vmatprep.subr.bf16.mxu0 0
      %6248 = vmatpush1.bf16.msra.mxu0 0
      %6249 = vmatprep.subr.bf16.mxu0 0
      %6250 = vmatpush1.bf16.msra.mxu0 0
      %6251 = vmatprep.subr.bf16.mxu0 0
      %6252 = vmatpush1.bf16.msra.mxu0 0
      %6253 = vmatprep.subr.bf16.mxu0 0
      %6254 = vmatpush1.bf16.msra.mxu0 0
      %6255 = vmatprep.subr.bf16.mxu0 0
      %6256 = vmatpush1.bf16.msra.mxu0 0
      %6257 = vmatprep.subr.bf16.mxu0 0
      %6258 = vmatpush1.bf16.msra.mxu0 0
      %6259 = vmatprep.subr.bf16.mxu0 0
      %6260 = vmatpush1.bf16.msra.mxu0 0
      %6261 = vmatprep.subr.bf16.mxu0 0
      %6262 = vmatpush1.bf16.msra.mxu0 0
      %6263 = vmatprep.subr.bf16.mxu0 0
      %6264 = vmatpush1.bf16.msra.mxu0 0
      %6265 = vmatprep.subr.bf16.mxu0 0
      %6266 = vmatpush1.bf16.msra.mxu0 0
      %6267 = vmatprep.subr.bf16.mxu0 0
      %6268 = vmatpush1.bf16.msra.mxu0 0
      %6269 = vmatprep.subr.bf16.mxu0 0
      %6270 = vmatpush1.bf16.msra.mxu0 0
      %6271 = vmatprep.subr.bf16.mxu0 0
      %6272 = vmatpush1.bf16.msra.mxu0 0
      %6273 = vmatprep.mubr.bf16.mxu0 0
      %6274 = vmatmul.mubr.bf16.gmra.mrb[0].mxu0 %v6218
      %v6275 = vpop.f32.mrb[0].mxu0
      %v6276 = vadd.f32 0.0, %v6275
      %v6277 = vpop.f32.mrb[0].mxu0
      %v6278 = vpop.f32.mrb[0].mxu0
      %v6279 = vadd.f32 0.0, %v6278
      %v6280 = vpop.f32.mrb[0].mxu0
      %6281 = vmatprep.mubr.bf16.mxu0 0
      %6282 = vmatmul.mubr.bf16.gmra.mrb[0].mxu0 %v6221
      %v6283 = vpop.f32.mrb[0].mxu0
      %v6284 = vadd.f32 0.0, %v6283
      %v6285 = vpop.f32.mrb[0].mxu0
      %v6286 = vpop.f32.mrb[0].mxu0
      %v6287 = vadd.f32 0.0, %v6286
      %v6288 = vpop.f32.mrb[0].mxu0
      %6289 = vmatprep.mubr.bf16.mxu0 0
      %6290 = vmatmul.mubr.bf16.gmra.mrb[0].mxu0 %v6224
      %v6291 = vpop.f32.mrb[0].mxu0
      %v6292 = vadd.f32 0.0, %v6291
      %v6293 = vpop.f32.mrb[0].mxu0
      %v6294 = vpop.f32.mrb[0].mxu0
      %v6295 = vadd.f32 0.0, %v6294
      %v6296 = vpop.f32.mrb[0].mxu0
      %6297 = vmatprep.mubr.bf16.mxu0 0
      %6298 = vmatmul.mubr.bf16.gmra.mrb[0].mxu0 %v6227
      %v6299 = vpop.f32.mrb[0].mxu0
      %v6300 = vadd.f32 0.0, %v6299
      %v6301 = vpop.f32.mrb[0].mxu0
      %v6302 = vpop.f32.mrb[0].mxu0
      %v6303 = vadd.f32 0.0, %v6302
      %v6304 = vpop.f32.mrb[0].mxu0
      %6305 = vmatprep.mubr.bf16.mxu0 0
      %6306 = vmatmul.mubr.bf16.gmra.mrb[0].mxu0 %v6230
      %v6307 = vpop.f32.mrb[0].mxu0
      %v6308 = vadd.f32 0.0, %v6307
      %v6309 = vpop.f32.mrb[0].mxu0
      %v6310 = vpop.f32.mrb[0].mxu0
      %v6311 = vadd.f32 0.0, %v6310
      %v6312 = vpop.f32.mrb[0].mxu0
      %6313 = vmatprep.mubr.bf16.mxu0 0
      %6314 = vmatmul.mubr.bf16.gmra.mrb[0].mxu0 %v6233
      %v6315 = vpop.f32.mrb[0].mxu0
      %v6316 = vadd.f32 0.0, %v6315
      %v6317 = vpop.f32.mrb[0].mxu0
      %v6318 = vpop.f32.mrb[0].mxu0
      %v6319 = vadd.f32 0.0, %v6318
      %v6320 = vpop.f32.mrb[0].mxu0
      %6321 = vmatprep.mubr.bf16.mxu0 0
      %6322 = vmatmul.mubr.bf16.gmra.mrb[0].mxu0 %v6236
      %v6323 = vpop.f32.mrb[0].mxu0
      %v6324 = vadd.f32 0.0, %v6323
      %v6325 = vpop.f32.mrb[0].mxu0
      %v6326 = vpop.f32.mrb[0].mxu0
      %v6327 = vpop.f32.mrb[0].mxu0
      %6328 = vdwg.mxu0
      %v6329 = vadd.f32 %v6182, %v6276
      %v6330 = vadd.f32 %v6183, %v6279
      %v6331 = vadd.f32 %v6184, %v6284
      %v6332 = vadd.f32 %v6185, %v6287
      %v6333 = vadd.f32 %v6186, %v6292
      %v6334 = vadd.f32 %v6187, %v6295
      %v6335 = vadd.f32 %v6188, %v6300
      %v6336 = vadd.f32 %v6189, %v6303
      %v6337 = vadd.f32 %v6190, %v6308
      %v6338 = vadd.f32 %v6191, %v6311
      %v6339 = vadd.f32 %v6192, %v6316
      %v6340 = vadd.f32 %v6193, %v6319
      %v6341 = vadd.f32 %v6194, %v6324
      %v6342 = vadd.f32 %v3521, %v6329
      %v6343 = vadd.f32 %v3522, %v6330
      %v6344 = vadd.f32 %v3523, %v6331
      %v6345 = vadd.f32 %v3524, %v6332
      %v6346 = vadd.f32 %v3525, %v6333
      %v6347 = vadd.f32 %v3526, %v6334
      %v6348 = vadd.f32 %v3527, %v6335
      %v6349 = vadd.f32 %v3528, %v6336
      %v6350 = vadd.f32 %v3529, %v6337
      %v6351 = vadd.f32 %v3530, %v6338
      %v6352 = vadd.f32 %v3531, %v6339
      %v6353 = vadd.f32 %v3532, %v6340
      %v6354 = vadd.f32 %v3533, %v6341
      %v6355 = vld [vmem:[%s8] sm:$0x1]
      %v6356 = vld [vmem:[%s9] sm:$0x1]
      %v6358 = vlaneseq
      %v6359 = vshrl.u32 %v6358, 7
      %v6360 = vsub.s32 0, %v6359
      %v6361 = vrot.slane %v6355, %v6360
      %v6363 = vmul.f32 %v6342, %v6361
      %v6364 = vmul.f32 %v6343, %v6361
      %v6365 = vmul.f32 %v6344, %v6361
      %v6366 = vmul.f32 %v6345, %v6361
      %v6367 = vmul.f32 %v6346, %v6361
      %v6368 = vmul.f32 %v6347, %v6361
      %v6369 = vmul.f32 %v6348, %v6361
      %v6370 = vmul.f32 %v6349, %v6361
      %v6371 = vmul.f32 %v6350, %v6361
      %v6372 = vmul.f32 %v6351, %v6361
      %v6373 = vmul.f32 %v6352, %v6361
      %v6374 = vmul.f32 %v6353, %v6361
      %v6375 = vmul.f32 %v6354, %v6361
      %v6377 = vlaneseq
      %v6378 = vshrl.u32 %v6377, 7
      %v6379 = vsub.s32 0, %v6378
      %v6380 = vrot.slane %v6356, %v6379
      %v6382 = vadd.f32 %v6363, %v6380
      %v6383 = vadd.f32 %v6364, %v6380
      %v6384 = vadd.f32 %v6365, %v6380
      %v6385 = vadd.f32 %v6366, %v6380
      %v6386 = vadd.f32 %v6367, %v6380
      %v6387 = vadd.f32 %v6368, %v6380
      %v6388 = vadd.f32 %v6369, %v6380
      %v6389 = vadd.f32 %v6370, %v6380
      %v6390 = vadd.f32 %v6371, %v6380
      %v6391 = vadd.f32 %v6372, %v6380
      %v6392 = vadd.f32 %v6373, %v6380
      %v6393 = vadd.f32 %v6374, %v6380
      %v6394 = vadd.f32 %v6375, %v6380
      %vm6395 = vcmp.gt.f32.partialorder %v6382, 0.0
      %vm6396 = vcmp.gt.f32.partialorder %v6383, 0.0
      %vm6397 = vcmp.gt.f32.partialorder %v6384, 0.0
      %vm6398 = vcmp.gt.f32.partialorder %v6385, 0.0
      %vm6399 = vcmp.gt.f32.partialorder %v6386, 0.0
      %vm6400 = vcmp.gt.f32.partialorder %v6387, 0.0
      %vm6401 = vcmp.gt.f32.partialorder %v6388, 0.0
      %vm6402 = vcmp.gt.f32.partialorder %v6389, 0.0
      %vm6403 = vcmp.gt.f32.partialorder %v6390, 0.0
      %vm6404 = vcmp.gt.f32.partialorder %v6391, 0.0
      %vm6405 = vcmp.gt.f32.partialorder %v6392, 0.0
      %vm6406 = vcmp.gt.f32.partialorder %v6393, 0.0
      %vm6407 = vcmp.gt.f32.partialorder %v6394, 0.0
      %v6408 = vmul.f32 %v6382, 0.01
      %v6409 = vmul.f32 %v6383, 0.01
      %v6410 = vmul.f32 %v6384, 0.01
      %v6411 = vmul.f32 %v6385, 0.01
      %v6412 = vmul.f32 %v6386, 0.01
      %v6413 = vmul.f32 %v6387, 0.01
      %v6414 = vmul.f32 %v6388, 0.01
      %v6415 = vmul.f32 %v6389, 0.01
      %v6416 = vmul.f32 %v6390, 0.01
      %v6417 = vmul.f32 %v6391, 0.01
      %v6418 = vmul.f32 %v6392, 0.01
      %v6419 = vmul.f32 %v6393, 0.01
      %v6420 = vmul.f32 %v6394, 0.01
      %v6421 = vsel %vm6395, %v6382, %v6408
      %v6422 = vsel %vm6396, %v6383, %v6409
      %v6423 = vsel %vm6397, %v6384, %v6410
      %v6424 = vsel %vm6398, %v6385, %v6411
      %v6425 = vsel %vm6399, %v6386, %v6412
      %v6426 = vsel %vm6400, %v6387, %v6413
      %v6427 = vsel %vm6401, %v6388, %v6414
      %v6428 = vsel %vm6402, %v6389, %v6415
      %v6429 = vsel %vm6403, %v6390, %v6416
      %v6430 = vsel %vm6404, %v6391, %v6417
      %v6431 = vsel %vm6405, %v6392, %v6418
      %v6432 = vsel %vm6406, %v6393, %v6419
      %v6433 = vsel %vm6407, %v6394, %v6420
      %v6434 = vmul.f32 %v6421, %v515
      %v6435 = vmul.f32 %v6422, %v520
      %v6436 = vmul.f32 %v6423, %v525
      %v6437 = vmul.f32 %v6424, %v530
      %v6438 = vmul.f32 %v6425, %v535
      %v6439 = vmul.f32 %v6426, %v540
      %v6440 = vmul.f32 %v6427, %v545
      %v6441 = vmul.f32 %v6428, %v550
      %v6442 = vmul.f32 %v6429, %v555
      %v6443 = vmul.f32 %v6430, %v560
      %v6444 = vmul.f32 %v6431, %v565
      %v6445 = vmul.f32 %v6432, %v570
      %v6446 = vmul.f32 %v6433, %v575
      %v6447 = vld [vmem:[%s10] sm:$0xf]
      %v6448 = vpack.c.bf16 %v6435, %v6434
      %v6449 = vpack.c.bf16 %v6437, %v6436
      %v6450 = vpack.c.bf16 %v6439, %v6438
      %v6451 = vpack.c.bf16 %v6441, %v6440
      %v6452 = vpack.c.bf16 %v6443, %v6442
      %v6453 = vpack.c.bf16 %v6445, %v6444
      %v6454 = vpack.c.bf16 %v6446, %v6446
      %v6456 = vsel %vm414, %v6448, 0
      %v6459 = vsel %vm414, %v6449, 0
      %v6462 = vsel %vm414, %v6450, 0
      %v6465 = vsel %vm414, %v6451, 0
      %v6468 = vsel %vm414, %v6452, 0
      %v6471 = vsel %vm414, %v6453, 0
      %v6474 = vsel %vm414, %v6454, 0
      %v6477 = vsel %vm884, %v6447, 0
      %6479 = vmatprep.subr.bf16.mxu0 0
      %6480 = vmatpush1.bf16.msra.mxu0 %v6477
      %6481 = vmatprep.subr.bf16.mxu0 0
      %6482 = vmatpush1.bf16.msra.mxu0 0
      %6483 = vmatprep.subr.bf16.mxu0 0
      %6484 = vmatpush1.bf16.msra.mxu0 0
      %6485 = vmatprep.subr.bf16.mxu0 0
      %6486 = vmatpush1.bf16.msra.mxu0 0
      %6487 = vmatprep.subr.bf16.mxu0 0
      %6488 = vmatpush1.bf16.msra.mxu0 0
      %6489 = vmatprep.subr.bf16.mxu0 0
      %6490 = vmatpush1.bf16.msra.mxu0 0
      %6491 = vmatprep.subr.bf16.mxu0 0
      %6492 = vmatpush1.bf16.msra.mxu0 0
      %6493 = vmatprep.subr.bf16.mxu0 0
      %6494 = vmatpush1.bf16.msra.mxu0 0
      %6495 = vmatprep.subr.bf16.mxu0 0
      %6496 = vmatpush1.bf16.msra.mxu0 0
      %6497 = vmatprep.subr.bf16.mxu0 0
      %6498 = vmatpush1.bf16.msra.mxu0 0
      %6499 = vmatprep.subr.bf16.mxu0 0
      %6500 = vmatpush1.bf16.msra.mxu0 0
      %6501 = vmatprep.subr.bf16.mxu0 0
      %6502 = vmatpush1.bf16.msra.mxu0 0
      %6503 = vmatprep.subr.bf16.mxu0 0
      %6504 = vmatpush1.bf16.msra.mxu0 0
      %6505 = vmatprep.subr.bf16.mxu0 0
      %6506 = vmatpush1.bf16.msra.mxu0 0
      %6507 = vmatprep.subr.bf16.mxu0 0
      %6508 = vmatpush1.bf16.msra.mxu0 0
      %6509 = vmatprep.subr.bf16.mxu0 0
      %6510 = vmatpush1.bf16.msra.mxu0 0
      %6511 = vmatprep.mubr.bf16.mxu0 0
      %6512 = vmatmul.mubr.bf16.gmra.mrb[0].mxu0 %v6456
      %v6513 = vpop.f32.mrb[0].mxu0
      %v6514 = vadd.f32 0.0, %v6513
      %v6515 = vpop.f32.mrb[0].mxu0
      %v6516 = vpop.f32.mrb[0].mxu0
      %v6517 = vadd.f32 0.0, %v6516
      %v6518 = vpop.f32.mrb[0].mxu0
      %6519 = vmatprep.mubr.bf16.mxu0 0
      %6520 = vmatmul.mubr.bf16.gmra.mrb[0].mxu0 %v6459
      %v6521 = vpop.f32.mrb[0].mxu0
      %v6522 = vadd.f32 0.0, %v6521
      %v6523 = vpop.f32.mrb[0].mxu0
      %v6524 = vpop.f32.mrb[0].mxu0
      %v6525 = vadd.f32 0.0, %v6524
      %v6526 = vpop.f32.mrb[0].mxu0
      %6527 = vmatprep.mubr.bf16.mxu0 0
      %6528 = vmatmul.mubr.bf16.gmra.mrb[0].mxu0 %v6462
      %v6529 = vpop.f32.mrb[0].mxu0
      %v6530 = vadd.f32 0.0, %v6529
      %v6531 = vpop.f32.mrb[0].mxu0
      %v6532 = vpop.f32.mrb[0].mxu0
      %v6533 = vadd.f32 0.0, %v6532
      %v6534 = vpop.f32.mrb[0].mxu0
      %6535 = vmatprep.mubr.bf16.mxu0 0
      %6536 = vmatmul.mubr.bf16.gmra.mrb[0].mxu0 %v6465
      %v6537 = vpop.f32.mrb[0].mxu0
      %v6538 = vadd.f32 0.0, %v6537
      %v6539 = vpop.f32.mrb[0].mxu0
      %v6540 = vpop.f32.mrb[0].mxu0
      %v6541 = vadd.f32 0.0, %v6540
      %v6542 = vpop.f32.mrb[0].mxu0
      %6543 = vmatprep.mubr.bf16.mxu0 0
      %6544 = vmatmul.mubr.bf16.gmra.mrb[0].mxu0 %v6468
      %v6545 = vpop.f32.mrb[0].mxu0
      %v6546 = vadd.f32 0.0, %v6545
      %v6547 = vpop.f32.mrb[0].mxu0
      %v6548 = vpop.f32.mrb[0].mxu0
      %v6549 = vadd.f32 0.0, %v6548
      %v6550 = vpop.f32.mrb[0].mxu0
      %6551 = vmatprep.mubr.bf16.mxu0 0
      %6552 = vmatmul.mubr.bf16.gmra.mrb[0].mxu0 %v6471
      %v6553 = vpop.f32.mrb[0].mxu0
      %v6554 = vadd.f32 0.0, %v6553
      %v6555 = vpop.f32.mrb[0].mxu0
      %v6556 = vpop.f32.mrb[0].mxu0
      %v6557 = vadd.f32 0.0, %v6556
      %v6558 = vpop.f32.mrb[0].mxu0
      %6559 = vmatprep.mubr.bf16.mxu0 0
      %6560 = vmatmul.mubr.bf16.gmra.mrb[0].mxu0 %v6474
      %v6561 = vpop.f32.mrb[0].mxu0
      %v6562 = vadd.f32 0.0, %v6561
      %v6563 = vpop.f32.mrb[0].mxu0
      %v6564 = vpop.f32.mrb[0].mxu0
      %v6565 = vpop.f32.mrb[0].mxu0
      %6566 = vdwg.mxu0
      %v6567 = vadd.f32 %v388, %v6514
      %v6568 = vadd.f32 %v389, %v6517
      %v6569 = vadd.f32 %v390, %v6522
      %v6570 = vadd.f32 %v391, %v6525
      %v6571 = vadd.f32 %v392, %v6530
      %v6572 = vadd.f32 %v393, %v6533
      %v6573 = vadd.f32 %v394, %v6538
      %v6574 = vadd.f32 %v395, %v6541
      %v6575 = vadd.f32 %v396, %v6546
      %v6576 = vadd.f32 %v397, %v6549
      %v6577 = vadd.f32 %v398, %v6554
      %v6578 = vadd.f32 %v399, %v6557
      %v6579 = vadd.f32 %v400, %v6562
      %6580 = vst.msk [vmem:[%s386] sm:$0xff] %vm605, %v6567
      %6581 = vst.msk [vmem:[%s386 + $0x8] sm:$0xff] %vm605, %v6568
      %6582 = vst.msk [vmem:[%s386 + $0x10] sm:$0xff] %vm605, %v6569
      %6583 = vst.msk [vmem:[%s386 + $0x18] sm:$0xff] %vm605, %v6570
      %6584 = vst.msk [vmem:[%s386 + $0x20] sm:$0xff] %vm605, %v6571
      %6585 = vst.msk [vmem:[%s386 + $0x28] sm:$0xff] %vm605, %v6572
      %6586 = vst.msk [vmem:[%s386 + $0x30] sm:$0xff] %vm605, %v6573
      %6587 = vst.msk [vmem:[%s386 + $0x38] sm:$0xff] %vm605, %v6574
      %6588 = vst.msk [vmem:[%s386 + $0x40] sm:$0xff] %vm605, %v6575
      %6589 = vst.msk [vmem:[%s386 + $0x48] sm:$0xff] %vm605, %v6576
      %6590 = vst.msk [vmem:[%s386 + $0x50] sm:$0xff] %vm605, %v6577
      %6591 = vst.msk [vmem:[%s386 + $0x58] sm:$0xff] %vm605, %v6578
      %vm6592 = vcmask 125952
      %6593 = vst.msk [vmem:[%s386 + $0x60] sm:$0xf] %vm6592, %v6579
      %p6594 = scmp.lt.s32.totalorder %s22, 1
      %s6595 = scalar_select %p6594, %s22, 1
      %s6596 = smul.addr %s6595, 13
      %s6597 = smul.addr %s6596, 8
      %s6598 = scalar_lea.vmem %s11, %s6597
      // Predicated region
      $region65: #{_lambda_.4} parent=63 // pred_check
        %p6599 = pneg %p276
      $region66: #{_lambda_.4} parent=63 // pred_check_branch
        %6601 = sbr.rel (%p6599) target = $region68
      $region67: #{_lambda_.4} parent=63 // pred_region
        _
      $region68: #{_lambda_.4} parent=63 // pred_fallthru
        _
    $region64: #{_lambda_.4} parent=5 // pred_fallthru
      _
    %p6602 = scmp.le.s32.totalorder 2, %s17
    // Predicated region
    $region69: #{_lambda_.4} parent=5 // pred_check
      %p6603 = pneg %p6602
    $region70: #{_lambda_.4} parent=5 // pred_check_branch
      %6605 = sbr.rel (%p6603) target = $region72
    $region71: #{_lambda_.4} parent=5 // pred_region
      %s6606 = ssub.s32 %s17, 2
      // Predicated region
      $region73: #{_lambda_.4} parent=71 // pred_check
        %p6607 = pneg %p282
      $region74: #{_lambda_.4} parent=71 // pred_check_branch
        %6609 = sbr.rel (%p6607) target = $region76
      $region75: #{_lambda_.4} parent=71 // pred_region
        %p6610 = scmp.lt.s32.totalorder %s23, 1
        %s6611 = scalar_select %p6610, %s23, 1
        %s6612 = smul.addr %s6611, 13
        %s6613 = smul.addr %s6612, 8
        %s6614 = scalar_lea.vmem %s11, %s6613
      $region76: #{_lambda_.4} parent=71 // pred_fallthru
        _
    $region72: #{_lambda_.4} parent=5 // pred_fallthru
      _
  $region6: #{_lambda_.4} parent=0 // loop_footer
    %s21 = sadd.s32 1, %s17
  $region7: #{_lambda_.4} parent=0 // loop_footer_branch
    %16 = sbr.rel target = $region3
  $region8: #{_lambda_.4} parent=0 // loop_exit
    _

</llo_original>
